<compile_context>
chip_gen: v5e
topology: v5e:2x2
jax: 0.10.0
libtpu: 0.0.40
codegen_flags: <defaults>
</compile_context>

<pallas_src>
import jax
import jax.numpy as jnp
from jax.experimental import pallas as pl
from jax.experimental.pallas import tpu as pltpu

# ---------------- hyper-parameters (consistent with the module) -----------------
N_BATCH = 2
N_CLASSES = 4
CH = 6              # EEG channels
CHP = 8             # EEG channels padded to a sublane multiple
S = 640             # samples; chosen so flatten size == 16*3*1 == fc.in_features
KL = 64             # kernelLength
KL2 = KL // 2
F1 = 8
D = 2
F2 = 16
F1D = F1 * D

W1 = S - KL + 1           # 577 after conv1
WP2 = W1 // 2             # 288 after AvgPool2d((1,2))
W3 = WP2 - KL + 1         # 225 after SeparableConv2d (1,KL)
WP3 = W3 // 4             # 56  after AvgPool2d((1,4))
W4 = WP3 - KL2 + 1        # 25  after conv4 (1,KL//2)
WP4 = W4 // 8             # 3   after AvgPool2d((1,8))
assert F2 * WP4 == 16 * 3 * 1     # matches nn.Linear(16*3*1, n_classes)

# packed per-channel constant slab: column indices
_C_SC1, _C_B1W2, _C_B2, _C_B3, _C_S4, _C_B4, _C_EBIAS = 0, 1, 2, 3, 4, 5, 6
_C_A3, _C_ACS3, _C_D13, _C_A4, _C_ACS4, _C_D14, _C_BFC = 7, 8, 9, 10, 11, 12, 13
NPACK = 14


# ================================ Pallas kernel =================================
def amcnn_kernel(x_ref, mte_ref, w2e_ref, w1e_ref, w3de_ref, w3pe_ref,
                 w4s_ref, wfcs_ref, pool2_ref, pool3_ref, pool4_ref,
                 pack_ref, out_ref):
    x2 = x_ref[0]                       # (CHP, S)  (rows >= CH are zero padding)
    pack = pack_ref[...]                # (F1D, NPACK)

    # ---- ECA attention gate.  conv1 + BN1 + global avg-pool + the 1-D band conv
    # are all linear, so they are folded into the single constant matrix `mte`.
    # TODO(synk): eca_block() is not defined in the source file; standard ECA with
    # kernel_size=3 is used (same assumption as the in-file reference).
    q = jnp.dot(x2, mte_ref[...], preferred_element_type=jnp.float32)     # (CHP, F1D)
    t_row = jnp.sum(q, axis=0, keepdims=True)                             # (1, F1D)
    ii = jax.lax.broadcasted_iota(jnp.int32, (F1D, F1D), 0)
    jj = jax.lax.broadcasted_iota(jnp.int32, (F1D, F1D), 1)
    eye = (ii == jj).astype(jnp.float32)
    t_col = jnp.sum(eye * t_row, axis=1, keepdims=True)                   # (F1D, 1)
    att = jax.nn.sigmoid(t_col + pack[:, _C_EBIAS:_C_EBIAS + 1])          # (F1D, 1)

    # ---- stage 1: conv2(depthwise over EEG rows) o gate o BN1 o conv1, collapsed.
    # Channel contraction on the MXU, then a 16-stream depthwise time conv.
    y = jnp.dot(w2e_ref[...], x2, preferred_element_type=jnp.float32)     # (F1D, S)
    w1e = w1e_ref[...]                                                    # (F1D, KL)
    acc = w1e[:, 0:1] * y[:, 0:W1]
    for k in range(1, KL):
        acc = acc + w1e[:, k:k + 1] * y[:, k:k + W1]                      # (F1D, W1)
    scale = att * pack[:, _C_SC1:_C_SC1 + 1]
    bias = att * pack[:, _C_B1W2:_C_B1W2 + 1] + pack[:, _C_B2:_C_B2 + 1]
    z2 = scale * acc + bias
    # TODO(synk): Hexpo() is not defined in the source file; standard Hexpo
    # (a=b=c=d=1): f(x) = 1-exp(-x) for x>=0 else exp(x)-1.
    h2 = jnp.where(z2 >= 0.0, 1.0 - jnp.exp(-z2), jnp.exp(z2) - 1.0)
    p2 = jnp.dot(h2, pool2_ref[...], preferred_element_type=jnp.float32)  # (F1D, WP2)

    # ---- SeparableConv2d: depthwise (1,KL) tap loop + pointwise (+bnsep+bn3 folded)
    w3de = w3de_ref[...]
    accb = w3de[:, 0:1] * p2[:, 0:W3]
    for k in range(1, KL):
        accb = accb + w3de[:, k:k + 1] * p2[:, k:k + W3]                  # (F1D, W3)
    out3 = jnp.dot(w3pe_ref[...], accb,
                   preferred_element_type=jnp.float32) + pack[:, _C_B3:_C_B3 + 1]
    a3 = pack[:, _C_A3:_C_A3 + 1]
    acs3 = pack[:, _C_ACS3:_C_ACS3 + 1]
    d13 = pack[:, _C_D13:_C_D13 + 1]
    act3 = jnp.where(out3 >= a3, (out3 - a3) * d13 + a3, acs3)            # CosELU
    p3 = jnp.dot(act3, pool3_ref[...], preferred_element_type=jnp.float32)  # (F2, WP3)

    # ---- conv4 (1, KL//2): ONE stacked MXU matmul, then 32 aligned shift-adds
    z_all = jnp.dot(w4s_ref[...], p3, preferred_element_type=jnp.float32)   # (KL2*F2, WP3)
    out4 = z_all[0:F2, 0:W4]
    for k in range(1, KL2):
        out4 = out4 + z_all[k * F2:(k + 1) * F2, k:k + W4]                  # (F2, W4)
    z4 = out4 * pack[:, _C_S4:_C_S4 + 1] + pack[:, _C_B4:_C_B4 + 1]
    a4 = pack[:, _C_A4:_C_A4 + 1]
    acs4 = pack[:, _C_ACS4:_C_ACS4 + 1]
    d14 = pack[:, _C_D14:_C_D14 + 1]
    act4 = jnp.where(z4 >= a4, (z4 - a4) * d14 + a4, acs4)
    tmp = jnp.dot(act4, pool4_ref[...], preferred_element_type=jnp.float32)  # (F2, WP4)

    # ---- flatten (channel-major) + fc as one stacked matmul + softmax
    lc = jnp.dot(wfcs_ref[...], tmp, preferred_element_type=jnp.float32)     # (WP4*8, WP4)
    logits = pack[0:N_CLASSES, _C_BFC:_C_BFC + 1]                            # (NC, 1)
    for u in range(WP4):
        logits = logits + lc[u * 8:u * 8 + N_CLASSES, u:u + 1]
    ii4 = jax.lax.broadcasted_iota(jnp.int32, (N_CLASSES, N_CLASSES), 0)
    jj4 = jax.lax.broadcasted_iota(jnp.int32, (N_CLASSES, N_CLASSES), 1)
    eye4 = (ii4 == jj4).astype(jnp.float32)
    lrow = jnp.sum(eye4 * logits, axis=0, keepdims=True)                     # (1, NC)
    m = jnp.max(lrow, axis=1, keepdims=True)
    e = jnp.exp(lrow - m)
    out_ref[0] = e / jnp.sum(e, axis=1, keepdims=True)                       # lane-dense write


# ============================== parameter plumbing ===============================
def bn_fold(p, eps):
    g, b, m, v = p
    s = g / jnp.sqrt(v + eps)
    return s, b - m * s


def coselu_scalars(alpha):
    """[alpha, coselu(alpha), coselu1(coselu(alpha))] with the constants of CosELU."""
    a = jnp.float32(alpha)
    acs = 0.5 * (a + 0.5 * jnp.cos(a)) * jax.nn.elu(a)                 # coselu(a,0.5,1,1,0.5)
    d1 = 0.5 * (2.0 * acs + 0.5 * (jnp.cos(acs) - jnp.sin(acs)))       # coselu1(acs,0.5,1,0.5)
    return jnp.stack([a, acs, d1]).astype(jnp.float32)


def _pool_matrix(n_in, k):
    """(n_in, n_in//k) matrix performing floor-mode average pooling with window k."""
    n_out = n_in // k
    rows = jnp.arange(n_in)[:, None]
    cols = jnp.arange(n_out)[None, :]
    return jnp.where(rows // k == cols, 1.0 / k, 0.0).astype(jnp.float32)


def init_params(key):
    ks = jax.random.split(key, 16)

    def nrm(k, shape, scale):
        return scale * jax.random.normal(k, shape, dtype=jnp.float32)

    def bn_init(k, c):
        k1, k2, k3, k4 = jax.random.split(k, 4)
        return (jax.random.uniform(k1, (c,), jnp.float32, 0.8, 1.2),   # gamma
                0.1 * jax.random.normal(k2, (c,), jnp.float32),        # beta
                0.1 * jax.random.normal(k3, (c,), jnp.float32),        # running_mean
                jax.random.uniform(k4, (c,), jnp.float32, 0.5, 1.5))   # running_var

    return dict(
        w1=nrm(ks[0], (F1, 1, 1, KL), 0.2),
        bn1=bn_init(ks[1], F1),
        eca=nrm(ks[2], (3,), 0.5),
        w2=nrm(ks[3], (F1D, 1, CH, 1), 0.2),
        b2=nrm(ks[4], (F1D,), 0.1),
        bn2=bn_init(ks[5], F1D),
        w3d=nrm(ks[6], (F1D, 1, 1, KL), 0.2),
        b3d=nrm(ks[7], (F1D,), 0.1),
        w3p=nrm(ks[8], (F2, F1D, 1, 1), 0.2),
        b3p=nrm(ks[9], (F2,), 0.1),
        bnsep=bn_init(ks[10], F2),
        bn3=bn_init(ks[11], F2),
        w4=nrm(ks[12], (F2, F2, 1, KL2), 0.1),
        bn4=bn_init(ks[13], F2),
        wfc=nrm(ks[14], (N_CLASSES, F2 * WP4), 0.2),
        bfc=nrm(ks[15], (N_CLASSES,), 0.1),
        alpha3=0.0,     # CosELU default learnable alpha
        alpha4=0.0,
    )


def prepare_kernel_inputs(P):
    s1, b1 = bn_fold(P['bn1'], 1e-3)          # BatchNorm2d1 (eps=0.001)
    s2, bb2 = bn_fold(P['bn2'], 1e-3)         # BatchNorm2d2 (eps=0.001)
    ssep, bsep = bn_fold(P['bnsep'], 1e-5)    # SeparableConv2d internal BN (default eps)
    s3, b3 = bn_fold(P['bn3'], 1e-3)          # BatchNorm2d3
    s4, b4 = bn_fold(P['bn4'], 1e-3)          # BatchNorm2d4

    w1 = P['w1'].reshape(F1, KL)
    w2 = P['w2'].reshape(F1D, CH)
    b2 = P['b2']
    w3d = P['w3d'].reshape(F1D, KL)
    b3d = P['b3d']
    w3p = P['w3p'].reshape(F2, F1D)
    b3p = P['b3p']
    w4 = P['w4'].reshape(F2, F2, KL2)
    wfc = P['wfc']
    bfc = P['bfc']

    fo = jnp.arange(F1D) // D                 # output channel o -> conv1 filter f
    w1e = w1[fo]                              # (F1D, KL)
    s1e = s1[fo]
    b1e = b1[fo]

    # ECA global-mean matrix: conv1 band-sums, BN1 scale, 1/(CH*W1) and the ECA band
    # conv are all folded into a single (S, F1D) constant.
    s_idx = jnp.arange(S)[:, None]
    k_idx = jnp.arange(KL)[None, :]
    band = ((k_idx <= s_idx) & (k_idx >= s_idx - (W1 - 1))).astype(jnp.float32)   # (S, KL)
    mt = (band @ w1e.T) * (s1e / (CH * W1))[None, :]                              # (S, F1D)
    we = P['eca']
    ecab = (we[0] * jnp.eye(F1, k=-1) + we[1] * jnp.eye(F1)
            + we[2] * jnp.eye(F1, k=1)).astype(jnp.float32)                       # (F1, F1)
    ecae = ecab[fo][:, fo] / D                                                    # (F1D, F1D)
    mte = (mt @ ecae.T).astype(jnp.float32)                                       # (S, F1D)
    ebias = ecae @ b1e                                                            # (F1D,)

    # stage-1 per-channel constants (conv2 bias, BN1 bias path, BN2 fold)
    w2sum = jnp.sum(w2, axis=1)
    c_sc1 = s2 * s1e
    c_b1w2 = s2 * b1e * w2sum
    c_b2 = s2 * b2 + bb2

    # SeparableConv2d pointwise with bnsep & bn3 folded in
    scmb = ssep * s3
    w3pe = (w3p * scmb[:, None]).astype(jnp.float32)
    c_b3 = scmb * (w3p @ b3d + b3p) + (s3 * bsep + b3)

    # conv4 stacked weights: w4stack[k*F2 + q, o] = w4[q, o, k]
    w4stack = jnp.transpose(w4, (2, 0, 1)).reshape(KL2 * F2, F2).astype(jnp.float32)

    # fc stacked weights (classes padded to 8 sublanes per time-position)
    wfc3 = jnp.transpose(wfc.reshape(N_CLASSES, F2, WP4), (2, 0, 1))   # (WP4, NC, F2)
    wfcs = jnp.pad(wfc3, ((0, 0), (0, 8 - N_CLASSES), (0, 0))).reshape(WP4 * 8, F2)
    wfcs = wfcs.astype(jnp.float32)

    cs3 = coselu_scalars(P['alpha3'])
    cs4 = coselu_scalars(P['alpha4'])
    full = lambda v: jnp.full((F1D,), v, jnp.float32)
    pack = jnp.stack([
        c_sc1, c_b1w2, c_b2, c_b3, s4, b4, ebias,
        full(cs3[0]), full(cs3[1]), full(cs3[2]),
        full(cs4[0]), full(cs4[1]), full(cs4[2]),
        jnp.pad(bfc, (0, F1D - N_CLASSES)),
    ], axis=1).astype(jnp.float32)                                     # (F1D, NPACK)

    w2e = jnp.pad(w2, ((0, 0), (0, CHP - CH))).astype(jnp.float32)     # (F1D, CHP)

    pool2 = _pool_matrix(W1, 2)      # (577, 288)
    pool3 = _pool_matrix(W3, 4)      # (225, 56)
    pool4 = _pool_matrix(W4, 8)      # (25, 3)

    return [mte, w2e, w1e.astype(jnp.float32), w3d.astype(jnp.float32), w3pe,
            w4stack, wfcs, pool2, pool3, pool4, pack]


def amcnn_pallas_forward(x_nchw, P):
    x = x_nchw[:, 0].astype(jnp.float32)                       # (N, CH, S)
    x = jnp.pad(x, ((0, 0), (0, CHP - CH), (0, 0)))            # pad EEG rows to 8
    kargs = prepare_kernel_inputs(P)
    n = x.shape[0]

    def const_spec(a):
        return pl.BlockSpec(a.shape, lambda i: (0,) * a.ndim)

    in_specs = ([pl.BlockSpec((1, CHP, S), lambda i: (i, 0, 0))]
                + [const_spec(a) for a in kargs])
    out_specs = pl.BlockSpec((1, 1, N_CLASSES), lambda i: (i, 0, 0))

    out = pl.pallas_call(
        amcnn_kernel,
        out_shape=jax.ShapeDtypeStruct((n, 1, N_CLASSES), jnp.float32),
        grid=(n,),
        in_specs=in_specs,
        out_specs=out_specs,
        compiler_params=pltpu.CompilerParams(dimension_semantics=("parallel",)),
    )(x, *kargs)
    return out[:, 0, :]                                         # (N, n_classes)


# =========================== pure-JAX reference (check) ==========================
def _bn_eval(x, p, eps, axis=1):
    g, b, m, v = p
    shp = [1] * x.ndim
    shp[axis] = -1
    return (x - m.reshape(shp)) / jnp.sqrt(v.reshape(shp) + eps) * g.reshape(shp) + b.reshape(shp)


def _hexpo(x):
    return jnp.where(x >= 0.0, 1.0 - jnp.exp(-x), jnp.exp(x) - 1.0)


def _coselu_act(x, alpha):
    c = coselu_scalars(alpha)
    a, acs, d1 = c[0], c[1], c[2]
    return jnp.where(x >= a, (x - a) * d1 + a, acs)


def _avgpool_last(x, k):
    to = x.shape[-1] // k
    return x[..., : to * k].reshape(x.shape[:-1] + (to, k)).mean(-1)


def reference_forward(x, P):
    HI = jax.lax.Precision.HIGHEST
    xs = x[:, 0]                                                        # (N, CH, S)
    pat = jnp.stack([xs[:, :, k:k + W1] for k in range(KL)], -1)
    out1 = jnp.einsum('nctk,fk->nfct', pat, P['w1'].reshape(F1, KL), precision=HI)
    out1 = _bn_eval(out1, P['bn1'], 1e-3)
    pooled = out1.mean(axis=(2, 3))
    pp = jnp.pad(pooled, ((0, 0), (1, 1)))
    we = P['eca']
    att = jax.nn.sigmoid(we[0] * pp[:, 0:F1] + we[1] * pp[:, 1:F1 + 1] + we[2] * pp[:, 2:F1 + 2])
    out1 = out1 * att[:, :, None, None]
    xrep = jnp.repeat(out1, D, axis=1)
    out2 = jnp.einsum('noht,oh->not', xrep, P['w2'].reshape(F1D, CH), precision=HI) \
        + P['b2'][None, :, None]
    out2 = _avgpool_last(_hexpo(_bn_eval(out2, P['bn2'], 1e-3)), 2)
    pat3 = jnp.stack([out2[:, :, k:k + W3] for k in range(KL)], -1)
    out3d = jnp.einsum('nctk,ck->nct', pat3, P['w3d'].reshape(F1D, KL), precision=HI) \
        + P['b3d'][None, :, None]
    out3 = jnp.einsum('nct,oc->not', out3d, P['w3p'].reshape(F2, F1D), precision=HI) \
        + P['b3p'][None, :, None]
    out3 = _bn_eval(out3, P['bnsep'], 1e-5)
    out3 = _bn_eval(out3, P['bn3'], 1e-3)
    out3 = _avgpool_last(_coselu_act(out3, P['alpha3']), 4)
    pat4 = jnp.stack([out3[:, :, k:k + W4] for k in range(KL2)], -1)
    out4 = jnp.einsum('nctk,ock->not', pat4, P['w4'].reshape(F2, F2, KL2), precision=HI)
    out4 = _bn_eval(out4, P['bn4'], 1e-3)
    out4 = _avgpool_last(_coselu_act(out4, P['alpha4']), 8)
    flat = out4.reshape(out4.shape[0], -1)
    logits = jnp.dot(flat, P['wfc'].T, precision=HI) + P['bfc'][None]
    return jax.nn.softmax(logits, axis=1)


# ===================================== main ======================================
if __name__ == "__main__":
    key = jax.random.PRNGKey(0)
    kx, kp = jax.random.split(key)
    x = jax.random.normal(kx, (N_BATCH, 1, CH, S), jnp.float32)   # NCHW, like PyTorch
    P = init_params(kp)

    out = amcnn_pallas_forward(x, P)
    out = jax.block_until_ready(out)

    ref = reference_forward(x, P)
    assert out.shape == (N_BATCH, N_CLASSES)
    assert bool(jnp.all(jnp.isfinite(out)))
    err = float(jnp.max(jnp.abs(out - ref)))
    assert err < 1e-2, f"mismatch vs reference: {err}"
    print("KERNEL_OK")
</pallas_src>

<mosaic_0001>
module attributes {stable_mosaic.version = 11 : i64} {
  func.func @amcnn_kernel(%arg0: i32, %arg1: memref<1x8x640xf32, #tpu.memory_space<vmem>>, %arg2: memref<640x16xf32, #tpu.memory_space<vmem>>, %arg3: memref<16x8xf32, #tpu.memory_space<vmem>>, %arg4: memref<16x64xf32, #tpu.memory_space<vmem>>, %arg5: memref<16x64xf32, #tpu.memory_space<vmem>>, %arg6: memref<16x16xf32, #tpu.memory_space<vmem>>, %arg7: memref<512x16xf32, #tpu.memory_space<vmem>>, %arg8: memref<24x16xf32, #tpu.memory_space<vmem>>, %arg9: memref<577x288xf32, #tpu.memory_space<vmem>>, %arg10: memref<225x56xf32, #tpu.memory_space<vmem>>, %arg11: memref<25x3xf32, #tpu.memory_space<vmem>>, %arg12: memref<16x14xf32, #tpu.memory_space<vmem>>, %arg13: memref<1x1x4xf32, #tpu.memory_space<vmem>>) attributes {dimension_semantics = [#tpu.dimension_semantics<parallel>], iteration_bounds = array<i64: 2>, scalar_prefetch = 0 : i64, scratch_operands = 0 : i64, tpu.core_type = #tpu.core_type<tc>, window_params = [{transform_indices = @transform_0, window_bounds = array<i64: 1, 8, 640>}, {pipeline_mode = #tpu.pipeline_mode<synchronous>, transform_indices = @transform_1, window_bounds = array<i64: 640, 16>}, {pipeline_mode = #tpu.pipeline_mode<synchronous>, transform_indices = @transform_2, window_bounds = array<i64: 16, 8>}, {pipeline_mode = #tpu.pipeline_mode<synchronous>, transform_indices = @transform_3, window_bounds = array<i64: 16, 64>}, {pipeline_mode = #tpu.pipeline_mode<synchronous>, transform_indices = @transform_4, window_bounds = array<i64: 16, 64>}, {pipeline_mode = #tpu.pipeline_mode<synchronous>, transform_indices = @transform_5, window_bounds = array<i64: 16, 16>}, {pipeline_mode = #tpu.pipeline_mode<synchronous>, transform_indices = @transform_6, window_bounds = array<i64: 512, 16>}, {pipeline_mode = #tpu.pipeline_mode<synchronous>, transform_indices = @transform_7, window_bounds = array<i64: 24, 16>}, {pipeline_mode = #tpu.pipeline_mode<synchronous>, transform_indices = @transform_8, window_bounds = array<i64: 577, 288>}, {pipeline_mode = #tpu.pipeline_mode<synchronous>, transform_indices = @transform_9, window_bounds = array<i64: 225, 56>}, {pipeline_mode = #tpu.pipeline_mode<synchronous>, transform_indices = @transform_10, window_bounds = array<i64: 25, 3>}, {pipeline_mode = #tpu.pipeline_mode<synchronous>, transform_indices = @transform_11, window_bounds = array<i64: 16, 14>}, {transform_indices = @transform_12, window_bounds = array<i64: 1, 1, 4>}]} {
    %c0 = arith.constant 0 : index
    %c0_0 = arith.constant 0 : index
    %c0_1 = arith.constant 0 : index
    %0 = vector.load %arg1[%c0, %c0_0, %c0_1] : memref<1x8x640xf32, #tpu.memory_space<vmem>>, vector<1x8x640xf32>
    %1 = vector.shape_cast %0 : vector<1x8x640xf32> to vector<8x640xf32>
    %c0_2 = arith.constant 0 : index
    %c0_3 = arith.constant 0 : index
    %2 = vector.load %arg12[%c0_2, %c0_3] : memref<16x14xf32, #tpu.memory_space<vmem>>, vector<16x14xf32>
    %c0_4 = arith.constant 0 : index
    %c0_5 = arith.constant 0 : index
    %3 = vector.load %arg2[%c0_4, %c0_5] : memref<640x16xf32, #tpu.memory_space<vmem>>, vector<640x16xf32>
    %cst = arith.constant dense<0.000000e+00> : vector<8x16xf32>
    %4 = tpu.matmul %1, %3, %cst {dimension_numbers = #tpu.dot_dimension_numbers<[1], [0], [0], [1], [0, 0, 1, 1], [], []>} : vector<8x640xf32>, vector<640x16xf32>, vector<8x16xf32> -> vector<8x16xf32>
    %cst_6 = arith.constant dense<0.000000e+00> : vector<16xf32>
    %5 = vector.multi_reduction <add>, %4, %cst_6 [0] : vector<8x16xf32> to vector<16xf32>
    %6 = vector.shape_cast %5 : vector<16xf32> to vector<1x16xf32>
    %7 = tpu.iota {dimensions = array<i32: 0>} : vector<16x16xi32>
    %8 = tpu.iota {dimensions = array<i32: 1>} : vector<16x16xi32>
    %9 = arith.cmpi eq, %7, %8 : vector<16x16xi32>
    %10 = arith.extui %9 : vector<16x16xi1> to vector<16x16xi32>
    %11 = arith.sitofp %10 : vector<16x16xi32> to vector<16x16xf32>
    %12 = vector.broadcast %6 : vector<1x16xf32> to vector<16x16xf32>
    %13 = arith.mulf %11, %12 : vector<16x16xf32>
    %cst_7 = arith.constant dense<0.000000e+00> : vector<16xf32>
    %14 = vector.multi_reduction <add>, %13, %cst_7 [1] : vector<16x16xf32> to vector<16xf32>
    %15 = vector.shape_cast %14 : vector<16xf32> to vector<16x1xf32>
    %16 = vector.extract_strided_slice %2 {offsets = [0, 6], sizes = [16, 1], strides = [1, 1]} : vector<16x14xf32> to vector<16x1xf32>
    %17 = arith.addf %15, %16 : vector<16x1xf32>
    %18 = arith.negf %17 : vector<16x1xf32>
    %19 = math.exp %18 : vector<16x1xf32>
    %cst_8 = arith.constant 1.000000e+00 : f32
    %20 = vector.broadcast %cst_8 : f32 to vector<16x1xf32>
    %21 = arith.addf %20, %19 : vector<16x1xf32>
    %22 = arith.divf %20, %21 : vector<16x1xf32>
    %c0_9 = arith.constant 0 : index
    %c0_10 = arith.constant 0 : index
    %23 = vector.load %arg3[%c0_9, %c0_10] : memref<16x8xf32, #tpu.memory_space<vmem>>, vector<16x8xf32>
    %cst_11 = arith.constant dense<0.000000e+00> : vector<16x640xf32>
    %24 = tpu.matmul %23, %1, %cst_11 {dimension_numbers = #tpu.dot_dimension_numbers<[1], [0], [0], [1], [0, 0, 1, 1], [], []>} : vector<16x8xf32>, vector<8x640xf32>, vector<16x640xf32> -> vector<16x640xf32>
    %c0_12 = arith.constant 0 : index
    %c0_13 = arith.constant 0 : index
    %25 = vector.load %arg4[%c0_12, %c0_13] : memref<16x64xf32, #tpu.memory_space<vmem>>, vector<16x64xf32>
    %26 = vector.extract_strided_slice %25 {offsets = [0, 0], sizes = [16, 1], strides = [1, 1]} : vector<16x64xf32> to vector<16x1xf32>
    %27 = vector.extract_strided_slice %24 {offsets = [0, 0], sizes = [16, 577], strides = [1, 1]} : vector<16x640xf32> to vector<16x577xf32>
    %28 = vector.broadcast %26 : vector<16x1xf32> to vector<16x577xf32>
    %29 = arith.mulf %28, %27 : vector<16x577xf32>
    %30 = vector.extract_strided_slice %25 {offsets = [0, 1], sizes = [16, 1], strides = [1, 1]} : vector<16x64xf32> to vector<16x1xf32>
    %31 = vector.extract_strided_slice %24 {offsets = [0, 1], sizes = [16, 577], strides = [1, 1]} : vector<16x640xf32> to vector<16x577xf32>
    %32 = vector.broadcast %30 : vector<16x1xf32> to vector<16x577xf32>
    %33 = arith.mulf %32, %31 : vector<16x577xf32>
    %34 = arith.addf %29, %33 : vector<16x577xf32>
    %35 = vector.extract_strided_slice %25 {offsets = [0, 2], sizes = [16, 1], strides = [1, 1]} : vector<16x64xf32> to vector<16x1xf32>
    %36 = vector.extract_strided_slice %24 {offsets = [0, 2], sizes = [16, 577], strides = [1, 1]} : vector<16x640xf32> to vector<16x577xf32>
    %37 = vector.broadcast %35 : vector<16x1xf32> to vector<16x577xf32>
    %38 = arith.mulf %37, %36 : vector<16x577xf32>
    %39 = arith.addf %34, %38 : vector<16x577xf32>
    %40 = vector.extract_strided_slice %25 {offsets = [0, 3], sizes = [16, 1], strides = [1, 1]} : vector<16x64xf32> to vector<16x1xf32>
    %41 = vector.extract_strided_slice %24 {offsets = [0, 3], sizes = [16, 577], strides = [1, 1]} : vector<16x640xf32> to vector<16x577xf32>
    %42 = vector.broadcast %40 : vector<16x1xf32> to vector<16x577xf32>
    %43 = arith.mulf %42, %41 : vector<16x577xf32>
    %44 = arith.addf %39, %43 : vector<16x577xf32>
    %45 = vector.extract_strided_slice %25 {offsets = [0, 4], sizes = [16, 1], strides = [1, 1]} : vector<16x64xf32> to vector<16x1xf32>
    %46 = vector.extract_strided_slice %24 {offsets = [0, 4], sizes = [16, 577], strides = [1, 1]} : vector<16x640xf32> to vector<16x577xf32>
    %47 = vector.broadcast %45 : vector<16x1xf32> to vector<16x577xf32>
    %48 = arith.mulf %47, %46 : vector<16x577xf32>
    %49 = arith.addf %44, %48 : vector<16x577xf32>
    %50 = vector.extract_strided_slice %25 {offsets = [0, 5], sizes = [16, 1], strides = [1, 1]} : vector<16x64xf32> to vector<16x1xf32>
    %51 = vector.extract_strided_slice %24 {offsets = [0, 5], sizes = [16, 577], strides = [1, 1]} : vector<16x640xf32> to vector<16x577xf32>
    %52 = vector.broadcast %50 : vector<16x1xf32> to vector<16x577xf32>
    %53 = arith.mulf %52, %51 : vector<16x577xf32>
    %54 = arith.addf %49, %53 : vector<16x577xf32>
    %55 = vector.extract_strided_slice %25 {offsets = [0, 6], sizes = [16, 1], strides = [1, 1]} : vector<16x64xf32> to vector<16x1xf32>
    %56 = vector.extract_strided_slice %24 {offsets = [0, 6], sizes = [16, 577], strides = [1, 1]} : vector<16x640xf32> to vector<16x577xf32>
    %57 = vector.broadcast %55 : vector<16x1xf32> to vector<16x577xf32>
    %58 = arith.mulf %57, %56 : vector<16x577xf32>
    %59 = arith.addf %54, %58 : vector<16x577xf32>
    %60 = vector.extract_strided_slice %25 {offsets = [0, 7], sizes = [16, 1], strides = [1, 1]} : vector<16x64xf32> to vector<16x1xf32>
    %61 = vector.extract_strided_slice %24 {offsets = [0, 7], sizes = [16, 577], strides = [1, 1]} : vector<16x640xf32> to vector<16x577xf32>
    %62 = vector.broadcast %60 : vector<16x1xf32> to vector<16x577xf32>
    %63 = arith.mulf %62, %61 : vector<16x577xf32>
    %64 = arith.addf %59, %63 : vector<16x577xf32>
    %65 = vector.extract_strided_slice %25 {offsets = [0, 8], sizes = [16, 1], strides = [1, 1]} : vector<16x64xf32> to vector<16x1xf32>
    %66 = vector.extract_strided_slice %24 {offsets = [0, 8], sizes = [16, 577], strides = [1, 1]} : vector<16x640xf32> to vector<16x577xf32>
    %67 = vector.broadcast %65 : vector<16x1xf32> to vector<16x577xf32>
    %68 = arith.mulf %67, %66 : vector<16x577xf32>
    %69 = arith.addf %64, %68 : vector<16x577xf32>
    %70 = vector.extract_strided_slice %25 {offsets = [0, 9], sizes = [16, 1], strides = [1, 1]} : vector<16x64xf32> to vector<16x1xf32>
    %71 = vector.extract_strided_slice %24 {offsets = [0, 9], sizes = [16, 577], strides = [1, 1]} : vector<16x640xf32> to vector<16x577xf32>
    %72 = vector.broadcast %70 : vector<16x1xf32> to vector<16x577xf32>
    %73 = arith.mulf %72, %71 : vector<16x577xf32>
    %74 = arith.addf %69, %73 : vector<16x577xf32>
    %75 = vector.extract_strided_slice %25 {offsets = [0, 10], sizes = [16, 1], strides = [1, 1]} : vector<16x64xf32> to vector<16x1xf32>
    %76 = vector.extract_strided_slice %24 {offsets = [0, 10], sizes = [16, 577], strides = [1, 1]} : vector<16x640xf32> to vector<16x577xf32>
    %77 = vector.broadcast %75 : vector<16x1xf32> to vector<16x577xf32>
    %78 = arith.mulf %77, %76 : vector<16x577xf32>
    %79 = arith.addf %74, %78 : vector<16x577xf32>
    %80 = vector.extract_strided_slice %25 {offsets = [0, 11], sizes = [16, 1], strides = [1, 1]} : vector<16x64xf32> to vector<16x1xf32>
    %81 = vector.extract_strided_slice %24 {offsets = [0, 11], sizes = [16, 577], strides = [1, 1]} : vector<16x640xf32> to vector<16x577xf32>
    %82 = vector.broadcast %80 : vector<16x1xf32> to vector<16x577xf32>
    %83 = arith.mulf %82, %81 : vector<16x577xf32>
    %84 = arith.addf %79, %83 : vector<16x577xf32>
    %85 = vector.extract_strided_slice %25 {offsets = [0, 12], sizes = [16, 1], strides = [1, 1]} : vector<16x64xf32> to vector<16x1xf32>
    %86 = vector.extract_strided_slice %24 {offsets = [0, 12], sizes = [16, 577], strides = [1, 1]} : vector<16x640xf32> to vector<16x577xf32>
    %87 = vector.broadcast %85 : vector<16x1xf32> to vector<16x577xf32>
    %88 = arith.mulf %87, %86 : vector<16x577xf32>
    %89 = arith.addf %84, %88 : vector<16x577xf32>
    %90 = vector.extract_strided_slice %25 {offsets = [0, 13], sizes = [16, 1], strides = [1, 1]} : vector<16x64xf32> to vector<16x1xf32>
    %91 = vector.extract_strided_slice %24 {offsets = [0, 13], sizes = [16, 577], strides = [1, 1]} : vector<16x640xf32> to vector<16x577xf32>
    %92 = vector.broadcast %90 : vector<16x1xf32> to vector<16x577xf32>
    %93 = arith.mulf %92, %91 : vector<16x577xf32>
    %94 = arith.addf %89, %93 : vector<16x577xf32>
    %95 = vector.extract_strided_slice %25 {offsets = [0, 14], sizes = [16, 1], strides = [1, 1]} : vector<16x64xf32> to vector<16x1xf32>
    %96 = vector.extract_strided_slice %24 {offsets = [0, 14], sizes = [16, 577], strides = [1, 1]} : vector<16x640xf32> to vector<16x577xf32>
    %97 = vector.broadcast %95 : vector<16x1xf32> to vector<16x577xf32>
    %98 = arith.mulf %97, %96 : vector<16x577xf32>
    %99 = arith.addf %94, %98 : vector<16x577xf32>
    %100 = vector.extract_strided_slice %25 {offsets = [0, 15], sizes = [16, 1], strides = [1, 1]} : vector<16x64xf32> to vector<16x1xf32>
    %101 = vector.extract_strided_slice %24 {offsets = [0, 15], sizes = [16, 577], strides = [1, 1]} : vector<16x640xf32> to vector<16x577xf32>
    %102 = vector.broadcast %100 : vector<16x1xf32> to vector<16x577xf32>
    %103 = arith.mulf %102, %101 : vector<16x577xf32>
    %104 = arith.addf %99, %103 : vector<16x577xf32>
    %105 = vector.extract_strided_slice %25 {offsets = [0, 16], sizes = [16, 1], strides = [1, 1]} : vector<16x64xf32> to vector<16x1xf32>
    %106 = vector.extract_strided_slice %24 {offsets = [0, 16], sizes = [16, 577], strides = [1, 1]} : vector<16x640xf32> to vector<16x577xf32>
    %107 = vector.broadcast %105 : vector<16x1xf32> to vector<16x577xf32>
    %108 = arith.mulf %107, %106 : vector<16x577xf32>
    %109 = arith.addf %104, %108 : vector<16x577xf32>
    %110 = vector.extract_strided_slice %25 {offsets = [0, 17], sizes = [16, 1], strides = [1, 1]} : vector<16x64xf32> to vector<16x1xf32>
    %111 = vector.extract_strided_slice %24 {offsets = [0, 17], sizes = [16, 577], strides = [1, 1]} : vector<16x640xf32> to vector<16x577xf32>
    %112 = vector.broadcast %110 : vector<16x1xf32> to vector<16x577xf32>
    %113 = arith.mulf %112, %111 : vector<16x577xf32>
    %114 = arith.addf %109, %113 : vector<16x577xf32>
    %115 = vector.extract_strided_slice %25 {offsets = [0, 18], sizes = [16, 1], strides = [1, 1]} : vector<16x64xf32> to vector<16x1xf32>
    %116 = vector.extract_strided_slice %24 {offsets = [0, 18], sizes = [16, 577], strides = [1, 1]} : vector<16x640xf32> to vector<16x577xf32>
    %117 = vector.broadcast %115 : vector<16x1xf32> to vector<16x577xf32>
    %118 = arith.mulf %117, %116 : vector<16x577xf32>
    %119 = arith.addf %114, %118 : vector<16x577xf32>
    %120 = vector.extract_strided_slice %25 {offsets = [0, 19], sizes = [16, 1], strides = [1, 1]} : vector<16x64xf32> to vector<16x1xf32>
    %121 = vector.extract_strided_slice %24 {offsets = [0, 19], sizes = [16, 577], strides = [1, 1]} : vector<16x640xf32> to vector<16x577xf32>
    %122 = vector.broadcast %120 : vector<16x1xf32> to vector<16x577xf32>
    %123 = arith.mulf %122, %121 : vector<16x577xf32>
    %124 = arith.addf %119, %123 : vector<16x577xf32>
    %125 = vector.extract_strided_slice %25 {offsets = [0, 20], sizes = [16, 1], strides = [1, 1]} : vector<16x64xf32> to vector<16x1xf32>
    %126 = vector.extract_strided_slice %24 {offsets = [0, 20], sizes = [16, 577], strides = [1, 1]} : vector<16x640xf32> to vector<16x577xf32>
    %127 = vector.broadcast %125 : vector<16x1xf32> to vector<16x577xf32>
    %128 = arith.mulf %127, %126 : vector<16x577xf32>
    %129 = arith.addf %124, %128 : vector<16x577xf32>
    %130 = vector.extract_strided_slice %25 {offsets = [0, 21], sizes = [16, 1], strides = [1, 1]} : vector<16x64xf32> to vector<16x1xf32>
    %131 = vector.extract_strided_slice %24 {offsets = [0, 21], sizes = [16, 577], strides = [1, 1]} : vector<16x640xf32> to vector<16x577xf32>
    %132 = vector.broadcast %130 : vector<16x1xf32> to vector<16x577xf32>
    %133 = arith.mulf %132, %131 : vector<16x577xf32>
    %134 = arith.addf %129, %133 : vector<16x577xf32>
    %135 = vector.extract_strided_slice %25 {offsets = [0, 22], sizes = [16, 1], strides = [1, 1]} : vector<16x64xf32> to vector<16x1xf32>
    %136 = vector.extract_strided_slice %24 {offsets = [0, 22], sizes = [16, 577], strides = [1, 1]} : vector<16x640xf32> to vector<16x577xf32>
    %137 = vector.broadcast %135 : vector<16x1xf32> to vector<16x577xf32>
    %138 = arith.mulf %137, %136 : vector<16x577xf32>
    %139 = arith.addf %134, %138 : vector<16x577xf32>
    %140 = vector.extract_strided_slice %25 {offsets = [0, 23], sizes = [16, 1], strides = [1, 1]} : vector<16x64xf32> to vector<16x1xf32>
    %141 = vector.extract_strided_slice %24 {offsets = [0, 23], sizes = [16, 577], strides = [1, 1]} : vector<16x640xf32> to vector<16x577xf32>
    %142 = vector.broadcast %140 : vector<16x1xf32> to vector<16x577xf32>
    %143 = arith.mulf %142, %141 : vector<16x577xf32>
    %144 = arith.addf %139, %143 : vector<16x577xf32>
    %145 = vector.extract_strided_slice %25 {offsets = [0, 24], sizes = [16, 1], strides = [1, 1]} : vector<16x64xf32> to vector<16x1xf32>
    %146 = vector.extract_strided_slice %24 {offsets = [0, 24], sizes = [16, 577], strides = [1, 1]} : vector<16x640xf32> to vector<16x577xf32>
    %147 = vector.broadcast %145 : vector<16x1xf32> to vector<16x577xf32>
    %148 = arith.mulf %147, %146 : vector<16x577xf32>
    %149 = arith.addf %144, %148 : vector<16x577xf32>
    %150 = vector.extract_strided_slice %25 {offsets = [0, 25], sizes = [16, 1], strides = [1, 1]} : vector<16x64xf32> to vector<16x1xf32>
    %151 = vector.extract_strided_slice %24 {offsets = [0, 25], sizes = [16, 577], strides = [1, 1]} : vector<16x640xf32> to vector<16x577xf32>
    %152 = vector.broadcast %150 : vector<16x1xf32> to vector<16x577xf32>
    %153 = arith.mulf %152, %151 : vector<16x577xf32>
    %154 = arith.addf %149, %153 : vector<16x577xf32>
    %155 = vector.extract_strided_slice %25 {offsets = [0, 26], sizes = [16, 1], strides = [1, 1]} : vector<16x64xf32> to vector<16x1xf32>
    %156 = vector.extract_strided_slice %24 {offsets = [0, 26], sizes = [16, 577], strides = [1, 1]} : vector<16x640xf32> to vector<16x577xf32>
    %157 = vector.broadcast %155 : vector<16x1xf32> to vector<16x577xf32>
    %158 = arith.mulf %157, %156 : vector<16x577xf32>
    %159 = arith.addf %154, %158 : vector<16x577xf32>
    %160 = vector.extract_strided_slice %25 {offsets = [0, 27], sizes = [16, 1], strides = [1, 1]} : vector<16x64xf32> to vector<16x1xf32>
    %161 = vector.extract_strided_slice %24 {offsets = [0, 27], sizes = [16, 577], strides = [1, 1]} : vector<16x640xf32> to vector<16x577xf32>
    %162 = vector.broadcast %160 : vector<16x1xf32> to vector<16x577xf32>
    %163 = arith.mulf %162, %161 : vector<16x577xf32>
    %164 = arith.addf %159, %163 : vector<16x577xf32>
    %165 = vector.extract_strided_slice %25 {offsets = [0, 28], sizes = [16, 1], strides = [1, 1]} : vector<16x64xf32> to vector<16x1xf32>
    %166 = vector.extract_strided_slice %24 {offsets = [0, 28], sizes = [16, 577], strides = [1, 1]} : vector<16x640xf32> to vector<16x577xf32>
    %167 = vector.broadcast %165 : vector<16x1xf32> to vector<16x577xf32>
    %168 = arith.mulf %167, %166 : vector<16x577xf32>
    %169 = arith.addf %164, %168 : vector<16x577xf32>
    %170 = vector.extract_strided_slice %25 {offsets = [0, 29], sizes = [16, 1], strides = [1, 1]} : vector<16x64xf32> to vector<16x1xf32>
    %171 = vector.extract_strided_slice %24 {offsets = [0, 29], sizes = [16, 577], strides = [1, 1]} : vector<16x640xf32> to vector<16x577xf32>
    %172 = vector.broadcast %170 : vector<16x1xf32> to vector<16x577xf32>
    %173 = arith.mulf %172, %171 : vector<16x577xf32>
    %174 = arith.addf %169, %173 : vector<16x577xf32>
    %175 = vector.extract_strided_slice %25 {offsets = [0, 30], sizes = [16, 1], strides = [1, 1]} : vector<16x64xf32> to vector<16x1xf32>
    %176 = vector.extract_strided_slice %24 {offsets = [0, 30], sizes = [16, 577], strides = [1, 1]} : vector<16x640xf32> to vector<16x577xf32>
    %177 = vector.broadcast %175 : vector<16x1xf32> to vector<16x577xf32>
    %178 = arith.mulf %177, %176 : vector<16x577xf32>
    %179 = arith.addf %174, %178 : vector<16x577xf32>
    %180 = vector.extract_strided_slice %25 {offsets = [0, 31], sizes = [16, 1], strides = [1, 1]} : vector<16x64xf32> to vector<16x1xf32>
    %181 = vector.extract_strided_slice %24 {offsets = [0, 31], sizes = [16, 577], strides = [1, 1]} : vector<16x640xf32> to vector<16x577xf32>
    %182 = vector.broadcast %180 : vector<16x1xf32> to vector<16x577xf32>
    %183 = arith.mulf %182, %181 : vector<16x577xf32>
    %184 = arith.addf %179, %183 : vector<16x577xf32>
    %185 = vector.extract_strided_slice %25 {offsets = [0, 32], sizes = [16, 1], strides = [1, 1]} : vector<16x64xf32> to vector<16x1xf32>
    %186 = vector.extract_strided_slice %24 {offsets = [0, 32], sizes = [16, 577], strides = [1, 1]} : vector<16x640xf32> to vector<16x577xf32>
    %187 = vector.broadcast %185 : vector<16x1xf32> to vector<16x577xf32>
    %188 = arith.mulf %187, %186 : vector<16x577xf32>
    %189 = arith.addf %184, %188 : vector<16x577xf32>
    %190 = vector.extract_strided_slice %25 {offsets = [0, 33], sizes = [16, 1], strides = [1, 1]} : vector<16x64xf32> to vector<16x1xf32>
    %191 = vector.extract_strided_slice %24 {offsets = [0, 33], sizes = [16, 577], strides = [1, 1]} : vector<16x640xf32> to vector<16x577xf32>
    %192 = vector.broadcast %190 : vector<16x1xf32> to vector<16x577xf32>
    %193 = arith.mulf %192, %191 : vector<16x577xf32>
    %194 = arith.addf %189, %193 : vector<16x577xf32>
    %195 = vector.extract_strided_slice %25 {offsets = [0, 34], sizes = [16, 1], strides = [1, 1]} : vector<16x64xf32> to vector<16x1xf32>
    %196 = vector.extract_strided_slice %24 {offsets = [0, 34], sizes = [16, 577], strides = [1, 1]} : vector<16x640xf32> to vector<16x577xf32>
    %197 = vector.broadcast %195 : vector<16x1xf32> to vector<16x577xf32>
    %198 = arith.mulf %197, %196 : vector<16x577xf32>
    %199 = arith.addf %194, %198 : vector<16x577xf32>
    %200 = vector.extract_strided_slice %25 {offsets = [0, 35], sizes = [16, 1], strides = [1, 1]} : vector<16x64xf32> to vector<16x1xf32>
    %201 = vector.extract_strided_slice %24 {offsets = [0, 35], sizes = [16, 577], strides = [1, 1]} : vector<16x640xf32> to vector<16x577xf32>
    %202 = vector.broadcast %200 : vector<16x1xf32> to vector<16x577xf32>
    %203 = arith.mulf %202, %201 : vector<16x577xf32>
    %204 = arith.addf %199, %203 : vector<16x577xf32>
    %205 = vector.extract_strided_slice %25 {offsets = [0, 36], sizes = [16, 1], strides = [1, 1]} : vector<16x64xf32> to vector<16x1xf32>
    %206 = vector.extract_strided_slice %24 {offsets = [0, 36], sizes = [16, 577], strides = [1, 1]} : vector<16x640xf32> to vector<16x577xf32>
    %207 = vector.broadcast %205 : vector<16x1xf32> to vector<16x577xf32>
    %208 = arith.mulf %207, %206 : vector<16x577xf32>
    %209 = arith.addf %204, %208 : vector<16x577xf32>
    %210 = vector.extract_strided_slice %25 {offsets = [0, 37], sizes = [16, 1], strides = [1, 1]} : vector<16x64xf32> to vector<16x1xf32>
    %211 = vector.extract_strided_slice %24 {offsets = [0, 37], sizes = [16, 577], strides = [1, 1]} : vector<16x640xf32> to vector<16x577xf32>
    %212 = vector.broadcast %210 : vector<16x1xf32> to vector<16x577xf32>
    %213 = arith.mulf %212, %211 : vector<16x577xf32>
    %214 = arith.addf %209, %213 : vector<16x577xf32>
    %215 = vector.extract_strided_slice %25 {offsets = [0, 38], sizes = [16, 1], strides = [1, 1]} : vector<16x64xf32> to vector<16x1xf32>
    %216 = vector.extract_strided_slice %24 {offsets = [0, 38], sizes = [16, 577], strides = [1, 1]} : vector<16x640xf32> to vector<16x577xf32>
    %217 = vector.broadcast %215 : vector<16x1xf32> to vector<16x577xf32>
    %218 = arith.mulf %217, %216 : vector<16x577xf32>
    %219 = arith.addf %214, %218 : vector<16x577xf32>
    %220 = vector.extract_strided_slice %25 {offsets = [0, 39], sizes = [16, 1], strides = [1, 1]} : vector<16x64xf32> to vector<16x1xf32>
    %221 = vector.extract_strided_slice %24 {offsets = [0, 39], sizes = [16, 577], strides = [1, 1]} : vector<16x640xf32> to vector<16x577xf32>
    %222 = vector.broadcast %220 : vector<16x1xf32> to vector<16x577xf32>
    %223 = arith.mulf %222, %221 : vector<16x577xf32>
    %224 = arith.addf %219, %223 : vector<16x577xf32>
    %225 = vector.extract_strided_slice %25 {offsets = [0, 40], sizes = [16, 1], strides = [1, 1]} : vector<16x64xf32> to vector<16x1xf32>
    %226 = vector.extract_strided_slice %24 {offsets = [0, 40], sizes = [16, 577], strides = [1, 1]} : vector<16x640xf32> to vector<16x577xf32>
    %227 = vector.broadcast %225 : vector<16x1xf32> to vector<16x577xf32>
    %228 = arith.mulf %227, %226 : vector<16x577xf32>
    %229 = arith.addf %224, %228 : vector<16x577xf32>
    %230 = vector.extract_strided_slice %25 {offsets = [0, 41], sizes = [16, 1], strides = [1, 1]} : vector<16x64xf32> to vector<16x1xf32>
    %231 = vector.extract_strided_slice %24 {offsets = [0, 41], sizes = [16, 577], strides = [1, 1]} : vector<16x640xf32> to vector<16x577xf32>
    %232 = vector.broadcast %230 : vector<16x1xf32> to vector<16x577xf32>
    %233 = arith.mulf %232, %231 : vector<16x577xf32>
    %234 = arith.addf %229, %233 : vector<16x577xf32>
    %235 = vector.extract_strided_slice %25 {offsets = [0, 42], sizes = [16, 1], strides = [1, 1]} : vector<16x64xf32> to vector<16x1xf32>
    %236 = vector.extract_strided_slice %24 {offsets = [0, 42], sizes = [16, 577], strides = [1, 1]} : vector<16x640xf32> to vector<16x577xf32>
    %237 = vector.broadcast %235 : vector<16x1xf32> to vector<16x577xf32>
    %238 = arith.mulf %237, %236 : vector<16x577xf32>
    %239 = arith.addf %234, %238 : vector<16x577xf32>
    %240 = vector.extract_strided_slice %25 {offsets = [0, 43], sizes = [16, 1], strides = [1, 1]} : vector<16x64xf32> to vector<16x1xf32>
    %241 = vector.extract_strided_slice %24 {offsets = [0, 43], sizes = [16, 577], strides = [1, 1]} : vector<16x640xf32> to vector<16x577xf32>
    %242 = vector.broadcast %240 : vector<16x1xf32> to vector<16x577xf32>
    %243 = arith.mulf %242, %241 : vector<16x577xf32>
    %244 = arith.addf %239, %243 : vector<16x577xf32>
    %245 = vector.extract_strided_slice %25 {offsets = [0, 44], sizes = [16, 1], strides = [1, 1]} : vector<16x64xf32> to vector<16x1xf32>
    %246 = vector.extract_strided_slice %24 {offsets = [0, 44], sizes = [16, 577], strides = [1, 1]} : vector<16x640xf32> to vector<16x577xf32>
    %247 = vector.broadcast %245 : vector<16x1xf32> to vector<16x577xf32>
    %248 = arith.mulf %247, %246 : vector<16x577xf32>
    %249 = arith.addf %244, %248 : vector<16x577xf32>
    %250 = vector.extract_strided_slice %25 {offsets = [0, 45], sizes = [16, 1], strides = [1, 1]} : vector<16x64xf32> to vector<16x1xf32>
    %251 = vector.extract_strided_slice %24 {offsets = [0, 45], sizes = [16, 577], strides = [1, 1]} : vector<16x640xf32> to vector<16x577xf32>
    %252 = vector.broadcast %250 : vector<16x1xf32> to vector<16x577xf32>
    %253 = arith.mulf %252, %251 : vector<16x577xf32>
    %254 = arith.addf %249, %253 : vector<16x577xf32>
    %255 = vector.extract_strided_slice %25 {offsets = [0, 46], sizes = [16, 1], strides = [1, 1]} : vector<16x64xf32> to vector<16x1xf32>
    %256 = vector.extract_strided_slice %24 {offsets = [0, 46], sizes = [16, 577], strides = [1, 1]} : vector<16x640xf32> to vector<16x577xf32>
    %257 = vector.broadcast %255 : vector<16x1xf32> to vector<16x577xf32>
    %258 = arith.mulf %257, %256 : vector<16x577xf32>
    %259 = arith.addf %254, %258 : vector<16x577xf32>
    %260 = vector.extract_strided_slice %25 {offsets = [0, 47], sizes = [16, 1], strides = [1, 1]} : vector<16x64xf32> to vector<16x1xf32>
    %261 = vector.extract_strided_slice %24 {offsets = [0, 47], sizes = [16, 577], strides = [1, 1]} : vector<16x640xf32> to vector<16x577xf32>
    %262 = vector.broadcast %260 : vector<16x1xf32> to vector<16x577xf32>
    %263 = arith.mulf %262, %261 : vector<16x577xf32>
    %264 = arith.addf %259, %263 : vector<16x577xf32>
    %265 = vector.extract_strided_slice %25 {offsets = [0, 48], sizes = [16, 1], strides = [1, 1]} : vector<16x64xf32> to vector<16x1xf32>
    %266 = vector.extract_strided_slice %24 {offsets = [0, 48], sizes = [16, 577], strides = [1, 1]} : vector<16x640xf32> to vector<16x577xf32>
    %267 = vector.broadcast %265 : vector<16x1xf32> to vector<16x577xf32>
    %268 = arith.mulf %267, %266 : vector<16x577xf32>
    %269 = arith.addf %264, %268 : vector<16x577xf32>
    %270 = vector.extract_strided_slice %25 {offsets = [0, 49], sizes = [16, 1], strides = [1, 1]} : vector<16x64xf32> to vector<16x1xf32>
    %271 = vector.extract_strided_slice %24 {offsets = [0, 49], sizes = [16, 577], strides = [1, 1]} : vector<16x640xf32> to vector<16x577xf32>
    %272 = vector.broadcast %270 : vector<16x1xf32> to vector<16x577xf32>
    %273 = arith.mulf %272, %271 : vector<16x577xf32>
    %274 = arith.addf %269, %273 : vector<16x577xf32>
    %275 = vector.extract_strided_slice %25 {offsets = [0, 50], sizes = [16, 1], strides = [1, 1]} : vector<16x64xf32> to vector<16x1xf32>
    %276 = vector.extract_strided_slice %24 {offsets = [0, 50], sizes = [16, 577], strides = [1, 1]} : vector<16x640xf32> to vector<16x577xf32>
    %277 = vector.broadcast %275 : vector<16x1xf32> to vector<16x577xf32>
    %278 = arith.mulf %277, %276 : vector<16x577xf32>
    %279 = arith.addf %274, %278 : vector<16x577xf32>
    %280 = vector.extract_strided_slice %25 {offsets = [0, 51], sizes = [16, 1], strides = [1, 1]} : vector<16x64xf32> to vector<16x1xf32>
    %281 = vector.extract_strided_slice %24 {offsets = [0, 51], sizes = [16, 577], strides = [1, 1]} : vector<16x640xf32> to vector<16x577xf32>
    %282 = vector.broadcast %280 : vector<16x1xf32> to vector<16x577xf32>
    %283 = arith.mulf %282, %281 : vector<16x577xf32>
    %284 = arith.addf %279, %283 : vector<16x577xf32>
    %285 = vector.extract_strided_slice %25 {offsets = [0, 52], sizes = [16, 1], strides = [1, 1]} : vector<16x64xf32> to vector<16x1xf32>
    %286 = vector.extract_strided_slice %24 {offsets = [0, 52], sizes = [16, 577], strides = [1, 1]} : vector<16x640xf32> to vector<16x577xf32>
    %287 = vector.broadcast %285 : vector<16x1xf32> to vector<16x577xf32>
    %288 = arith.mulf %287, %286 : vector<16x577xf32>
    %289 = arith.addf %284, %288 : vector<16x577xf32>
    %290 = vector.extract_strided_slice %25 {offsets = [0, 53], sizes = [16, 1], strides = [1, 1]} : vector<16x64xf32> to vector<16x1xf32>
    %291 = vector.extract_strided_slice %24 {offsets = [0, 53], sizes = [16, 577], strides = [1, 1]} : vector<16x640xf32> to vector<16x577xf32>
    %292 = vector.broadcast %290 : vector<16x1xf32> to vector<16x577xf32>
    %293 = arith.mulf %292, %291 : vector<16x577xf32>
    %294 = arith.addf %289, %293 : vector<16x577xf32>
    %295 = vector.extract_strided_slice %25 {offsets = [0, 54], sizes = [16, 1], strides = [1, 1]} : vector<16x64xf32> to vector<16x1xf32>
    %296 = vector.extract_strided_slice %24 {offsets = [0, 54], sizes = [16, 577], strides = [1, 1]} : vector<16x640xf32> to vector<16x577xf32>
    %297 = vector.broadcast %295 : vector<16x1xf32> to vector<16x577xf32>
    %298 = arith.mulf %297, %296 : vector<16x577xf32>
    %299 = arith.addf %294, %298 : vector<16x577xf32>
    %300 = vector.extract_strided_slice %25 {offsets = [0, 55], sizes = [16, 1], strides = [1, 1]} : vector<16x64xf32> to vector<16x1xf32>
    %301 = vector.extract_strided_slice %24 {offsets = [0, 55], sizes = [16, 577], strides = [1, 1]} : vector<16x640xf32> to vector<16x577xf32>
    %302 = vector.broadcast %300 : vector<16x1xf32> to vector<16x577xf32>
    %303 = arith.mulf %302, %301 : vector<16x577xf32>
    %304 = arith.addf %299, %303 : vector<16x577xf32>
    %305 = vector.extract_strided_slice %25 {offsets = [0, 56], sizes = [16, 1], strides = [1, 1]} : vector<16x64xf32> to vector<16x1xf32>
    %306 = vector.extract_strided_slice %24 {offsets = [0, 56], sizes = [16, 577], strides = [1, 1]} : vector<16x640xf32> to vector<16x577xf32>
    %307 = vector.broadcast %305 : vector<16x1xf32> to vector<16x577xf32>
    %308 = arith.mulf %307, %306 : vector<16x577xf32>
    %309 = arith.addf %304, %308 : vector<16x577xf32>
    %310 = vector.extract_strided_slice %25 {offsets = [0, 57], sizes = [16, 1], strides = [1, 1]} : vector<16x64xf32> to vector<16x1xf32>
    %311 = vector.extract_strided_slice %24 {offsets = [0, 57], sizes = [16, 577], strides = [1, 1]} : vector<16x640xf32> to vector<16x577xf32>
    %312 = vector.broadcast %310 : vector<16x1xf32> to vector<16x577xf32>
    %313 = arith.mulf %312, %311 : vector<16x577xf32>
    %314 = arith.addf %309, %313 : vector<16x577xf32>
    %315 = vector.extract_strided_slice %25 {offsets = [0, 58], sizes = [16, 1], strides = [1, 1]} : vector<16x64xf32> to vector<16x1xf32>
    %316 = vector.extract_strided_slice %24 {offsets = [0, 58], sizes = [16, 577], strides = [1, 1]} : vector<16x640xf32> to vector<16x577xf32>
    %317 = vector.broadcast %315 : vector<16x1xf32> to vector<16x577xf32>
    %318 = arith.mulf %317, %316 : vector<16x577xf32>
    %319 = arith.addf %314, %318 : vector<16x577xf32>
    %320 = vector.extract_strided_slice %25 {offsets = [0, 59], sizes = [16, 1], strides = [1, 1]} : vector<16x64xf32> to vector<16x1xf32>
    %321 = vector.extract_strided_slice %24 {offsets = [0, 59], sizes = [16, 577], strides = [1, 1]} : vector<16x640xf32> to vector<16x577xf32>
    %322 = vector.broadcast %320 : vector<16x1xf32> to vector<16x577xf32>
    %323 = arith.mulf %322, %321 : vector<16x577xf32>
    %324 = arith.addf %319, %323 : vector<16x577xf32>
    %325 = vector.extract_strided_slice %25 {offsets = [0, 60], sizes = [16, 1], strides = [1, 1]} : vector<16x64xf32> to vector<16x1xf32>
    %326 = vector.extract_strided_slice %24 {offsets = [0, 60], sizes = [16, 577], strides = [1, 1]} : vector<16x640xf32> to vector<16x577xf32>
    %327 = vector.broadcast %325 : vector<16x1xf32> to vector<16x577xf32>
    %328 = arith.mulf %327, %326 : vector<16x577xf32>
    %329 = arith.addf %324, %328 : vector<16x577xf32>
    %330 = vector.extract_strided_slice %25 {offsets = [0, 61], sizes = [16, 1], strides = [1, 1]} : vector<16x64xf32> to vector<16x1xf32>
    %331 = vector.extract_strided_slice %24 {offsets = [0, 61], sizes = [16, 577], strides = [1, 1]} : vector<16x640xf32> to vector<16x577xf32>
    %332 = vector.broadcast %330 : vector<16x1xf32> to vector<16x577xf32>
    %333 = arith.mulf %332, %331 : vector<16x577xf32>
    %334 = arith.addf %329, %333 : vector<16x577xf32>
    %335 = vector.extract_strided_slice %25 {offsets = [0, 62], sizes = [16, 1], strides = [1, 1]} : vector<16x64xf32> to vector<16x1xf32>
    %336 = vector.extract_strided_slice %24 {offsets = [0, 62], sizes = [16, 577], strides = [1, 1]} : vector<16x640xf32> to vector<16x577xf32>
    %337 = vector.broadcast %335 : vector<16x1xf32> to vector<16x577xf32>
    %338 = arith.mulf %337, %336 : vector<16x577xf32>
    %339 = arith.addf %334, %338 : vector<16x577xf32>
    %340 = vector.extract_strided_slice %25 {offsets = [0, 63], sizes = [16, 1], strides = [1, 1]} : vector<16x64xf32> to vector<16x1xf32>
    %341 = vector.extract_strided_slice %24 {offsets = [0, 63], sizes = [16, 577], strides = [1, 1]} : vector<16x640xf32> to vector<16x577xf32>
    %342 = vector.broadcast %340 : vector<16x1xf32> to vector<16x577xf32>
    %343 = arith.mulf %342, %341 : vector<16x577xf32>
    %344 = arith.addf %339, %343 : vector<16x577xf32>
    %345 = vector.extract_strided_slice %2 {offsets = [0, 0], sizes = [16, 1], strides = [1, 1]} : vector<16x14xf32> to vector<16x1xf32>
    %346 = arith.mulf %22, %345 : vector<16x1xf32>
    %347 = vector.extract_strided_slice %2 {offsets = [0, 1], sizes = [16, 1], strides = [1, 1]} : vector<16x14xf32> to vector<16x1xf32>
    %348 = arith.mulf %22, %347 : vector<16x1xf32>
    %349 = vector.extract_strided_slice %2 {offsets = [0, 2], sizes = [16, 1], strides = [1, 1]} : vector<16x14xf32> to vector<16x1xf32>
    %350 = arith.addf %348, %349 : vector<16x1xf32>
    %351 = vector.broadcast %346 : vector<16x1xf32> to vector<16x577xf32>
    %352 = arith.mulf %351, %344 : vector<16x577xf32>
    %353 = vector.broadcast %350 : vector<16x1xf32> to vector<16x577xf32>
    %354 = arith.addf %352, %353 : vector<16x577xf32>
    %cst_14 = arith.constant 0.000000e+00 : f32
    %355 = vector.broadcast %cst_14 : f32 to vector<16x577xf32>
    %356 = arith.cmpf oge, %354, %355 : vector<16x577xf32>
    %cst_15 = arith.constant 0.000000e+00 : f32
    %357 = vector.broadcast %cst_15 : f32 to vector<16x577xf32>
    %358 = arith.subf %357, %354 : vector<16x577xf32>
    %359 = math.exp %358 : vector<16x577xf32>
    %cst_16 = arith.constant 1.000000e+00 : f32
    %360 = vector.broadcast %cst_16 : f32 to vector<16x577xf32>
    %361 = arith.subf %360, %359 : vector<16x577xf32>
    %362 = math.exp %354 : vector<16x577xf32>
    %cst_17 = arith.constant 1.000000e+00 : f32
    %363 = vector.broadcast %cst_17 : f32 to vector<16x577xf32>
    %364 = arith.subf %362, %363 : vector<16x577xf32>
    %365 = arith.select %356, %361, %364 : vector<16x577xi1>, vector<16x577xf32>
    %c0_18 = arith.constant 0 : index
    %c0_19 = arith.constant 0 : index
    %366 = vector.load %arg9[%c0_18, %c0_19] : memref<577x288xf32, #tpu.memory_space<vmem>>, vector<577x288xf32>
    %cst_20 = arith.constant dense<0.000000e+00> : vector<16x288xf32>
    %367 = tpu.matmul %365, %366, %cst_20 {dimension_numbers = #tpu.dot_dimension_numbers<[1], [0], [0], [1], [0, 0, 1, 1], [], []>} : vector<16x577xf32>, vector<577x288xf32>, vector<16x288xf32> -> vector<16x288xf32>
    %c0_21 = arith.constant 0 : index
    %c0_22 = arith.constant 0 : index
    %368 = vector.load %arg5[%c0_21, %c0_22] : memref<16x64xf32, #tpu.memory_space<vmem>>, vector<16x64xf32>
    %369 = vector.extract_strided_slice %368 {offsets = [0, 0], sizes = [16, 1], strides = [1, 1]} : vector<16x64xf32> to vector<16x1xf32>
    %370 = vector.extract_strided_slice %367 {offsets = [0, 0], sizes = [16, 225], strides = [1, 1]} : vector<16x288xf32> to vector<16x225xf32>
    %371 = vector.broadcast %369 : vector<16x1xf32> to vector<16x225xf32>
    %372 = arith.mulf %371, %370 : vector<16x225xf32>
    %373 = vector.extract_strided_slice %368 {offsets = [0, 1], sizes = [16, 1], strides = [1, 1]} : vector<16x64xf32> to vector<16x1xf32>
    %374 = vector.extract_strided_slice %367 {offsets = [0, 1], sizes = [16, 225], strides = [1, 1]} : vector<16x288xf32> to vector<16x225xf32>
    %375 = vector.broadcast %373 : vector<16x1xf32> to vector<16x225xf32>
    %376 = arith.mulf %375, %374 : vector<16x225xf32>
    %377 = arith.addf %372, %376 : vector<16x225xf32>
    %378 = vector.extract_strided_slice %368 {offsets = [0, 2], sizes = [16, 1], strides = [1, 1]} : vector<16x64xf32> to vector<16x1xf32>
    %379 = vector.extract_strided_slice %367 {offsets = [0, 2], sizes = [16, 225], strides = [1, 1]} : vector<16x288xf32> to vector<16x225xf32>
    %380 = vector.broadcast %378 : vector<16x1xf32> to vector<16x225xf32>
    %381 = arith.mulf %380, %379 : vector<16x225xf32>
    %382 = arith.addf %377, %381 : vector<16x225xf32>
    %383 = vector.extract_strided_slice %368 {offsets = [0, 3], sizes = [16, 1], strides = [1, 1]} : vector<16x64xf32> to vector<16x1xf32>
    %384 = vector.extract_strided_slice %367 {offsets = [0, 3], sizes = [16, 225], strides = [1, 1]} : vector<16x288xf32> to vector<16x225xf32>
    %385 = vector.broadcast %383 : vector<16x1xf32> to vector<16x225xf32>
    %386 = arith.mulf %385, %384 : vector<16x225xf32>
    %387 = arith.addf %382, %386 : vector<16x225xf32>
    %388 = vector.extract_strided_slice %368 {offsets = [0, 4], sizes = [16, 1], strides = [1, 1]} : vector<16x64xf32> to vector<16x1xf32>
    %389 = vector.extract_strided_slice %367 {offsets = [0, 4], sizes = [16, 225], strides = [1, 1]} : vector<16x288xf32> to vector<16x225xf32>
    %390 = vector.broadcast %388 : vector<16x1xf32> to vector<16x225xf32>
    %391 = arith.mulf %390, %389 : vector<16x225xf32>
    %392 = arith.addf %387, %391 : vector<16x225xf32>
    %393 = vector.extract_strided_slice %368 {offsets = [0, 5], sizes = [16, 1], strides = [1, 1]} : vector<16x64xf32> to vector<16x1xf32>
    %394 = vector.extract_strided_slice %367 {offsets = [0, 5], sizes = [16, 225], strides = [1, 1]} : vector<16x288xf32> to vector<16x225xf32>
    %395 = vector.broadcast %393 : vector<16x1xf32> to vector<16x225xf32>
    %396 = arith.mulf %395, %394 : vector<16x225xf32>
    %397 = arith.addf %392, %396 : vector<16x225xf32>
    %398 = vector.extract_strided_slice %368 {offsets = [0, 6], sizes = [16, 1], strides = [1, 1]} : vector<16x64xf32> to vector<16x1xf32>
    %399 = vector.extract_strided_slice %367 {offsets = [0, 6], sizes = [16, 225], strides = [1, 1]} : vector<16x288xf32> to vector<16x225xf32>
    %400 = vector.broadcast %398 : vector<16x1xf32> to vector<16x225xf32>
    %401 = arith.mulf %400, %399 : vector<16x225xf32>
    %402 = arith.addf %397, %401 : vector<16x225xf32>
    %403 = vector.extract_strided_slice %368 {offsets = [0, 7], sizes = [16, 1], strides = [1, 1]} : vector<16x64xf32> to vector<16x1xf32>
    %404 = vector.extract_strided_slice %367 {offsets = [0, 7], sizes = [16, 225], strides = [1, 1]} : vector<16x288xf32> to vector<16x225xf32>
    %405 = vector.broadcast %403 : vector<16x1xf32> to vector<16x225xf32>
    %406 = arith.mulf %405, %404 : vector<16x225xf32>
    %407 = arith.addf %402, %406 : vector<16x225xf32>
    %408 = vector.extract_strided_slice %368 {offsets = [0, 8], sizes = [16, 1], strides = [1, 1]} : vector<16x64xf32> to vector<16x1xf32>
    %409 = vector.extract_strided_slice %367 {offsets = [0, 8], sizes = [16, 225], strides = [1, 1]} : vector<16x288xf32> to vector<16x225xf32>
    %410 = vector.broadcast %408 : vector<16x1xf32> to vector<16x225xf32>
    %411 = arith.mulf %410, %409 : vector<16x225xf32>
    %412 = arith.addf %407, %411 : vector<16x225xf32>
    %413 = vector.extract_strided_slice %368 {offsets = [0, 9], sizes = [16, 1], strides = [1, 1]} : vector<16x64xf32> to vector<16x1xf32>
    %414 = vector.extract_strided_slice %367 {offsets = [0, 9], sizes = [16, 225], strides = [1, 1]} : vector<16x288xf32> to vector<16x225xf32>
    %415 = vector.broadcast %413 : vector<16x1xf32> to vector<16x225xf32>
    %416 = arith.mulf %415, %414 : vector<16x225xf32>
    %417 = arith.addf %412, %416 : vector<16x225xf32>
    %418 = vector.extract_strided_slice %368 {offsets = [0, 10], sizes = [16, 1], strides = [1, 1]} : vector<16x64xf32> to vector<16x1xf32>
    %419 = vector.extract_strided_slice %367 {offsets = [0, 10], sizes = [16, 225], strides = [1, 1]} : vector<16x288xf32> to vector<16x225xf32>
    %420 = vector.broadcast %418 : vector<16x1xf32> to vector<16x225xf32>
    %421 = arith.mulf %420, %419 : vector<16x225xf32>
    %422 = arith.addf %417, %421 : vector<16x225xf32>
    %423 = vector.extract_strided_slice %368 {offsets = [0, 11], sizes = [16, 1], strides = [1, 1]} : vector<16x64xf32> to vector<16x1xf32>
    %424 = vector.extract_strided_slice %367 {offsets = [0, 11], sizes = [16, 225], strides = [1, 1]} : vector<16x288xf32> to vector<16x225xf32>
    %425 = vector.broadcast %423 : vector<16x1xf32> to vector<16x225xf32>
    %426 = arith.mulf %425, %424 : vector<16x225xf32>
    %427 = arith.addf %422, %426 : vector<16x225xf32>
    %428 = vector.extract_strided_slice %368 {offsets = [0, 12], sizes = [16, 1], strides = [1, 1]} : vector<16x64xf32> to vector<16x1xf32>
    %429 = vector.extract_strided_slice %367 {offsets = [0, 12], sizes = [16, 225], strides = [1, 1]} : vector<16x288xf32> to vector<16x225xf32>
    %430 = vector.broadcast %428 : vector<16x1xf32> to vector<16x225xf32>
    %431 = arith.mulf %430, %429 : vector<16x225xf32>
    %432 = arith.addf %427, %431 : vector<16x225xf32>
    %433 = vector.extract_strided_slice %368 {offsets = [0, 13], sizes = [16, 1], strides = [1, 1]} : vector<16x64xf32> to vector<16x1xf32>
    %434 = vector.extract_strided_slice %367 {offsets = [0, 13], sizes = [16, 225], strides = [1, 1]} : vector<16x288xf32> to vector<16x225xf32>
    %435 = vector.broadcast %433 : vector<16x1xf32> to vector<16x225xf32>
    %436 = arith.mulf %435, %434 : vector<16x225xf32>
    %437 = arith.addf %432, %436 : vector<16x225xf32>
    %438 = vector.extract_strided_slice %368 {offsets = [0, 14], sizes = [16, 1], strides = [1, 1]} : vector<16x64xf32> to vector<16x1xf32>
    %439 = vector.extract_strided_slice %367 {offsets = [0, 14], sizes = [16, 225], strides = [1, 1]} : vector<16x288xf32> to vector<16x225xf32>
    %440 = vector.broadcast %438 : vector<16x1xf32> to vector<16x225xf32>
    %441 = arith.mulf %440, %439 : vector<16x225xf32>
    %442 = arith.addf %437, %441 : vector<16x225xf32>
    %443 = vector.extract_strided_slice %368 {offsets = [0, 15], sizes = [16, 1], strides = [1, 1]} : vector<16x64xf32> to vector<16x1xf32>
    %444 = vector.extract_strided_slice %367 {offsets = [0, 15], sizes = [16, 225], strides = [1, 1]} : vector<16x288xf32> to vector<16x225xf32>
    %445 = vector.broadcast %443 : vector<16x1xf32> to vector<16x225xf32>
    %446 = arith.mulf %445, %444 : vector<16x225xf32>
    %447 = arith.addf %442, %446 : vector<16x225xf32>
    %448 = vector.extract_strided_slice %368 {offsets = [0, 16], sizes = [16, 1], strides = [1, 1]} : vector<16x64xf32> to vector<16x1xf32>
    %449 = vector.extract_strided_slice %367 {offsets = [0, 16], sizes = [16, 225], strides = [1, 1]} : vector<16x288xf32> to vector<16x225xf32>
    %450 = vector.broadcast %448 : vector<16x1xf32> to vector<16x225xf32>
    %451 = arith.mulf %450, %449 : vector<16x225xf32>
    %452 = arith.addf %447, %451 : vector<16x225xf32>
    %453 = vector.extract_strided_slice %368 {offsets = [0, 17], sizes = [16, 1], strides = [1, 1]} : vector<16x64xf32> to vector<16x1xf32>
    %454 = vector.extract_strided_slice %367 {offsets = [0, 17], sizes = [16, 225], strides = [1, 1]} : vector<16x288xf32> to vector<16x225xf32>
    %455 = vector.broadcast %453 : vector<16x1xf32> to vector<16x225xf32>
    %456 = arith.mulf %455, %454 : vector<16x225xf32>
    %457 = arith.addf %452, %456 : vector<16x225xf32>
    %458 = vector.extract_strided_slice %368 {offsets = [0, 18], sizes = [16, 1], strides = [1, 1]} : vector<16x64xf32> to vector<16x1xf32>
    %459 = vector.extract_strided_slice %367 {offsets = [0, 18], sizes = [16, 225], strides = [1, 1]} : vector<16x288xf32> to vector<16x225xf32>
    %460 = vector.broadcast %458 : vector<16x1xf32> to vector<16x225xf32>
    %461 = arith.mulf %460, %459 : vector<16x225xf32>
    %462 = arith.addf %457, %461 : vector<16x225xf32>
    %463 = vector.extract_strided_slice %368 {offsets = [0, 19], sizes = [16, 1], strides = [1, 1]} : vector<16x64xf32> to vector<16x1xf32>
    %464 = vector.extract_strided_slice %367 {offsets = [0, 19], sizes = [16, 225], strides = [1, 1]} : vector<16x288xf32> to vector<16x225xf32>
    %465 = vector.broadcast %463 : vector<16x1xf32> to vector<16x225xf32>
    %466 = arith.mulf %465, %464 : vector<16x225xf32>
    %467 = arith.addf %462, %466 : vector<16x225xf32>
    %468 = vector.extract_strided_slice %368 {offsets = [0, 20], sizes = [16, 1], strides = [1, 1]} : vector<16x64xf32> to vector<16x1xf32>
    %469 = vector.extract_strided_slice %367 {offsets = [0, 20], sizes = [16, 225], strides = [1, 1]} : vector<16x288xf32> to vector<16x225xf32>
    %470 = vector.broadcast %468 : vector<16x1xf32> to vector<16x225xf32>
    %471 = arith.mulf %470, %469 : vector<16x225xf32>
    %472 = arith.addf %467, %471 : vector<16x225xf32>
    %473 = vector.extract_strided_slice %368 {offsets = [0, 21], sizes = [16, 1], strides = [1, 1]} : vector<16x64xf32> to vector<16x1xf32>
    %474 = vector.extract_strided_slice %367 {offsets = [0, 21], sizes = [16, 225], strides = [1, 1]} : vector<16x288xf32> to vector<16x225xf32>
    %475 = vector.broadcast %473 : vector<16x1xf32> to vector<16x225xf32>
    %476 = arith.mulf %475, %474 : vector<16x225xf32>
    %477 = arith.addf %472, %476 : vector<16x225xf32>
    %478 = vector.extract_strided_slice %368 {offsets = [0, 22], sizes = [16, 1], strides = [1, 1]} : vector<16x64xf32> to vector<16x1xf32>
    %479 = vector.extract_strided_slice %367 {offsets = [0, 22], sizes = [16, 225], strides = [1, 1]} : vector<16x288xf32> to vector<16x225xf32>
    %480 = vector.broadcast %478 : vector<16x1xf32> to vector<16x225xf32>
    %481 = arith.mulf %480, %479 : vector<16x225xf32>
    %482 = arith.addf %477, %481 : vector<16x225xf32>
    %483 = vector.extract_strided_slice %368 {offsets = [0, 23], sizes = [16, 1], strides = [1, 1]} : vector<16x64xf32> to vector<16x1xf32>
    %484 = vector.extract_strided_slice %367 {offsets = [0, 23], sizes = [16, 225], strides = [1, 1]} : vector<16x288xf32> to vector<16x225xf32>
    %485 = vector.broadcast %483 : vector<16x1xf32> to vector<16x225xf32>
    %486 = arith.mulf %485, %484 : vector<16x225xf32>
    %487 = arith.addf %482, %486 : vector<16x225xf32>
    %488 = vector.extract_strided_slice %368 {offsets = [0, 24], sizes = [16, 1], strides = [1, 1]} : vector<16x64xf32> to vector<16x1xf32>
    %489 = vector.extract_strided_slice %367 {offsets = [0, 24], sizes = [16, 225], strides = [1, 1]} : vector<16x288xf32> to vector<16x225xf32>
    %490 = vector.broadcast %488 : vector<16x1xf32> to vector<16x225xf32>
    %491 = arith.mulf %490, %489 : vector<16x225xf32>
    %492 = arith.addf %487, %491 : vector<16x225xf32>
    %493 = vector.extract_strided_slice %368 {offsets = [0, 25], sizes = [16, 1], strides = [1, 1]} : vector<16x64xf32> to vector<16x1xf32>
    %494 = vector.extract_strided_slice %367 {offsets = [0, 25], sizes = [16, 225], strides = [1, 1]} : vector<16x288xf32> to vector<16x225xf32>
    %495 = vector.broadcast %493 : vector<16x1xf32> to vector<16x225xf32>
    %496 = arith.mulf %495, %494 : vector<16x225xf32>
    %497 = arith.addf %492, %496 : vector<16x225xf32>
    %498 = vector.extract_strided_slice %368 {offsets = [0, 26], sizes = [16, 1], strides = [1, 1]} : vector<16x64xf32> to vector<16x1xf32>
    %499 = vector.extract_strided_slice %367 {offsets = [0, 26], sizes = [16, 225], strides = [1, 1]} : vector<16x288xf32> to vector<16x225xf32>
    %500 = vector.broadcast %498 : vector<16x1xf32> to vector<16x225xf32>
    %501 = arith.mulf %500, %499 : vector<16x225xf32>
    %502 = arith.addf %497, %501 : vector<16x225xf32>
    %503 = vector.extract_strided_slice %368 {offsets = [0, 27], sizes = [16, 1], strides = [1, 1]} : vector<16x64xf32> to vector<16x1xf32>
    %504 = vector.extract_strided_slice %367 {offsets = [0, 27], sizes = [16, 225], strides = [1, 1]} : vector<16x288xf32> to vector<16x225xf32>
    %505 = vector.broadcast %503 : vector<16x1xf32> to vector<16x225xf32>
    %506 = arith.mulf %505, %504 : vector<16x225xf32>
    %507 = arith.addf %502, %506 : vector<16x225xf32>
    %508 = vector.extract_strided_slice %368 {offsets = [0, 28], sizes = [16, 1], strides = [1, 1]} : vector<16x64xf32> to vector<16x1xf32>
    %509 = vector.extract_strided_slice %367 {offsets = [0, 28], sizes = [16, 225], strides = [1, 1]} : vector<16x288xf32> to vector<16x225xf32>
    %510 = vector.broadcast %508 : vector<16x1xf32> to vector<16x225xf32>
    %511 = arith.mulf %510, %509 : vector<16x225xf32>
    %512 = arith.addf %507, %511 : vector<16x225xf32>
    %513 = vector.extract_strided_slice %368 {offsets = [0, 29], sizes = [16, 1], strides = [1, 1]} : vector<16x64xf32> to vector<16x1xf32>
    %514 = vector.extract_strided_slice %367 {offsets = [0, 29], sizes = [16, 225], strides = [1, 1]} : vector<16x288xf32> to vector<16x225xf32>
    %515 = vector.broadcast %513 : vector<16x1xf32> to vector<16x225xf32>
    %516 = arith.mulf %515, %514 : vector<16x225xf32>
    %517 = arith.addf %512, %516 : vector<16x225xf32>
    %518 = vector.extract_strided_slice %368 {offsets = [0, 30], sizes = [16, 1], strides = [1, 1]} : vector<16x64xf32> to vector<16x1xf32>
    %519 = vector.extract_strided_slice %367 {offsets = [0, 30], sizes = [16, 225], strides = [1, 1]} : vector<16x288xf32> to vector<16x225xf32>
    %520 = vector.broadcast %518 : vector<16x1xf32> to vector<16x225xf32>
    %521 = arith.mulf %520, %519 : vector<16x225xf32>
    %522 = arith.addf %517, %521 : vector<16x225xf32>
    %523 = vector.extract_strided_slice %368 {offsets = [0, 31], sizes = [16, 1], strides = [1, 1]} : vector<16x64xf32> to vector<16x1xf32>
    %524 = vector.extract_strided_slice %367 {offsets = [0, 31], sizes = [16, 225], strides = [1, 1]} : vector<16x288xf32> to vector<16x225xf32>
    %525 = vector.broadcast %523 : vector<16x1xf32> to vector<16x225xf32>
    %526 = arith.mulf %525, %524 : vector<16x225xf32>
    %527 = arith.addf %522, %526 : vector<16x225xf32>
    %528 = vector.extract_strided_slice %368 {offsets = [0, 32], sizes = [16, 1], strides = [1, 1]} : vector<16x64xf32> to vector<16x1xf32>
    %529 = vector.extract_strided_slice %367 {offsets = [0, 32], sizes = [16, 225], strides = [1, 1]} : vector<16x288xf32> to vector<16x225xf32>
    %530 = vector.broadcast %528 : vector<16x1xf32> to vector<16x225xf32>
    %531 = arith.mulf %530, %529 : vector<16x225xf32>
    %532 = arith.addf %527, %531 : vector<16x225xf32>
    %533 = vector.extract_strided_slice %368 {offsets = [0, 33], sizes = [16, 1], strides = [1, 1]} : vector<16x64xf32> to vector<16x1xf32>
    %534 = vector.extract_strided_slice %367 {offsets = [0, 33], sizes = [16, 225], strides = [1, 1]} : vector<16x288xf32> to vector<16x225xf32>
    %535 = vector.broadcast %533 : vector<16x1xf32> to vector<16x225xf32>
    %536 = arith.mulf %535, %534 : vector<16x225xf32>
    %537 = arith.addf %532, %536 : vector<16x225xf32>
    %538 = vector.extract_strided_slice %368 {offsets = [0, 34], sizes = [16, 1], strides = [1, 1]} : vector<16x64xf32> to vector<16x1xf32>
    %539 = vector.extract_strided_slice %367 {offsets = [0, 34], sizes = [16, 225], strides = [1, 1]} : vector<16x288xf32> to vector<16x225xf32>
    %540 = vector.broadcast %538 : vector<16x1xf32> to vector<16x225xf32>
    %541 = arith.mulf %540, %539 : vector<16x225xf32>
    %542 = arith.addf %537, %541 : vector<16x225xf32>
    %543 = vector.extract_strided_slice %368 {offsets = [0, 35], sizes = [16, 1], strides = [1, 1]} : vector<16x64xf32> to vector<16x1xf32>
    %544 = vector.extract_strided_slice %367 {offsets = [0, 35], sizes = [16, 225], strides = [1, 1]} : vector<16x288xf32> to vector<16x225xf32>
    %545 = vector.broadcast %543 : vector<16x1xf32> to vector<16x225xf32>
    %546 = arith.mulf %545, %544 : vector<16x225xf32>
    %547 = arith.addf %542, %546 : vector<16x225xf32>
    %548 = vector.extract_strided_slice %368 {offsets = [0, 36], sizes = [16, 1], strides = [1, 1]} : vector<16x64xf32> to vector<16x1xf32>
    %549 = vector.extract_strided_slice %367 {offsets = [0, 36], sizes = [16, 225], strides = [1, 1]} : vector<16x288xf32> to vector<16x225xf32>
    %550 = vector.broadcast %548 : vector<16x1xf32> to vector<16x225xf32>
    %551 = arith.mulf %550, %549 : vector<16x225xf32>
    %552 = arith.addf %547, %551 : vector<16x225xf32>
    %553 = vector.extract_strided_slice %368 {offsets = [0, 37], sizes = [16, 1], strides = [1, 1]} : vector<16x64xf32> to vector<16x1xf32>
    %554 = vector.extract_strided_slice %367 {offsets = [0, 37], sizes = [16, 225], strides = [1, 1]} : vector<16x288xf32> to vector<16x225xf32>
    %555 = vector.broadcast %553 : vector<16x1xf32> to vector<16x225xf32>
    %556 = arith.mulf %555, %554 : vector<16x225xf32>
    %557 = arith.addf %552, %556 : vector<16x225xf32>
    %558 = vector.extract_strided_slice %368 {offsets = [0, 38], sizes = [16, 1], strides = [1, 1]} : vector<16x64xf32> to vector<16x1xf32>
    %559 = vector.extract_strided_slice %367 {offsets = [0, 38], sizes = [16, 225], strides = [1, 1]} : vector<16x288xf32> to vector<16x225xf32>
    %560 = vector.broadcast %558 : vector<16x1xf32> to vector<16x225xf32>
    %561 = arith.mulf %560, %559 : vector<16x225xf32>
    %562 = arith.addf %557, %561 : vector<16x225xf32>
    %563 = vector.extract_strided_slice %368 {offsets = [0, 39], sizes = [16, 1], strides = [1, 1]} : vector<16x64xf32> to vector<16x1xf32>
    %564 = vector.extract_strided_slice %367 {offsets = [0, 39], sizes = [16, 225], strides = [1, 1]} : vector<16x288xf32> to vector<16x225xf32>
    %565 = vector.broadcast %563 : vector<16x1xf32> to vector<16x225xf32>
    %566 = arith.mulf %565, %564 : vector<16x225xf32>
    %567 = arith.addf %562, %566 : vector<16x225xf32>
    %568 = vector.extract_strided_slice %368 {offsets = [0, 40], sizes = [16, 1], strides = [1, 1]} : vector<16x64xf32> to vector<16x1xf32>
    %569 = vector.extract_strided_slice %367 {offsets = [0, 40], sizes = [16, 225], strides = [1, 1]} : vector<16x288xf32> to vector<16x225xf32>
    %570 = vector.broadcast %568 : vector<16x1xf32> to vector<16x225xf32>
    %571 = arith.mulf %570, %569 : vector<16x225xf32>
    %572 = arith.addf %567, %571 : vector<16x225xf32>
    %573 = vector.extract_strided_slice %368 {offsets = [0, 41], sizes = [16, 1], strides = [1, 1]} : vector<16x64xf32> to vector<16x1xf32>
    %574 = vector.extract_strided_slice %367 {offsets = [0, 41], sizes = [16, 225], strides = [1, 1]} : vector<16x288xf32> to vector<16x225xf32>
    %575 = vector.broadcast %573 : vector<16x1xf32> to vector<16x225xf32>
    %576 = arith.mulf %575, %574 : vector<16x225xf32>
    %577 = arith.addf %572, %576 : vector<16x225xf32>
    %578 = vector.extract_strided_slice %368 {offsets = [0, 42], sizes = [16, 1], strides = [1, 1]} : vector<16x64xf32> to vector<16x1xf32>
    %579 = vector.extract_strided_slice %367 {offsets = [0, 42], sizes = [16, 225], strides = [1, 1]} : vector<16x288xf32> to vector<16x225xf32>
    %580 = vector.broadcast %578 : vector<16x1xf32> to vector<16x225xf32>
    %581 = arith.mulf %580, %579 : vector<16x225xf32>
    %582 = arith.addf %577, %581 : vector<16x225xf32>
    %583 = vector.extract_strided_slice %368 {offsets = [0, 43], sizes = [16, 1], strides = [1, 1]} : vector<16x64xf32> to vector<16x1xf32>
    %584 = vector.extract_strided_slice %367 {offsets = [0, 43], sizes = [16, 225], strides = [1, 1]} : vector<16x288xf32> to vector<16x225xf32>
    %585 = vector.broadcast %583 : vector<16x1xf32> to vector<16x225xf32>
    %586 = arith.mulf %585, %584 : vector<16x225xf32>
    %587 = arith.addf %582, %586 : vector<16x225xf32>
    %588 = vector.extract_strided_slice %368 {offsets = [0, 44], sizes = [16, 1], strides = [1, 1]} : vector<16x64xf32> to vector<16x1xf32>
    %589 = vector.extract_strided_slice %367 {offsets = [0, 44], sizes = [16, 225], strides = [1, 1]} : vector<16x288xf32> to vector<16x225xf32>
    %590 = vector.broadcast %588 : vector<16x1xf32> to vector<16x225xf32>
    %591 = arith.mulf %590, %589 : vector<16x225xf32>
    %592 = arith.addf %587, %591 : vector<16x225xf32>
    %593 = vector.extract_strided_slice %368 {offsets = [0, 45], sizes = [16, 1], strides = [1, 1]} : vector<16x64xf32> to vector<16x1xf32>
    %594 = vector.extract_strided_slice %367 {offsets = [0, 45], sizes = [16, 225], strides = [1, 1]} : vector<16x288xf32> to vector<16x225xf32>
    %595 = vector.broadcast %593 : vector<16x1xf32> to vector<16x225xf32>
    %596 = arith.mulf %595, %594 : vector<16x225xf32>
    %597 = arith.addf %592, %596 : vector<16x225xf32>
    %598 = vector.extract_strided_slice %368 {offsets = [0, 46], sizes = [16, 1], strides = [1, 1]} : vector<16x64xf32> to vector<16x1xf32>
    %599 = vector.extract_strided_slice %367 {offsets = [0, 46], sizes = [16, 225], strides = [1, 1]} : vector<16x288xf32> to vector<16x225xf32>
    %600 = vector.broadcast %598 : vector<16x1xf32> to vector<16x225xf32>
    %601 = arith.mulf %600, %599 : vector<16x225xf32>
    %602 = arith.addf %597, %601 : vector<16x225xf32>
    %603 = vector.extract_strided_slice %368 {offsets = [0, 47], sizes = [16, 1], strides = [1, 1]} : vector<16x64xf32> to vector<16x1xf32>
    %604 = vector.extract_strided_slice %367 {offsets = [0, 47], sizes = [16, 225], strides = [1, 1]} : vector<16x288xf32> to vector<16x225xf32>
    %605 = vector.broadcast %603 : vector<16x1xf32> to vector<16x225xf32>
    %606 = arith.mulf %605, %604 : vector<16x225xf32>
    %607 = arith.addf %602, %606 : vector<16x225xf32>
    %608 = vector.extract_strided_slice %368 {offsets = [0, 48], sizes = [16, 1], strides = [1, 1]} : vector<16x64xf32> to vector<16x1xf32>
    %609 = vector.extract_strided_slice %367 {offsets = [0, 48], sizes = [16, 225], strides = [1, 1]} : vector<16x288xf32> to vector<16x225xf32>
    %610 = vector.broadcast %608 : vector<16x1xf32> to vector<16x225xf32>
    %611 = arith.mulf %610, %609 : vector<16x225xf32>
    %612 = arith.addf %607, %611 : vector<16x225xf32>
    %613 = vector.extract_strided_slice %368 {offsets = [0, 49], sizes = [16, 1], strides = [1, 1]} : vector<16x64xf32> to vector<16x1xf32>
    %614 = vector.extract_strided_slice %367 {offsets = [0, 49], sizes = [16, 225], strides = [1, 1]} : vector<16x288xf32> to vector<16x225xf32>
    %615 = vector.broadcast %613 : vector<16x1xf32> to vector<16x225xf32>
    %616 = arith.mulf %615, %614 : vector<16x225xf32>
    %617 = arith.addf %612, %616 : vector<16x225xf32>
    %618 = vector.extract_strided_slice %368 {offsets = [0, 50], sizes = [16, 1], strides = [1, 1]} : vector<16x64xf32> to vector<16x1xf32>
    %619 = vector.extract_strided_slice %367 {offsets = [0, 50], sizes = [16, 225], strides = [1, 1]} : vector<16x288xf32> to vector<16x225xf32>
    %620 = vector.broadcast %618 : vector<16x1xf32> to vector<16x225xf32>
    %621 = arith.mulf %620, %619 : vector<16x225xf32>
    %622 = arith.addf %617, %621 : vector<16x225xf32>
    %623 = vector.extract_strided_slice %368 {offsets = [0, 51], sizes = [16, 1], strides = [1, 1]} : vector<16x64xf32> to vector<16x1xf32>
    %624 = vector.extract_strided_slice %367 {offsets = [0, 51], sizes = [16, 225], strides = [1, 1]} : vector<16x288xf32> to vector<16x225xf32>
    %625 = vector.broadcast %623 : vector<16x1xf32> to vector<16x225xf32>
    %626 = arith.mulf %625, %624 : vector<16x225xf32>
    %627 = arith.addf %622, %626 : vector<16x225xf32>
    %628 = vector.extract_strided_slice %368 {offsets = [0, 52], sizes = [16, 1], strides = [1, 1]} : vector<16x64xf32> to vector<16x1xf32>
    %629 = vector.extract_strided_slice %367 {offsets = [0, 52], sizes = [16, 225], strides = [1, 1]} : vector<16x288xf32> to vector<16x225xf32>
    %630 = vector.broadcast %628 : vector<16x1xf32> to vector<16x225xf32>
    %631 = arith.mulf %630, %629 : vector<16x225xf32>
    %632 = arith.addf %627, %631 : vector<16x225xf32>
    %633 = vector.extract_strided_slice %368 {offsets = [0, 53], sizes = [16, 1], strides = [1, 1]} : vector<16x64xf32> to vector<16x1xf32>
    %634 = vector.extract_strided_slice %367 {offsets = [0, 53], sizes = [16, 225], strides = [1, 1]} : vector<16x288xf32> to vector<16x225xf32>
    %635 = vector.broadcast %633 : vector<16x1xf32> to vector<16x225xf32>
    %636 = arith.mulf %635, %634 : vector<16x225xf32>
    %637 = arith.addf %632, %636 : vector<16x225xf32>
    %638 = vector.extract_strided_slice %368 {offsets = [0, 54], sizes = [16, 1], strides = [1, 1]} : vector<16x64xf32> to vector<16x1xf32>
    %639 = vector.extract_strided_slice %367 {offsets = [0, 54], sizes = [16, 225], strides = [1, 1]} : vector<16x288xf32> to vector<16x225xf32>
    %640 = vector.broadcast %638 : vector<16x1xf32> to vector<16x225xf32>
    %641 = arith.mulf %640, %639 : vector<16x225xf32>
    %642 = arith.addf %637, %641 : vector<16x225xf32>
    %643 = vector.extract_strided_slice %368 {offsets = [0, 55], sizes = [16, 1], strides = [1, 1]} : vector<16x64xf32> to vector<16x1xf32>
    %644 = vector.extract_strided_slice %367 {offsets = [0, 55], sizes = [16, 225], strides = [1, 1]} : vector<16x288xf32> to vector<16x225xf32>
    %645 = vector.broadcast %643 : vector<16x1xf32> to vector<16x225xf32>
    %646 = arith.mulf %645, %644 : vector<16x225xf32>
    %647 = arith.addf %642, %646 : vector<16x225xf32>
    %648 = vector.extract_strided_slice %368 {offsets = [0, 56], sizes = [16, 1], strides = [1, 1]} : vector<16x64xf32> to vector<16x1xf32>
    %649 = vector.extract_strided_slice %367 {offsets = [0, 56], sizes = [16, 225], strides = [1, 1]} : vector<16x288xf32> to vector<16x225xf32>
    %650 = vector.broadcast %648 : vector<16x1xf32> to vector<16x225xf32>
    %651 = arith.mulf %650, %649 : vector<16x225xf32>
    %652 = arith.addf %647, %651 : vector<16x225xf32>
    %653 = vector.extract_strided_slice %368 {offsets = [0, 57], sizes = [16, 1], strides = [1, 1]} : vector<16x64xf32> to vector<16x1xf32>
    %654 = vector.extract_strided_slice %367 {offsets = [0, 57], sizes = [16, 225], strides = [1, 1]} : vector<16x288xf32> to vector<16x225xf32>
    %655 = vector.broadcast %653 : vector<16x1xf32> to vector<16x225xf32>
    %656 = arith.mulf %655, %654 : vector<16x225xf32>
    %657 = arith.addf %652, %656 : vector<16x225xf32>
    %658 = vector.extract_strided_slice %368 {offsets = [0, 58], sizes = [16, 1], strides = [1, 1]} : vector<16x64xf32> to vector<16x1xf32>
    %659 = vector.extract_strided_slice %367 {offsets = [0, 58], sizes = [16, 225], strides = [1, 1]} : vector<16x288xf32> to vector<16x225xf32>
    %660 = vector.broadcast %658 : vector<16x1xf32> to vector<16x225xf32>
    %661 = arith.mulf %660, %659 : vector<16x225xf32>
    %662 = arith.addf %657, %661 : vector<16x225xf32>
    %663 = vector.extract_strided_slice %368 {offsets = [0, 59], sizes = [16, 1], strides = [1, 1]} : vector<16x64xf32> to vector<16x1xf32>
    %664 = vector.extract_strided_slice %367 {offsets = [0, 59], sizes = [16, 225], strides = [1, 1]} : vector<16x288xf32> to vector<16x225xf32>
    %665 = vector.broadcast %663 : vector<16x1xf32> to vector<16x225xf32>
    %666 = arith.mulf %665, %664 : vector<16x225xf32>
    %667 = arith.addf %662, %666 : vector<16x225xf32>
    %668 = vector.extract_strided_slice %368 {offsets = [0, 60], sizes = [16, 1], strides = [1, 1]} : vector<16x64xf32> to vector<16x1xf32>
    %669 = vector.extract_strided_slice %367 {offsets = [0, 60], sizes = [16, 225], strides = [1, 1]} : vector<16x288xf32> to vector<16x225xf32>
    %670 = vector.broadcast %668 : vector<16x1xf32> to vector<16x225xf32>
    %671 = arith.mulf %670, %669 : vector<16x225xf32>
    %672 = arith.addf %667, %671 : vector<16x225xf32>
    %673 = vector.extract_strided_slice %368 {offsets = [0, 61], sizes = [16, 1], strides = [1, 1]} : vector<16x64xf32> to vector<16x1xf32>
    %674 = vector.extract_strided_slice %367 {offsets = [0, 61], sizes = [16, 225], strides = [1, 1]} : vector<16x288xf32> to vector<16x225xf32>
    %675 = vector.broadcast %673 : vector<16x1xf32> to vector<16x225xf32>
    %676 = arith.mulf %675, %674 : vector<16x225xf32>
    %677 = arith.addf %672, %676 : vector<16x225xf32>
    %678 = vector.extract_strided_slice %368 {offsets = [0, 62], sizes = [16, 1], strides = [1, 1]} : vector<16x64xf32> to vector<16x1xf32>
    %679 = vector.extract_strided_slice %367 {offsets = [0, 62], sizes = [16, 225], strides = [1, 1]} : vector<16x288xf32> to vector<16x225xf32>
    %680 = vector.broadcast %678 : vector<16x1xf32> to vector<16x225xf32>
    %681 = arith.mulf %680, %679 : vector<16x225xf32>
    %682 = arith.addf %677, %681 : vector<16x225xf32>
    %683 = vector.extract_strided_slice %368 {offsets = [0, 63], sizes = [16, 1], strides = [1, 1]} : vector<16x64xf32> to vector<16x1xf32>
    %684 = vector.extract_strided_slice %367 {offsets = [0, 63], sizes = [16, 225], strides = [1, 1]} : vector<16x288xf32> to vector<16x225xf32>
    %685 = vector.broadcast %683 : vector<16x1xf32> to vector<16x225xf32>
    %686 = arith.mulf %685, %684 : vector<16x225xf32>
    %687 = arith.addf %682, %686 : vector<16x225xf32>
    %c0_23 = arith.constant 0 : index
    %c0_24 = arith.constant 0 : index
    %688 = vector.load %arg6[%c0_23, %c0_24] : memref<16x16xf32, #tpu.memory_space<vmem>>, vector<16x16xf32>
    %cst_25 = arith.constant dense<0.000000e+00> : vector<16x225xf32>
    %689 = tpu.matmul %688, %687, %cst_25 {dimension_numbers = #tpu.dot_dimension_numbers<[1], [0], [0], [1], [0, 0, 1, 1], [], []>} : vector<16x16xf32>, vector<16x225xf32>, vector<16x225xf32> -> vector<16x225xf32>
    %690 = vector.extract_strided_slice %2 {offsets = [0, 3], sizes = [16, 1], strides = [1, 1]} : vector<16x14xf32> to vector<16x1xf32>
    %691 = vector.broadcast %690 : vector<16x1xf32> to vector<16x225xf32>
    %692 = arith.addf %689, %691 : vector<16x225xf32>
    %693 = vector.extract_strided_slice %2 {offsets = [0, 7], sizes = [16, 1], strides = [1, 1]} : vector<16x14xf32> to vector<16x1xf32>
    %694 = vector.extract_strided_slice %2 {offsets = [0, 8], sizes = [16, 1], strides = [1, 1]} : vector<16x14xf32> to vector<16x1xf32>
    %695 = vector.extract_strided_slice %2 {offsets = [0, 9], sizes = [16, 1], strides = [1, 1]} : vector<16x14xf32> to vector<16x1xf32>
    %696 = vector.broadcast %693 : vector<16x1xf32> to vector<16x225xf32>
    %697 = arith.cmpf oge, %692, %696 : vector<16x225xf32>
    %698 = vector.broadcast %693 : vector<16x1xf32> to vector<16x225xf32>
    %699 = arith.subf %692, %698 : vector<16x225xf32>
    %700 = vector.broadcast %695 : vector<16x1xf32> to vector<16x225xf32>
    %701 = arith.mulf %699, %700 : vector<16x225xf32>
    %702 = vector.broadcast %693 : vector<16x1xf32> to vector<16x225xf32>
    %703 = arith.addf %701, %702 : vector<16x225xf32>
    %704 = vector.shape_cast %694 : vector<16x1xf32> to vector<16x1xf32>
    %705 = vector.broadcast %704 : vector<16x1xf32> to vector<16x225xf32>
    %706 = arith.select %697, %703, %705 : vector<16x225xi1>, vector<16x225xf32>
    %c0_26 = arith.constant 0 : index
    %c0_27 = arith.constant 0 : index
    %707 = vector.load %arg10[%c0_26, %c0_27] : memref<225x56xf32, #tpu.memory_space<vmem>>, vector<225x56xf32>
    %cst_28 = arith.constant dense<0.000000e+00> : vector<16x56xf32>
    %708 = tpu.matmul %706, %707, %cst_28 {dimension_numbers = #tpu.dot_dimension_numbers<[1], [0], [0], [1], [0, 0, 1, 1], [], []>} : vector<16x225xf32>, vector<225x56xf32>, vector<16x56xf32> -> vector<16x56xf32>
    %c0_29 = arith.constant 0 : index
    %c0_30 = arith.constant 0 : index
    %709 = vector.load %arg7[%c0_29, %c0_30] : memref<512x16xf32, #tpu.memory_space<vmem>>, vector<512x16xf32>
    %cst_31 = arith.constant dense<0.000000e+00> : vector<512x56xf32>
    %710 = tpu.matmul %709, %708, %cst_31 {dimension_numbers = #tpu.dot_dimension_numbers<[1], [0], [0], [1], [0, 0, 1, 1], [], []>} : vector<512x16xf32>, vector<16x56xf32>, vector<512x56xf32> -> vector<512x56xf32>
    %711 = vector.extract_strided_slice %710 {offsets = [0, 0], sizes = [16, 25], strides = [1, 1]} : vector<512x56xf32> to vector<16x25xf32>
    %712 = vector.extract_strided_slice %710 {offsets = [16, 1], sizes = [16, 25], strides = [1, 1]} : vector<512x56xf32> to vector<16x25xf32>
    %713 = arith.addf %711, %712 : vector<16x25xf32>
    %714 = vector.extract_strided_slice %710 {offsets = [32, 2], sizes = [16, 25], strides = [1, 1]} : vector<512x56xf32> to vector<16x25xf32>
    %715 = arith.addf %713, %714 : vector<16x25xf32>
    %716 = vector.extract_strided_slice %710 {offsets = [48, 3], sizes = [16, 25], strides = [1, 1]} : vector<512x56xf32> to vector<16x25xf32>
    %717 = arith.addf %715, %716 : vector<16x25xf32>
    %718 = vector.extract_strided_slice %710 {offsets = [64, 4], sizes = [16, 25], strides = [1, 1]} : vector<512x56xf32> to vector<16x25xf32>
    %719 = arith.addf %717, %718 : vector<16x25xf32>
    %720 = vector.extract_strided_slice %710 {offsets = [80, 5], sizes = [16, 25], strides = [1, 1]} : vector<512x56xf32> to vector<16x25xf32>
    %721 = arith.addf %719, %720 : vector<16x25xf32>
    %722 = vector.extract_strided_slice %710 {offsets = [96, 6], sizes = [16, 25], strides = [1, 1]} : vector<512x56xf32> to vector<16x25xf32>
    %723 = arith.addf %721, %722 : vector<16x25xf32>
    %724 = vector.extract_strided_slice %710 {offsets = [112, 7], sizes = [16, 25], strides = [1, 1]} : vector<512x56xf32> to vector<16x25xf32>
    %725 = arith.addf %723, %724 : vector<16x25xf32>
    %726 = vector.extract_strided_slice %710 {offsets = [128, 8], sizes = [16, 25], strides = [1, 1]} : vector<512x56xf32> to vector<16x25xf32>
    %727 = arith.addf %725, %726 : vector<16x25xf32>
    %728 = vector.extract_strided_slice %710 {offsets = [144, 9], sizes = [16, 25], strides = [1, 1]} : vector<512x56xf32> to vector<16x25xf32>
    %729 = arith.addf %727, %728 : vector<16x25xf32>
    %730 = vector.extract_strided_slice %710 {offsets = [160, 10], sizes = [16, 25], strides = [1, 1]} : vector<512x56xf32> to vector<16x25xf32>
    %731 = arith.addf %729, %730 : vector<16x25xf32>
    %732 = vector.extract_strided_slice %710 {offsets = [176, 11], sizes = [16, 25], strides = [1, 1]} : vector<512x56xf32> to vector<16x25xf32>
    %733 = arith.addf %731, %732 : vector<16x25xf32>
    %734 = vector.extract_strided_slice %710 {offsets = [192, 12], sizes = [16, 25], strides = [1, 1]} : vector<512x56xf32> to vector<16x25xf32>
    %735 = arith.addf %733, %734 : vector<16x25xf32>
    %736 = vector.extract_strided_slice %710 {offsets = [208, 13], sizes = [16, 25], strides = [1, 1]} : vector<512x56xf32> to vector<16x25xf32>
    %737 = arith.addf %735, %736 : vector<16x25xf32>
    %738 = vector.extract_strided_slice %710 {offsets = [224, 14], sizes = [16, 25], strides = [1, 1]} : vector<512x56xf32> to vector<16x25xf32>
    %739 = arith.addf %737, %738 : vector<16x25xf32>
    %740 = vector.extract_strided_slice %710 {offsets = [240, 15], sizes = [16, 25], strides = [1, 1]} : vector<512x56xf32> to vector<16x25xf32>
    %741 = arith.addf %739, %740 : vector<16x25xf32>
    %742 = vector.extract_strided_slice %710 {offsets = [256, 16], sizes = [16, 25], strides = [1, 1]} : vector<512x56xf32> to vector<16x25xf32>
    %743 = arith.addf %741, %742 : vector<16x25xf32>
    %744 = vector.extract_strided_slice %710 {offsets = [272, 17], sizes = [16, 25], strides = [1, 1]} : vector<512x56xf32> to vector<16x25xf32>
    %745 = arith.addf %743, %744 : vector<16x25xf32>
    %746 = vector.extract_strided_slice %710 {offsets = [288, 18], sizes = [16, 25], strides = [1, 1]} : vector<512x56xf32> to vector<16x25xf32>
    %747 = arith.addf %745, %746 : vector<16x25xf32>
    %748 = vector.extract_strided_slice %710 {offsets = [304, 19], sizes = [16, 25], strides = [1, 1]} : vector<512x56xf32> to vector<16x25xf32>
    %749 = arith.addf %747, %748 : vector<16x25xf32>
    %750 = vector.extract_strided_slice %710 {offsets = [320, 20], sizes = [16, 25], strides = [1, 1]} : vector<512x56xf32> to vector<16x25xf32>
    %751 = arith.addf %749, %750 : vector<16x25xf32>
    %752 = vector.extract_strided_slice %710 {offsets = [336, 21], sizes = [16, 25], strides = [1, 1]} : vector<512x56xf32> to vector<16x25xf32>
    %753 = arith.addf %751, %752 : vector<16x25xf32>
    %754 = vector.extract_strided_slice %710 {offsets = [352, 22], sizes = [16, 25], strides = [1, 1]} : vector<512x56xf32> to vector<16x25xf32>
    %755 = arith.addf %753, %754 : vector<16x25xf32>
    %756 = vector.extract_strided_slice %710 {offsets = [368, 23], sizes = [16, 25], strides = [1, 1]} : vector<512x56xf32> to vector<16x25xf32>
    %757 = arith.addf %755, %756 : vector<16x25xf32>
    %758 = vector.extract_strided_slice %710 {offsets = [384, 24], sizes = [16, 25], strides = [1, 1]} : vector<512x56xf32> to vector<16x25xf32>
    %759 = arith.addf %757, %758 : vector<16x25xf32>
    %760 = vector.extract_strided_slice %710 {offsets = [400, 25], sizes = [16, 25], strides = [1, 1]} : vector<512x56xf32> to vector<16x25xf32>
    %761 = arith.addf %759, %760 : vector<16x25xf32>
    %762 = vector.extract_strided_slice %710 {offsets = [416, 26], sizes = [16, 25], strides = [1, 1]} : vector<512x56xf32> to vector<16x25xf32>
    %763 = arith.addf %761, %762 : vector<16x25xf32>
    %764 = vector.extract_strided_slice %710 {offsets = [432, 27], sizes = [16, 25], strides = [1, 1]} : vector<512x56xf32> to vector<16x25xf32>
    %765 = arith.addf %763, %764 : vector<16x25xf32>
    %766 = vector.extract_strided_slice %710 {offsets = [448, 28], sizes = [16, 25], strides = [1, 1]} : vector<512x56xf32> to vector<16x25xf32>
    %767 = arith.addf %765, %766 : vector<16x25xf32>
    %768 = vector.extract_strided_slice %710 {offsets = [464, 29], sizes = [16, 25], strides = [1, 1]} : vector<512x56xf32> to vector<16x25xf32>
    %769 = arith.addf %767, %768 : vector<16x25xf32>
    %770 = vector.extract_strided_slice %710 {offsets = [480, 30], sizes = [16, 25], strides = [1, 1]} : vector<512x56xf32> to vector<16x25xf32>
    %771 = arith.addf %769, %770 : vector<16x25xf32>
    %772 = vector.extract_strided_slice %710 {offsets = [496, 31], sizes = [16, 25], strides = [1, 1]} : vector<512x56xf32> to vector<16x25xf32>
    %773 = arith.addf %771, %772 : vector<16x25xf32>
    %774 = vector.extract_strided_slice %2 {offsets = [0, 4], sizes = [16, 1], strides = [1, 1]} : vector<16x14xf32> to vector<16x1xf32>
    %775 = vector.broadcast %774 : vector<16x1xf32> to vector<16x25xf32>
    %776 = arith.mulf %773, %775 : vector<16x25xf32>
    %777 = vector.extract_strided_slice %2 {offsets = [0, 5], sizes = [16, 1], strides = [1, 1]} : vector<16x14xf32> to vector<16x1xf32>
    %778 = vector.broadcast %777 : vector<16x1xf32> to vector<16x25xf32>
    %779 = arith.addf %776, %778 : vector<16x25xf32>
    %780 = vector.extract_strided_slice %2 {offsets = [0, 10], sizes = [16, 1], strides = [1, 1]} : vector<16x14xf32> to vector<16x1xf32>
    %781 = vector.extract_strided_slice %2 {offsets = [0, 11], sizes = [16, 1], strides = [1, 1]} : vector<16x14xf32> to vector<16x1xf32>
    %782 = vector.extract_strided_slice %2 {offsets = [0, 12], sizes = [16, 1], strides = [1, 1]} : vector<16x14xf32> to vector<16x1xf32>
    %783 = vector.broadcast %780 : vector<16x1xf32> to vector<16x25xf32>
    %784 = arith.cmpf oge, %779, %783 : vector<16x25xf32>
    %785 = vector.broadcast %780 : vector<16x1xf32> to vector<16x25xf32>
    %786 = arith.subf %779, %785 : vector<16x25xf32>
    %787 = vector.broadcast %782 : vector<16x1xf32> to vector<16x25xf32>
    %788 = arith.mulf %786, %787 : vector<16x25xf32>
    %789 = vector.broadcast %780 : vector<16x1xf32> to vector<16x25xf32>
    %790 = arith.addf %788, %789 : vector<16x25xf32>
    %791 = vector.shape_cast %781 : vector<16x1xf32> to vector<16x1xf32>
    %792 = vector.broadcast %791 : vector<16x1xf32> to vector<16x25xf32>
    %793 = arith.select %784, %790, %792 : vector<16x25xi1>, vector<16x25xf32>
    %c0_32 = arith.constant 0 : index
    %c0_33 = arith.constant 0 : index
    %794 = vector.load %arg11[%c0_32, %c0_33] : memref<25x3xf32, #tpu.memory_space<vmem>>, vector<25x3xf32>
    %cst_34 = arith.constant dense<0.000000e+00> : vector<16x3xf32>
    %795 = tpu.matmul %793, %794, %cst_34 {dimension_numbers = #tpu.dot_dimension_numbers<[1], [0], [0], [1], [0, 0, 1, 1], [], []>} : vector<16x25xf32>, vector<25x3xf32>, vector<16x3xf32> -> vector<16x3xf32>
    %c0_35 = arith.constant 0 : index
    %c0_36 = arith.constant 0 : index
    %796 = vector.load %arg8[%c0_35, %c0_36] : memref<24x16xf32, #tpu.memory_space<vmem>>, vector<24x16xf32>
    %cst_37 = arith.constant dense<0.000000e+00> : vector<24x3xf32>
    %797 = tpu.matmul %796, %795, %cst_37 {dimension_numbers = #tpu.dot_dimension_numbers<[1], [0], [0], [1], [0, 0, 1, 1], [], []>} : vector<24x16xf32>, vector<16x3xf32>, vector<24x3xf32> -> vector<24x3xf32>
    %798 = vector.extract_strided_slice %2 {offsets = [0, 13], sizes = [4, 1], strides = [1, 1]} : vector<16x14xf32> to vector<4x1xf32>
    %799 = vector.extract_strided_slice %797 {offsets = [0, 0], sizes = [4, 1], strides = [1, 1]} : vector<24x3xf32> to vector<4x1xf32>
    %800 = arith.addf %798, %799 : vector<4x1xf32>
    %801 = vector.extract_strided_slice %797 {offsets = [8, 1], sizes = [4, 1], strides = [1, 1]} : vector<24x3xf32> to vector<4x1xf32>
    %802 = arith.addf %800, %801 : vector<4x1xf32>
    %803 = vector.extract_strided_slice %797 {offsets = [16, 2], sizes = [4, 1], strides = [1, 1]} : vector<24x3xf32> to vector<4x1xf32>
    %804 = arith.addf %802, %803 : vector<4x1xf32>
    %805 = tpu.iota {dimensions = array<i32: 0>} : vector<4x4xi32>
    %806 = tpu.iota {dimensions = array<i32: 1>} : vector<4x4xi32>
    %807 = arith.cmpi eq, %805, %806 : vector<4x4xi32>
    %808 = arith.extui %807 : vector<4x4xi1> to vector<4x4xi32>
    %809 = arith.sitofp %808 : vector<4x4xi32> to vector<4x4xf32>
    %810 = vector.broadcast %804 : vector<4x1xf32> to vector<4x4xf32>
    %811 = arith.mulf %809, %810 : vector<4x4xf32>
    %cst_38 = arith.constant dense<0.000000e+00> : vector<4xf32>
    %812 = vector.multi_reduction <add>, %811, %cst_38 [0] : vector<4x4xf32> to vector<4xf32>
    %813 = vector.shape_cast %812 : vector<4xf32> to vector<1x4xf32>
    %cst_39 = arith.constant dense<0xFF800000> : vector<1xf32>
    %814 = vector.multi_reduction <maximumf>, %813, %cst_39 [1] : vector<1x4xf32> to vector<1xf32>
    %815 = vector.shape_cast %814 : vector<1xf32> to vector<1x1xf32>
    %816 = vector.broadcast %815 : vector<1x1xf32> to vector<1x4xf32>
    %817 = arith.subf %813, %816 : vector<1x4xf32>
    %818 = math.exp %817 : vector<1x4xf32>
    %cst_40 = arith.constant dense<0.000000e+00> : vector<1xf32>
    %819 = vector.multi_reduction <add>, %818, %cst_40 [1] : vector<1x4xf32> to vector<1xf32>
    %820 = vector.shape_cast %819 : vector<1xf32> to vector<1x1xf32>
    %821 = vector.broadcast %820 : vector<1x1xf32> to vector<1x4xf32>
    %822 = arith.divf %818, %821 : vector<1x4xf32>
    %c0_41 = arith.constant 0 : index
    %c0_42 = arith.constant 0 : index
    %c0_43 = arith.constant 0 : index
    %823 = vector.load %arg13[%c0_41, %c0_42, %c0_43] : memref<1x1x4xf32, #tpu.memory_space<vmem>>, vector<1x1x4xf32>
    %824 = vector.shape_cast %823 : vector<1x1x4xf32> to vector<1x4xf32>
    %825 = vector.shape_cast %822 : vector<1x4xf32> to vector<1x1x4xf32>
    tpu.vector_store %arg13[%c0_41, %c0_42, %c0_43], %825 {strides = array<i32>} : memref<1x1x4xf32, #tpu.memory_space<vmem>>, vector<1x1x4xf32>,
    return
  }
  func.func @transform_0(%arg0: i32) -> (i32, i32, i32) {
    %c0_i32 = arith.constant 0 : i32
    %c0_i32_0 = arith.constant 0 : i32
    %c0_i32_1 = arith.constant 0 : i32
    return %arg0, %c0_i32, %c0_i32_0 : i32, i32, i32
  }
  func.func @transform_1(%arg0: i32) -> (i32, i32) {
    %c0_i32 = arith.constant 0 : i32
    %c0_i32_0 = arith.constant 0 : i32
    %c0_i32_1 = arith.constant 0 : i32
    return %c0_i32, %c0_i32_0 : i32, i32
  }
  func.func @transform_2(%arg0: i32) -> (i32, i32) {
    %c0_i32 = arith.constant 0 : i32
    %c0_i32_0 = arith.constant 0 : i32
    %c0_i32_1 = arith.constant 0 : i32
    return %c0_i32, %c0_i32_0 : i32, i32
  }
  func.func @transform_3(%arg0: i32) -> (i32, i32) {
    %c0_i32 = arith.constant 0 : i32
    %c0_i32_0 = arith.constant 0 : i32
    %c0_i32_1 = arith.constant 0 : i32
    return %c0_i32, %c0_i32_0 : i32, i32
  }
  func.func @transform_4(%arg0: i32) -> (i32, i32) {
    %c0_i32 = arith.constant 0 : i32
    %c0_i32_0 = arith.constant 0 : i32
    %c0_i32_1 = arith.constant 0 : i32
    return %c0_i32, %c0_i32_0 : i32, i32
  }
  func.func @transform_5(%arg0: i32) -> (i32, i32) {
    %c0_i32 = arith.constant 0 : i32
    %c0_i32_0 = arith.constant 0 : i32
    %c0_i32_1 = arith.constant 0 : i32
    return %c0_i32, %c0_i32_0 : i32, i32
  }
  func.func @transform_6(%arg0: i32) -> (i32, i32) {
    %c0_i32 = arith.constant 0 : i32
    %c0_i32_0 = arith.constant 0 : i32
    %c0_i32_1 = arith.constant 0 : i32
    return %c0_i32, %c0_i32_0 : i32, i32
  }
  func.func @transform_7(%arg0: i32) -> (i32, i32) {
    %c0_i32 = arith.constant 0 : i32
    %c0_i32_0 = arith.constant 0 : i32
    %c0_i32_1 = arith.constant 0 : i32
    return %c0_i32, %c0_i32_0 : i32, i32
  }
  func.func @transform_8(%arg0: i32) -> (i32, i32) {
    %c0_i32 = arith.constant 0 : i32
    %c0_i32_0 = arith.constant 0 : i32
    %c0_i32_1 = arith.constant 0 : i32
    return %c0_i32, %c0_i32_0 : i32, i32
  }
  func.func @transform_9(%arg0: i32) -> (i32, i32) {
    %c0_i32 = arith.constant 0 : i32
    %c0_i32_0 = arith.constant 0 : i32
    %c0_i32_1 = arith.constant 0 : i32
    return %c0_i32, %c0_i32_0 : i32, i32
  }
  func.func @transform_10(%arg0: i32) -> (i32, i32) {
    %c0_i32 = arith.constant 0 : i32
    %c0_i32_0 = arith.constant 0 : i32
    %c0_i32_1 = arith.constant 0 : i32
    return %c0_i32, %c0_i32_0 : i32, i32
  }
  func.func @transform_11(%arg0: i32) -> (i32, i32) {
    %c0_i32 = arith.constant 0 : i32
    %c0_i32_0 = arith.constant 0 : i32
    %c0_i32_1 = arith.constant 0 : i32
    return %c0_i32, %c0_i32_0 : i32, i32
  }
  func.func @transform_12(%arg0: i32) -> (i32, i32, i32) {
    %c0_i32 = arith.constant 0 : i32
    %c0_i32_0 = arith.constant 0 : i32
    %c0_i32_1 = arith.constant 0 : i32
    return %arg0, %c0_i32, %c0_i32_0 : i32, i32, i32
  }
}

</mosaic_0001>

<llo_original>
// kernel: tpu_custom_call.1
$region0: #{tpu_custom_call.1}
  #allocation0 [shape = 'u32[]', space=smem, size = 0x4, offset = 0x4, fixed_abs, tag = 'smem constant byte address 0x4 - core index']
  #allocation1 [shape = 'u32[72,128]{1,0:T(1,128)}', space=vmem, size = 0x9000, scoped, tag = 'internal scratch']
  %s0 = inlined_call_operand.vmem [shape: f32[2,8,640], index: 0, kind: input, shape index: {}]
  %s1 = inlined_call_operand.vmem [shape: f32[640,16], index: 1, kind: input, shape index: {}]
  %s2 = inlined_call_operand.vmem [shape: f32[16,8], index: 2, kind: input, shape index: {}]
  %s3 = inlined_call_operand.vmem [shape: f32[16,64], index: 3, kind: input, shape index: {}]
  %s4 = inlined_call_operand.vmem [shape: f32[16,64], index: 4, kind: input, shape index: {}]
  %s5 = inlined_call_operand.vmem [shape: f32[16,16], index: 5, kind: input, shape index: {}]
  %s6 = inlined_call_operand.vmem [shape: f32[512,16], index: 6, kind: input, shape index: {}]
  %s7 = inlined_call_operand.vmem [shape: f32[24,16], index: 7, kind: input, shape index: {}]
  %s8 = inlined_call_operand.vmem [shape: f32[577,288], index: 8, kind: input, shape index: {}]
  %s9 = inlined_call_operand.vmem [shape: f32[225,56], index: 9, kind: input, shape index: {}]
  %s10 = inlined_call_operand.vmem [shape: f32[25,3], index: 10, kind: input, shape index: {}]
  %s11 = inlined_call_operand.vmem [shape: f32[16,14], index: 11, kind: input, shape index: {}]
  %s12 = inlined_call_operand.hbm [shape: f32[2,1,4], index: 12, kind: output, shape index: {}]
  %s13 = sld [smem:[#allocation0]]
  $region81: #{tpu_custom_call.1} parent=0
    _
  %s15 = ssub.s32 1, %s13
  %s16 = scalar_select 0, %s15, %s13
  $region1: #{tpu_custom_call.1} parent=0
    #allocation2 [shape = 'u8[1024]{0}', space=vmem, size = 0x400, scoped, tag = 'output window, operand 0']
    #allocation3 [shape = 's32[2]{0}', space=sflag, size = 0x8, scoped, tag = 'scoped memory for tpu_custom_call.1']
    %17 = vsyncpa [#allocation3], 0
    %s18 = scalar_lea.sflag [#allocation3], 1
    %19 = vsyncpa %s18, 0
    loop: start=0, step=1, limit=4
    $region2: #{tpu_custom_call.1} parent=1 // loop_pre_header
      _
    $region3: #{tpu_custom_call.1} parent=1 // loop_header
      %s21 = sphi 0, %s25
      %p22 = scmp.ge.s32.totalorder %s21, 4
      %s31 = sphi 0, %s33
      %s34 = sphi 0, %s31
      %s35 = sphi 0, %s34
      %s51 = sphi 0, %s35
      %s55 = sphi 0, %s55
      %s57 = sphi 0, %s55
      %s58 = sphi 0, %s57
      %s72 = sphi 0, %s58
      %s76 = sphi 0, %s76
      %s78 = sphi 0, %s76
      %s79 = sphi 0, %s78
      %s93 = sphi 0, %s79
      %s97 = sphi 0, %s97
      %s99 = sphi 0, %s97
      %s100 = sphi 0, %s99
      %s114 = sphi 0, %s100
      %s118 = sphi 0, %s118
      %s120 = sphi 0, %s118
      %s121 = sphi 0, %s120
      %s135 = sphi 0, %s121
      %s139 = sphi 0, %s139
      %s141 = sphi 0, %s139
      %s142 = sphi 0, %s141
      %s156 = sphi 0, %s142
      %s160 = sphi 0, %s160
      %s162 = sphi 0, %s160
      %s163 = sphi 0, %s162
      %s177 = sphi 0, %s163
      %s181 = sphi 0, %s181
      %s183 = sphi 0, %s181
      %s184 = sphi 0, %s183
      %s198 = sphi 0, %s184
      %s202 = sphi 0, %s202
      %s204 = sphi 0, %s202
      %s205 = sphi 0, %s204
      %s219 = sphi 0, %s205
      %s223 = sphi 0, %s223
      %s225 = sphi 0, %s223
      %s226 = sphi 0, %s225
      %s240 = sphi 0, %s226
      %s244 = sphi 0, %s244
      %s246 = sphi 0, %s244
      %s247 = sphi 0, %s246
      %s261 = sphi 0, %s247
      %s265 = sphi 0, %s265
      %s267 = sphi 0, %s265
      %s268 = sphi 0, %s267
      %s282 = sphi 0, %s268
      %s288 = sphi 0, %s290
      %s291 = sphi 0, %s288
      %s292 = sphi 0, %s291
      %s308 = sphi 0, %s292
    $region4: #{tpu_custom_call.1} parent=1 // loop_header_branch
      %24 = sbr.rel (%p22) target = $region8
    $region5: #{tpu_custom_call.1} parent=1 // loop_body
      %s26 = ssub.s32 %s21, 1
      %s27 = ssub.s32 %s21, 2
      %s28 = sadd.s32 %s21, 1
      %s29 = ssub.s32 %s21, %s28
      %p30 = scmp.eq.s32.totalorder %s29, 0
      %s32 = sadd.s32 %s31, 1
      %s33 = scalar_select %p30, %s31, %s32
      %p36 = pneg %p30
      %p37 = scmp.eq.s32.totalorder %s21, 1
      %p38 = por %p36, %p37
      %p39 = scmp.ne.s32.totalorder %s31, %s34
      %p40 = scmp.eq.s32.totalorder %s21, 0
      %p41 = por %p39, %p40
      %p42 = scmp.ne.s32.totalorder %s31, %s34
      %p43 = scmp.eq.s32.totalorder %s26, 1
      %p44 = por %p42, %p43
      %p45 = scmp.ne.s32.totalorder %s34, %s35
      %p46 = scmp.eq.s32.totalorder %s26, 0
      %p47 = por %p45, %p46
      %p48 = scmp.ne.s32.totalorder %s34, %s35
      %p49 = scmp.eq.s32.totalorder %s27, 1
      %p50 = por %p48, %p49
      %p52 = scmp.ne.s32.totalorder %s35, %s51
      %p53 = scmp.eq.s32.totalorder %s27, 0
      %p54 = por %p52, %p53
      %s56 = sadd.s32 %s55, 1
      %p59 = scmp.eq.s32.totalorder %s21, 1
      %p60 = scmp.ne.s32.totalorder %s55, %s57
      %p61 = scmp.eq.s32.totalorder %s21, 0
      %p62 = por %p60, %p61
      %p63 = scmp.ne.s32.totalorder %s55, %s57
      %p64 = scmp.eq.s32.totalorder %s26, 1
      %p65 = por %p63, %p64
      %p66 = scmp.ne.s32.totalorder %s57, %s58
      %p67 = scmp.eq.s32.totalorder %s26, 0
      %p68 = por %p66, %p67
      %p69 = scmp.ne.s32.totalorder %s57, %s58
      %p70 = scmp.eq.s32.totalorder %s27, 1
      %p71 = por %p69, %p70
      %p73 = scmp.ne.s32.totalorder %s58, %s72
      %p74 = scmp.eq.s32.totalorder %s27, 0
      %p75 = por %p73, %p74
      %s77 = sadd.s32 %s76, 1
      %p80 = scmp.eq.s32.totalorder %s21, 1
      %p81 = scmp.ne.s32.totalorder %s76, %s78
      %p82 = scmp.eq.s32.totalorder %s21, 0
      %p83 = por %p81, %p82
      %p84 = scmp.ne.s32.totalorder %s76, %s78
      %p85 = scmp.eq.s32.totalorder %s26, 1
      %p86 = por %p84, %p85
      %p87 = scmp.ne.s32.totalorder %s78, %s79
      %p88 = scmp.eq.s32.totalorder %s26, 0
      %p89 = por %p87, %p88
      %p90 = scmp.ne.s32.totalorder %s78, %s79
      %p91 = scmp.eq.s32.totalorder %s27, 1
      %p92 = por %p90, %p91
      %p94 = scmp.ne.s32.totalorder %s79, %s93
      %p95 = scmp.eq.s32.totalorder %s27, 0
      %p96 = por %p94, %p95
      %s98 = sadd.s32 %s97, 1
      %p101 = scmp.eq.s32.totalorder %s21, 1
      %p102 = scmp.ne.s32.totalorder %s97, %s99
      %p103 = scmp.eq.s32.totalorder %s21, 0
      %p104 = por %p102, %p103
      %p105 = scmp.ne.s32.totalorder %s97, %s99
      %p106 = scmp.eq.s32.totalorder %s26, 1
      %p107 = por %p105, %p106
      %p108 = scmp.ne.s32.totalorder %s99, %s100
      %p109 = scmp.eq.s32.totalorder %s26, 0
      %p110 = por %p108, %p109
      %p111 = scmp.ne.s32.totalorder %s99, %s100
      %p112 = scmp.eq.s32.totalorder %s27, 1
      %p113 = por %p111, %p112
      %p115 = scmp.ne.s32.totalorder %s100, %s114
      %p116 = scmp.eq.s32.totalorder %s27, 0
      %p117 = por %p115, %p116
      %s119 = sadd.s32 %s118, 1
      %p122 = scmp.eq.s32.totalorder %s21, 1
      %p123 = scmp.ne.s32.totalorder %s118, %s120
      %p124 = scmp.eq.s32.totalorder %s21, 0
      %p125 = por %p123, %p124
      %p126 = scmp.ne.s32.totalorder %s118, %s120
      %p127 = scmp.eq.s32.totalorder %s26, 1
      %p128 = por %p126, %p127
      %p129 = scmp.ne.s32.totalorder %s120, %s121
      %p130 = scmp.eq.s32.totalorder %s26, 0
      %p131 = por %p129, %p130
      %p132 = scmp.ne.s32.totalorder %s120, %s121
      %p133 = scmp.eq.s32.totalorder %s27, 1
      %p134 = por %p132, %p133
      %p136 = scmp.ne.s32.totalorder %s121, %s135
      %p137 = scmp.eq.s32.totalorder %s27, 0
      %p138 = por %p136, %p137
      %s140 = sadd.s32 %s139, 1
      %p143 = scmp.eq.s32.totalorder %s21, 1
      %p144 = scmp.ne.s32.totalorder %s139, %s141
      %p145 = scmp.eq.s32.totalorder %s21, 0
      %p146 = por %p144, %p145
      %p147 = scmp.ne.s32.totalorder %s139, %s141
      %p148 = scmp.eq.s32.totalorder %s26, 1
      %p149 = por %p147, %p148
      %p150 = scmp.ne.s32.totalorder %s141, %s142
      %p151 = scmp.eq.s32.totalorder %s26, 0
      %p152 = por %p150, %p151
      %p153 = scmp.ne.s32.totalorder %s141, %s142
      %p154 = scmp.eq.s32.totalorder %s27, 1
      %p155 = por %p153, %p154
      %p157 = scmp.ne.s32.totalorder %s142, %s156
      %p158 = scmp.eq.s32.totalorder %s27, 0
      %p159 = por %p157, %p158
      %s161 = sadd.s32 %s160, 1
      %p164 = scmp.eq.s32.totalorder %s21, 1
      %p165 = scmp.ne.s32.totalorder %s160, %s162
      %p166 = scmp.eq.s32.totalorder %s21, 0
      %p167 = por %p165, %p166
      %p168 = scmp.ne.s32.totalorder %s160, %s162
      %p169 = scmp.eq.s32.totalorder %s26, 1
      %p170 = por %p168, %p169
      %p171 = scmp.ne.s32.totalorder %s162, %s163
      %p172 = scmp.eq.s32.totalorder %s26, 0
      %p173 = por %p171, %p172
      %p174 = scmp.ne.s32.totalorder %s162, %s163
      %p175 = scmp.eq.s32.totalorder %s27, 1
      %p176 = por %p174, %p175
      %p178 = scmp.ne.s32.totalorder %s163, %s177
      %p179 = scmp.eq.s32.totalorder %s27, 0
      %p180 = por %p178, %p179
      %s182 = sadd.s32 %s181, 1
      %p185 = scmp.eq.s32.totalorder %s21, 1
      %p186 = scmp.ne.s32.totalorder %s181, %s183
      %p187 = scmp.eq.s32.totalorder %s21, 0
      %p188 = por %p186, %p187
      %p189 = scmp.ne.s32.totalorder %s181, %s183
      %p190 = scmp.eq.s32.totalorder %s26, 1
      %p191 = por %p189, %p190
      %p192 = scmp.ne.s32.totalorder %s183, %s184
      %p193 = scmp.eq.s32.totalorder %s26, 0
      %p194 = por %p192, %p193
      %p195 = scmp.ne.s32.totalorder %s183, %s184
      %p196 = scmp.eq.s32.totalorder %s27, 1
      %p197 = por %p195, %p196
      %p199 = scmp.ne.s32.totalorder %s184, %s198
      %p200 = scmp.eq.s32.totalorder %s27, 0
      %p201 = por %p199, %p200
      %s203 = sadd.s32 %s202, 1
      %p206 = scmp.eq.s32.totalorder %s21, 1
      %p207 = scmp.ne.s32.totalorder %s202, %s204
      %p208 = scmp.eq.s32.totalorder %s21, 0
      %p209 = por %p207, %p208
      %p210 = scmp.ne.s32.totalorder %s202, %s204
      %p211 = scmp.eq.s32.totalorder %s26, 1
      %p212 = por %p210, %p211
      %p213 = scmp.ne.s32.totalorder %s204, %s205
      %p214 = scmp.eq.s32.totalorder %s26, 0
      %p215 = por %p213, %p214
      %p216 = scmp.ne.s32.totalorder %s204, %s205
      %p217 = scmp.eq.s32.totalorder %s27, 1
      %p218 = por %p216, %p217
      %p220 = scmp.ne.s32.totalorder %s205, %s219
      %p221 = scmp.eq.s32.totalorder %s27, 0
      %p222 = por %p220, %p221
      %s224 = sadd.s32 %s223, 1
      %p227 = scmp.eq.s32.totalorder %s21, 1
      %p228 = scmp.ne.s32.totalorder %s223, %s225
      %p229 = scmp.eq.s32.totalorder %s21, 0
      %p230 = por %p228, %p229
      %p231 = scmp.ne.s32.totalorder %s223, %s225
      %p232 = scmp.eq.s32.totalorder %s26, 1
      %p233 = por %p231, %p232
      %p234 = scmp.ne.s32.totalorder %s225, %s226
      %p235 = scmp.eq.s32.totalorder %s26, 0
      %p236 = por %p234, %p235
      %p237 = scmp.ne.s32.totalorder %s225, %s226
      %p238 = scmp.eq.s32.totalorder %s27, 1
      %p239 = por %p237, %p238
      %p241 = scmp.ne.s32.totalorder %s226, %s240
      %p242 = scmp.eq.s32.totalorder %s27, 0
      %p243 = por %p241, %p242
      %s245 = sadd.s32 %s244, 1
      %p248 = scmp.eq.s32.totalorder %s21, 1
      %p249 = scmp.ne.s32.totalorder %s244, %s246
      %p250 = scmp.eq.s32.totalorder %s21, 0
      %p251 = por %p249, %p250
      %p252 = scmp.ne.s32.totalorder %s244, %s246
      %p253 = scmp.eq.s32.totalorder %s26, 1
      %p254 = por %p252, %p253
      %p255 = scmp.ne.s32.totalorder %s246, %s247
      %p256 = scmp.eq.s32.totalorder %s26, 0
      %p257 = por %p255, %p256
      %p258 = scmp.ne.s32.totalorder %s246, %s247
      %p259 = scmp.eq.s32.totalorder %s27, 1
      %p260 = por %p258, %p259
      %p262 = scmp.ne.s32.totalorder %s247, %s261
      %p263 = scmp.eq.s32.totalorder %s27, 0
      %p264 = por %p262, %p263
      %s266 = sadd.s32 %s265, 1
      %p269 = scmp.eq.s32.totalorder %s21, 1
      %p270 = scmp.ne.s32.totalorder %s265, %s267
      %p271 = scmp.eq.s32.totalorder %s21, 0
      %p272 = por %p270, %p271
      %p273 = scmp.ne.s32.totalorder %s265, %s267
      %p274 = scmp.eq.s32.totalorder %s26, 1
      %p275 = por %p273, %p274
      %p276 = scmp.ne.s32.totalorder %s267, %s268
      %p277 = scmp.eq.s32.totalorder %s26, 0
      %p278 = por %p276, %p277
      %p279 = scmp.ne.s32.totalorder %s267, %s268
      %p280 = scmp.eq.s32.totalorder %s27, 1
      %p281 = por %p279, %p280
      %p283 = scmp.ne.s32.totalorder %s268, %s282
      %p284 = scmp.eq.s32.totalorder %s27, 0
      %p285 = por %p283, %p284
      %s286 = ssub.s32 %s21, %s28
      %p287 = scmp.eq.s32.totalorder %s286, 0
      %s289 = sadd.s32 %s288, 1
      %s290 = scalar_select %p287, %s288, %s289
      %p293 = pneg %p287
      %p294 = scmp.eq.s32.totalorder %s21, 1
      %p295 = por %p293, %p294
      %p296 = scmp.ne.s32.totalorder %s288, %s291
      %p297 = scmp.eq.s32.totalorder %s21, 0
      %p298 = por %p296, %p297
      %p299 = scmp.ne.s32.totalorder %s288, %s291
      %p300 = scmp.eq.s32.totalorder %s26, 1
      %p301 = por %p299, %p300
      %p302 = scmp.ne.s32.totalorder %s291, %s292
      %p303 = scmp.eq.s32.totalorder %s26, 0
      %p304 = por %p302, %p303
      %p305 = scmp.ne.s32.totalorder %s291, %s292
      %p306 = scmp.eq.s32.totalorder %s27, 1
      %p307 = por %p305, %p306
      %p309 = scmp.ne.s32.totalorder %s292, %s308
      %p310 = scmp.eq.s32.totalorder %s27, 0
      %p311 = por %p309, %p310
      %p312 = scmp.le.s32.totalorder 1, %s21
      %p313 = scmp.lt.s32.totalorder %s21, 3
      %p314 = pnand %p312, %p313
      %p315 = pneg %p314
      // Predicated region
      $region9: #{tpu_custom_call.1} parent=5 // pred_check
        _
      $region10: #{tpu_custom_call.1} parent=5 // pred_check_branch
        %317 = sbr.rel (%p314) target = $region12
      $region11: #{tpu_custom_call.1} parent=5 // pred_region
        %s318 = ssub.s32 %s21, 1
        // Predicated region
        $region13: #{tpu_custom_call.1} parent=11 // pred_check
          %p319 = pneg %p68
        $region14: #{tpu_custom_call.1} parent=11 // pred_check_branch
          %321 = sbr.rel (%p319) target = $region16
        $region15: #{tpu_custom_call.1} parent=11 // pred_region
          _
        $region16: #{tpu_custom_call.1} parent=11 // pred_fallthru
          _
        // Predicated region
        $region17: #{tpu_custom_call.1} parent=11 // pred_check
          %p322 = pneg %p89
        $region18: #{tpu_custom_call.1} parent=11 // pred_check_branch
          %324 = sbr.rel (%p322) target = $region20
        $region19: #{tpu_custom_call.1} parent=11 // pred_region
          _
        $region20: #{tpu_custom_call.1} parent=11 // pred_fallthru
          _
        // Predicated region
        $region21: #{tpu_custom_call.1} parent=11 // pred_check
          %p325 = pneg %p110
        $region22: #{tpu_custom_call.1} parent=11 // pred_check_branch
          %327 = sbr.rel (%p325) target = $region24
        $region23: #{tpu_custom_call.1} parent=11 // pred_region
          _
        $region24: #{tpu_custom_call.1} parent=11 // pred_fallthru
          _
        // Predicated region
        $region25: #{tpu_custom_call.1} parent=11 // pred_check
          %p328 = pneg %p131
        $region26: #{tpu_custom_call.1} parent=11 // pred_check_branch
          %330 = sbr.rel (%p328) target = $region28
        $region27: #{tpu_custom_call.1} parent=11 // pred_region
          _
        $region28: #{tpu_custom_call.1} parent=11 // pred_fallthru
          _
        // Predicated region
        $region29: #{tpu_custom_call.1} parent=11 // pred_check
          %p331 = pneg %p152
        $region30: #{tpu_custom_call.1} parent=11 // pred_check_branch
          %333 = sbr.rel (%p331) target = $region32
        $region31: #{tpu_custom_call.1} parent=11 // pred_region
          _
        $region32: #{tpu_custom_call.1} parent=11 // pred_fallthru
          _
        // Predicated region
        $region33: #{tpu_custom_call.1} parent=11 // pred_check
          %p334 = pneg %p173
        $region34: #{tpu_custom_call.1} parent=11 // pred_check_branch
          %336 = sbr.rel (%p334) target = $region36
        $region35: #{tpu_custom_call.1} parent=11 // pred_region
          _
        $region36: #{tpu_custom_call.1} parent=11 // pred_fallthru
          _
        // Predicated region
        $region37: #{tpu_custom_call.1} parent=11 // pred_check
          %p337 = pneg %p194
        $region38: #{tpu_custom_call.1} parent=11 // pred_check_branch
          %339 = sbr.rel (%p337) target = $region40
        $region39: #{tpu_custom_call.1} parent=11 // pred_region
          _
        $region40: #{tpu_custom_call.1} parent=11 // pred_fallthru
          _
        // Predicated region
        $region41: #{tpu_custom_call.1} parent=11 // pred_check
          %p340 = pneg %p215
        $region42: #{tpu_custom_call.1} parent=11 // pred_check_branch
          %342 = sbr.rel (%p340) target = $region44
        $region43: #{tpu_custom_call.1} parent=11 // pred_region
          _
        $region44: #{tpu_custom_call.1} parent=11 // pred_fallthru
          _
        // Predicated region
        $region45: #{tpu_custom_call.1} parent=11 // pred_check
          %p343 = pneg %p236
        $region46: #{tpu_custom_call.1} parent=11 // pred_check_branch
          %345 = sbr.rel (%p343) target = $region48
        $region47: #{tpu_custom_call.1} parent=11 // pred_region
          _
        $region48: #{tpu_custom_call.1} parent=11 // pred_fallthru
          _
        // Predicated region
        $region49: #{tpu_custom_call.1} parent=11 // pred_check
          %p346 = pneg %p257
        $region50: #{tpu_custom_call.1} parent=11 // pred_check_branch
          %348 = sbr.rel (%p346) target = $region52
        $region51: #{tpu_custom_call.1} parent=11 // pred_region
          _
        $region52: #{tpu_custom_call.1} parent=11 // pred_fallthru
          _
        // Predicated region
        $region53: #{tpu_custom_call.1} parent=11 // pred_check
          %p349 = pneg %p278
        $region54: #{tpu_custom_call.1} parent=11 // pred_check_branch
          %351 = sbr.rel (%p349) target = $region56
        $region55: #{tpu_custom_call.1} parent=11 // pred_region
          _
        $region56: #{tpu_custom_call.1} parent=11 // pred_fallthru
          _
      $region12: #{tpu_custom_call.1} parent=5 // pred_fallthru
        _
      %p352 = scmp.lt.s32.totalorder %s21, 2
      // Predicated region
      $region57: #{tpu_custom_call.1} parent=5 // pred_check
        %p353 = pneg %p352
      $region58: #{tpu_custom_call.1} parent=5 // pred_check_branch
        %355 = sbr.rel (%p353) target = $region60
      $region59: #{tpu_custom_call.1} parent=5 // pred_region
        // Predicated region
        $region61: #{tpu_custom_call.1} parent=59 // pred_check
          %p356 = pneg %p41
        $region62: #{tpu_custom_call.1} parent=59 // pred_check_branch
          %358 = sbr.rel (%p356) target = $region64
        $region63: #{tpu_custom_call.1} parent=59 // pred_region
          %p359 = scmp.lt.s32.totalorder %s21, 1
          %s360 = scalar_select %p359, %s21, 1
          %s361 = smul.addr %s360, 5
          %s362 = smul.addr %s361, 8
          %s363 = scalar_lea.vmem %s0, %s362
        $region64: #{tpu_custom_call.1} parent=59 // pred_fallthru
          _
      $region60: #{tpu_custom_call.1} parent=5 // pred_fallthru
        _
      %p364 = scmp.le.s32.totalorder 1, %s21
      %p365 = scmp.lt.s32.totalorder %s21, 3
      %p366 = pnand %p364, %p365
      %p367 = pneg %p366
      // Predicated region
      $region65: #{tpu_custom_call.1} parent=5 // pred_check
        _
      $region66: #{tpu_custom_call.1} parent=5 // pred_check_branch
        %369 = sbr.rel (%p366) target = $region68
      $region67: #{tpu_custom_call.1} parent=5 // pred_region
        %s370 = ssub.s32 %s21, 1
        %p371 = scmp.lt.s32.totalorder %s26, 1
        %s372 = scalar_select %p371, %s26, 1
        %s373 = smul.addr %s372, 5
        %s374 = smul.addr %s373, 8
        %s375 = scalar_lea.vmem %s0, %s374
        %p376 = pneg %p47
        %p377 = pneg %p44
        %p378 = pneg %p68
        %p379 = pneg %p65
        %p380 = pneg %p89
        %p381 = pneg %p86
        %p382 = pneg %p110
        %p383 = pneg %p107
        %p384 = pneg %p131
        %p385 = pneg %p128
        %p386 = pneg %p152
        %p387 = pneg %p149
        %p388 = pneg %p173
        %p389 = pneg %p170
        %p390 = pneg %p194
        %p391 = pneg %p191
        %p392 = pneg %p215
        %p393 = pneg %p212
        %p394 = pneg %p236
        %p395 = pneg %p233
        %p396 = pneg %p257
        %p397 = pneg %p254
        %p398 = pneg %p278
        %p399 = pneg %p275
        %p400 = pneg %p304
        %p401 = pneg %p301
        %s402 = sand.u32 %s291, 1
        %s403 = scalar_lea.sflag [#allocation3], %s402
        %s404 = sand.u32 %s291, 1
        %s405 = scalar_lea.vmem [#allocation2], %s404
        %p406 = scmp.lt.s32.totalorder %s26, 1
        %s407 = scalar_select %p406, %s26, 1
        %s408 = smul.addr %s407, 5
        %s409 = smul.addr %s408, 8
        %s410 = scalar_lea.vmem %s0, %s409
        %v411 = vld [vmem:[%s410] sm:$0xff]
        %v412 = vld [vmem:[%s410 + $0x8] sm:$0xff]
        %v413 = vld [vmem:[%s410 + $0x10] sm:$0xff]
        %v414 = vld [vmem:[%s410 + $0x18] sm:$0xff]
        %v415 = vld [vmem:[%s410 + $0x20] sm:$0xff]
        %v416 = vld [vmem:[%s11] sm:$0xff]
        %v417 = vld [vmem:[%s11 + $0x8] sm:$0xff]
        %v418 = vld [vmem:[%s1] sm:$0xff]
        %v419 = vld [vmem:[%s1 + $0x8] sm:$0xff]
        %v420 = vld [vmem:[%s1 + $0x10] sm:$0xff]
        %v421 = vld [vmem:[%s1 + $0x18] sm:$0xff]
        %v422 = vld [vmem:[%s1 + $0x20] sm:$0xff]
        %v423 = vld [vmem:[%s1 + $0x28] sm:$0xff]
        %v424 = vld [vmem:[%s1 + $0x30] sm:$0xff]
        %v425 = vld [vmem:[%s1 + $0x38] sm:$0xff]
        %v426 = vld [vmem:[%s1 + $0x40] sm:$0xff]
        %v427 = vld [vmem:[%s1 + $0x48] sm:$0xff]
        %v428 = vld [vmem:[%s1 + $0x50] sm:$0xff]
        %v429 = vld [vmem:[%s1 + $0x58] sm:$0xff]
        %v430 = vld [vmem:[%s1 + $0x60] sm:$0xff]
        %v431 = vld [vmem:[%s1 + $0x68] sm:$0xff]
        %v432 = vld [vmem:[%s1 + $0x70] sm:$0xff]
        %v433 = vld [vmem:[%s1 + $0x78] sm:$0xff]
        %v434 = vld [vmem:[%s1 + $0x80] sm:$0xff]
        %v435 = vld [vmem:[%s1 + $0x88] sm:$0xff]
        %v436 = vld [vmem:[%s1 + $0x90] sm:$0xff]
        %v437 = vld [vmem:[%s1 + $0x98] sm:$0xff]
        %v438 = vld [vmem:[%s1 + $0xa0] sm:$0xff]
        %v439 = vld [vmem:[%s1 + $0xa8] sm:$0xff]
        %v440 = vld [vmem:[%s1 + $0xb0] sm:$0xff]
        %v441 = vld [vmem:[%s1 + $0xb8] sm:$0xff]
        %v442 = vld [vmem:[%s1 + $0xc0] sm:$0xff]
        %v443 = vld [vmem:[%s1 + $0xc8] sm:$0xff]
        %v444 = vld [vmem:[%s1 + $0xd0] sm:$0xff]
        %v445 = vld [vmem:[%s1 + $0xd8] sm:$0xff]
        %v446 = vld [vmem:[%s1 + $0xe0] sm:$0xff]
        %v447 = vld [vmem:[%s1 + $0xe8] sm:$0xff]
        %v448 = vld [vmem:[%s1 + $0xf0] sm:$0xff]
        %v449 = vld [vmem:[%s1 + $0xf8] sm:$0xff]
        %v450 = vld [vmem:[%s1 + $0x100] sm:$0xff]
        %v451 = vld [vmem:[%s1 + $0x108] sm:$0xff]
        %v452 = vld [vmem:[%s1 + $0x110] sm:$0xff]
        %v453 = vld [vmem:[%s1 + $0x118] sm:$0xff]
        %v454 = vld [vmem:[%s1 + $0x120] sm:$0xff]
        %v455 = vld [vmem:[%s1 + $0x128] sm:$0xff]
        %v456 = vld [vmem:[%s1 + $0x130] sm:$0xff]
        %v457 = vld [vmem:[%s1 + $0x138] sm:$0xff]
        %v458 = vld [vmem:[%s1 + $0x140] sm:$0xff]
        %v459 = vld [vmem:[%s1 + $0x148] sm:$0xff]
        %v460 = vld [vmem:[%s1 + $0x150] sm:$0xff]
        %v461 = vld [vmem:[%s1 + $0x158] sm:$0xff]
        %v462 = vld [vmem:[%s1 + $0x160] sm:$0xff]
        %v463 = vld [vmem:[%s1 + $0x168] sm:$0xff]
        %v464 = vld [vmem:[%s1 + $0x170] sm:$0xff]
        %v465 = vld [vmem:[%s1 + $0x178] sm:$0xff]
        %v466 = vld [vmem:[%s1 + $0x180] sm:$0xff]
        %v467 = vld [vmem:[%s1 + $0x188] sm:$0xff]
        %v468 = vld [vmem:[%s1 + $0x190] sm:$0xff]
        %v469 = vld [vmem:[%s1 + $0x198] sm:$0xff]
        %v470 = vld [vmem:[%s1 + $0x1a0] sm:$0xff]
        %v471 = vld [vmem:[%s1 + $0x1a8] sm:$0xff]
        %v472 = vld [vmem:[%s1 + $0x1b0] sm:$0xff]
        %v473 = vld [vmem:[%s1 + $0x1b8] sm:$0xff]
        %v474 = vld [vmem:[%s1 + $0x1c0] sm:$0xff]
        %v475 = vld [vmem:[%s1 + $0x1c8] sm:$0xff]
        %v476 = vld [vmem:[%s1 + $0x1d0] sm:$0xff]
        %v477 = vld [vmem:[%s1 + $0x1d8] sm:$0xff]
        %v478 = vld [vmem:[%s1 + $0x1e0] sm:$0xff]
        %v479 = vld [vmem:[%s1 + $0x1e8] sm:$0xff]
        %v480 = vld [vmem:[%s1 + $0x1f0] sm:$0xff]
        %v481 = vld [vmem:[%s1 + $0x1f8] sm:$0xff]
        %v482 = vld [vmem:[%s1 + $0x200] sm:$0xff]
        %v483 = vld [vmem:[%s1 + $0x208] sm:$0xff]
        %v484 = vld [vmem:[%s1 + $0x210] sm:$0xff]
        %v485 = vld [vmem:[%s1 + $0x218] sm:$0xff]
        %v486 = vld [vmem:[%s1 + $0x220] sm:$0xff]
        %v487 = vld [vmem:[%s1 + $0x228] sm:$0xff]
        %v488 = vld [vmem:[%s1 + $0x230] sm:$0xff]
        %v489 = vld [vmem:[%s1 + $0x238] sm:$0xff]
        %v490 = vld [vmem:[%s1 + $0x240] sm:$0xff]
        %v491 = vld [vmem:[%s1 + $0x248] sm:$0xff]
        %v492 = vld [vmem:[%s1 + $0x250] sm:$0xff]
        %v493 = vld [vmem:[%s1 + $0x258] sm:$0xff]
        %v494 = vld [vmem:[%s1 + $0x260] sm:$0xff]
        %v495 = vld [vmem:[%s1 + $0x268] sm:$0xff]
        %v496 = vld [vmem:[%s1 + $0x270] sm:$0xff]
        %v497 = vld [vmem:[%s1 + $0x278] sm:$0xff]
        %498 = vmatpush.msra.mxu0 %v433
        %499 = vmatpush.msra.mxu0 %v432
        %500 = vmatpush.msra.mxu0 %v431
        %501 = vmatpush.msra.mxu0 %v430
        %502 = vmatpush.msra.mxu0 %v429
        %503 = vmatpush.msra.mxu0 %v428
        %504 = vmatpush.msra.mxu0 %v427
        %505 = vmatpush.msra.mxu0 %v426
        %506 = vmatpush.msra.mxu0 %v425
        %507 = vmatpush.msra.mxu0 %v424
        %508 = vmatpush.msra.mxu0 %v423
        %509 = vmatpush.msra.mxu0 %v422
        %510 = vmatpush.msra.mxu0 %v421
        %511 = vmatpush.msra.mxu0 %v420
        %512 = vmatpush.msra.mxu0 %v419
        %513 = vmatpush.msra.mxu0 %v418
        %514 = vmatmul.f32.gmra.mxu0 %v411
        %v515 = vpop.f32.mrf.mxu0
        %v516 = vadd.f32 0.0, %v515
        %517 = vdwg.mxu0
        %518 = vmatpush.msra.mxu0 %v449
        %519 = vmatpush.msra.mxu0 %v448
        %520 = vmatpush.msra.mxu0 %v447
        %521 = vmatpush.msra.mxu0 %v446
        %522 = vmatpush.msra.mxu0 %v445
        %523 = vmatpush.msra.mxu0 %v444
        %524 = vmatpush.msra.mxu0 %v443
        %525 = vmatpush.msra.mxu0 %v442
        %526 = vmatpush.msra.mxu0 %v441
        %527 = vmatpush.msra.mxu0 %v440
        %528 = vmatpush.msra.mxu0 %v439
        %529 = vmatpush.msra.mxu0 %v438
        %530 = vmatpush.msra.mxu0 %v437
        %531 = vmatpush.msra.mxu0 %v436
        %532 = vmatpush.msra.mxu0 %v435
        %533 = vmatpush.msra.mxu0 %v434
        %534 = vmatmul.f32.gmra.mxu0 %v412
        %v535 = vpop.f32.mrf.mxu0
        %v536 = vadd.f32 %v516, %v535
        %537 = vdwg.mxu0
        %538 = vmatpush.msra.mxu0 %v465
        %539 = vmatpush.msra.mxu0 %v464
        %540 = vmatpush.msra.mxu0 %v463
        %541 = vmatpush.msra.mxu0 %v462
        %542 = vmatpush.msra.mxu0 %v461
        %543 = vmatpush.msra.mxu0 %v460
        %544 = vmatpush.msra.mxu0 %v459
        %545 = vmatpush.msra.mxu0 %v458
        %546 = vmatpush.msra.mxu0 %v457
        %547 = vmatpush.msra.mxu0 %v456
        %548 = vmatpush.msra.mxu0 %v455
        %549 = vmatpush.msra.mxu0 %v454
        %550 = vmatpush.msra.mxu0 %v453
        %551 = vmatpush.msra.mxu0 %v452
        %552 = vmatpush.msra.mxu0 %v451
        %553 = vmatpush.msra.mxu0 %v450
        %554 = vmatmul.f32.gmra.mxu0 %v413
        %v555 = vpop.f32.mrf.mxu0
        %v556 = vadd.f32 %v536, %v555
        %557 = vdwg.mxu0
        %558 = vmatpush.msra.mxu0 %v481
        %559 = vmatpush.msra.mxu0 %v480
        %560 = vmatpush.msra.mxu0 %v479
        %561 = vmatpush.msra.mxu0 %v478
        %562 = vmatpush.msra.mxu0 %v477
        %563 = vmatpush.msra.mxu0 %v476
        %564 = vmatpush.msra.mxu0 %v475
        %565 = vmatpush.msra.mxu0 %v474
        %566 = vmatpush.msra.mxu0 %v473
        %567 = vmatpush.msra.mxu0 %v472
        %568 = vmatpush.msra.mxu0 %v471
        %569 = vmatpush.msra.mxu0 %v470
        %570 = vmatpush.msra.mxu0 %v469
        %571 = vmatpush.msra.mxu0 %v468
        %572 = vmatpush.msra.mxu0 %v467
        %573 = vmatpush.msra.mxu0 %v466
        %574 = vmatmul.f32.gmra.mxu0 %v414
        %v575 = vpop.f32.mrf.mxu0
        %v576 = vadd.f32 %v556, %v575
        %577 = vdwg.mxu0
        %578 = vmatpush.msra.mxu0 %v497
        %579 = vmatpush.msra.mxu0 %v496
        %580 = vmatpush.msra.mxu0 %v495
        %581 = vmatpush.msra.mxu0 %v494
        %582 = vmatpush.msra.mxu0 %v493
        %583 = vmatpush.msra.mxu0 %v492
        %584 = vmatpush.msra.mxu0 %v491
        %585 = vmatpush.msra.mxu0 %v490
        %586 = vmatpush.msra.mxu0 %v489
        %587 = vmatpush.msra.mxu0 %v488
        %588 = vmatpush.msra.mxu0 %v487
        %589 = vmatpush.msra.mxu0 %v486
        %590 = vmatpush.msra.mxu0 %v485
        %591 = vmatpush.msra.mxu0 %v484
        %592 = vmatpush.msra.mxu0 %v483
        %593 = vmatpush.msra.mxu0 %v482
        %594 = vmatmul.f32.gmra.mxu0 %v415
        %v595 = vpop.f32.mrf.mxu0
        %v596 = vadd.f32 %v576, %v595
        %597 = vdwg.mxu0
        %vm598 = vcmask 130048
        %v599 = vsel %vm598, %v596, 0.0
        %v600 = vrot.slane %v599, 4
        %v601 = vadd.f32 %v599, %v600
        %v602 = vrot.slane %v601, 2
        %v603 = vadd.f32 %v601, %v602
        %v604 = vrot.slane %v603, 1
        %v605 = vadd.f32 %v603, %v604
        %v606 = vlaneseq
        %v607 = vshrl.u32 %v606, 7
        %v608 = vadd.s32 %v607, 8
        %v609 = vlaneseq
        %v610 = vand.u32 %v609, 127
        %vm611 = vcmp.eq.s32.totalorder %v607, %v610
        %vm612 = vcmp.eq.s32.totalorder %v608, %v610
        %v613 = vsel %vm611, 1, 0
        %v614 = vsel %vm612, 1, 0
        %v615 = vcvt.s32.f32 %v613
        %v616 = vcvt.s32.f32 %v614
        %v617 = vmul.f32 %v615, %v605
        %v618 = vmul.f32 %v616, %v605
        %v619 = vsel %vm598, %v617, 0.0
        %620 = vadd.xlane.f32.xlu0 %v619
        %v621 = vpop.xlane.xlu0 %620
        %v622 = vsel %vm598, %v618, 0.0
        %623 = vadd.xlane.f32.xlu0 %v622
        %v624 = vpop.xlane.xlu0 %623
        %v625 = vadd.f32 %v621, %v416
        %v626 = vadd.f32 %v624, %v417
        %v627 = vxor.u32 %v625, 2147483648
        %v628 = vxor.u32 %v626, 2147483648
        %v629 = vmul.f32 %v627, 1.442695
        %v630 = vpow.pop %v629
        %v631 = vmul.f32 %v628, 1.442695
        %v632 = vpow.pop %v631
        %v633 = vadd.f32 %v630, 1.0
        %v634 = vadd.f32 %v632, 1.0
        %v635 = vrcp.pop %v633
        %v636 = vmul.f32 %v633, %v635
        %v637 = vsub.f32 1.0, %v636
        %v638 = vmul.f32 %v635, %v637
        %v639 = vadd.f32 %v635, %v638
        %vm640 = vweird.f32 %v633
        %vm641 = vweird.f32 %v635
        %vm642 = vmor %vm640, %vm641
        %v643 = vsel %vm642, %v635, %v639
        %v644 = vand.u32 2147483647, %v633
        %vm645 = vcmp.eq.f32.partialorder %v644, 8.507059e+37
        %v646 = vand.u32 %v633, 2147483648
        %v647 = vor.u32 1.1754944e-38, %v646
        %v648 = vsel %vm645, %v647, %v643
        %v649 = vmul.f32 1.0, %v648
        %v650 = vrcp.pop %v634
        %v651 = vmul.f32 %v634, %v650
        %v652 = vsub.f32 1.0, %v651
        %v653 = vmul.f32 %v650, %v652
        %v654 = vadd.f32 %v650, %v653
        %vm655 = vweird.f32 %v634
        %vm656 = vweird.f32 %v650
        %vm657 = vmor %vm655, %vm656
        %v658 = vsel %vm657, %v650, %v654
        %v659 = vand.u32 2147483647, %v634
        %vm660 = vcmp.eq.f32.partialorder %v659, 8.507059e+37
        %v661 = vand.u32 %v634, 2147483648
        %v662 = vor.u32 1.1754944e-38, %v661
        %v663 = vsel %vm660, %v662, %v658
        %v664 = vmul.f32 1.0, %v663
        %v665 = vld [vmem:[%s2] sm:$0xff]
        %v666 = vld [vmem:[%s2 + $0x8] sm:$0xff]
        %vm667 = vcmask 64512
        %v669 = vsel %vm667, %v665, 0
        %v672 = vsel %vm667, %v666, 0
        %674 = vmatpush.msra.mxu0 0.0
        %675 = vmatpush.msra.mxu0 0.0
        %676 = vmatpush.msra.mxu0 0.0
        %677 = vmatpush.msra.mxu0 0.0
        %678 = vmatpush.msra.mxu0 0.0
        %679 = vmatpush.msra.mxu0 0.0
        %680 = vmatpush.msra.mxu0 0.0
        %681 = vmatpush.msra.mxu0 0.0
        %682 = vmatpush.msra.mxu0 0.0
        %683 = vmatpush.msra.mxu0 0.0
        %684 = vmatpush.msra.mxu0 0.0
        %685 = vmatpush.msra.mxu0 0.0
        %686 = vmatpush.msra.mxu0 0.0
        %687 = vmatpush.msra.mxu0 0.0
        %688 = vmatpush.msra.mxu0 0.0
        %689 = vmatpush.msra.mxu0 %v411
        %690 = vmatmul.f32.gmra.mxu0 %v669
        %v691 = vpop.f32.mrf.mxu0
        %v692 = vadd.f32 0.0, %v691
        %693 = vmatmul.f32.gmra.mxu0 %v672
        %v694 = vpop.f32.mrf.mxu0
        %v695 = vadd.f32 0.0, %v694
        %696 = vdwg.mxu0
        %697 = vmatpush.msra.mxu0 0.0
        %698 = vmatpush.msra.mxu0 0.0
        %699 = vmatpush.msra.mxu0 0.0
        %700 = vmatpush.msra.mxu0 0.0
        %701 = vmatpush.msra.mxu0 0.0
        %702 = vmatpush.msra.mxu0 0.0
        %703 = vmatpush.msra.mxu0 0.0
        %704 = vmatpush.msra.mxu0 0.0
        %705 = vmatpush.msra.mxu0 0.0
        %706 = vmatpush.msra.mxu0 0.0
        %707 = vmatpush.msra.mxu0 0.0
        %708 = vmatpush.msra.mxu0 0.0
        %709 = vmatpush.msra.mxu0 0.0
        %710 = vmatpush.msra.mxu0 0.0
        %711 = vmatpush.msra.mxu0 0.0
        %712 = vmatpush.msra.mxu0 %v412
        %713 = vmatmul.f32.gmra.mxu0 %v669
        %v714 = vpop.f32.mrf.mxu0
        %v715 = vadd.f32 0.0, %v714
        %716 = vmatmul.f32.gmra.mxu0 %v672
        %v717 = vpop.f32.mrf.mxu0
        %v718 = vadd.f32 0.0, %v717
        %719 = vdwg.mxu0
        %720 = vmatpush.msra.mxu0 0.0
        %721 = vmatpush.msra.mxu0 0.0
        %722 = vmatpush.msra.mxu0 0.0
        %723 = vmatpush.msra.mxu0 0.0
        %724 = vmatpush.msra.mxu0 0.0
        %725 = vmatpush.msra.mxu0 0.0
        %726 = vmatpush.msra.mxu0 0.0
        %727 = vmatpush.msra.mxu0 0.0
        %728 = vmatpush.msra.mxu0 0.0
        %729 = vmatpush.msra.mxu0 0.0
        %730 = vmatpush.msra.mxu0 0.0
        %731 = vmatpush.msra.mxu0 0.0
        %732 = vmatpush.msra.mxu0 0.0
        %733 = vmatpush.msra.mxu0 0.0
        %734 = vmatpush.msra.mxu0 0.0
        %735 = vmatpush.msra.mxu0 %v413
        %736 = vmatmul.f32.gmra.mxu0 %v669
        %v737 = vpop.f32.mrf.mxu0
        %v738 = vadd.f32 0.0, %v737
        %739 = vmatmul.f32.gmra.mxu0 %v672
        %v740 = vpop.f32.mrf.mxu0
        %v741 = vadd.f32 0.0, %v740
        %742 = vdwg.mxu0
        %743 = vmatpush.msra.mxu0 0.0
        %744 = vmatpush.msra.mxu0 0.0
        %745 = vmatpush.msra.mxu0 0.0
        %746 = vmatpush.msra.mxu0 0.0
        %747 = vmatpush.msra.mxu0 0.0
        %748 = vmatpush.msra.mxu0 0.0
        %749 = vmatpush.msra.mxu0 0.0
        %750 = vmatpush.msra.mxu0 0.0
        %751 = vmatpush.msra.mxu0 0.0
        %752 = vmatpush.msra.mxu0 0.0
        %753 = vmatpush.msra.mxu0 0.0
        %754 = vmatpush.msra.mxu0 0.0
        %755 = vmatpush.msra.mxu0 0.0
        %756 = vmatpush.msra.mxu0 0.0
        %757 = vmatpush.msra.mxu0 0.0
        %758 = vmatpush.msra.mxu0 %v414
        %759 = vmatmul.f32.gmra.mxu0 %v669
        %v760 = vpop.f32.mrf.mxu0
        %v761 = vadd.f32 0.0, %v760
        %762 = vmatmul.f32.gmra.mxu0 %v672
        %v763 = vpop.f32.mrf.mxu0
        %v764 = vadd.f32 0.0, %v763
        %765 = vdwg.mxu0
        %766 = vmatpush.msra.mxu0 0.0
        %767 = vmatpush.msra.mxu0 0.0
        %768 = vmatpush.msra.mxu0 0.0
        %769 = vmatpush.msra.mxu0 0.0
        %770 = vmatpush.msra.mxu0 0.0
        %771 = vmatpush.msra.mxu0 0.0
        %772 = vmatpush.msra.mxu0 0.0
        %773 = vmatpush.msra.mxu0 0.0
        %774 = vmatpush.msra.mxu0 0.0
        %775 = vmatpush.msra.mxu0 0.0
        %776 = vmatpush.msra.mxu0 0.0
        %777 = vmatpush.msra.mxu0 0.0
        %778 = vmatpush.msra.mxu0 0.0
        %779 = vmatpush.msra.mxu0 0.0
        %780 = vmatpush.msra.mxu0 0.0
        %781 = vmatpush.msra.mxu0 %v415
        %782 = vmatmul.f32.gmra.mxu0 %v669
        %v783 = vpop.f32.mrf.mxu0
        %v784 = vadd.f32 0.0, %v783
        %785 = vmatmul.f32.gmra.mxu0 %v672
        %v786 = vpop.f32.mrf.mxu0
        %v787 = vadd.f32 0.0, %v786
        %788 = vdwg.mxu0
        %v789 = vld [vmem:[%s3] sm:$0xff]
        %v790 = vld [vmem:[%s3 + $0x8] sm:$0xff]
        %792 = vset.pattern.permute.xlu0 0
        %793 = vperm.xlu0 %792, %v789
        %v794 = vpop.permute.xlu0 %793
        %797 = vset.pattern.permute.xlu0 0
        %798 = vperm.xlu0 %797, %v790
        %v799 = vpop.permute.xlu0 %798
        %v801 = vmul.f32 %v794, %v692
        %v802 = vmul.f32 %v794, %v715
        %v803 = vmul.f32 %v794, %v738
        %v804 = vmul.f32 %v794, %v761
        %v805 = vmul.f32 %v794, %v784
        %v806 = vmul.f32 %v799, %v695
        %v807 = vmul.f32 %v799, %v718
        %v808 = vmul.f32 %v799, %v741
        %v809 = vmul.f32 %v799, %v764
        %v810 = vmul.f32 %v799, %v787
        %811 = vset.pattern.permute.xlu0 1
        %812 = vperm.xlu0 %811, %v789
        %v813 = vpop.permute.xlu0 %812
        %815 = vset.pattern.permute.xlu0 1
        %816 = vperm.xlu0 %815, %v790
        %v817 = vpop.permute.xlu0 %816
        %v819 = vmul.f32 %v813, %v692
        %v820 = vmul.f32 %v813, %v715
        %v821 = vmul.f32 %v813, %v738
        %v822 = vmul.f32 %v813, %v761
        %v823 = vmul.f32 %v813, %v784
        %v824 = vmul.f32 %v817, %v695
        %v825 = vmul.f32 %v817, %v718
        %v826 = vmul.f32 %v817, %v741
        %v827 = vmul.f32 %v817, %v764
        %v828 = vmul.f32 %v817, %v787
        %839 = vrot.lane.b32.xlu0 %v819, 127
        %v840 = vpop.permute.xlu0 %839
        %841 = vrot.lane.b32.xlu0 %v820, 127
        %v842 = vpop.permute.xlu0 %841
        %843 = vrot.lane.b32.xlu0 %v821, 127
        %v844 = vpop.permute.xlu0 %843
        %845 = vrot.lane.b32.xlu0 %v822, 127
        %v846 = vpop.permute.xlu0 %845
        %847 = vrot.lane.b32.xlu0 %v823, 127
        %v848 = vpop.permute.xlu0 %847
        %849 = vrot.lane.b32.xlu0 %v824, 127
        %v850 = vpop.permute.xlu0 %849
        %851 = vrot.lane.b32.xlu0 %v825, 127
        %v852 = vpop.permute.xlu0 %851
        %853 = vrot.lane.b32.xlu0 %v826, 127
        %v854 = vpop.permute.xlu0 %853
        %855 = vrot.lane.b32.xlu0 %v827, 127
        %v856 = vpop.permute.xlu0 %855
        %857 = vrot.lane.b32.xlu0 %v828, 127
        %v858 = vpop.permute.xlu0 %857
        %vm859 = vcmask 1039360
        %v860 = vsel %vm859, %v840, %v842
        %v861 = vsel %vm859, %v842, %v844
        %v862 = vsel %vm859, %v844, %v846
        %v863 = vsel %vm859, %v846, %v848
        %v864 = vsel %vm859, %v850, %v852
        %v865 = vsel %vm859, %v852, %v854
        %v866 = vsel %vm859, %v854, %v856
        %v867 = vsel %vm859, %v856, %v858
        %v878 = vadd.f32 %v801, %v860
        %v879 = vadd.f32 %v802, %v861
        %v880 = vadd.f32 %v803, %v862
        %v881 = vadd.f32 %v804, %v863
        %v882 = vadd.f32 %v805, %v848
        %v883 = vadd.f32 %v806, %v864
        %v884 = vadd.f32 %v807, %v865
        %v885 = vadd.f32 %v808, %v866
        %v886 = vadd.f32 %v809, %v867
        %v887 = vadd.f32 %v810, %v858
        %888 = vset.pattern.permute.xlu0 2
        %889 = vperm.xlu0 %888, %v789
        %v890 = vpop.permute.xlu0 %889
        %892 = vset.pattern.permute.xlu0 2
        %893 = vperm.xlu0 %892, %v790
        %v894 = vpop.permute.xlu0 %893
        %v896 = vmul.f32 %v890, %v692
        %v897 = vmul.f32 %v890, %v715
        %v898 = vmul.f32 %v890, %v738
        %v899 = vmul.f32 %v890, %v761
        %v900 = vmul.f32 %v890, %v784
        %v901 = vmul.f32 %v894, %v695
        %v902 = vmul.f32 %v894, %v718
        %v903 = vmul.f32 %v894, %v741
        %v904 = vmul.f32 %v894, %v764
        %v905 = vmul.f32 %v894, %v787
        %916 = vrot.lane.b32.xlu0 %v896, 126
        %v917 = vpop.permute.xlu0 %916
        %918 = vrot.lane.b32.xlu0 %v897, 126
        %v919 = vpop.permute.xlu0 %918
        %920 = vrot.lane.b32.xlu0 %v898, 126
        %v921 = vpop.permute.xlu0 %920
        %922 = vrot.lane.b32.xlu0 %v899, 126
        %v923 = vpop.permute.xlu0 %922
        %924 = vrot.lane.b32.xlu0 %v900, 126
        %v925 = vpop.permute.xlu0 %924
        %926 = vrot.lane.b32.xlu0 %v901, 126
        %v927 = vpop.permute.xlu0 %926
        %928 = vrot.lane.b32.xlu0 %v902, 126
        %v929 = vpop.permute.xlu0 %928
        %930 = vrot.lane.b32.xlu0 %v903, 126
        %v931 = vpop.permute.xlu0 %930
        %932 = vrot.lane.b32.xlu0 %v904, 126
        %v933 = vpop.permute.xlu0 %932
        %934 = vrot.lane.b32.xlu0 %v905, 126
        %v935 = vpop.permute.xlu0 %934
        %vm936 = vcmask 1031168
        %v937 = vsel %vm936, %v917, %v919
        %v938 = vsel %vm936, %v919, %v921
        %v939 = vsel %vm936, %v921, %v923
        %v940 = vsel %vm936, %v923, %v925
        %v941 = vsel %vm936, %v927, %v929
        %v942 = vsel %vm936, %v929, %v931
        %v943 = vsel %vm936, %v931, %v933
        %v944 = vsel %vm936, %v933, %v935
        %v955 = vadd.f32 %v878, %v937
        %v956 = vadd.f32 %v879, %v938
        %v957 = vadd.f32 %v880, %v939
        %v958 = vadd.f32 %v881, %v940
        %v959 = vadd.f32 %v882, %v925
        %v960 = vadd.f32 %v883, %v941
        %v961 = vadd.f32 %v884, %v942
        %v962 = vadd.f32 %v885, %v943
        %v963 = vadd.f32 %v886, %v944
        %v964 = vadd.f32 %v887, %v935
        %965 = vset.pattern.permute.xlu0 3
        %966 = vperm.xlu0 %965, %v789
        %v967 = vpop.permute.xlu0 %966
        %969 = vset.pattern.permute.xlu0 3
        %970 = vperm.xlu0 %969, %v790
        %v971 = vpop.permute.xlu0 %970
        %v973 = vmul.f32 %v967, %v692
        %v974 = vmul.f32 %v967, %v715
        %v975 = vmul.f32 %v967, %v738
        %v976 = vmul.f32 %v967, %v761
        %v977 = vmul.f32 %v967, %v784
        %v978 = vmul.f32 %v971, %v695
        %v979 = vmul.f32 %v971, %v718
        %v980 = vmul.f32 %v971, %v741
        %v981 = vmul.f32 %v971, %v764
        %v982 = vmul.f32 %v971, %v787
        %993 = vrot.lane.b32.xlu0 %v973, 125
        %v994 = vpop.permute.xlu0 %993
        %995 = vrot.lane.b32.xlu0 %v974, 125
        %v996 = vpop.permute.xlu0 %995
        %997 = vrot.lane.b32.xlu0 %v975, 125
        %v998 = vpop.permute.xlu0 %997
        %999 = vrot.lane.b32.xlu0 %v976, 125
        %v1000 = vpop.permute.xlu0 %999
        %1001 = vrot.lane.b32.xlu0 %v977, 125
        %v1002 = vpop.permute.xlu0 %1001
        %1003 = vrot.lane.b32.xlu0 %v978, 125
        %v1004 = vpop.permute.xlu0 %1003
        %1005 = vrot.lane.b32.xlu0 %v979, 125
        %v1006 = vpop.permute.xlu0 %1005
        %1007 = vrot.lane.b32.xlu0 %v980, 125
        %v1008 = vpop.permute.xlu0 %1007
        %1009 = vrot.lane.b32.xlu0 %v981, 125
        %v1010 = vpop.permute.xlu0 %1009
        %1011 = vrot.lane.b32.xlu0 %v982, 125
        %v1012 = vpop.permute.xlu0 %1011
        %vm1013 = vcmask 1022976
        %v1014 = vsel %vm1013, %v994, %v996
        %v1015 = vsel %vm1013, %v996, %v998
        %v1016 = vsel %vm1013, %v998, %v1000
        %v1017 = vsel %vm1013, %v1000, %v1002
        %v1018 = vsel %vm1013, %v1004, %v1006
        %v1019 = vsel %vm1013, %v1006, %v1008
        %v1020 = vsel %vm1013, %v1008, %v1010
        %v1021 = vsel %vm1013, %v1010, %v1012
        %v1032 = vadd.f32 %v955, %v1014
        %v1033 = vadd.f32 %v956, %v1015
        %v1034 = vadd.f32 %v957, %v1016
        %v1035 = vadd.f32 %v958, %v1017
        %v1036 = vadd.f32 %v959, %v1002
        %v1037 = vadd.f32 %v960, %v1018
        %v1038 = vadd.f32 %v961, %v1019
        %v1039 = vadd.f32 %v962, %v1020
        %v1040 = vadd.f32 %v963, %v1021
        %v1041 = vadd.f32 %v964, %v1012
        %1042 = vset.pattern.permute.xlu0 4
        %1043 = vperm.xlu0 %1042, %v789
        %v1044 = vpop.permute.xlu0 %1043
        %1046 = vset.pattern.permute.xlu0 4
        %1047 = vperm.xlu0 %1046, %v790
        %v1048 = vpop.permute.xlu0 %1047
        %v1050 = vmul.f32 %v1044, %v692
        %v1051 = vmul.f32 %v1044, %v715
        %v1052 = vmul.f32 %v1044, %v738
        %v1053 = vmul.f32 %v1044, %v761
        %v1054 = vmul.f32 %v1044, %v784
        %v1055 = vmul.f32 %v1048, %v695
        %v1056 = vmul.f32 %v1048, %v718
        %v1057 = vmul.f32 %v1048, %v741
        %v1058 = vmul.f32 %v1048, %v764
        %v1059 = vmul.f32 %v1048, %v787
        %1070 = vrot.lane.b32.xlu0 %v1050, 124
        %v1071 = vpop.permute.xlu0 %1070
        %1072 = vrot.lane.b32.xlu0 %v1051, 124
        %v1073 = vpop.permute.xlu0 %1072
        %1074 = vrot.lane.b32.xlu0 %v1052, 124
        %v1075 = vpop.permute.xlu0 %1074
        %1076 = vrot.lane.b32.xlu0 %v1053, 124
        %v1077 = vpop.permute.xlu0 %1076
        %1078 = vrot.lane.b32.xlu0 %v1054, 124
        %v1079 = vpop.permute.xlu0 %1078
        %1080 = vrot.lane.b32.xlu0 %v1055, 124
        %v1081 = vpop.permute.xlu0 %1080
        %1082 = vrot.lane.b32.xlu0 %v1056, 124
        %v1083 = vpop.permute.xlu0 %1082
        %1084 = vrot.lane.b32.xlu0 %v1057, 124
        %v1085 = vpop.permute.xlu0 %1084
        %1086 = vrot.lane.b32.xlu0 %v1058, 124
        %v1087 = vpop.permute.xlu0 %1086
        %1088 = vrot.lane.b32.xlu0 %v1059, 124
        %v1089 = vpop.permute.xlu0 %1088
        %vm1090 = vcmask 1014784
        %v1091 = vsel %vm1090, %v1071, %v1073
        %v1092 = vsel %vm1090, %v1073, %v1075
        %v1093 = vsel %vm1090, %v1075, %v1077
        %v1094 = vsel %vm1090, %v1077, %v1079
        %v1095 = vsel %vm1090, %v1081, %v1083
        %v1096 = vsel %vm1090, %v1083, %v1085
        %v1097 = vsel %vm1090, %v1085, %v1087
        %v1098 = vsel %vm1090, %v1087, %v1089
        %v1109 = vadd.f32 %v1032, %v1091
        %v1110 = vadd.f32 %v1033, %v1092
        %v1111 = vadd.f32 %v1034, %v1093
        %v1112 = vadd.f32 %v1035, %v1094
        %v1113 = vadd.f32 %v1036, %v1079
        %v1114 = vadd.f32 %v1037, %v1095
        %v1115 = vadd.f32 %v1038, %v1096
        %v1116 = vadd.f32 %v1039, %v1097
        %v1117 = vadd.f32 %v1040, %v1098
        %v1118 = vadd.f32 %v1041, %v1089
        %1119 = vset.pattern.permute.xlu0 5
        %1120 = vperm.xlu0 %1119, %v789
        %v1121 = vpop.permute.xlu0 %1120
        %1123 = vset.pattern.permute.xlu0 5
        %1124 = vperm.xlu0 %1123, %v790
        %v1125 = vpop.permute.xlu0 %1124
        %v1127 = vmul.f32 %v1121, %v692
        %v1128 = vmul.f32 %v1121, %v715
        %v1129 = vmul.f32 %v1121, %v738
        %v1130 = vmul.f32 %v1121, %v761
        %v1131 = vmul.f32 %v1121, %v784
        %v1132 = vmul.f32 %v1125, %v695
        %v1133 = vmul.f32 %v1125, %v718
        %v1134 = vmul.f32 %v1125, %v741
        %v1135 = vmul.f32 %v1125, %v764
        %v1136 = vmul.f32 %v1125, %v787
        %1147 = vrot.lane.b32.xlu0 %v1127, 123
        %v1148 = vpop.permute.xlu0 %1147
        %1149 = vrot.lane.b32.xlu0 %v1128, 123
        %v1150 = vpop.permute.xlu0 %1149
        %1151 = vrot.lane.b32.xlu0 %v1129, 123
        %v1152 = vpop.permute.xlu0 %1151
        %1153 = vrot.lane.b32.xlu0 %v1130, 123
        %v1154 = vpop.permute.xlu0 %1153
        %1155 = vrot.lane.b32.xlu0 %v1131, 123
        %v1156 = vpop.permute.xlu0 %1155
        %1157 = vrot.lane.b32.xlu0 %v1132, 123
        %v1158 = vpop.permute.xlu0 %1157
        %1159 = vrot.lane.b32.xlu0 %v1133, 123
        %v1160 = vpop.permute.xlu0 %1159
        %1161 = vrot.lane.b32.xlu0 %v1134, 123
        %v1162 = vpop.permute.xlu0 %1161
        %1163 = vrot.lane.b32.xlu0 %v1135, 123
        %v1164 = vpop.permute.xlu0 %1163
        %1165 = vrot.lane.b32.xlu0 %v1136, 123
        %v1166 = vpop.permute.xlu0 %1165
        %vm1167 = vcmask 1006592
        %v1168 = vsel %vm1167, %v1148, %v1150
        %v1169 = vsel %vm1167, %v1150, %v1152
        %v1170 = vsel %vm1167, %v1152, %v1154
        %v1171 = vsel %vm1167, %v1154, %v1156
        %v1172 = vsel %vm1167, %v1158, %v1160
        %v1173 = vsel %vm1167, %v1160, %v1162
        %v1174 = vsel %vm1167, %v1162, %v1164
        %v1175 = vsel %vm1167, %v1164, %v1166
        %v1186 = vadd.f32 %v1109, %v1168
        %v1187 = vadd.f32 %v1110, %v1169
        %v1188 = vadd.f32 %v1111, %v1170
        %v1189 = vadd.f32 %v1112, %v1171
        %v1190 = vadd.f32 %v1113, %v1156
        %v1191 = vadd.f32 %v1114, %v1172
        %v1192 = vadd.f32 %v1115, %v1173
        %v1193 = vadd.f32 %v1116, %v1174
        %v1194 = vadd.f32 %v1117, %v1175
        %v1195 = vadd.f32 %v1118, %v1166
        %1196 = vset.pattern.permute.xlu0 6
        %1197 = vperm.xlu0 %1196, %v789
        %v1198 = vpop.permute.xlu0 %1197
        %1200 = vset.pattern.permute.xlu0 6
        %1201 = vperm.xlu0 %1200, %v790
        %v1202 = vpop.permute.xlu0 %1201
        %v1204 = vmul.f32 %v1198, %v692
        %v1205 = vmul.f32 %v1198, %v715
        %v1206 = vmul.f32 %v1198, %v738
        %v1207 = vmul.f32 %v1198, %v761
        %v1208 = vmul.f32 %v1198, %v784
        %v1209 = vmul.f32 %v1202, %v695
        %v1210 = vmul.f32 %v1202, %v718
        %v1211 = vmul.f32 %v1202, %v741
        %v1212 = vmul.f32 %v1202, %v764
        %v1213 = vmul.f32 %v1202, %v787
        %1224 = vrot.lane.b32.xlu0 %v1204, 122
        %v1225 = vpop.permute.xlu0 %1224
        %1226 = vrot.lane.b32.xlu0 %v1205, 122
        %v1227 = vpop.permute.xlu0 %1226
        %1228 = vrot.lane.b32.xlu0 %v1206, 122
        %v1229 = vpop.permute.xlu0 %1228
        %1230 = vrot.lane.b32.xlu0 %v1207, 122
        %v1231 = vpop.permute.xlu0 %1230
        %1232 = vrot.lane.b32.xlu0 %v1208, 122
        %v1233 = vpop.permute.xlu0 %1232
        %1234 = vrot.lane.b32.xlu0 %v1209, 122
        %v1235 = vpop.permute.xlu0 %1234
        %1236 = vrot.lane.b32.xlu0 %v1210, 122
        %v1237 = vpop.permute.xlu0 %1236
        %1238 = vrot.lane.b32.xlu0 %v1211, 122
        %v1239 = vpop.permute.xlu0 %1238
        %1240 = vrot.lane.b32.xlu0 %v1212, 122
        %v1241 = vpop.permute.xlu0 %1240
        %1242 = vrot.lane.b32.xlu0 %v1213, 122
        %v1243 = vpop.permute.xlu0 %1242
        %vm1244 = vcmask 998400
        %v1245 = vsel %vm1244, %v1225, %v1227
        %v1246 = vsel %vm1244, %v1227, %v1229
        %v1247 = vsel %vm1244, %v1229, %v1231
        %v1248 = vsel %vm1244, %v1231, %v1233
        %v1249 = vsel %vm1244, %v1235, %v1237
        %v1250 = vsel %vm1244, %v1237, %v1239
        %v1251 = vsel %vm1244, %v1239, %v1241
        %v1252 = vsel %vm1244, %v1241, %v1243
        %v1263 = vadd.f32 %v1186, %v1245
        %v1264 = vadd.f32 %v1187, %v1246
        %v1265 = vadd.f32 %v1188, %v1247
        %v1266 = vadd.f32 %v1189, %v1248
        %v1267 = vadd.f32 %v1190, %v1233
        %v1268 = vadd.f32 %v1191, %v1249
        %v1269 = vadd.f32 %v1192, %v1250
        %v1270 = vadd.f32 %v1193, %v1251
        %v1271 = vadd.f32 %v1194, %v1252
        %v1272 = vadd.f32 %v1195, %v1243
        %1273 = vset.pattern.permute.xlu0 7
        %1274 = vperm.xlu0 %1273, %v789
        %v1275 = vpop.permute.xlu0 %1274
        %1277 = vset.pattern.permute.xlu0 7
        %1278 = vperm.xlu0 %1277, %v790
        %v1279 = vpop.permute.xlu0 %1278
        %v1281 = vmul.f32 %v1275, %v692
        %v1282 = vmul.f32 %v1275, %v715
        %v1283 = vmul.f32 %v1275, %v738
        %v1284 = vmul.f32 %v1275, %v761
        %v1285 = vmul.f32 %v1275, %v784
        %v1286 = vmul.f32 %v1279, %v695
        %v1287 = vmul.f32 %v1279, %v718
        %v1288 = vmul.f32 %v1279, %v741
        %v1289 = vmul.f32 %v1279, %v764
        %v1290 = vmul.f32 %v1279, %v787
        %1301 = vrot.lane.b32.xlu0 %v1281, 121
        %v1302 = vpop.permute.xlu0 %1301
        %1303 = vrot.lane.b32.xlu0 %v1282, 121
        %v1304 = vpop.permute.xlu0 %1303
        %1305 = vrot.lane.b32.xlu0 %v1283, 121
        %v1306 = vpop.permute.xlu0 %1305
        %1307 = vrot.lane.b32.xlu0 %v1284, 121
        %v1308 = vpop.permute.xlu0 %1307
        %1309 = vrot.lane.b32.xlu0 %v1285, 121
        %v1310 = vpop.permute.xlu0 %1309
        %1311 = vrot.lane.b32.xlu0 %v1286, 121
        %v1312 = vpop.permute.xlu0 %1311
        %1313 = vrot.lane.b32.xlu0 %v1287, 121
        %v1314 = vpop.permute.xlu0 %1313
        %1315 = vrot.lane.b32.xlu0 %v1288, 121
        %v1316 = vpop.permute.xlu0 %1315
        %1317 = vrot.lane.b32.xlu0 %v1289, 121
        %v1318 = vpop.permute.xlu0 %1317
        %1319 = vrot.lane.b32.xlu0 %v1290, 121
        %v1320 = vpop.permute.xlu0 %1319
        %vm1321 = vcmask 990208
        %v1322 = vsel %vm1321, %v1302, %v1304
        %v1323 = vsel %vm1321, %v1304, %v1306
        %v1324 = vsel %vm1321, %v1306, %v1308
        %v1325 = vsel %vm1321, %v1308, %v1310
        %v1326 = vsel %vm1321, %v1312, %v1314
        %v1327 = vsel %vm1321, %v1314, %v1316
        %v1328 = vsel %vm1321, %v1316, %v1318
        %v1329 = vsel %vm1321, %v1318, %v1320
        %v1340 = vadd.f32 %v1263, %v1322
        %v1341 = vadd.f32 %v1264, %v1323
        %v1342 = vadd.f32 %v1265, %v1324
        %v1343 = vadd.f32 %v1266, %v1325
        %v1344 = vadd.f32 %v1267, %v1310
        %v1345 = vadd.f32 %v1268, %v1326
        %v1346 = vadd.f32 %v1269, %v1327
        %v1347 = vadd.f32 %v1270, %v1328
        %v1348 = vadd.f32 %v1271, %v1329
        %v1349 = vadd.f32 %v1272, %v1320
        %1350 = vset.pattern.permute.xlu0 8
        %1351 = vperm.xlu0 %1350, %v789
        %v1352 = vpop.permute.xlu0 %1351
        %1354 = vset.pattern.permute.xlu0 8
        %1355 = vperm.xlu0 %1354, %v790
        %v1356 = vpop.permute.xlu0 %1355
        %v1358 = vmul.f32 %v1352, %v692
        %v1359 = vmul.f32 %v1352, %v715
        %v1360 = vmul.f32 %v1352, %v738
        %v1361 = vmul.f32 %v1352, %v761
        %v1362 = vmul.f32 %v1352, %v784
        %v1363 = vmul.f32 %v1356, %v695
        %v1364 = vmul.f32 %v1356, %v718
        %v1365 = vmul.f32 %v1356, %v741
        %v1366 = vmul.f32 %v1356, %v764
        %v1367 = vmul.f32 %v1356, %v787
        %1378 = vrot.lane.b32.xlu0 %v1358, 120
        %v1379 = vpop.permute.xlu0 %1378
        %1380 = vrot.lane.b32.xlu0 %v1359, 120
        %v1381 = vpop.permute.xlu0 %1380
        %1382 = vrot.lane.b32.xlu0 %v1360, 120
        %v1383 = vpop.permute.xlu0 %1382
        %1384 = vrot.lane.b32.xlu0 %v1361, 120
        %v1385 = vpop.permute.xlu0 %1384
        %1386 = vrot.lane.b32.xlu0 %v1362, 120
        %v1387 = vpop.permute.xlu0 %1386
        %1388 = vrot.lane.b32.xlu0 %v1363, 120
        %v1389 = vpop.permute.xlu0 %1388
        %1390 = vrot.lane.b32.xlu0 %v1364, 120
        %v1391 = vpop.permute.xlu0 %1390
        %1392 = vrot.lane.b32.xlu0 %v1365, 120
        %v1393 = vpop.permute.xlu0 %1392
        %1394 = vrot.lane.b32.xlu0 %v1366, 120
        %v1395 = vpop.permute.xlu0 %1394
        %1396 = vrot.lane.b32.xlu0 %v1367, 120
        %v1397 = vpop.permute.xlu0 %1396
        %vm1398 = vcmask 982016
        %v1399 = vsel %vm1398, %v1379, %v1381
        %v1400 = vsel %vm1398, %v1381, %v1383
        %v1401 = vsel %vm1398, %v1383, %v1385
        %v1402 = vsel %vm1398, %v1385, %v1387
        %v1403 = vsel %vm1398, %v1389, %v1391
        %v1404 = vsel %vm1398, %v1391, %v1393
        %v1405 = vsel %vm1398, %v1393, %v1395
        %v1406 = vsel %vm1398, %v1395, %v1397
        %v1417 = vadd.f32 %v1340, %v1399
        %v1418 = vadd.f32 %v1341, %v1400
        %v1419 = vadd.f32 %v1342, %v1401
        %v1420 = vadd.f32 %v1343, %v1402
        %v1421 = vadd.f32 %v1344, %v1387
        %v1422 = vadd.f32 %v1345, %v1403
        %v1423 = vadd.f32 %v1346, %v1404
        %v1424 = vadd.f32 %v1347, %v1405
        %v1425 = vadd.f32 %v1348, %v1406
        %v1426 = vadd.f32 %v1349, %v1397
        %1427 = vset.pattern.permute.xlu0 9
        %1428 = vperm.xlu0 %1427, %v789
        %v1429 = vpop.permute.xlu0 %1428
        %1431 = vset.pattern.permute.xlu0 9
        %1432 = vperm.xlu0 %1431, %v790
        %v1433 = vpop.permute.xlu0 %1432
        %v1435 = vmul.f32 %v1429, %v692
        %v1436 = vmul.f32 %v1429, %v715
        %v1437 = vmul.f32 %v1429, %v738
        %v1438 = vmul.f32 %v1429, %v761
        %v1439 = vmul.f32 %v1429, %v784
        %v1440 = vmul.f32 %v1433, %v695
        %v1441 = vmul.f32 %v1433, %v718
        %v1442 = vmul.f32 %v1433, %v741
        %v1443 = vmul.f32 %v1433, %v764
        %v1444 = vmul.f32 %v1433, %v787
        %1455 = vrot.lane.b32.xlu0 %v1435, 119
        %v1456 = vpop.permute.xlu0 %1455
        %1457 = vrot.lane.b32.xlu0 %v1436, 119
        %v1458 = vpop.permute.xlu0 %1457
        %1459 = vrot.lane.b32.xlu0 %v1437, 119
        %v1460 = vpop.permute.xlu0 %1459
        %1461 = vrot.lane.b32.xlu0 %v1438, 119
        %v1462 = vpop.permute.xlu0 %1461
        %1463 = vrot.lane.b32.xlu0 %v1439, 119
        %v1464 = vpop.permute.xlu0 %1463
        %1465 = vrot.lane.b32.xlu0 %v1440, 119
        %v1466 = vpop.permute.xlu0 %1465
        %1467 = vrot.lane.b32.xlu0 %v1441, 119
        %v1468 = vpop.permute.xlu0 %1467
        %1469 = vrot.lane.b32.xlu0 %v1442, 119
        %v1470 = vpop.permute.xlu0 %1469
        %1471 = vrot.lane.b32.xlu0 %v1443, 119
        %v1472 = vpop.permute.xlu0 %1471
        %1473 = vrot.lane.b32.xlu0 %v1444, 119
        %v1474 = vpop.permute.xlu0 %1473
        %vm1475 = vcmask 973824
        %v1476 = vsel %vm1475, %v1456, %v1458
        %v1477 = vsel %vm1475, %v1458, %v1460
        %v1478 = vsel %vm1475, %v1460, %v1462
        %v1479 = vsel %vm1475, %v1462, %v1464
        %v1480 = vsel %vm1475, %v1466, %v1468
        %v1481 = vsel %vm1475, %v1468, %v1470
        %v1482 = vsel %vm1475, %v1470, %v1472
        %v1483 = vsel %vm1475, %v1472, %v1474
        %v1494 = vadd.f32 %v1417, %v1476
        %v1495 = vadd.f32 %v1418, %v1477
        %v1496 = vadd.f32 %v1419, %v1478
        %v1497 = vadd.f32 %v1420, %v1479
        %v1498 = vadd.f32 %v1421, %v1464
        %v1499 = vadd.f32 %v1422, %v1480
        %v1500 = vadd.f32 %v1423, %v1481
        %v1501 = vadd.f32 %v1424, %v1482
        %v1502 = vadd.f32 %v1425, %v1483
        %v1503 = vadd.f32 %v1426, %v1474
        %1504 = vset.pattern.permute.xlu0 10
        %1505 = vperm.xlu0 %1504, %v789
        %v1506 = vpop.permute.xlu0 %1505
        %1508 = vset.pattern.permute.xlu0 10
        %1509 = vperm.xlu0 %1508, %v790
        %v1510 = vpop.permute.xlu0 %1509
        %v1512 = vmul.f32 %v1506, %v692
        %v1513 = vmul.f32 %v1506, %v715
        %v1514 = vmul.f32 %v1506, %v738
        %v1515 = vmul.f32 %v1506, %v761
        %v1516 = vmul.f32 %v1506, %v784
        %v1517 = vmul.f32 %v1510, %v695
        %v1518 = vmul.f32 %v1510, %v718
        %v1519 = vmul.f32 %v1510, %v741
        %v1520 = vmul.f32 %v1510, %v764
        %v1521 = vmul.f32 %v1510, %v787
        %1532 = vrot.lane.b32.xlu0 %v1512, 118
        %v1533 = vpop.permute.xlu0 %1532
        %1534 = vrot.lane.b32.xlu0 %v1513, 118
        %v1535 = vpop.permute.xlu0 %1534
        %1536 = vrot.lane.b32.xlu0 %v1514, 118
        %v1537 = vpop.permute.xlu0 %1536
        %1538 = vrot.lane.b32.xlu0 %v1515, 118
        %v1539 = vpop.permute.xlu0 %1538
        %1540 = vrot.lane.b32.xlu0 %v1516, 118
        %v1541 = vpop.permute.xlu0 %1540
        %1542 = vrot.lane.b32.xlu0 %v1517, 118
        %v1543 = vpop.permute.xlu0 %1542
        %1544 = vrot.lane.b32.xlu0 %v1518, 118
        %v1545 = vpop.permute.xlu0 %1544
        %1546 = vrot.lane.b32.xlu0 %v1519, 118
        %v1547 = vpop.permute.xlu0 %1546
        %1548 = vrot.lane.b32.xlu0 %v1520, 118
        %v1549 = vpop.permute.xlu0 %1548
        %1550 = vrot.lane.b32.xlu0 %v1521, 118
        %v1551 = vpop.permute.xlu0 %1550
        %vm1552 = vcmask 965632
        %v1553 = vsel %vm1552, %v1533, %v1535
        %v1554 = vsel %vm1552, %v1535, %v1537
        %v1555 = vsel %vm1552, %v1537, %v1539
        %v1556 = vsel %vm1552, %v1539, %v1541
        %v1557 = vsel %vm1552, %v1543, %v1545
        %v1558 = vsel %vm1552, %v1545, %v1547
        %v1559 = vsel %vm1552, %v1547, %v1549
        %v1560 = vsel %vm1552, %v1549, %v1551
        %v1571 = vadd.f32 %v1494, %v1553
        %v1572 = vadd.f32 %v1495, %v1554
        %v1573 = vadd.f32 %v1496, %v1555
        %v1574 = vadd.f32 %v1497, %v1556
        %v1575 = vadd.f32 %v1498, %v1541
        %v1576 = vadd.f32 %v1499, %v1557
        %v1577 = vadd.f32 %v1500, %v1558
        %v1578 = vadd.f32 %v1501, %v1559
        %v1579 = vadd.f32 %v1502, %v1560
        %v1580 = vadd.f32 %v1503, %v1551
        %1581 = vset.pattern.permute.xlu0 11
        %1582 = vperm.xlu0 %1581, %v789
        %v1583 = vpop.permute.xlu0 %1582
        %1585 = vset.pattern.permute.xlu0 11
        %1586 = vperm.xlu0 %1585, %v790
        %v1587 = vpop.permute.xlu0 %1586
        %v1589 = vmul.f32 %v1583, %v692
        %v1590 = vmul.f32 %v1583, %v715
        %v1591 = vmul.f32 %v1583, %v738
        %v1592 = vmul.f32 %v1583, %v761
        %v1593 = vmul.f32 %v1583, %v784
        %v1594 = vmul.f32 %v1587, %v695
        %v1595 = vmul.f32 %v1587, %v718
        %v1596 = vmul.f32 %v1587, %v741
        %v1597 = vmul.f32 %v1587, %v764
        %v1598 = vmul.f32 %v1587, %v787
        %1609 = vrot.lane.b32.xlu0 %v1589, 117
        %v1610 = vpop.permute.xlu0 %1609
        %1611 = vrot.lane.b32.xlu0 %v1590, 117
        %v1612 = vpop.permute.xlu0 %1611
        %1613 = vrot.lane.b32.xlu0 %v1591, 117
        %v1614 = vpop.permute.xlu0 %1613
        %1615 = vrot.lane.b32.xlu0 %v1592, 117
        %v1616 = vpop.permute.xlu0 %1615
        %1617 = vrot.lane.b32.xlu0 %v1593, 117
        %v1618 = vpop.permute.xlu0 %1617
        %1619 = vrot.lane.b32.xlu0 %v1594, 117
        %v1620 = vpop.permute.xlu0 %1619
        %1621 = vrot.lane.b32.xlu0 %v1595, 117
        %v1622 = vpop.permute.xlu0 %1621
        %1623 = vrot.lane.b32.xlu0 %v1596, 117
        %v1624 = vpop.permute.xlu0 %1623
        %1625 = vrot.lane.b32.xlu0 %v1597, 117
        %v1626 = vpop.permute.xlu0 %1625
        %1627 = vrot.lane.b32.xlu0 %v1598, 117
        %v1628 = vpop.permute.xlu0 %1627
        %vm1629 = vcmask 957440
        %v1630 = vsel %vm1629, %v1610, %v1612
        %v1631 = vsel %vm1629, %v1612, %v1614
        %v1632 = vsel %vm1629, %v1614, %v1616
        %v1633 = vsel %vm1629, %v1616, %v1618
        %v1634 = vsel %vm1629, %v1620, %v1622
        %v1635 = vsel %vm1629, %v1622, %v1624
        %v1636 = vsel %vm1629, %v1624, %v1626
        %v1637 = vsel %vm1629, %v1626, %v1628
        %v1648 = vadd.f32 %v1571, %v1630
        %v1649 = vadd.f32 %v1572, %v1631
        %v1650 = vadd.f32 %v1573, %v1632
        %v1651 = vadd.f32 %v1574, %v1633
        %v1652 = vadd.f32 %v1575, %v1618
        %v1653 = vadd.f32 %v1576, %v1634
        %v1654 = vadd.f32 %v1577, %v1635
        %v1655 = vadd.f32 %v1578, %v1636
        %v1656 = vadd.f32 %v1579, %v1637
        %v1657 = vadd.f32 %v1580, %v1628
        %1658 = vset.pattern.permute.xlu0 12
        %1659 = vperm.xlu0 %1658, %v789
        %v1660 = vpop.permute.xlu0 %1659
        %1662 = vset.pattern.permute.xlu0 12
        %1663 = vperm.xlu0 %1662, %v790
        %v1664 = vpop.permute.xlu0 %1663
        %v1666 = vmul.f32 %v1660, %v692
        %v1667 = vmul.f32 %v1660, %v715
        %v1668 = vmul.f32 %v1660, %v738
        %v1669 = vmul.f32 %v1660, %v761
        %v1670 = vmul.f32 %v1660, %v784
        %v1671 = vmul.f32 %v1664, %v695
        %v1672 = vmul.f32 %v1664, %v718
        %v1673 = vmul.f32 %v1664, %v741
        %v1674 = vmul.f32 %v1664, %v764
        %v1675 = vmul.f32 %v1664, %v787
        %1686 = vrot.lane.b32.xlu0 %v1666, 116
        %v1687 = vpop.permute.xlu0 %1686
        %1688 = vrot.lane.b32.xlu0 %v1667, 116
        %v1689 = vpop.permute.xlu0 %1688
        %1690 = vrot.lane.b32.xlu0 %v1668, 116
        %v1691 = vpop.permute.xlu0 %1690
        %1692 = vrot.lane.b32.xlu0 %v1669, 116
        %v1693 = vpop.permute.xlu0 %1692
        %1694 = vrot.lane.b32.xlu0 %v1670, 116
        %v1695 = vpop.permute.xlu0 %1694
        %1696 = vrot.lane.b32.xlu0 %v1671, 116
        %v1697 = vpop.permute.xlu0 %1696
        %1698 = vrot.lane.b32.xlu0 %v1672, 116
        %v1699 = vpop.permute.xlu0 %1698
        %1700 = vrot.lane.b32.xlu0 %v1673, 116
        %v1701 = vpop.permute.xlu0 %1700
        %1702 = vrot.lane.b32.xlu0 %v1674, 116
        %v1703 = vpop.permute.xlu0 %1702
        %1704 = vrot.lane.b32.xlu0 %v1675, 116
        %v1705 = vpop.permute.xlu0 %1704
        %vm1706 = vcmask 949248
        %v1707 = vsel %vm1706, %v1687, %v1689
        %v1708 = vsel %vm1706, %v1689, %v1691
        %v1709 = vsel %vm1706, %v1691, %v1693
        %v1710 = vsel %vm1706, %v1693, %v1695
        %v1711 = vsel %vm1706, %v1697, %v1699
        %v1712 = vsel %vm1706, %v1699, %v1701
        %v1713 = vsel %vm1706, %v1701, %v1703
        %v1714 = vsel %vm1706, %v1703, %v1705
        %v1725 = vadd.f32 %v1648, %v1707
        %v1726 = vadd.f32 %v1649, %v1708
        %v1727 = vadd.f32 %v1650, %v1709
        %v1728 = vadd.f32 %v1651, %v1710
        %v1729 = vadd.f32 %v1652, %v1695
        %v1730 = vadd.f32 %v1653, %v1711
        %v1731 = vadd.f32 %v1654, %v1712
        %v1732 = vadd.f32 %v1655, %v1713
        %v1733 = vadd.f32 %v1656, %v1714
        %v1734 = vadd.f32 %v1657, %v1705
        %1735 = vset.pattern.permute.xlu0 13
        %1736 = vperm.xlu0 %1735, %v789
        %v1737 = vpop.permute.xlu0 %1736
        %1739 = vset.pattern.permute.xlu0 13
        %1740 = vperm.xlu0 %1739, %v790
        %v1741 = vpop.permute.xlu0 %1740
        %v1743 = vmul.f32 %v1737, %v692
        %v1744 = vmul.f32 %v1737, %v715
        %v1745 = vmul.f32 %v1737, %v738
        %v1746 = vmul.f32 %v1737, %v761
        %v1747 = vmul.f32 %v1737, %v784
        %v1748 = vmul.f32 %v1741, %v695
        %v1749 = vmul.f32 %v1741, %v718
        %v1750 = vmul.f32 %v1741, %v741
        %v1751 = vmul.f32 %v1741, %v764
        %v1752 = vmul.f32 %v1741, %v787
        %1763 = vrot.lane.b32.xlu0 %v1743, 115
        %v1764 = vpop.permute.xlu0 %1763
        %1765 = vrot.lane.b32.xlu0 %v1744, 115
        %v1766 = vpop.permute.xlu0 %1765
        %1767 = vrot.lane.b32.xlu0 %v1745, 115
        %v1768 = vpop.permute.xlu0 %1767
        %1769 = vrot.lane.b32.xlu0 %v1746, 115
        %v1770 = vpop.permute.xlu0 %1769
        %1771 = vrot.lane.b32.xlu0 %v1747, 115
        %v1772 = vpop.permute.xlu0 %1771
        %1773 = vrot.lane.b32.xlu0 %v1748, 115
        %v1774 = vpop.permute.xlu0 %1773
        %1775 = vrot.lane.b32.xlu0 %v1749, 115
        %v1776 = vpop.permute.xlu0 %1775
        %1777 = vrot.lane.b32.xlu0 %v1750, 115
        %v1778 = vpop.permute.xlu0 %1777
        %1779 = vrot.lane.b32.xlu0 %v1751, 115
        %v1780 = vpop.permute.xlu0 %1779
        %1781 = vrot.lane.b32.xlu0 %v1752, 115
        %v1782 = vpop.permute.xlu0 %1781
        %vm1783 = vcmask 941056
        %v1784 = vsel %vm1783, %v1764, %v1766
        %v1785 = vsel %vm1783, %v1766, %v1768
        %v1786 = vsel %vm1783, %v1768, %v1770
        %v1787 = vsel %vm1783, %v1770, %v1772
        %v1788 = vsel %vm1783, %v1774, %v1776
        %v1789 = vsel %vm1783, %v1776, %v1778
        %v1790 = vsel %vm1783, %v1778, %v1780
        %v1791 = vsel %vm1783, %v1780, %v1782
        %v1802 = vadd.f32 %v1725, %v1784
        %v1803 = vadd.f32 %v1726, %v1785
        %v1804 = vadd.f32 %v1727, %v1786
        %v1805 = vadd.f32 %v1728, %v1787
        %v1806 = vadd.f32 %v1729, %v1772
        %v1807 = vadd.f32 %v1730, %v1788
        %v1808 = vadd.f32 %v1731, %v1789
        %v1809 = vadd.f32 %v1732, %v1790
        %v1810 = vadd.f32 %v1733, %v1791
        %v1811 = vadd.f32 %v1734, %v1782
        %1812 = vset.pattern.permute.xlu0 14
        %1813 = vperm.xlu0 %1812, %v789
        %v1814 = vpop.permute.xlu0 %1813
        %1816 = vset.pattern.permute.xlu0 14
        %1817 = vperm.xlu0 %1816, %v790
        %v1818 = vpop.permute.xlu0 %1817
        %v1820 = vmul.f32 %v1814, %v692
        %v1821 = vmul.f32 %v1814, %v715
        %v1822 = vmul.f32 %v1814, %v738
        %v1823 = vmul.f32 %v1814, %v761
        %v1824 = vmul.f32 %v1814, %v784
        %v1825 = vmul.f32 %v1818, %v695
        %v1826 = vmul.f32 %v1818, %v718
        %v1827 = vmul.f32 %v1818, %v741
        %v1828 = vmul.f32 %v1818, %v764
        %v1829 = vmul.f32 %v1818, %v787
        %1840 = vrot.lane.b32.xlu0 %v1820, 114
        %v1841 = vpop.permute.xlu0 %1840
        %1842 = vrot.lane.b32.xlu0 %v1821, 114
        %v1843 = vpop.permute.xlu0 %1842
        %1844 = vrot.lane.b32.xlu0 %v1822, 114
        %v1845 = vpop.permute.xlu0 %1844
        %1846 = vrot.lane.b32.xlu0 %v1823, 114
        %v1847 = vpop.permute.xlu0 %1846
        %1848 = vrot.lane.b32.xlu0 %v1824, 114
        %v1849 = vpop.permute.xlu0 %1848
        %1850 = vrot.lane.b32.xlu0 %v1825, 114
        %v1851 = vpop.permute.xlu0 %1850
        %1852 = vrot.lane.b32.xlu0 %v1826, 114
        %v1853 = vpop.permute.xlu0 %1852
        %1854 = vrot.lane.b32.xlu0 %v1827, 114
        %v1855 = vpop.permute.xlu0 %1854
        %1856 = vrot.lane.b32.xlu0 %v1828, 114
        %v1857 = vpop.permute.xlu0 %1856
        %1858 = vrot.lane.b32.xlu0 %v1829, 114
        %v1859 = vpop.permute.xlu0 %1858
        %vm1860 = vcmask 932864
        %v1861 = vsel %vm1860, %v1841, %v1843
        %v1862 = vsel %vm1860, %v1843, %v1845
        %v1863 = vsel %vm1860, %v1845, %v1847
        %v1864 = vsel %vm1860, %v1847, %v1849
        %v1865 = vsel %vm1860, %v1851, %v1853
        %v1866 = vsel %vm1860, %v1853, %v1855
        %v1867 = vsel %vm1860, %v1855, %v1857
        %v1868 = vsel %vm1860, %v1857, %v1859
        %v1879 = vadd.f32 %v1802, %v1861
        %v1880 = vadd.f32 %v1803, %v1862
        %v1881 = vadd.f32 %v1804, %v1863
        %v1882 = vadd.f32 %v1805, %v1864
        %v1883 = vadd.f32 %v1806, %v1849
        %v1884 = vadd.f32 %v1807, %v1865
        %v1885 = vadd.f32 %v1808, %v1866
        %v1886 = vadd.f32 %v1809, %v1867
        %v1887 = vadd.f32 %v1810, %v1868
        %v1888 = vadd.f32 %v1811, %v1859
        %1889 = vset.pattern.permute.xlu0 15
        %1890 = vperm.xlu0 %1889, %v789
        %v1891 = vpop.permute.xlu0 %1890
        %1893 = vset.pattern.permute.xlu0 15
        %1894 = vperm.xlu0 %1893, %v790
        %v1895 = vpop.permute.xlu0 %1894
        %v1897 = vmul.f32 %v1891, %v692
        %v1898 = vmul.f32 %v1891, %v715
        %v1899 = vmul.f32 %v1891, %v738
        %v1900 = vmul.f32 %v1891, %v761
        %v1901 = vmul.f32 %v1891, %v784
        %v1902 = vmul.f32 %v1895, %v695
        %v1903 = vmul.f32 %v1895, %v718
        %v1904 = vmul.f32 %v1895, %v741
        %v1905 = vmul.f32 %v1895, %v764
        %v1906 = vmul.f32 %v1895, %v787
        %1917 = vrot.lane.b32.xlu0 %v1897, 113
        %v1918 = vpop.permute.xlu0 %1917
        %1919 = vrot.lane.b32.xlu0 %v1898, 113
        %v1920 = vpop.permute.xlu0 %1919
        %1921 = vrot.lane.b32.xlu0 %v1899, 113
        %v1922 = vpop.permute.xlu0 %1921
        %1923 = vrot.lane.b32.xlu0 %v1900, 113
        %v1924 = vpop.permute.xlu0 %1923
        %1925 = vrot.lane.b32.xlu0 %v1901, 113
        %v1926 = vpop.permute.xlu0 %1925
        %1927 = vrot.lane.b32.xlu0 %v1902, 113
        %v1928 = vpop.permute.xlu0 %1927
        %1929 = vrot.lane.b32.xlu0 %v1903, 113
        %v1930 = vpop.permute.xlu0 %1929
        %1931 = vrot.lane.b32.xlu0 %v1904, 113
        %v1932 = vpop.permute.xlu0 %1931
        %1933 = vrot.lane.b32.xlu0 %v1905, 113
        %v1934 = vpop.permute.xlu0 %1933
        %1935 = vrot.lane.b32.xlu0 %v1906, 113
        %v1936 = vpop.permute.xlu0 %1935
        %vm1937 = vcmask 924672
        %v1938 = vsel %vm1937, %v1918, %v1920
        %v1939 = vsel %vm1937, %v1920, %v1922
        %v1940 = vsel %vm1937, %v1922, %v1924
        %v1941 = vsel %vm1937, %v1924, %v1926
        %v1942 = vsel %vm1937, %v1928, %v1930
        %v1943 = vsel %vm1937, %v1930, %v1932
        %v1944 = vsel %vm1937, %v1932, %v1934
        %v1945 = vsel %vm1937, %v1934, %v1936
        %v1956 = vadd.f32 %v1879, %v1938
        %v1957 = vadd.f32 %v1880, %v1939
        %v1958 = vadd.f32 %v1881, %v1940
        %v1959 = vadd.f32 %v1882, %v1941
        %v1960 = vadd.f32 %v1883, %v1926
        %v1961 = vadd.f32 %v1884, %v1942
        %v1962 = vadd.f32 %v1885, %v1943
        %v1963 = vadd.f32 %v1886, %v1944
        %v1964 = vadd.f32 %v1887, %v1945
        %v1965 = vadd.f32 %v1888, %v1936
        %1966 = vset.pattern.permute.xlu0 16
        %1967 = vperm.xlu0 %1966, %v789
        %v1968 = vpop.permute.xlu0 %1967
        %1970 = vset.pattern.permute.xlu0 16
        %1971 = vperm.xlu0 %1970, %v790
        %v1972 = vpop.permute.xlu0 %1971
        %v1974 = vmul.f32 %v1968, %v692
        %v1975 = vmul.f32 %v1968, %v715
        %v1976 = vmul.f32 %v1968, %v738
        %v1977 = vmul.f32 %v1968, %v761
        %v1978 = vmul.f32 %v1968, %v784
        %v1979 = vmul.f32 %v1972, %v695
        %v1980 = vmul.f32 %v1972, %v718
        %v1981 = vmul.f32 %v1972, %v741
        %v1982 = vmul.f32 %v1972, %v764
        %v1983 = vmul.f32 %v1972, %v787
        %1994 = vrot.lane.b32.xlu0 %v1974, 112
        %v1995 = vpop.permute.xlu0 %1994
        %1996 = vrot.lane.b32.xlu0 %v1975, 112
        %v1997 = vpop.permute.xlu0 %1996
        %1998 = vrot.lane.b32.xlu0 %v1976, 112
        %v1999 = vpop.permute.xlu0 %1998
        %2000 = vrot.lane.b32.xlu0 %v1977, 112
        %v2001 = vpop.permute.xlu0 %2000
        %2002 = vrot.lane.b32.xlu0 %v1978, 112
        %v2003 = vpop.permute.xlu0 %2002
        %2004 = vrot.lane.b32.xlu0 %v1979, 112
        %v2005 = vpop.permute.xlu0 %2004
        %2006 = vrot.lane.b32.xlu0 %v1980, 112
        %v2007 = vpop.permute.xlu0 %2006
        %2008 = vrot.lane.b32.xlu0 %v1981, 112
        %v2009 = vpop.permute.xlu0 %2008
        %2010 = vrot.lane.b32.xlu0 %v1982, 112
        %v2011 = vpop.permute.xlu0 %2010
        %2012 = vrot.lane.b32.xlu0 %v1983, 112
        %v2013 = vpop.permute.xlu0 %2012
        %vm2014 = vcmask 916480
        %v2015 = vsel %vm2014, %v1995, %v1997
        %v2016 = vsel %vm2014, %v1997, %v1999
        %v2017 = vsel %vm2014, %v1999, %v2001
        %v2018 = vsel %vm2014, %v2001, %v2003
        %v2019 = vsel %vm2014, %v2005, %v2007
        %v2020 = vsel %vm2014, %v2007, %v2009
        %v2021 = vsel %vm2014, %v2009, %v2011
        %v2022 = vsel %vm2014, %v2011, %v2013
        %v2033 = vadd.f32 %v1956, %v2015
        %v2034 = vadd.f32 %v1957, %v2016
        %v2035 = vadd.f32 %v1958, %v2017
        %v2036 = vadd.f32 %v1959, %v2018
        %v2037 = vadd.f32 %v1960, %v2003
        %v2038 = vadd.f32 %v1961, %v2019
        %v2039 = vadd.f32 %v1962, %v2020
        %v2040 = vadd.f32 %v1963, %v2021
        %v2041 = vadd.f32 %v1964, %v2022
        %v2042 = vadd.f32 %v1965, %v2013
        %2043 = vset.pattern.permute.xlu0 17
        %2044 = vperm.xlu0 %2043, %v789
        %v2045 = vpop.permute.xlu0 %2044
        %2047 = vset.pattern.permute.xlu0 17
        %2048 = vperm.xlu0 %2047, %v790
        %v2049 = vpop.permute.xlu0 %2048
        %v2051 = vmul.f32 %v2045, %v692
        %v2052 = vmul.f32 %v2045, %v715
        %v2053 = vmul.f32 %v2045, %v738
        %v2054 = vmul.f32 %v2045, %v761
        %v2055 = vmul.f32 %v2045, %v784
        %v2056 = vmul.f32 %v2049, %v695
        %v2057 = vmul.f32 %v2049, %v718
        %v2058 = vmul.f32 %v2049, %v741
        %v2059 = vmul.f32 %v2049, %v764
        %v2060 = vmul.f32 %v2049, %v787
        %2071 = vrot.lane.b32.xlu0 %v2051, 111
        %v2072 = vpop.permute.xlu0 %2071
        %2073 = vrot.lane.b32.xlu0 %v2052, 111
        %v2074 = vpop.permute.xlu0 %2073
        %2075 = vrot.lane.b32.xlu0 %v2053, 111
        %v2076 = vpop.permute.xlu0 %2075
        %2077 = vrot.lane.b32.xlu0 %v2054, 111
        %v2078 = vpop.permute.xlu0 %2077
        %2079 = vrot.lane.b32.xlu0 %v2055, 111
        %v2080 = vpop.permute.xlu0 %2079
        %2081 = vrot.lane.b32.xlu0 %v2056, 111
        %v2082 = vpop.permute.xlu0 %2081
        %2083 = vrot.lane.b32.xlu0 %v2057, 111
        %v2084 = vpop.permute.xlu0 %2083
        %2085 = vrot.lane.b32.xlu0 %v2058, 111
        %v2086 = vpop.permute.xlu0 %2085
        %2087 = vrot.lane.b32.xlu0 %v2059, 111
        %v2088 = vpop.permute.xlu0 %2087
        %2089 = vrot.lane.b32.xlu0 %v2060, 111
        %v2090 = vpop.permute.xlu0 %2089
        %vm2091 = vcmask 908288
        %v2092 = vsel %vm2091, %v2072, %v2074
        %v2093 = vsel %vm2091, %v2074, %v2076
        %v2094 = vsel %vm2091, %v2076, %v2078
        %v2095 = vsel %vm2091, %v2078, %v2080
        %v2096 = vsel %vm2091, %v2082, %v2084
        %v2097 = vsel %vm2091, %v2084, %v2086
        %v2098 = vsel %vm2091, %v2086, %v2088
        %v2099 = vsel %vm2091, %v2088, %v2090
        %v2110 = vadd.f32 %v2033, %v2092
        %v2111 = vadd.f32 %v2034, %v2093
        %v2112 = vadd.f32 %v2035, %v2094
        %v2113 = vadd.f32 %v2036, %v2095
        %v2114 = vadd.f32 %v2037, %v2080
        %v2115 = vadd.f32 %v2038, %v2096
        %v2116 = vadd.f32 %v2039, %v2097
        %v2117 = vadd.f32 %v2040, %v2098
        %v2118 = vadd.f32 %v2041, %v2099
        %v2119 = vadd.f32 %v2042, %v2090
        %2120 = vset.pattern.permute.xlu0 18
        %2121 = vperm.xlu0 %2120, %v789
        %v2122 = vpop.permute.xlu0 %2121
        %2124 = vset.pattern.permute.xlu0 18
        %2125 = vperm.xlu0 %2124, %v790
        %v2126 = vpop.permute.xlu0 %2125
        %v2128 = vmul.f32 %v2122, %v692
        %v2129 = vmul.f32 %v2122, %v715
        %v2130 = vmul.f32 %v2122, %v738
        %v2131 = vmul.f32 %v2122, %v761
        %v2132 = vmul.f32 %v2122, %v784
        %v2133 = vmul.f32 %v2126, %v695
        %v2134 = vmul.f32 %v2126, %v718
        %v2135 = vmul.f32 %v2126, %v741
        %v2136 = vmul.f32 %v2126, %v764
        %v2137 = vmul.f32 %v2126, %v787
        %2148 = vrot.lane.b32.xlu0 %v2128, 110
        %v2149 = vpop.permute.xlu0 %2148
        %2150 = vrot.lane.b32.xlu0 %v2129, 110
        %v2151 = vpop.permute.xlu0 %2150
        %2152 = vrot.lane.b32.xlu0 %v2130, 110
        %v2153 = vpop.permute.xlu0 %2152
        %2154 = vrot.lane.b32.xlu0 %v2131, 110
        %v2155 = vpop.permute.xlu0 %2154
        %2156 = vrot.lane.b32.xlu0 %v2132, 110
        %v2157 = vpop.permute.xlu0 %2156
        %2158 = vrot.lane.b32.xlu0 %v2133, 110
        %v2159 = vpop.permute.xlu0 %2158
        %2160 = vrot.lane.b32.xlu0 %v2134, 110
        %v2161 = vpop.permute.xlu0 %2160
        %2162 = vrot.lane.b32.xlu0 %v2135, 110
        %v2163 = vpop.permute.xlu0 %2162
        %2164 = vrot.lane.b32.xlu0 %v2136, 110
        %v2165 = vpop.permute.xlu0 %2164
        %2166 = vrot.lane.b32.xlu0 %v2137, 110
        %v2167 = vpop.permute.xlu0 %2166
        %vm2168 = vcmask 900096
        %v2169 = vsel %vm2168, %v2149, %v2151
        %v2170 = vsel %vm2168, %v2151, %v2153
        %v2171 = vsel %vm2168, %v2153, %v2155
        %v2172 = vsel %vm2168, %v2155, %v2157
        %v2173 = vsel %vm2168, %v2159, %v2161
        %v2174 = vsel %vm2168, %v2161, %v2163
        %v2175 = vsel %vm2168, %v2163, %v2165
        %v2176 = vsel %vm2168, %v2165, %v2167
        %v2187 = vadd.f32 %v2110, %v2169
        %v2188 = vadd.f32 %v2111, %v2170
        %v2189 = vadd.f32 %v2112, %v2171
        %v2190 = vadd.f32 %v2113, %v2172
        %v2191 = vadd.f32 %v2114, %v2157
        %v2192 = vadd.f32 %v2115, %v2173
        %v2193 = vadd.f32 %v2116, %v2174
        %v2194 = vadd.f32 %v2117, %v2175
        %v2195 = vadd.f32 %v2118, %v2176
        %v2196 = vadd.f32 %v2119, %v2167
        %2197 = vset.pattern.permute.xlu0 19
        %2198 = vperm.xlu0 %2197, %v789
        %v2199 = vpop.permute.xlu0 %2198
        %2201 = vset.pattern.permute.xlu0 19
        %2202 = vperm.xlu0 %2201, %v790
        %v2203 = vpop.permute.xlu0 %2202
        %v2205 = vmul.f32 %v2199, %v692
        %v2206 = vmul.f32 %v2199, %v715
        %v2207 = vmul.f32 %v2199, %v738
        %v2208 = vmul.f32 %v2199, %v761
        %v2209 = vmul.f32 %v2199, %v784
        %v2210 = vmul.f32 %v2203, %v695
        %v2211 = vmul.f32 %v2203, %v718
        %v2212 = vmul.f32 %v2203, %v741
        %v2213 = vmul.f32 %v2203, %v764
        %v2214 = vmul.f32 %v2203, %v787
        %2225 = vrot.lane.b32.xlu0 %v2205, 109
        %v2226 = vpop.permute.xlu0 %2225
        %2227 = vrot.lane.b32.xlu0 %v2206, 109
        %v2228 = vpop.permute.xlu0 %2227
        %2229 = vrot.lane.b32.xlu0 %v2207, 109
        %v2230 = vpop.permute.xlu0 %2229
        %2231 = vrot.lane.b32.xlu0 %v2208, 109
        %v2232 = vpop.permute.xlu0 %2231
        %2233 = vrot.lane.b32.xlu0 %v2209, 109
        %v2234 = vpop.permute.xlu0 %2233
        %2235 = vrot.lane.b32.xlu0 %v2210, 109
        %v2236 = vpop.permute.xlu0 %2235
        %2237 = vrot.lane.b32.xlu0 %v2211, 109
        %v2238 = vpop.permute.xlu0 %2237
        %2239 = vrot.lane.b32.xlu0 %v2212, 109
        %v2240 = vpop.permute.xlu0 %2239
        %2241 = vrot.lane.b32.xlu0 %v2213, 109
        %v2242 = vpop.permute.xlu0 %2241
        %2243 = vrot.lane.b32.xlu0 %v2214, 109
        %v2244 = vpop.permute.xlu0 %2243
        %vm2245 = vcmask 891904
        %v2246 = vsel %vm2245, %v2226, %v2228
        %v2247 = vsel %vm2245, %v2228, %v2230
        %v2248 = vsel %vm2245, %v2230, %v2232
        %v2249 = vsel %vm2245, %v2232, %v2234
        %v2250 = vsel %vm2245, %v2236, %v2238
        %v2251 = vsel %vm2245, %v2238, %v2240
        %v2252 = vsel %vm2245, %v2240, %v2242
        %v2253 = vsel %vm2245, %v2242, %v2244
        %v2264 = vadd.f32 %v2187, %v2246
        %v2265 = vadd.f32 %v2188, %v2247
        %v2266 = vadd.f32 %v2189, %v2248
        %v2267 = vadd.f32 %v2190, %v2249
        %v2268 = vadd.f32 %v2191, %v2234
        %v2269 = vadd.f32 %v2192, %v2250
        %v2270 = vadd.f32 %v2193, %v2251
        %v2271 = vadd.f32 %v2194, %v2252
        %v2272 = vadd.f32 %v2195, %v2253
        %v2273 = vadd.f32 %v2196, %v2244
        %2274 = vset.pattern.permute.xlu0 20
        %2275 = vperm.xlu0 %2274, %v789
        %v2276 = vpop.permute.xlu0 %2275
        %2278 = vset.pattern.permute.xlu0 20
        %2279 = vperm.xlu0 %2278, %v790
        %v2280 = vpop.permute.xlu0 %2279
        %v2282 = vmul.f32 %v2276, %v692
        %v2283 = vmul.f32 %v2276, %v715
        %v2284 = vmul.f32 %v2276, %v738
        %v2285 = vmul.f32 %v2276, %v761
        %v2286 = vmul.f32 %v2276, %v784
        %v2287 = vmul.f32 %v2280, %v695
        %v2288 = vmul.f32 %v2280, %v718
        %v2289 = vmul.f32 %v2280, %v741
        %v2290 = vmul.f32 %v2280, %v764
        %v2291 = vmul.f32 %v2280, %v787
        %2302 = vrot.lane.b32.xlu0 %v2282, 108
        %v2303 = vpop.permute.xlu0 %2302
        %2304 = vrot.lane.b32.xlu0 %v2283, 108
        %v2305 = vpop.permute.xlu0 %2304
        %2306 = vrot.lane.b32.xlu0 %v2284, 108
        %v2307 = vpop.permute.xlu0 %2306
        %2308 = vrot.lane.b32.xlu0 %v2285, 108
        %v2309 = vpop.permute.xlu0 %2308
        %2310 = vrot.lane.b32.xlu0 %v2286, 108
        %v2311 = vpop.permute.xlu0 %2310
        %2312 = vrot.lane.b32.xlu0 %v2287, 108
        %v2313 = vpop.permute.xlu0 %2312
        %2314 = vrot.lane.b32.xlu0 %v2288, 108
        %v2315 = vpop.permute.xlu0 %2314
        %2316 = vrot.lane.b32.xlu0 %v2289, 108
        %v2317 = vpop.permute.xlu0 %2316
        %2318 = vrot.lane.b32.xlu0 %v2290, 108
        %v2319 = vpop.permute.xlu0 %2318
        %2320 = vrot.lane.b32.xlu0 %v2291, 108
        %v2321 = vpop.permute.xlu0 %2320
        %vm2322 = vcmask 883712
        %v2323 = vsel %vm2322, %v2303, %v2305
        %v2324 = vsel %vm2322, %v2305, %v2307
        %v2325 = vsel %vm2322, %v2307, %v2309
        %v2326 = vsel %vm2322, %v2309, %v2311
        %v2327 = vsel %vm2322, %v2313, %v2315
        %v2328 = vsel %vm2322, %v2315, %v2317
        %v2329 = vsel %vm2322, %v2317, %v2319
        %v2330 = vsel %vm2322, %v2319, %v2321
        %v2341 = vadd.f32 %v2264, %v2323
        %v2342 = vadd.f32 %v2265, %v2324
        %v2343 = vadd.f32 %v2266, %v2325
        %v2344 = vadd.f32 %v2267, %v2326
        %v2345 = vadd.f32 %v2268, %v2311
        %v2346 = vadd.f32 %v2269, %v2327
        %v2347 = vadd.f32 %v2270, %v2328
        %v2348 = vadd.f32 %v2271, %v2329
        %v2349 = vadd.f32 %v2272, %v2330
        %v2350 = vadd.f32 %v2273, %v2321
        %2351 = vset.pattern.permute.xlu0 21
        %2352 = vperm.xlu0 %2351, %v789
        %v2353 = vpop.permute.xlu0 %2352
        %2355 = vset.pattern.permute.xlu0 21
        %2356 = vperm.xlu0 %2355, %v790
        %v2357 = vpop.permute.xlu0 %2356
        %v2359 = vmul.f32 %v2353, %v692
        %v2360 = vmul.f32 %v2353, %v715
        %v2361 = vmul.f32 %v2353, %v738
        %v2362 = vmul.f32 %v2353, %v761
        %v2363 = vmul.f32 %v2353, %v784
        %v2364 = vmul.f32 %v2357, %v695
        %v2365 = vmul.f32 %v2357, %v718
        %v2366 = vmul.f32 %v2357, %v741
        %v2367 = vmul.f32 %v2357, %v764
        %v2368 = vmul.f32 %v2357, %v787
        %2379 = vrot.lane.b32.xlu0 %v2359, 107
        %v2380 = vpop.permute.xlu0 %2379
        %2381 = vrot.lane.b32.xlu0 %v2360, 107
        %v2382 = vpop.permute.xlu0 %2381
        %2383 = vrot.lane.b32.xlu0 %v2361, 107
        %v2384 = vpop.permute.xlu0 %2383
        %2385 = vrot.lane.b32.xlu0 %v2362, 107
        %v2386 = vpop.permute.xlu0 %2385
        %2387 = vrot.lane.b32.xlu0 %v2363, 107
        %v2388 = vpop.permute.xlu0 %2387
        %2389 = vrot.lane.b32.xlu0 %v2364, 107
        %v2390 = vpop.permute.xlu0 %2389
        %2391 = vrot.lane.b32.xlu0 %v2365, 107
        %v2392 = vpop.permute.xlu0 %2391
        %2393 = vrot.lane.b32.xlu0 %v2366, 107
        %v2394 = vpop.permute.xlu0 %2393
        %2395 = vrot.lane.b32.xlu0 %v2367, 107
        %v2396 = vpop.permute.xlu0 %2395
        %2397 = vrot.lane.b32.xlu0 %v2368, 107
        %v2398 = vpop.permute.xlu0 %2397
        %vm2399 = vcmask 875520
        %v2400 = vsel %vm2399, %v2380, %v2382
        %v2401 = vsel %vm2399, %v2382, %v2384
        %v2402 = vsel %vm2399, %v2384, %v2386
        %v2403 = vsel %vm2399, %v2386, %v2388
        %v2404 = vsel %vm2399, %v2390, %v2392
        %v2405 = vsel %vm2399, %v2392, %v2394
        %v2406 = vsel %vm2399, %v2394, %v2396
        %v2407 = vsel %vm2399, %v2396, %v2398
        %v2418 = vadd.f32 %v2341, %v2400
        %v2419 = vadd.f32 %v2342, %v2401
        %v2420 = vadd.f32 %v2343, %v2402
        %v2421 = vadd.f32 %v2344, %v2403
        %v2422 = vadd.f32 %v2345, %v2388
        %v2423 = vadd.f32 %v2346, %v2404
        %v2424 = vadd.f32 %v2347, %v2405
        %v2425 = vadd.f32 %v2348, %v2406
        %v2426 = vadd.f32 %v2349, %v2407
        %v2427 = vadd.f32 %v2350, %v2398
        %2428 = vset.pattern.permute.xlu0 22
        %2429 = vperm.xlu0 %2428, %v789
        %v2430 = vpop.permute.xlu0 %2429
        %2432 = vset.pattern.permute.xlu0 22
        %2433 = vperm.xlu0 %2432, %v790
        %v2434 = vpop.permute.xlu0 %2433
        %v2436 = vmul.f32 %v2430, %v692
        %v2437 = vmul.f32 %v2430, %v715
        %v2438 = vmul.f32 %v2430, %v738
        %v2439 = vmul.f32 %v2430, %v761
        %v2440 = vmul.f32 %v2430, %v784
        %v2441 = vmul.f32 %v2434, %v695
        %v2442 = vmul.f32 %v2434, %v718
        %v2443 = vmul.f32 %v2434, %v741
        %v2444 = vmul.f32 %v2434, %v764
        %v2445 = vmul.f32 %v2434, %v787
        %2456 = vrot.lane.b32.xlu0 %v2436, 106
        %v2457 = vpop.permute.xlu0 %2456
        %2458 = vrot.lane.b32.xlu0 %v2437, 106
        %v2459 = vpop.permute.xlu0 %2458
        %2460 = vrot.lane.b32.xlu0 %v2438, 106
        %v2461 = vpop.permute.xlu0 %2460
        %2462 = vrot.lane.b32.xlu0 %v2439, 106
        %v2463 = vpop.permute.xlu0 %2462
        %2464 = vrot.lane.b32.xlu0 %v2440, 106
        %v2465 = vpop.permute.xlu0 %2464
        %2466 = vrot.lane.b32.xlu0 %v2441, 106
        %v2467 = vpop.permute.xlu0 %2466
        %2468 = vrot.lane.b32.xlu0 %v2442, 106
        %v2469 = vpop.permute.xlu0 %2468
        %2470 = vrot.lane.b32.xlu0 %v2443, 106
        %v2471 = vpop.permute.xlu0 %2470
        %2472 = vrot.lane.b32.xlu0 %v2444, 106
        %v2473 = vpop.permute.xlu0 %2472
        %2474 = vrot.lane.b32.xlu0 %v2445, 106
        %v2475 = vpop.permute.xlu0 %2474
        %vm2476 = vcmask 867328
        %v2477 = vsel %vm2476, %v2457, %v2459
        %v2478 = vsel %vm2476, %v2459, %v2461
        %v2479 = vsel %vm2476, %v2461, %v2463
        %v2480 = vsel %vm2476, %v2463, %v2465
        %v2481 = vsel %vm2476, %v2467, %v2469
        %v2482 = vsel %vm2476, %v2469, %v2471
        %v2483 = vsel %vm2476, %v2471, %v2473
        %v2484 = vsel %vm2476, %v2473, %v2475
        %v2495 = vadd.f32 %v2418, %v2477
        %v2496 = vadd.f32 %v2419, %v2478
        %v2497 = vadd.f32 %v2420, %v2479
        %v2498 = vadd.f32 %v2421, %v2480
        %v2499 = vadd.f32 %v2422, %v2465
        %v2500 = vadd.f32 %v2423, %v2481
        %v2501 = vadd.f32 %v2424, %v2482
        %v2502 = vadd.f32 %v2425, %v2483
        %v2503 = vadd.f32 %v2426, %v2484
        %v2504 = vadd.f32 %v2427, %v2475
        %2505 = vset.pattern.permute.xlu0 23
        %2506 = vperm.xlu0 %2505, %v789
        %v2507 = vpop.permute.xlu0 %2506
        %2509 = vset.pattern.permute.xlu0 23
        %2510 = vperm.xlu0 %2509, %v790
        %v2511 = vpop.permute.xlu0 %2510
        %v2513 = vmul.f32 %v2507, %v692
        %v2514 = vmul.f32 %v2507, %v715
        %v2515 = vmul.f32 %v2507, %v738
        %v2516 = vmul.f32 %v2507, %v761
        %v2517 = vmul.f32 %v2507, %v784
        %v2518 = vmul.f32 %v2511, %v695
        %v2519 = vmul.f32 %v2511, %v718
        %v2520 = vmul.f32 %v2511, %v741
        %v2521 = vmul.f32 %v2511, %v764
        %v2522 = vmul.f32 %v2511, %v787
        %2533 = vrot.lane.b32.xlu0 %v2513, 105
        %v2534 = vpop.permute.xlu0 %2533
        %2535 = vrot.lane.b32.xlu0 %v2514, 105
        %v2536 = vpop.permute.xlu0 %2535
        %2537 = vrot.lane.b32.xlu0 %v2515, 105
        %v2538 = vpop.permute.xlu0 %2537
        %2539 = vrot.lane.b32.xlu0 %v2516, 105
        %v2540 = vpop.permute.xlu0 %2539
        %2541 = vrot.lane.b32.xlu0 %v2517, 105
        %v2542 = vpop.permute.xlu0 %2541
        %2543 = vrot.lane.b32.xlu0 %v2518, 105
        %v2544 = vpop.permute.xlu0 %2543
        %2545 = vrot.lane.b32.xlu0 %v2519, 105
        %v2546 = vpop.permute.xlu0 %2545
        %2547 = vrot.lane.b32.xlu0 %v2520, 105
        %v2548 = vpop.permute.xlu0 %2547
        %2549 = vrot.lane.b32.xlu0 %v2521, 105
        %v2550 = vpop.permute.xlu0 %2549
        %2551 = vrot.lane.b32.xlu0 %v2522, 105
        %v2552 = vpop.permute.xlu0 %2551
        %vm2553 = vcmask 859136
        %v2554 = vsel %vm2553, %v2534, %v2536
        %v2555 = vsel %vm2553, %v2536, %v2538
        %v2556 = vsel %vm2553, %v2538, %v2540
        %v2557 = vsel %vm2553, %v2540, %v2542
        %v2558 = vsel %vm2553, %v2544, %v2546
        %v2559 = vsel %vm2553, %v2546, %v2548
        %v2560 = vsel %vm2553, %v2548, %v2550
        %v2561 = vsel %vm2553, %v2550, %v2552
        %v2572 = vadd.f32 %v2495, %v2554
        %v2573 = vadd.f32 %v2496, %v2555
        %v2574 = vadd.f32 %v2497, %v2556
        %v2575 = vadd.f32 %v2498, %v2557
        %v2576 = vadd.f32 %v2499, %v2542
        %v2577 = vadd.f32 %v2500, %v2558
        %v2578 = vadd.f32 %v2501, %v2559
        %v2579 = vadd.f32 %v2502, %v2560
        %v2580 = vadd.f32 %v2503, %v2561
        %v2581 = vadd.f32 %v2504, %v2552
        %2582 = vset.pattern.permute.xlu0 24
        %2583 = vperm.xlu0 %2582, %v789
        %v2584 = vpop.permute.xlu0 %2583
        %2586 = vset.pattern.permute.xlu0 24
        %2587 = vperm.xlu0 %2586, %v790
        %v2588 = vpop.permute.xlu0 %2587
        %v2590 = vmul.f32 %v2584, %v692
        %v2591 = vmul.f32 %v2584, %v715
        %v2592 = vmul.f32 %v2584, %v738
        %v2593 = vmul.f32 %v2584, %v761
        %v2594 = vmul.f32 %v2584, %v784
        %v2595 = vmul.f32 %v2588, %v695
        %v2596 = vmul.f32 %v2588, %v718
        %v2597 = vmul.f32 %v2588, %v741
        %v2598 = vmul.f32 %v2588, %v764
        %v2599 = vmul.f32 %v2588, %v787
        %2610 = vrot.lane.b32.xlu0 %v2590, 104
        %v2611 = vpop.permute.xlu0 %2610
        %2612 = vrot.lane.b32.xlu0 %v2591, 104
        %v2613 = vpop.permute.xlu0 %2612
        %2614 = vrot.lane.b32.xlu0 %v2592, 104
        %v2615 = vpop.permute.xlu0 %2614
        %2616 = vrot.lane.b32.xlu0 %v2593, 104
        %v2617 = vpop.permute.xlu0 %2616
        %2618 = vrot.lane.b32.xlu0 %v2594, 104
        %v2619 = vpop.permute.xlu0 %2618
        %2620 = vrot.lane.b32.xlu0 %v2595, 104
        %v2621 = vpop.permute.xlu0 %2620
        %2622 = vrot.lane.b32.xlu0 %v2596, 104
        %v2623 = vpop.permute.xlu0 %2622
        %2624 = vrot.lane.b32.xlu0 %v2597, 104
        %v2625 = vpop.permute.xlu0 %2624
        %2626 = vrot.lane.b32.xlu0 %v2598, 104
        %v2627 = vpop.permute.xlu0 %2626
        %2628 = vrot.lane.b32.xlu0 %v2599, 104
        %v2629 = vpop.permute.xlu0 %2628
        %vm2630 = vcmask 850944
        %v2631 = vsel %vm2630, %v2611, %v2613
        %v2632 = vsel %vm2630, %v2613, %v2615
        %v2633 = vsel %vm2630, %v2615, %v2617
        %v2634 = vsel %vm2630, %v2617, %v2619
        %v2635 = vsel %vm2630, %v2621, %v2623
        %v2636 = vsel %vm2630, %v2623, %v2625
        %v2637 = vsel %vm2630, %v2625, %v2627
        %v2638 = vsel %vm2630, %v2627, %v2629
        %v2649 = vadd.f32 %v2572, %v2631
        %v2650 = vadd.f32 %v2573, %v2632
        %v2651 = vadd.f32 %v2574, %v2633
        %v2652 = vadd.f32 %v2575, %v2634
        %v2653 = vadd.f32 %v2576, %v2619
        %v2654 = vadd.f32 %v2577, %v2635
        %v2655 = vadd.f32 %v2578, %v2636
        %v2656 = vadd.f32 %v2579, %v2637
        %v2657 = vadd.f32 %v2580, %v2638
        %v2658 = vadd.f32 %v2581, %v2629
        %2659 = vset.pattern.permute.xlu0 25
        %2660 = vperm.xlu0 %2659, %v789
        %v2661 = vpop.permute.xlu0 %2660
        %2663 = vset.pattern.permute.xlu0 25
        %2664 = vperm.xlu0 %2663, %v790
        %v2665 = vpop.permute.xlu0 %2664
        %v2667 = vmul.f32 %v2661, %v692
        %v2668 = vmul.f32 %v2661, %v715
        %v2669 = vmul.f32 %v2661, %v738
        %v2670 = vmul.f32 %v2661, %v761
        %v2671 = vmul.f32 %v2661, %v784
        %v2672 = vmul.f32 %v2665, %v695
        %v2673 = vmul.f32 %v2665, %v718
        %v2674 = vmul.f32 %v2665, %v741
        %v2675 = vmul.f32 %v2665, %v764
        %v2676 = vmul.f32 %v2665, %v787
        %2687 = vrot.lane.b32.xlu0 %v2667, 103
        %v2688 = vpop.permute.xlu0 %2687
        %2689 = vrot.lane.b32.xlu0 %v2668, 103
        %v2690 = vpop.permute.xlu0 %2689
        %2691 = vrot.lane.b32.xlu0 %v2669, 103
        %v2692 = vpop.permute.xlu0 %2691
        %2693 = vrot.lane.b32.xlu0 %v2670, 103
        %v2694 = vpop.permute.xlu0 %2693
        %2695 = vrot.lane.b32.xlu0 %v2671, 103
        %v2696 = vpop.permute.xlu0 %2695
        %2697 = vrot.lane.b32.xlu0 %v2672, 103
        %v2698 = vpop.permute.xlu0 %2697
        %2699 = vrot.lane.b32.xlu0 %v2673, 103
        %v2700 = vpop.permute.xlu0 %2699
        %2701 = vrot.lane.b32.xlu0 %v2674, 103
        %v2702 = vpop.permute.xlu0 %2701
        %2703 = vrot.lane.b32.xlu0 %v2675, 103
        %v2704 = vpop.permute.xlu0 %2703
        %2705 = vrot.lane.b32.xlu0 %v2676, 103
        %v2706 = vpop.permute.xlu0 %2705
        %vm2707 = vcmask 842752
        %v2708 = vsel %vm2707, %v2688, %v2690
        %v2709 = vsel %vm2707, %v2690, %v2692
        %v2710 = vsel %vm2707, %v2692, %v2694
        %v2711 = vsel %vm2707, %v2694, %v2696
        %v2712 = vsel %vm2707, %v2698, %v2700
        %v2713 = vsel %vm2707, %v2700, %v2702
        %v2714 = vsel %vm2707, %v2702, %v2704
        %v2715 = vsel %vm2707, %v2704, %v2706
        %v2726 = vadd.f32 %v2649, %v2708
        %v2727 = vadd.f32 %v2650, %v2709
        %v2728 = vadd.f32 %v2651, %v2710
        %v2729 = vadd.f32 %v2652, %v2711
        %v2730 = vadd.f32 %v2653, %v2696
        %v2731 = vadd.f32 %v2654, %v2712
        %v2732 = vadd.f32 %v2655, %v2713
        %v2733 = vadd.f32 %v2656, %v2714
        %v2734 = vadd.f32 %v2657, %v2715
        %v2735 = vadd.f32 %v2658, %v2706
        %2736 = vset.pattern.permute.xlu0 26
        %2737 = vperm.xlu0 %2736, %v789
        %v2738 = vpop.permute.xlu0 %2737
        %2740 = vset.pattern.permute.xlu0 26
        %2741 = vperm.xlu0 %2740, %v790
        %v2742 = vpop.permute.xlu0 %2741
        %v2744 = vmul.f32 %v2738, %v692
        %v2745 = vmul.f32 %v2738, %v715
        %v2746 = vmul.f32 %v2738, %v738
        %v2747 = vmul.f32 %v2738, %v761
        %v2748 = vmul.f32 %v2738, %v784
        %v2749 = vmul.f32 %v2742, %v695
        %v2750 = vmul.f32 %v2742, %v718
        %v2751 = vmul.f32 %v2742, %v741
        %v2752 = vmul.f32 %v2742, %v764
        %v2753 = vmul.f32 %v2742, %v787
        %2764 = vrot.lane.b32.xlu0 %v2744, 102
        %v2765 = vpop.permute.xlu0 %2764
        %2766 = vrot.lane.b32.xlu0 %v2745, 102
        %v2767 = vpop.permute.xlu0 %2766
        %2768 = vrot.lane.b32.xlu0 %v2746, 102
        %v2769 = vpop.permute.xlu0 %2768
        %2770 = vrot.lane.b32.xlu0 %v2747, 102
        %v2771 = vpop.permute.xlu0 %2770
        %2772 = vrot.lane.b32.xlu0 %v2748, 102
        %v2773 = vpop.permute.xlu0 %2772
        %2774 = vrot.lane.b32.xlu0 %v2749, 102
        %v2775 = vpop.permute.xlu0 %2774
        %2776 = vrot.lane.b32.xlu0 %v2750, 102
        %v2777 = vpop.permute.xlu0 %2776
        %2778 = vrot.lane.b32.xlu0 %v2751, 102
        %v2779 = vpop.permute.xlu0 %2778
        %2780 = vrot.lane.b32.xlu0 %v2752, 102
        %v2781 = vpop.permute.xlu0 %2780
        %2782 = vrot.lane.b32.xlu0 %v2753, 102
        %v2783 = vpop.permute.xlu0 %2782
        %vm2784 = vcmask 834560
        %v2785 = vsel %vm2784, %v2765, %v2767
        %v2786 = vsel %vm2784, %v2767, %v2769
        %v2787 = vsel %vm2784, %v2769, %v2771
        %v2788 = vsel %vm2784, %v2771, %v2773
        %v2789 = vsel %vm2784, %v2775, %v2777
        %v2790 = vsel %vm2784, %v2777, %v2779
        %v2791 = vsel %vm2784, %v2779, %v2781
        %v2792 = vsel %vm2784, %v2781, %v2783
        %v2803 = vadd.f32 %v2726, %v2785
        %v2804 = vadd.f32 %v2727, %v2786
        %v2805 = vadd.f32 %v2728, %v2787
        %v2806 = vadd.f32 %v2729, %v2788
        %v2807 = vadd.f32 %v2730, %v2773
        %v2808 = vadd.f32 %v2731, %v2789
        %v2809 = vadd.f32 %v2732, %v2790
        %v2810 = vadd.f32 %v2733, %v2791
        %v2811 = vadd.f32 %v2734, %v2792
        %v2812 = vadd.f32 %v2735, %v2783
        %2813 = vset.pattern.permute.xlu0 27
        %2814 = vperm.xlu0 %2813, %v789
        %v2815 = vpop.permute.xlu0 %2814
        %2817 = vset.pattern.permute.xlu0 27
        %2818 = vperm.xlu0 %2817, %v790
        %v2819 = vpop.permute.xlu0 %2818
        %v2821 = vmul.f32 %v2815, %v692
        %v2822 = vmul.f32 %v2815, %v715
        %v2823 = vmul.f32 %v2815, %v738
        %v2824 = vmul.f32 %v2815, %v761
        %v2825 = vmul.f32 %v2815, %v784
        %v2826 = vmul.f32 %v2819, %v695
        %v2827 = vmul.f32 %v2819, %v718
        %v2828 = vmul.f32 %v2819, %v741
        %v2829 = vmul.f32 %v2819, %v764
        %v2830 = vmul.f32 %v2819, %v787
        %2841 = vrot.lane.b32.xlu0 %v2821, 101
        %v2842 = vpop.permute.xlu0 %2841
        %2843 = vrot.lane.b32.xlu0 %v2822, 101
        %v2844 = vpop.permute.xlu0 %2843
        %2845 = vrot.lane.b32.xlu0 %v2823, 101
        %v2846 = vpop.permute.xlu0 %2845
        %2847 = vrot.lane.b32.xlu0 %v2824, 101
        %v2848 = vpop.permute.xlu0 %2847
        %2849 = vrot.lane.b32.xlu0 %v2825, 101
        %v2850 = vpop.permute.xlu0 %2849
        %2851 = vrot.lane.b32.xlu0 %v2826, 101
        %v2852 = vpop.permute.xlu0 %2851
        %2853 = vrot.lane.b32.xlu0 %v2827, 101
        %v2854 = vpop.permute.xlu0 %2853
        %2855 = vrot.lane.b32.xlu0 %v2828, 101
        %v2856 = vpop.permute.xlu0 %2855
        %2857 = vrot.lane.b32.xlu0 %v2829, 101
        %v2858 = vpop.permute.xlu0 %2857
        %2859 = vrot.lane.b32.xlu0 %v2830, 101
        %v2860 = vpop.permute.xlu0 %2859
        %vm2861 = vcmask 826368
        %v2862 = vsel %vm2861, %v2842, %v2844
        %v2863 = vsel %vm2861, %v2844, %v2846
        %v2864 = vsel %vm2861, %v2846, %v2848
        %v2865 = vsel %vm2861, %v2848, %v2850
        %v2866 = vsel %vm2861, %v2852, %v2854
        %v2867 = vsel %vm2861, %v2854, %v2856
        %v2868 = vsel %vm2861, %v2856, %v2858
        %v2869 = vsel %vm2861, %v2858, %v2860
        %v2880 = vadd.f32 %v2803, %v2862
        %v2881 = vadd.f32 %v2804, %v2863
        %v2882 = vadd.f32 %v2805, %v2864
        %v2883 = vadd.f32 %v2806, %v2865
        %v2884 = vadd.f32 %v2807, %v2850
        %v2885 = vadd.f32 %v2808, %v2866
        %v2886 = vadd.f32 %v2809, %v2867
        %v2887 = vadd.f32 %v2810, %v2868
        %v2888 = vadd.f32 %v2811, %v2869
        %v2889 = vadd.f32 %v2812, %v2860
        %2890 = vset.pattern.permute.xlu0 28
        %2891 = vperm.xlu0 %2890, %v789
        %v2892 = vpop.permute.xlu0 %2891
        %2894 = vset.pattern.permute.xlu0 28
        %2895 = vperm.xlu0 %2894, %v790
        %v2896 = vpop.permute.xlu0 %2895
        %v2898 = vmul.f32 %v2892, %v692
        %v2899 = vmul.f32 %v2892, %v715
        %v2900 = vmul.f32 %v2892, %v738
        %v2901 = vmul.f32 %v2892, %v761
        %v2902 = vmul.f32 %v2892, %v784
        %v2903 = vmul.f32 %v2896, %v695
        %v2904 = vmul.f32 %v2896, %v718
        %v2905 = vmul.f32 %v2896, %v741
        %v2906 = vmul.f32 %v2896, %v764
        %v2907 = vmul.f32 %v2896, %v787
        %2918 = vrot.lane.b32.xlu0 %v2898, 100
        %v2919 = vpop.permute.xlu0 %2918
        %2920 = vrot.lane.b32.xlu0 %v2899, 100
        %v2921 = vpop.permute.xlu0 %2920
        %2922 = vrot.lane.b32.xlu0 %v2900, 100
        %v2923 = vpop.permute.xlu0 %2922
        %2924 = vrot.lane.b32.xlu0 %v2901, 100
        %v2925 = vpop.permute.xlu0 %2924
        %2926 = vrot.lane.b32.xlu0 %v2902, 100
        %v2927 = vpop.permute.xlu0 %2926
        %2928 = vrot.lane.b32.xlu0 %v2903, 100
        %v2929 = vpop.permute.xlu0 %2928
        %2930 = vrot.lane.b32.xlu0 %v2904, 100
        %v2931 = vpop.permute.xlu0 %2930
        %2932 = vrot.lane.b32.xlu0 %v2905, 100
        %v2933 = vpop.permute.xlu0 %2932
        %2934 = vrot.lane.b32.xlu0 %v2906, 100
        %v2935 = vpop.permute.xlu0 %2934
        %2936 = vrot.lane.b32.xlu0 %v2907, 100
        %v2937 = vpop.permute.xlu0 %2936
        %vm2938 = vcmask 818176
        %v2939 = vsel %vm2938, %v2919, %v2921
        %v2940 = vsel %vm2938, %v2921, %v2923
        %v2941 = vsel %vm2938, %v2923, %v2925
        %v2942 = vsel %vm2938, %v2925, %v2927
        %v2943 = vsel %vm2938, %v2929, %v2931
        %v2944 = vsel %vm2938, %v2931, %v2933
        %v2945 = vsel %vm2938, %v2933, %v2935
        %v2946 = vsel %vm2938, %v2935, %v2937
        %v2957 = vadd.f32 %v2880, %v2939
        %v2958 = vadd.f32 %v2881, %v2940
        %v2959 = vadd.f32 %v2882, %v2941
        %v2960 = vadd.f32 %v2883, %v2942
        %v2961 = vadd.f32 %v2884, %v2927
        %v2962 = vadd.f32 %v2885, %v2943
        %v2963 = vadd.f32 %v2886, %v2944
        %v2964 = vadd.f32 %v2887, %v2945
        %v2965 = vadd.f32 %v2888, %v2946
        %v2966 = vadd.f32 %v2889, %v2937
        %2967 = vset.pattern.permute.xlu0 29
        %2968 = vperm.xlu0 %2967, %v789
        %v2969 = vpop.permute.xlu0 %2968
        %2971 = vset.pattern.permute.xlu0 29
        %2972 = vperm.xlu0 %2971, %v790
        %v2973 = vpop.permute.xlu0 %2972
        %v2975 = vmul.f32 %v2969, %v692
        %v2976 = vmul.f32 %v2969, %v715
        %v2977 = vmul.f32 %v2969, %v738
        %v2978 = vmul.f32 %v2969, %v761
        %v2979 = vmul.f32 %v2969, %v784
        %v2980 = vmul.f32 %v2973, %v695
        %v2981 = vmul.f32 %v2973, %v718
        %v2982 = vmul.f32 %v2973, %v741
        %v2983 = vmul.f32 %v2973, %v764
        %v2984 = vmul.f32 %v2973, %v787
        %2995 = vrot.lane.b32.xlu0 %v2975, 99
        %v2996 = vpop.permute.xlu0 %2995
        %2997 = vrot.lane.b32.xlu0 %v2976, 99
        %v2998 = vpop.permute.xlu0 %2997
        %2999 = vrot.lane.b32.xlu0 %v2977, 99
        %v3000 = vpop.permute.xlu0 %2999
        %3001 = vrot.lane.b32.xlu0 %v2978, 99
        %v3002 = vpop.permute.xlu0 %3001
        %3003 = vrot.lane.b32.xlu0 %v2979, 99
        %v3004 = vpop.permute.xlu0 %3003
        %3005 = vrot.lane.b32.xlu0 %v2980, 99
        %v3006 = vpop.permute.xlu0 %3005
        %3007 = vrot.lane.b32.xlu0 %v2981, 99
        %v3008 = vpop.permute.xlu0 %3007
        %3009 = vrot.lane.b32.xlu0 %v2982, 99
        %v3010 = vpop.permute.xlu0 %3009
        %3011 = vrot.lane.b32.xlu0 %v2983, 99
        %v3012 = vpop.permute.xlu0 %3011
        %3013 = vrot.lane.b32.xlu0 %v2984, 99
        %v3014 = vpop.permute.xlu0 %3013
        %vm3015 = vcmask 809984
        %v3016 = vsel %vm3015, %v2996, %v2998
        %v3017 = vsel %vm3015, %v2998, %v3000
        %v3018 = vsel %vm3015, %v3000, %v3002
        %v3019 = vsel %vm3015, %v3002, %v3004
        %v3020 = vsel %vm3015, %v3006, %v3008
        %v3021 = vsel %vm3015, %v3008, %v3010
        %v3022 = vsel %vm3015, %v3010, %v3012
        %v3023 = vsel %vm3015, %v3012, %v3014
        %v3034 = vadd.f32 %v2957, %v3016
        %v3035 = vadd.f32 %v2958, %v3017
        %v3036 = vadd.f32 %v2959, %v3018
        %v3037 = vadd.f32 %v2960, %v3019
        %v3038 = vadd.f32 %v2961, %v3004
        %v3039 = vadd.f32 %v2962, %v3020
        %v3040 = vadd.f32 %v2963, %v3021
        %v3041 = vadd.f32 %v2964, %v3022
        %v3042 = vadd.f32 %v2965, %v3023
        %v3043 = vadd.f32 %v2966, %v3014
        %3044 = vset.pattern.permute.xlu0 30
        %3045 = vperm.xlu0 %3044, %v789
        %v3046 = vpop.permute.xlu0 %3045
        %3048 = vset.pattern.permute.xlu0 30
        %3049 = vperm.xlu0 %3048, %v790
        %v3050 = vpop.permute.xlu0 %3049
        %v3052 = vmul.f32 %v3046, %v692
        %v3053 = vmul.f32 %v3046, %v715
        %v3054 = vmul.f32 %v3046, %v738
        %v3055 = vmul.f32 %v3046, %v761
        %v3056 = vmul.f32 %v3046, %v784
        %v3057 = vmul.f32 %v3050, %v695
        %v3058 = vmul.f32 %v3050, %v718
        %v3059 = vmul.f32 %v3050, %v741
        %v3060 = vmul.f32 %v3050, %v764
        %v3061 = vmul.f32 %v3050, %v787
        %3072 = vrot.lane.b32.xlu0 %v3052, 98
        %v3073 = vpop.permute.xlu0 %3072
        %3074 = vrot.lane.b32.xlu0 %v3053, 98
        %v3075 = vpop.permute.xlu0 %3074
        %3076 = vrot.lane.b32.xlu0 %v3054, 98
        %v3077 = vpop.permute.xlu0 %3076
        %3078 = vrot.lane.b32.xlu0 %v3055, 98
        %v3079 = vpop.permute.xlu0 %3078
        %3080 = vrot.lane.b32.xlu0 %v3056, 98
        %v3081 = vpop.permute.xlu0 %3080
        %3082 = vrot.lane.b32.xlu0 %v3057, 98
        %v3083 = vpop.permute.xlu0 %3082
        %3084 = vrot.lane.b32.xlu0 %v3058, 98
        %v3085 = vpop.permute.xlu0 %3084
        %3086 = vrot.lane.b32.xlu0 %v3059, 98
        %v3087 = vpop.permute.xlu0 %3086
        %3088 = vrot.lane.b32.xlu0 %v3060, 98
        %v3089 = vpop.permute.xlu0 %3088
        %3090 = vrot.lane.b32.xlu0 %v3061, 98
        %v3091 = vpop.permute.xlu0 %3090
        %vm3092 = vcmask 801792
        %v3093 = vsel %vm3092, %v3073, %v3075
        %v3094 = vsel %vm3092, %v3075, %v3077
        %v3095 = vsel %vm3092, %v3077, %v3079
        %v3096 = vsel %vm3092, %v3079, %v3081
        %v3097 = vsel %vm3092, %v3083, %v3085
        %v3098 = vsel %vm3092, %v3085, %v3087
        %v3099 = vsel %vm3092, %v3087, %v3089
        %v3100 = vsel %vm3092, %v3089, %v3091
        %v3111 = vadd.f32 %v3034, %v3093
        %v3112 = vadd.f32 %v3035, %v3094
        %v3113 = vadd.f32 %v3036, %v3095
        %v3114 = vadd.f32 %v3037, %v3096
        %v3115 = vadd.f32 %v3038, %v3081
        %v3116 = vadd.f32 %v3039, %v3097
        %v3117 = vadd.f32 %v3040, %v3098
        %v3118 = vadd.f32 %v3041, %v3099
        %v3119 = vadd.f32 %v3042, %v3100
        %v3120 = vadd.f32 %v3043, %v3091
        %3121 = vset.pattern.permute.xlu0 31
        %3122 = vperm.xlu0 %3121, %v789
        %v3123 = vpop.permute.xlu0 %3122
        %3125 = vset.pattern.permute.xlu0 31
        %3126 = vperm.xlu0 %3125, %v790
        %v3127 = vpop.permute.xlu0 %3126
        %v3129 = vmul.f32 %v3123, %v692
        %v3130 = vmul.f32 %v3123, %v715
        %v3131 = vmul.f32 %v3123, %v738
        %v3132 = vmul.f32 %v3123, %v761
        %v3133 = vmul.f32 %v3123, %v784
        %v3134 = vmul.f32 %v3127, %v695
        %v3135 = vmul.f32 %v3127, %v718
        %v3136 = vmul.f32 %v3127, %v741
        %v3137 = vmul.f32 %v3127, %v764
        %v3138 = vmul.f32 %v3127, %v787
        %3149 = vrot.lane.b32.xlu0 %v3129, 97
        %v3150 = vpop.permute.xlu0 %3149
        %3151 = vrot.lane.b32.xlu0 %v3130, 97
        %v3152 = vpop.permute.xlu0 %3151
        %3153 = vrot.lane.b32.xlu0 %v3131, 97
        %v3154 = vpop.permute.xlu0 %3153
        %3155 = vrot.lane.b32.xlu0 %v3132, 97
        %v3156 = vpop.permute.xlu0 %3155
        %3157 = vrot.lane.b32.xlu0 %v3133, 97
        %v3158 = vpop.permute.xlu0 %3157
        %3159 = vrot.lane.b32.xlu0 %v3134, 97
        %v3160 = vpop.permute.xlu0 %3159
        %3161 = vrot.lane.b32.xlu0 %v3135, 97
        %v3162 = vpop.permute.xlu0 %3161
        %3163 = vrot.lane.b32.xlu0 %v3136, 97
        %v3164 = vpop.permute.xlu0 %3163
        %3165 = vrot.lane.b32.xlu0 %v3137, 97
        %v3166 = vpop.permute.xlu0 %3165
        %3167 = vrot.lane.b32.xlu0 %v3138, 97
        %v3168 = vpop.permute.xlu0 %3167
        %vm3169 = vcmask 793600
        %v3170 = vsel %vm3169, %v3150, %v3152
        %v3171 = vsel %vm3169, %v3152, %v3154
        %v3172 = vsel %vm3169, %v3154, %v3156
        %v3173 = vsel %vm3169, %v3156, %v3158
        %v3174 = vsel %vm3169, %v3160, %v3162
        %v3175 = vsel %vm3169, %v3162, %v3164
        %v3176 = vsel %vm3169, %v3164, %v3166
        %v3177 = vsel %vm3169, %v3166, %v3168
        %v3188 = vadd.f32 %v3111, %v3170
        %v3189 = vadd.f32 %v3112, %v3171
        %v3190 = vadd.f32 %v3113, %v3172
        %v3191 = vadd.f32 %v3114, %v3173
        %v3192 = vadd.f32 %v3115, %v3158
        %v3193 = vadd.f32 %v3116, %v3174
        %v3194 = vadd.f32 %v3117, %v3175
        %v3195 = vadd.f32 %v3118, %v3176
        %v3196 = vadd.f32 %v3119, %v3177
        %v3197 = vadd.f32 %v3120, %v3168
        %3198 = vset.pattern.permute.xlu0 32
        %3199 = vperm.xlu0 %3198, %v789
        %v3200 = vpop.permute.xlu0 %3199
        %3202 = vset.pattern.permute.xlu0 32
        %3203 = vperm.xlu0 %3202, %v790
        %v3204 = vpop.permute.xlu0 %3203
        %v3206 = vmul.f32 %v3200, %v692
        %v3207 = vmul.f32 %v3200, %v715
        %v3208 = vmul.f32 %v3200, %v738
        %v3209 = vmul.f32 %v3200, %v761
        %v3210 = vmul.f32 %v3200, %v784
        %v3211 = vmul.f32 %v3204, %v695
        %v3212 = vmul.f32 %v3204, %v718
        %v3213 = vmul.f32 %v3204, %v741
        %v3214 = vmul.f32 %v3204, %v764
        %v3215 = vmul.f32 %v3204, %v787
        %3226 = vrot.lane.b32.xlu0 %v3206, 96
        %v3227 = vpop.permute.xlu0 %3226
        %3228 = vrot.lane.b32.xlu0 %v3207, 96
        %v3229 = vpop.permute.xlu0 %3228
        %3230 = vrot.lane.b32.xlu0 %v3208, 96
        %v3231 = vpop.permute.xlu0 %3230
        %3232 = vrot.lane.b32.xlu0 %v3209, 96
        %v3233 = vpop.permute.xlu0 %3232
        %3234 = vrot.lane.b32.xlu0 %v3210, 96
        %v3235 = vpop.permute.xlu0 %3234
        %3236 = vrot.lane.b32.xlu0 %v3211, 96
        %v3237 = vpop.permute.xlu0 %3236
        %3238 = vrot.lane.b32.xlu0 %v3212, 96
        %v3239 = vpop.permute.xlu0 %3238
        %3240 = vrot.lane.b32.xlu0 %v3213, 96
        %v3241 = vpop.permute.xlu0 %3240
        %3242 = vrot.lane.b32.xlu0 %v3214, 96
        %v3243 = vpop.permute.xlu0 %3242
        %3244 = vrot.lane.b32.xlu0 %v3215, 96
        %v3245 = vpop.permute.xlu0 %3244
        %vm3246 = vcmask 785408
        %v3247 = vsel %vm3246, %v3227, %v3229
        %v3248 = vsel %vm3246, %v3229, %v3231
        %v3249 = vsel %vm3246, %v3231, %v3233
        %v3250 = vsel %vm3246, %v3233, %v3235
        %v3251 = vsel %vm3246, %v3237, %v3239
        %v3252 = vsel %vm3246, %v3239, %v3241
        %v3253 = vsel %vm3246, %v3241, %v3243
        %v3254 = vsel %vm3246, %v3243, %v3245
        %v3265 = vadd.f32 %v3188, %v3247
        %v3266 = vadd.f32 %v3189, %v3248
        %v3267 = vadd.f32 %v3190, %v3249
        %v3268 = vadd.f32 %v3191, %v3250
        %v3269 = vadd.f32 %v3192, %v3235
        %v3270 = vadd.f32 %v3193, %v3251
        %v3271 = vadd.f32 %v3194, %v3252
        %v3272 = vadd.f32 %v3195, %v3253
        %v3273 = vadd.f32 %v3196, %v3254
        %v3274 = vadd.f32 %v3197, %v3245
        %3275 = vset.pattern.permute.xlu0 33
        %3276 = vperm.xlu0 %3275, %v789
        %v3277 = vpop.permute.xlu0 %3276
        %3279 = vset.pattern.permute.xlu0 33
        %3280 = vperm.xlu0 %3279, %v790
        %v3281 = vpop.permute.xlu0 %3280
        %v3283 = vmul.f32 %v3277, %v692
        %v3284 = vmul.f32 %v3277, %v715
        %v3285 = vmul.f32 %v3277, %v738
        %v3286 = vmul.f32 %v3277, %v761
        %v3287 = vmul.f32 %v3277, %v784
        %v3288 = vmul.f32 %v3281, %v695
        %v3289 = vmul.f32 %v3281, %v718
        %v3290 = vmul.f32 %v3281, %v741
        %v3291 = vmul.f32 %v3281, %v764
        %v3292 = vmul.f32 %v3281, %v787
        %3303 = vrot.lane.b32.xlu0 %v3283, 95
        %v3304 = vpop.permute.xlu0 %3303
        %3305 = vrot.lane.b32.xlu0 %v3284, 95
        %v3306 = vpop.permute.xlu0 %3305
        %3307 = vrot.lane.b32.xlu0 %v3285, 95
        %v3308 = vpop.permute.xlu0 %3307
        %3309 = vrot.lane.b32.xlu0 %v3286, 95
        %v3310 = vpop.permute.xlu0 %3309
        %3311 = vrot.lane.b32.xlu0 %v3287, 95
        %v3312 = vpop.permute.xlu0 %3311
        %3313 = vrot.lane.b32.xlu0 %v3288, 95
        %v3314 = vpop.permute.xlu0 %3313
        %3315 = vrot.lane.b32.xlu0 %v3289, 95
        %v3316 = vpop.permute.xlu0 %3315
        %3317 = vrot.lane.b32.xlu0 %v3290, 95
        %v3318 = vpop.permute.xlu0 %3317
        %3319 = vrot.lane.b32.xlu0 %v3291, 95
        %v3320 = vpop.permute.xlu0 %3319
        %3321 = vrot.lane.b32.xlu0 %v3292, 95
        %v3322 = vpop.permute.xlu0 %3321
        %vm3323 = vcmask 777216
        %v3324 = vsel %vm3323, %v3304, %v3306
        %v3325 = vsel %vm3323, %v3306, %v3308
        %v3326 = vsel %vm3323, %v3308, %v3310
        %v3327 = vsel %vm3323, %v3310, %v3312
        %v3328 = vsel %vm3323, %v3314, %v3316
        %v3329 = vsel %vm3323, %v3316, %v3318
        %v3330 = vsel %vm3323, %v3318, %v3320
        %v3331 = vsel %vm3323, %v3320, %v3322
        %v3342 = vadd.f32 %v3265, %v3324
        %v3343 = vadd.f32 %v3266, %v3325
        %v3344 = vadd.f32 %v3267, %v3326
        %v3345 = vadd.f32 %v3268, %v3327
        %v3346 = vadd.f32 %v3269, %v3312
        %v3347 = vadd.f32 %v3270, %v3328
        %v3348 = vadd.f32 %v3271, %v3329
        %v3349 = vadd.f32 %v3272, %v3330
        %v3350 = vadd.f32 %v3273, %v3331
        %v3351 = vadd.f32 %v3274, %v3322
        %3352 = vset.pattern.permute.xlu0 34
        %3353 = vperm.xlu0 %3352, %v789
        %v3354 = vpop.permute.xlu0 %3353
        %3356 = vset.pattern.permute.xlu0 34
        %3357 = vperm.xlu0 %3356, %v790
        %v3358 = vpop.permute.xlu0 %3357
        %v3360 = vmul.f32 %v3354, %v692
        %v3361 = vmul.f32 %v3354, %v715
        %v3362 = vmul.f32 %v3354, %v738
        %v3363 = vmul.f32 %v3354, %v761
        %v3364 = vmul.f32 %v3354, %v784
        %v3365 = vmul.f32 %v3358, %v695
        %v3366 = vmul.f32 %v3358, %v718
        %v3367 = vmul.f32 %v3358, %v741
        %v3368 = vmul.f32 %v3358, %v764
        %v3369 = vmul.f32 %v3358, %v787
        %3380 = vrot.lane.b32.xlu0 %v3360, 94
        %v3381 = vpop.permute.xlu0 %3380
        %3382 = vrot.lane.b32.xlu0 %v3361, 94
        %v3383 = vpop.permute.xlu0 %3382
        %3384 = vrot.lane.b32.xlu0 %v3362, 94
        %v3385 = vpop.permute.xlu0 %3384
        %3386 = vrot.lane.b32.xlu0 %v3363, 94
        %v3387 = vpop.permute.xlu0 %3386
        %3388 = vrot.lane.b32.xlu0 %v3364, 94
        %v3389 = vpop.permute.xlu0 %3388
        %3390 = vrot.lane.b32.xlu0 %v3365, 94
        %v3391 = vpop.permute.xlu0 %3390
        %3392 = vrot.lane.b32.xlu0 %v3366, 94
        %v3393 = vpop.permute.xlu0 %3392
        %3394 = vrot.lane.b32.xlu0 %v3367, 94
        %v3395 = vpop.permute.xlu0 %3394
        %3396 = vrot.lane.b32.xlu0 %v3368, 94
        %v3397 = vpop.permute.xlu0 %3396
        %3398 = vrot.lane.b32.xlu0 %v3369, 94
        %v3399 = vpop.permute.xlu0 %3398
        %vm3400 = vcmask 769024
        %v3401 = vsel %vm3400, %v3381, %v3383
        %v3402 = vsel %vm3400, %v3383, %v3385
        %v3403 = vsel %vm3400, %v3385, %v3387
        %v3404 = vsel %vm3400, %v3387, %v3389
        %v3405 = vsel %vm3400, %v3391, %v3393
        %v3406 = vsel %vm3400, %v3393, %v3395
        %v3407 = vsel %vm3400, %v3395, %v3397
        %v3408 = vsel %vm3400, %v3397, %v3399
        %v3419 = vadd.f32 %v3342, %v3401
        %v3420 = vadd.f32 %v3343, %v3402
        %v3421 = vadd.f32 %v3344, %v3403
        %v3422 = vadd.f32 %v3345, %v3404
        %v3423 = vadd.f32 %v3346, %v3389
        %v3424 = vadd.f32 %v3347, %v3405
        %v3425 = vadd.f32 %v3348, %v3406
        %v3426 = vadd.f32 %v3349, %v3407
        %v3427 = vadd.f32 %v3350, %v3408
        %v3428 = vadd.f32 %v3351, %v3399
        %3429 = vset.pattern.permute.xlu0 35
        %3430 = vperm.xlu0 %3429, %v789
        %v3431 = vpop.permute.xlu0 %3430
        %3433 = vset.pattern.permute.xlu0 35
        %3434 = vperm.xlu0 %3433, %v790
        %v3435 = vpop.permute.xlu0 %3434
        %v3437 = vmul.f32 %v3431, %v692
        %v3438 = vmul.f32 %v3431, %v715
        %v3439 = vmul.f32 %v3431, %v738
        %v3440 = vmul.f32 %v3431, %v761
        %v3441 = vmul.f32 %v3431, %v784
        %v3442 = vmul.f32 %v3435, %v695
        %v3443 = vmul.f32 %v3435, %v718
        %v3444 = vmul.f32 %v3435, %v741
        %v3445 = vmul.f32 %v3435, %v764
        %v3446 = vmul.f32 %v3435, %v787
        %3457 = vrot.lane.b32.xlu0 %v3437, 93
        %v3458 = vpop.permute.xlu0 %3457
        %3459 = vrot.lane.b32.xlu0 %v3438, 93
        %v3460 = vpop.permute.xlu0 %3459
        %3461 = vrot.lane.b32.xlu0 %v3439, 93
        %v3462 = vpop.permute.xlu0 %3461
        %3463 = vrot.lane.b32.xlu0 %v3440, 93
        %v3464 = vpop.permute.xlu0 %3463
        %3465 = vrot.lane.b32.xlu0 %v3441, 93
        %v3466 = vpop.permute.xlu0 %3465
        %3467 = vrot.lane.b32.xlu0 %v3442, 93
        %v3468 = vpop.permute.xlu0 %3467
        %3469 = vrot.lane.b32.xlu0 %v3443, 93
        %v3470 = vpop.permute.xlu0 %3469
        %3471 = vrot.lane.b32.xlu0 %v3444, 93
        %v3472 = vpop.permute.xlu0 %3471
        %3473 = vrot.lane.b32.xlu0 %v3445, 93
        %v3474 = vpop.permute.xlu0 %3473
        %3475 = vrot.lane.b32.xlu0 %v3446, 93
        %v3476 = vpop.permute.xlu0 %3475
        %vm3477 = vcmask 760832
        %v3478 = vsel %vm3477, %v3458, %v3460
        %v3479 = vsel %vm3477, %v3460, %v3462
        %v3480 = vsel %vm3477, %v3462, %v3464
        %v3481 = vsel %vm3477, %v3464, %v3466
        %v3482 = vsel %vm3477, %v3468, %v3470
        %v3483 = vsel %vm3477, %v3470, %v3472
        %v3484 = vsel %vm3477, %v3472, %v3474
        %v3485 = vsel %vm3477, %v3474, %v3476
        %v3496 = vadd.f32 %v3419, %v3478
        %v3497 = vadd.f32 %v3420, %v3479
        %v3498 = vadd.f32 %v3421, %v3480
        %v3499 = vadd.f32 %v3422, %v3481
        %v3500 = vadd.f32 %v3423, %v3466
        %v3501 = vadd.f32 %v3424, %v3482
        %v3502 = vadd.f32 %v3425, %v3483
        %v3503 = vadd.f32 %v3426, %v3484
        %v3504 = vadd.f32 %v3427, %v3485
        %v3505 = vadd.f32 %v3428, %v3476
        %3506 = vset.pattern.permute.xlu0 36
        %3507 = vperm.xlu0 %3506, %v789
        %v3508 = vpop.permute.xlu0 %3507
        %3510 = vset.pattern.permute.xlu0 36
        %3511 = vperm.xlu0 %3510, %v790
        %v3512 = vpop.permute.xlu0 %3511
        %v3514 = vmul.f32 %v3508, %v692
        %v3515 = vmul.f32 %v3508, %v715
        %v3516 = vmul.f32 %v3508, %v738
        %v3517 = vmul.f32 %v3508, %v761
        %v3518 = vmul.f32 %v3508, %v784
        %v3519 = vmul.f32 %v3512, %v695
        %v3520 = vmul.f32 %v3512, %v718
        %v3521 = vmul.f32 %v3512, %v741
        %v3522 = vmul.f32 %v3512, %v764
        %v3523 = vmul.f32 %v3512, %v787
        %3534 = vrot.lane.b32.xlu0 %v3514, 92
        %v3535 = vpop.permute.xlu0 %3534
        %3536 = vrot.lane.b32.xlu0 %v3515, 92
        %v3537 = vpop.permute.xlu0 %3536
        %3538 = vrot.lane.b32.xlu0 %v3516, 92
        %v3539 = vpop.permute.xlu0 %3538
        %3540 = vrot.lane.b32.xlu0 %v3517, 92
        %v3541 = vpop.permute.xlu0 %3540
        %3542 = vrot.lane.b32.xlu0 %v3518, 92
        %v3543 = vpop.permute.xlu0 %3542
        %3544 = vrot.lane.b32.xlu0 %v3519, 92
        %v3545 = vpop.permute.xlu0 %3544
        %3546 = vrot.lane.b32.xlu0 %v3520, 92
        %v3547 = vpop.permute.xlu0 %3546
        %3548 = vrot.lane.b32.xlu0 %v3521, 92
        %v3549 = vpop.permute.xlu0 %3548
        %3550 = vrot.lane.b32.xlu0 %v3522, 92
        %v3551 = vpop.permute.xlu0 %3550
        %3552 = vrot.lane.b32.xlu0 %v3523, 92
        %v3553 = vpop.permute.xlu0 %3552
        %vm3554 = vcmask 752640
        %v3555 = vsel %vm3554, %v3535, %v3537
        %v3556 = vsel %vm3554, %v3537, %v3539
        %v3557 = vsel %vm3554, %v3539, %v3541
        %v3558 = vsel %vm3554, %v3541, %v3543
        %v3559 = vsel %vm3554, %v3545, %v3547
        %v3560 = vsel %vm3554, %v3547, %v3549
        %v3561 = vsel %vm3554, %v3549, %v3551
        %v3562 = vsel %vm3554, %v3551, %v3553
        %v3573 = vadd.f32 %v3496, %v3555
        %v3574 = vadd.f32 %v3497, %v3556
        %v3575 = vadd.f32 %v3498, %v3557
        %v3576 = vadd.f32 %v3499, %v3558
        %v3577 = vadd.f32 %v3500, %v3543
        %v3578 = vadd.f32 %v3501, %v3559
        %v3579 = vadd.f32 %v3502, %v3560
        %v3580 = vadd.f32 %v3503, %v3561
        %v3581 = vadd.f32 %v3504, %v3562
        %v3582 = vadd.f32 %v3505, %v3553
        %3583 = vset.pattern.permute.xlu0 37
        %3584 = vperm.xlu0 %3583, %v789
        %v3585 = vpop.permute.xlu0 %3584
        %3587 = vset.pattern.permute.xlu0 37
        %3588 = vperm.xlu0 %3587, %v790
        %v3589 = vpop.permute.xlu0 %3588
        %v3591 = vmul.f32 %v3585, %v692
        %v3592 = vmul.f32 %v3585, %v715
        %v3593 = vmul.f32 %v3585, %v738
        %v3594 = vmul.f32 %v3585, %v761
        %v3595 = vmul.f32 %v3585, %v784
        %v3596 = vmul.f32 %v3589, %v695
        %v3597 = vmul.f32 %v3589, %v718
        %v3598 = vmul.f32 %v3589, %v741
        %v3599 = vmul.f32 %v3589, %v764
        %v3600 = vmul.f32 %v3589, %v787
        %3611 = vrot.lane.b32.xlu0 %v3591, 91
        %v3612 = vpop.permute.xlu0 %3611
        %3613 = vrot.lane.b32.xlu0 %v3592, 91
        %v3614 = vpop.permute.xlu0 %3613
        %3615 = vrot.lane.b32.xlu0 %v3593, 91
        %v3616 = vpop.permute.xlu0 %3615
        %3617 = vrot.lane.b32.xlu0 %v3594, 91
        %v3618 = vpop.permute.xlu0 %3617
        %3619 = vrot.lane.b32.xlu0 %v3595, 91
        %v3620 = vpop.permute.xlu0 %3619
        %3621 = vrot.lane.b32.xlu0 %v3596, 91
        %v3622 = vpop.permute.xlu0 %3621
        %3623 = vrot.lane.b32.xlu0 %v3597, 91
        %v3624 = vpop.permute.xlu0 %3623
        %3625 = vrot.lane.b32.xlu0 %v3598, 91
        %v3626 = vpop.permute.xlu0 %3625
        %3627 = vrot.lane.b32.xlu0 %v3599, 91
        %v3628 = vpop.permute.xlu0 %3627
        %3629 = vrot.lane.b32.xlu0 %v3600, 91
        %v3630 = vpop.permute.xlu0 %3629
        %vm3631 = vcmask 744448
        %v3632 = vsel %vm3631, %v3612, %v3614
        %v3633 = vsel %vm3631, %v3614, %v3616
        %v3634 = vsel %vm3631, %v3616, %v3618
        %v3635 = vsel %vm3631, %v3618, %v3620
        %v3636 = vsel %vm3631, %v3622, %v3624
        %v3637 = vsel %vm3631, %v3624, %v3626
        %v3638 = vsel %vm3631, %v3626, %v3628
        %v3639 = vsel %vm3631, %v3628, %v3630
        %v3650 = vadd.f32 %v3573, %v3632
        %v3651 = vadd.f32 %v3574, %v3633
        %v3652 = vadd.f32 %v3575, %v3634
        %v3653 = vadd.f32 %v3576, %v3635
        %v3654 = vadd.f32 %v3577, %v3620
        %v3655 = vadd.f32 %v3578, %v3636
        %v3656 = vadd.f32 %v3579, %v3637
        %v3657 = vadd.f32 %v3580, %v3638
        %v3658 = vadd.f32 %v3581, %v3639
        %v3659 = vadd.f32 %v3582, %v3630
        %3660 = vset.pattern.permute.xlu0 38
        %3661 = vperm.xlu0 %3660, %v789
        %v3662 = vpop.permute.xlu0 %3661
        %3664 = vset.pattern.permute.xlu0 38
        %3665 = vperm.xlu0 %3664, %v790
        %v3666 = vpop.permute.xlu0 %3665
        %v3668 = vmul.f32 %v3662, %v692
        %v3669 = vmul.f32 %v3662, %v715
        %v3670 = vmul.f32 %v3662, %v738
        %v3671 = vmul.f32 %v3662, %v761
        %v3672 = vmul.f32 %v3662, %v784
        %v3673 = vmul.f32 %v3666, %v695
        %v3674 = vmul.f32 %v3666, %v718
        %v3675 = vmul.f32 %v3666, %v741
        %v3676 = vmul.f32 %v3666, %v764
        %v3677 = vmul.f32 %v3666, %v787
        %3688 = vrot.lane.b32.xlu0 %v3668, 90
        %v3689 = vpop.permute.xlu0 %3688
        %3690 = vrot.lane.b32.xlu0 %v3669, 90
        %v3691 = vpop.permute.xlu0 %3690
        %3692 = vrot.lane.b32.xlu0 %v3670, 90
        %v3693 = vpop.permute.xlu0 %3692
        %3694 = vrot.lane.b32.xlu0 %v3671, 90
        %v3695 = vpop.permute.xlu0 %3694
        %3696 = vrot.lane.b32.xlu0 %v3672, 90
        %v3697 = vpop.permute.xlu0 %3696
        %3698 = vrot.lane.b32.xlu0 %v3673, 90
        %v3699 = vpop.permute.xlu0 %3698
        %3700 = vrot.lane.b32.xlu0 %v3674, 90
        %v3701 = vpop.permute.xlu0 %3700
        %3702 = vrot.lane.b32.xlu0 %v3675, 90
        %v3703 = vpop.permute.xlu0 %3702
        %3704 = vrot.lane.b32.xlu0 %v3676, 90
        %v3705 = vpop.permute.xlu0 %3704
        %3706 = vrot.lane.b32.xlu0 %v3677, 90
        %v3707 = vpop.permute.xlu0 %3706
        %vm3708 = vcmask 736256
        %v3709 = vsel %vm3708, %v3689, %v3691
        %v3710 = vsel %vm3708, %v3691, %v3693
        %v3711 = vsel %vm3708, %v3693, %v3695
        %v3712 = vsel %vm3708, %v3695, %v3697
        %v3713 = vsel %vm3708, %v3699, %v3701
        %v3714 = vsel %vm3708, %v3701, %v3703
        %v3715 = vsel %vm3708, %v3703, %v3705
        %v3716 = vsel %vm3708, %v3705, %v3707
        %v3727 = vadd.f32 %v3650, %v3709
        %v3728 = vadd.f32 %v3651, %v3710
        %v3729 = vadd.f32 %v3652, %v3711
        %v3730 = vadd.f32 %v3653, %v3712
        %v3731 = vadd.f32 %v3654, %v3697
        %v3732 = vadd.f32 %v3655, %v3713
        %v3733 = vadd.f32 %v3656, %v3714
        %v3734 = vadd.f32 %v3657, %v3715
        %v3735 = vadd.f32 %v3658, %v3716
        %v3736 = vadd.f32 %v3659, %v3707
        %3737 = vset.pattern.permute.xlu0 39
        %3738 = vperm.xlu0 %3737, %v789
        %v3739 = vpop.permute.xlu0 %3738
        %3741 = vset.pattern.permute.xlu0 39
        %3742 = vperm.xlu0 %3741, %v790
        %v3743 = vpop.permute.xlu0 %3742
        %v3745 = vmul.f32 %v3739, %v692
        %v3746 = vmul.f32 %v3739, %v715
        %v3747 = vmul.f32 %v3739, %v738
        %v3748 = vmul.f32 %v3739, %v761
        %v3749 = vmul.f32 %v3739, %v784
        %v3750 = vmul.f32 %v3743, %v695
        %v3751 = vmul.f32 %v3743, %v718
        %v3752 = vmul.f32 %v3743, %v741
        %v3753 = vmul.f32 %v3743, %v764
        %v3754 = vmul.f32 %v3743, %v787
        %3765 = vrot.lane.b32.xlu0 %v3745, 89
        %v3766 = vpop.permute.xlu0 %3765
        %3767 = vrot.lane.b32.xlu0 %v3746, 89
        %v3768 = vpop.permute.xlu0 %3767
        %3769 = vrot.lane.b32.xlu0 %v3747, 89
        %v3770 = vpop.permute.xlu0 %3769
        %3771 = vrot.lane.b32.xlu0 %v3748, 89
        %v3772 = vpop.permute.xlu0 %3771
        %3773 = vrot.lane.b32.xlu0 %v3749, 89
        %v3774 = vpop.permute.xlu0 %3773
        %3775 = vrot.lane.b32.xlu0 %v3750, 89
        %v3776 = vpop.permute.xlu0 %3775
        %3777 = vrot.lane.b32.xlu0 %v3751, 89
        %v3778 = vpop.permute.xlu0 %3777
        %3779 = vrot.lane.b32.xlu0 %v3752, 89
        %v3780 = vpop.permute.xlu0 %3779
        %3781 = vrot.lane.b32.xlu0 %v3753, 89
        %v3782 = vpop.permute.xlu0 %3781
        %3783 = vrot.lane.b32.xlu0 %v3754, 89
        %v3784 = vpop.permute.xlu0 %3783
        %vm3785 = vcmask 728064
        %v3786 = vsel %vm3785, %v3766, %v3768
        %v3787 = vsel %vm3785, %v3768, %v3770
        %v3788 = vsel %vm3785, %v3770, %v3772
        %v3789 = vsel %vm3785, %v3772, %v3774
        %v3790 = vsel %vm3785, %v3776, %v3778
        %v3791 = vsel %vm3785, %v3778, %v3780
        %v3792 = vsel %vm3785, %v3780, %v3782
        %v3793 = vsel %vm3785, %v3782, %v3784
        %v3804 = vadd.f32 %v3727, %v3786
        %v3805 = vadd.f32 %v3728, %v3787
        %v3806 = vadd.f32 %v3729, %v3788
        %v3807 = vadd.f32 %v3730, %v3789
        %v3808 = vadd.f32 %v3731, %v3774
        %v3809 = vadd.f32 %v3732, %v3790
        %v3810 = vadd.f32 %v3733, %v3791
        %v3811 = vadd.f32 %v3734, %v3792
        %v3812 = vadd.f32 %v3735, %v3793
        %v3813 = vadd.f32 %v3736, %v3784
        %3814 = vset.pattern.permute.xlu0 40
        %3815 = vperm.xlu0 %3814, %v789
        %v3816 = vpop.permute.xlu0 %3815
        %3818 = vset.pattern.permute.xlu0 40
        %3819 = vperm.xlu0 %3818, %v790
        %v3820 = vpop.permute.xlu0 %3819
        %v3822 = vmul.f32 %v3816, %v692
        %v3823 = vmul.f32 %v3816, %v715
        %v3824 = vmul.f32 %v3816, %v738
        %v3825 = vmul.f32 %v3816, %v761
        %v3826 = vmul.f32 %v3816, %v784
        %v3827 = vmul.f32 %v3820, %v695
        %v3828 = vmul.f32 %v3820, %v718
        %v3829 = vmul.f32 %v3820, %v741
        %v3830 = vmul.f32 %v3820, %v764
        %v3831 = vmul.f32 %v3820, %v787
        %3842 = vrot.lane.b32.xlu0 %v3822, 88
        %v3843 = vpop.permute.xlu0 %3842
        %3844 = vrot.lane.b32.xlu0 %v3823, 88
        %v3845 = vpop.permute.xlu0 %3844
        %3846 = vrot.lane.b32.xlu0 %v3824, 88
        %v3847 = vpop.permute.xlu0 %3846
        %3848 = vrot.lane.b32.xlu0 %v3825, 88
        %v3849 = vpop.permute.xlu0 %3848
        %3850 = vrot.lane.b32.xlu0 %v3826, 88
        %v3851 = vpop.permute.xlu0 %3850
        %3852 = vrot.lane.b32.xlu0 %v3827, 88
        %v3853 = vpop.permute.xlu0 %3852
        %3854 = vrot.lane.b32.xlu0 %v3828, 88
        %v3855 = vpop.permute.xlu0 %3854
        %3856 = vrot.lane.b32.xlu0 %v3829, 88
        %v3857 = vpop.permute.xlu0 %3856
        %3858 = vrot.lane.b32.xlu0 %v3830, 88
        %v3859 = vpop.permute.xlu0 %3858
        %3860 = vrot.lane.b32.xlu0 %v3831, 88
        %v3861 = vpop.permute.xlu0 %3860
        %vm3862 = vcmask 719872
        %v3863 = vsel %vm3862, %v3843, %v3845
        %v3864 = vsel %vm3862, %v3845, %v3847
        %v3865 = vsel %vm3862, %v3847, %v3849
        %v3866 = vsel %vm3862, %v3849, %v3851
        %v3867 = vsel %vm3862, %v3853, %v3855
        %v3868 = vsel %vm3862, %v3855, %v3857
        %v3869 = vsel %vm3862, %v3857, %v3859
        %v3870 = vsel %vm3862, %v3859, %v3861
        %v3881 = vadd.f32 %v3804, %v3863
        %v3882 = vadd.f32 %v3805, %v3864
        %v3883 = vadd.f32 %v3806, %v3865
        %v3884 = vadd.f32 %v3807, %v3866
        %v3885 = vadd.f32 %v3808, %v3851
        %v3886 = vadd.f32 %v3809, %v3867
        %v3887 = vadd.f32 %v3810, %v3868
        %v3888 = vadd.f32 %v3811, %v3869
        %v3889 = vadd.f32 %v3812, %v3870
        %v3890 = vadd.f32 %v3813, %v3861
        %3891 = vset.pattern.permute.xlu0 41
        %3892 = vperm.xlu0 %3891, %v789
        %v3893 = vpop.permute.xlu0 %3892
        %3895 = vset.pattern.permute.xlu0 41
        %3896 = vperm.xlu0 %3895, %v790
        %v3897 = vpop.permute.xlu0 %3896
        %v3899 = vmul.f32 %v3893, %v692
        %v3900 = vmul.f32 %v3893, %v715
        %v3901 = vmul.f32 %v3893, %v738
        %v3902 = vmul.f32 %v3893, %v761
        %v3903 = vmul.f32 %v3893, %v784
        %v3904 = vmul.f32 %v3897, %v695
        %v3905 = vmul.f32 %v3897, %v718
        %v3906 = vmul.f32 %v3897, %v741
        %v3907 = vmul.f32 %v3897, %v764
        %v3908 = vmul.f32 %v3897, %v787
        %3919 = vrot.lane.b32.xlu0 %v3899, 87
        %v3920 = vpop.permute.xlu0 %3919
        %3921 = vrot.lane.b32.xlu0 %v3900, 87
        %v3922 = vpop.permute.xlu0 %3921
        %3923 = vrot.lane.b32.xlu0 %v3901, 87
        %v3924 = vpop.permute.xlu0 %3923
        %3925 = vrot.lane.b32.xlu0 %v3902, 87
        %v3926 = vpop.permute.xlu0 %3925
        %3927 = vrot.lane.b32.xlu0 %v3903, 87
        %v3928 = vpop.permute.xlu0 %3927
        %3929 = vrot.lane.b32.xlu0 %v3904, 87
        %v3930 = vpop.permute.xlu0 %3929
        %3931 = vrot.lane.b32.xlu0 %v3905, 87
        %v3932 = vpop.permute.xlu0 %3931
        %3933 = vrot.lane.b32.xlu0 %v3906, 87
        %v3934 = vpop.permute.xlu0 %3933
        %3935 = vrot.lane.b32.xlu0 %v3907, 87
        %v3936 = vpop.permute.xlu0 %3935
        %3937 = vrot.lane.b32.xlu0 %v3908, 87
        %v3938 = vpop.permute.xlu0 %3937
        %vm3939 = vcmask 711680
        %v3940 = vsel %vm3939, %v3920, %v3922
        %v3941 = vsel %vm3939, %v3922, %v3924
        %v3942 = vsel %vm3939, %v3924, %v3926
        %v3943 = vsel %vm3939, %v3926, %v3928
        %v3944 = vsel %vm3939, %v3930, %v3932
        %v3945 = vsel %vm3939, %v3932, %v3934
        %v3946 = vsel %vm3939, %v3934, %v3936
        %v3947 = vsel %vm3939, %v3936, %v3938
        %v3958 = vadd.f32 %v3881, %v3940
        %v3959 = vadd.f32 %v3882, %v3941
        %v3960 = vadd.f32 %v3883, %v3942
        %v3961 = vadd.f32 %v3884, %v3943
        %v3962 = vadd.f32 %v3885, %v3928
        %v3963 = vadd.f32 %v3886, %v3944
        %v3964 = vadd.f32 %v3887, %v3945
        %v3965 = vadd.f32 %v3888, %v3946
        %v3966 = vadd.f32 %v3889, %v3947
        %v3967 = vadd.f32 %v3890, %v3938
        %3968 = vset.pattern.permute.xlu0 42
        %3969 = vperm.xlu0 %3968, %v789
        %v3970 = vpop.permute.xlu0 %3969
        %3972 = vset.pattern.permute.xlu0 42
        %3973 = vperm.xlu0 %3972, %v790
        %v3974 = vpop.permute.xlu0 %3973
        %v3976 = vmul.f32 %v3970, %v692
        %v3977 = vmul.f32 %v3970, %v715
        %v3978 = vmul.f32 %v3970, %v738
        %v3979 = vmul.f32 %v3970, %v761
        %v3980 = vmul.f32 %v3970, %v784
        %v3981 = vmul.f32 %v3974, %v695
        %v3982 = vmul.f32 %v3974, %v718
        %v3983 = vmul.f32 %v3974, %v741
        %v3984 = vmul.f32 %v3974, %v764
        %v3985 = vmul.f32 %v3974, %v787
        %3996 = vrot.lane.b32.xlu0 %v3976, 86
        %v3997 = vpop.permute.xlu0 %3996
        %3998 = vrot.lane.b32.xlu0 %v3977, 86
        %v3999 = vpop.permute.xlu0 %3998
        %4000 = vrot.lane.b32.xlu0 %v3978, 86
        %v4001 = vpop.permute.xlu0 %4000
        %4002 = vrot.lane.b32.xlu0 %v3979, 86
        %v4003 = vpop.permute.xlu0 %4002
        %4004 = vrot.lane.b32.xlu0 %v3980, 86
        %v4005 = vpop.permute.xlu0 %4004
        %4006 = vrot.lane.b32.xlu0 %v3981, 86
        %v4007 = vpop.permute.xlu0 %4006
        %4008 = vrot.lane.b32.xlu0 %v3982, 86
        %v4009 = vpop.permute.xlu0 %4008
        %4010 = vrot.lane.b32.xlu0 %v3983, 86
        %v4011 = vpop.permute.xlu0 %4010
        %4012 = vrot.lane.b32.xlu0 %v3984, 86
        %v4013 = vpop.permute.xlu0 %4012
        %4014 = vrot.lane.b32.xlu0 %v3985, 86
        %v4015 = vpop.permute.xlu0 %4014
        %vm4016 = vcmask 703488
        %v4017 = vsel %vm4016, %v3997, %v3999
        %v4018 = vsel %vm4016, %v3999, %v4001
        %v4019 = vsel %vm4016, %v4001, %v4003
        %v4020 = vsel %vm4016, %v4003, %v4005
        %v4021 = vsel %vm4016, %v4007, %v4009
        %v4022 = vsel %vm4016, %v4009, %v4011
        %v4023 = vsel %vm4016, %v4011, %v4013
        %v4024 = vsel %vm4016, %v4013, %v4015
        %v4035 = vadd.f32 %v3958, %v4017
        %v4036 = vadd.f32 %v3959, %v4018
        %v4037 = vadd.f32 %v3960, %v4019
        %v4038 = vadd.f32 %v3961, %v4020
        %v4039 = vadd.f32 %v3962, %v4005
        %v4040 = vadd.f32 %v3963, %v4021
        %v4041 = vadd.f32 %v3964, %v4022
        %v4042 = vadd.f32 %v3965, %v4023
        %v4043 = vadd.f32 %v3966, %v4024
        %v4044 = vadd.f32 %v3967, %v4015
        %4045 = vset.pattern.permute.xlu0 43
        %4046 = vperm.xlu0 %4045, %v789
        %v4047 = vpop.permute.xlu0 %4046
        %4049 = vset.pattern.permute.xlu0 43
        %4050 = vperm.xlu0 %4049, %v790
        %v4051 = vpop.permute.xlu0 %4050
        %v4053 = vmul.f32 %v4047, %v692
        %v4054 = vmul.f32 %v4047, %v715
        %v4055 = vmul.f32 %v4047, %v738
        %v4056 = vmul.f32 %v4047, %v761
        %v4057 = vmul.f32 %v4047, %v784
        %v4058 = vmul.f32 %v4051, %v695
        %v4059 = vmul.f32 %v4051, %v718
        %v4060 = vmul.f32 %v4051, %v741
        %v4061 = vmul.f32 %v4051, %v764
        %v4062 = vmul.f32 %v4051, %v787
        %4073 = vrot.lane.b32.xlu0 %v4053, 85
        %v4074 = vpop.permute.xlu0 %4073
        %4075 = vrot.lane.b32.xlu0 %v4054, 85
        %v4076 = vpop.permute.xlu0 %4075
        %4077 = vrot.lane.b32.xlu0 %v4055, 85
        %v4078 = vpop.permute.xlu0 %4077
        %4079 = vrot.lane.b32.xlu0 %v4056, 85
        %v4080 = vpop.permute.xlu0 %4079
        %4081 = vrot.lane.b32.xlu0 %v4057, 85
        %v4082 = vpop.permute.xlu0 %4081
        %4083 = vrot.lane.b32.xlu0 %v4058, 85
        %v4084 = vpop.permute.xlu0 %4083
        %4085 = vrot.lane.b32.xlu0 %v4059, 85
        %v4086 = vpop.permute.xlu0 %4085
        %4087 = vrot.lane.b32.xlu0 %v4060, 85
        %v4088 = vpop.permute.xlu0 %4087
        %4089 = vrot.lane.b32.xlu0 %v4061, 85
        %v4090 = vpop.permute.xlu0 %4089
        %4091 = vrot.lane.b32.xlu0 %v4062, 85
        %v4092 = vpop.permute.xlu0 %4091
        %vm4093 = vcmask 695296
        %v4094 = vsel %vm4093, %v4074, %v4076
        %v4095 = vsel %vm4093, %v4076, %v4078
        %v4096 = vsel %vm4093, %v4078, %v4080
        %v4097 = vsel %vm4093, %v4080, %v4082
        %v4098 = vsel %vm4093, %v4084, %v4086
        %v4099 = vsel %vm4093, %v4086, %v4088
        %v4100 = vsel %vm4093, %v4088, %v4090
        %v4101 = vsel %vm4093, %v4090, %v4092
        %v4112 = vadd.f32 %v4035, %v4094
        %v4113 = vadd.f32 %v4036, %v4095
        %v4114 = vadd.f32 %v4037, %v4096
        %v4115 = vadd.f32 %v4038, %v4097
        %v4116 = vadd.f32 %v4039, %v4082
        %v4117 = vadd.f32 %v4040, %v4098
        %v4118 = vadd.f32 %v4041, %v4099
        %v4119 = vadd.f32 %v4042, %v4100
        %v4120 = vadd.f32 %v4043, %v4101
        %v4121 = vadd.f32 %v4044, %v4092
        %4122 = vset.pattern.permute.xlu0 44
        %4123 = vperm.xlu0 %4122, %v789
        %v4124 = vpop.permute.xlu0 %4123
        %4126 = vset.pattern.permute.xlu0 44
        %4127 = vperm.xlu0 %4126, %v790
        %v4128 = vpop.permute.xlu0 %4127
        %v4130 = vmul.f32 %v4124, %v692
        %v4131 = vmul.f32 %v4124, %v715
        %v4132 = vmul.f32 %v4124, %v738
        %v4133 = vmul.f32 %v4124, %v761
        %v4134 = vmul.f32 %v4124, %v784
        %v4135 = vmul.f32 %v4128, %v695
        %v4136 = vmul.f32 %v4128, %v718
        %v4137 = vmul.f32 %v4128, %v741
        %v4138 = vmul.f32 %v4128, %v764
        %v4139 = vmul.f32 %v4128, %v787
        %4150 = vrot.lane.b32.xlu0 %v4130, 84
        %v4151 = vpop.permute.xlu0 %4150
        %4152 = vrot.lane.b32.xlu0 %v4131, 84
        %v4153 = vpop.permute.xlu0 %4152
        %4154 = vrot.lane.b32.xlu0 %v4132, 84
        %v4155 = vpop.permute.xlu0 %4154
        %4156 = vrot.lane.b32.xlu0 %v4133, 84
        %v4157 = vpop.permute.xlu0 %4156
        %4158 = vrot.lane.b32.xlu0 %v4134, 84
        %v4159 = vpop.permute.xlu0 %4158
        %4160 = vrot.lane.b32.xlu0 %v4135, 84
        %v4161 = vpop.permute.xlu0 %4160
        %4162 = vrot.lane.b32.xlu0 %v4136, 84
        %v4163 = vpop.permute.xlu0 %4162
        %4164 = vrot.lane.b32.xlu0 %v4137, 84
        %v4165 = vpop.permute.xlu0 %4164
        %4166 = vrot.lane.b32.xlu0 %v4138, 84
        %v4167 = vpop.permute.xlu0 %4166
        %4168 = vrot.lane.b32.xlu0 %v4139, 84
        %v4169 = vpop.permute.xlu0 %4168
        %vm4170 = vcmask 687104
        %v4171 = vsel %vm4170, %v4151, %v4153
        %v4172 = vsel %vm4170, %v4153, %v4155
        %v4173 = vsel %vm4170, %v4155, %v4157
        %v4174 = vsel %vm4170, %v4157, %v4159
        %v4175 = vsel %vm4170, %v4161, %v4163
        %v4176 = vsel %vm4170, %v4163, %v4165
        %v4177 = vsel %vm4170, %v4165, %v4167
        %v4178 = vsel %vm4170, %v4167, %v4169
        %v4189 = vadd.f32 %v4112, %v4171
        %v4190 = vadd.f32 %v4113, %v4172
        %v4191 = vadd.f32 %v4114, %v4173
        %v4192 = vadd.f32 %v4115, %v4174
        %v4193 = vadd.f32 %v4116, %v4159
        %v4194 = vadd.f32 %v4117, %v4175
        %v4195 = vadd.f32 %v4118, %v4176
        %v4196 = vadd.f32 %v4119, %v4177
        %v4197 = vadd.f32 %v4120, %v4178
        %v4198 = vadd.f32 %v4121, %v4169
        %4199 = vset.pattern.permute.xlu0 45
        %4200 = vperm.xlu0 %4199, %v789
        %v4201 = vpop.permute.xlu0 %4200
        %4203 = vset.pattern.permute.xlu0 45
        %4204 = vperm.xlu0 %4203, %v790
        %v4205 = vpop.permute.xlu0 %4204
        %v4207 = vmul.f32 %v4201, %v692
        %v4208 = vmul.f32 %v4201, %v715
        %v4209 = vmul.f32 %v4201, %v738
        %v4210 = vmul.f32 %v4201, %v761
        %v4211 = vmul.f32 %v4201, %v784
        %v4212 = vmul.f32 %v4205, %v695
        %v4213 = vmul.f32 %v4205, %v718
        %v4214 = vmul.f32 %v4205, %v741
        %v4215 = vmul.f32 %v4205, %v764
        %v4216 = vmul.f32 %v4205, %v787
        %4227 = vrot.lane.b32.xlu0 %v4207, 83
        %v4228 = vpop.permute.xlu0 %4227
        %4229 = vrot.lane.b32.xlu0 %v4208, 83
        %v4230 = vpop.permute.xlu0 %4229
        %4231 = vrot.lane.b32.xlu0 %v4209, 83
        %v4232 = vpop.permute.xlu0 %4231
        %4233 = vrot.lane.b32.xlu0 %v4210, 83
        %v4234 = vpop.permute.xlu0 %4233
        %4235 = vrot.lane.b32.xlu0 %v4211, 83
        %v4236 = vpop.permute.xlu0 %4235
        %4237 = vrot.lane.b32.xlu0 %v4212, 83
        %v4238 = vpop.permute.xlu0 %4237
        %4239 = vrot.lane.b32.xlu0 %v4213, 83
        %v4240 = vpop.permute.xlu0 %4239
        %4241 = vrot.lane.b32.xlu0 %v4214, 83
        %v4242 = vpop.permute.xlu0 %4241
        %4243 = vrot.lane.b32.xlu0 %v4215, 83
        %v4244 = vpop.permute.xlu0 %4243
        %4245 = vrot.lane.b32.xlu0 %v4216, 83
        %v4246 = vpop.permute.xlu0 %4245
        %vm4247 = vcmask 678912
        %v4248 = vsel %vm4247, %v4228, %v4230
        %v4249 = vsel %vm4247, %v4230, %v4232
        %v4250 = vsel %vm4247, %v4232, %v4234
        %v4251 = vsel %vm4247, %v4234, %v4236
        %v4252 = vsel %vm4247, %v4238, %v4240
        %v4253 = vsel %vm4247, %v4240, %v4242
        %v4254 = vsel %vm4247, %v4242, %v4244
        %v4255 = vsel %vm4247, %v4244, %v4246
        %v4266 = vadd.f32 %v4189, %v4248
        %v4267 = vadd.f32 %v4190, %v4249
        %v4268 = vadd.f32 %v4191, %v4250
        %v4269 = vadd.f32 %v4192, %v4251
        %v4270 = vadd.f32 %v4193, %v4236
        %v4271 = vadd.f32 %v4194, %v4252
        %v4272 = vadd.f32 %v4195, %v4253
        %v4273 = vadd.f32 %v4196, %v4254
        %v4274 = vadd.f32 %v4197, %v4255
        %v4275 = vadd.f32 %v4198, %v4246
        %4276 = vset.pattern.permute.xlu0 46
        %4277 = vperm.xlu0 %4276, %v789
        %v4278 = vpop.permute.xlu0 %4277
        %4280 = vset.pattern.permute.xlu0 46
        %4281 = vperm.xlu0 %4280, %v790
        %v4282 = vpop.permute.xlu0 %4281
        %v4284 = vmul.f32 %v4278, %v692
        %v4285 = vmul.f32 %v4278, %v715
        %v4286 = vmul.f32 %v4278, %v738
        %v4287 = vmul.f32 %v4278, %v761
        %v4288 = vmul.f32 %v4278, %v784
        %v4289 = vmul.f32 %v4282, %v695
        %v4290 = vmul.f32 %v4282, %v718
        %v4291 = vmul.f32 %v4282, %v741
        %v4292 = vmul.f32 %v4282, %v764
        %v4293 = vmul.f32 %v4282, %v787
        %4304 = vrot.lane.b32.xlu0 %v4284, 82
        %v4305 = vpop.permute.xlu0 %4304
        %4306 = vrot.lane.b32.xlu0 %v4285, 82
        %v4307 = vpop.permute.xlu0 %4306
        %4308 = vrot.lane.b32.xlu0 %v4286, 82
        %v4309 = vpop.permute.xlu0 %4308
        %4310 = vrot.lane.b32.xlu0 %v4287, 82
        %v4311 = vpop.permute.xlu0 %4310
        %4312 = vrot.lane.b32.xlu0 %v4288, 82
        %v4313 = vpop.permute.xlu0 %4312
        %4314 = vrot.lane.b32.xlu0 %v4289, 82
        %v4315 = vpop.permute.xlu0 %4314
        %4316 = vrot.lane.b32.xlu0 %v4290, 82
        %v4317 = vpop.permute.xlu0 %4316
        %4318 = vrot.lane.b32.xlu0 %v4291, 82
        %v4319 = vpop.permute.xlu0 %4318
        %4320 = vrot.lane.b32.xlu0 %v4292, 82
        %v4321 = vpop.permute.xlu0 %4320
        %4322 = vrot.lane.b32.xlu0 %v4293, 82
        %v4323 = vpop.permute.xlu0 %4322
        %vm4324 = vcmask 670720
        %v4325 = vsel %vm4324, %v4305, %v4307
        %v4326 = vsel %vm4324, %v4307, %v4309
        %v4327 = vsel %vm4324, %v4309, %v4311
        %v4328 = vsel %vm4324, %v4311, %v4313
        %v4329 = vsel %vm4324, %v4315, %v4317
        %v4330 = vsel %vm4324, %v4317, %v4319
        %v4331 = vsel %vm4324, %v4319, %v4321
        %v4332 = vsel %vm4324, %v4321, %v4323
        %v4343 = vadd.f32 %v4266, %v4325
        %v4344 = vadd.f32 %v4267, %v4326
        %v4345 = vadd.f32 %v4268, %v4327
        %v4346 = vadd.f32 %v4269, %v4328
        %v4347 = vadd.f32 %v4270, %v4313
        %v4348 = vadd.f32 %v4271, %v4329
        %v4349 = vadd.f32 %v4272, %v4330
        %v4350 = vadd.f32 %v4273, %v4331
        %v4351 = vadd.f32 %v4274, %v4332
        %v4352 = vadd.f32 %v4275, %v4323
        %4353 = vset.pattern.permute.xlu0 47
        %4354 = vperm.xlu0 %4353, %v789
        %v4355 = vpop.permute.xlu0 %4354
        %4357 = vset.pattern.permute.xlu0 47
        %4358 = vperm.xlu0 %4357, %v790
        %v4359 = vpop.permute.xlu0 %4358
        %v4361 = vmul.f32 %v4355, %v692
        %v4362 = vmul.f32 %v4355, %v715
        %v4363 = vmul.f32 %v4355, %v738
        %v4364 = vmul.f32 %v4355, %v761
        %v4365 = vmul.f32 %v4355, %v784
        %v4366 = vmul.f32 %v4359, %v695
        %v4367 = vmul.f32 %v4359, %v718
        %v4368 = vmul.f32 %v4359, %v741
        %v4369 = vmul.f32 %v4359, %v764
        %v4370 = vmul.f32 %v4359, %v787
        %4381 = vrot.lane.b32.xlu0 %v4361, 81
        %v4382 = vpop.permute.xlu0 %4381
        %4383 = vrot.lane.b32.xlu0 %v4362, 81
        %v4384 = vpop.permute.xlu0 %4383
        %4385 = vrot.lane.b32.xlu0 %v4363, 81
        %v4386 = vpop.permute.xlu0 %4385
        %4387 = vrot.lane.b32.xlu0 %v4364, 81
        %v4388 = vpop.permute.xlu0 %4387
        %4389 = vrot.lane.b32.xlu0 %v4365, 81
        %v4390 = vpop.permute.xlu0 %4389
        %4391 = vrot.lane.b32.xlu0 %v4366, 81
        %v4392 = vpop.permute.xlu0 %4391
        %4393 = vrot.lane.b32.xlu0 %v4367, 81
        %v4394 = vpop.permute.xlu0 %4393
        %4395 = vrot.lane.b32.xlu0 %v4368, 81
        %v4396 = vpop.permute.xlu0 %4395
        %4397 = vrot.lane.b32.xlu0 %v4369, 81
        %v4398 = vpop.permute.xlu0 %4397
        %4399 = vrot.lane.b32.xlu0 %v4370, 81
        %v4400 = vpop.permute.xlu0 %4399
        %vm4401 = vcmask 662528
        %v4402 = vsel %vm4401, %v4382, %v4384
        %v4403 = vsel %vm4401, %v4384, %v4386
        %v4404 = vsel %vm4401, %v4386, %v4388
        %v4405 = vsel %vm4401, %v4388, %v4390
        %v4406 = vsel %vm4401, %v4392, %v4394
        %v4407 = vsel %vm4401, %v4394, %v4396
        %v4408 = vsel %vm4401, %v4396, %v4398
        %v4409 = vsel %vm4401, %v4398, %v4400
        %v4420 = vadd.f32 %v4343, %v4402
        %v4421 = vadd.f32 %v4344, %v4403
        %v4422 = vadd.f32 %v4345, %v4404
        %v4423 = vadd.f32 %v4346, %v4405
        %v4424 = vadd.f32 %v4347, %v4390
        %v4425 = vadd.f32 %v4348, %v4406
        %v4426 = vadd.f32 %v4349, %v4407
        %v4427 = vadd.f32 %v4350, %v4408
        %v4428 = vadd.f32 %v4351, %v4409
        %v4429 = vadd.f32 %v4352, %v4400
        %4430 = vset.pattern.permute.xlu0 48
        %4431 = vperm.xlu0 %4430, %v789
        %v4432 = vpop.permute.xlu0 %4431
        %4434 = vset.pattern.permute.xlu0 48
        %4435 = vperm.xlu0 %4434, %v790
        %v4436 = vpop.permute.xlu0 %4435
        %v4438 = vmul.f32 %v4432, %v692
        %v4439 = vmul.f32 %v4432, %v715
        %v4440 = vmul.f32 %v4432, %v738
        %v4441 = vmul.f32 %v4432, %v761
        %v4442 = vmul.f32 %v4432, %v784
        %v4443 = vmul.f32 %v4436, %v695
        %v4444 = vmul.f32 %v4436, %v718
        %v4445 = vmul.f32 %v4436, %v741
        %v4446 = vmul.f32 %v4436, %v764
        %v4447 = vmul.f32 %v4436, %v787
        %4458 = vrot.lane.b32.xlu0 %v4438, 80
        %v4459 = vpop.permute.xlu0 %4458
        %4460 = vrot.lane.b32.xlu0 %v4439, 80
        %v4461 = vpop.permute.xlu0 %4460
        %4462 = vrot.lane.b32.xlu0 %v4440, 80
        %v4463 = vpop.permute.xlu0 %4462
        %4464 = vrot.lane.b32.xlu0 %v4441, 80
        %v4465 = vpop.permute.xlu0 %4464
        %4466 = vrot.lane.b32.xlu0 %v4442, 80
        %v4467 = vpop.permute.xlu0 %4466
        %4468 = vrot.lane.b32.xlu0 %v4443, 80
        %v4469 = vpop.permute.xlu0 %4468
        %4470 = vrot.lane.b32.xlu0 %v4444, 80
        %v4471 = vpop.permute.xlu0 %4470
        %4472 = vrot.lane.b32.xlu0 %v4445, 80
        %v4473 = vpop.permute.xlu0 %4472
        %4474 = vrot.lane.b32.xlu0 %v4446, 80
        %v4475 = vpop.permute.xlu0 %4474
        %4476 = vrot.lane.b32.xlu0 %v4447, 80
        %v4477 = vpop.permute.xlu0 %4476
        %vm4478 = vcmask 654336
        %v4479 = vsel %vm4478, %v4459, %v4461
        %v4480 = vsel %vm4478, %v4461, %v4463
        %v4481 = vsel %vm4478, %v4463, %v4465
        %v4482 = vsel %vm4478, %v4465, %v4467
        %v4483 = vsel %vm4478, %v4469, %v4471
        %v4484 = vsel %vm4478, %v4471, %v4473
        %v4485 = vsel %vm4478, %v4473, %v4475
        %v4486 = vsel %vm4478, %v4475, %v4477
        %v4497 = vadd.f32 %v4420, %v4479
        %v4498 = vadd.f32 %v4421, %v4480
        %v4499 = vadd.f32 %v4422, %v4481
        %v4500 = vadd.f32 %v4423, %v4482
        %v4501 = vadd.f32 %v4424, %v4467
        %v4502 = vadd.f32 %v4425, %v4483
        %v4503 = vadd.f32 %v4426, %v4484
        %v4504 = vadd.f32 %v4427, %v4485
        %v4505 = vadd.f32 %v4428, %v4486
        %v4506 = vadd.f32 %v4429, %v4477
        %4507 = vset.pattern.permute.xlu0 49
        %4508 = vperm.xlu0 %4507, %v789
        %v4509 = vpop.permute.xlu0 %4508
        %4511 = vset.pattern.permute.xlu0 49
        %4512 = vperm.xlu0 %4511, %v790
        %v4513 = vpop.permute.xlu0 %4512
        %v4515 = vmul.f32 %v4509, %v692
        %v4516 = vmul.f32 %v4509, %v715
        %v4517 = vmul.f32 %v4509, %v738
        %v4518 = vmul.f32 %v4509, %v761
        %v4519 = vmul.f32 %v4509, %v784
        %v4520 = vmul.f32 %v4513, %v695
        %v4521 = vmul.f32 %v4513, %v718
        %v4522 = vmul.f32 %v4513, %v741
        %v4523 = vmul.f32 %v4513, %v764
        %v4524 = vmul.f32 %v4513, %v787
        %4535 = vrot.lane.b32.xlu0 %v4515, 79
        %v4536 = vpop.permute.xlu0 %4535
        %4537 = vrot.lane.b32.xlu0 %v4516, 79
        %v4538 = vpop.permute.xlu0 %4537
        %4539 = vrot.lane.b32.xlu0 %v4517, 79
        %v4540 = vpop.permute.xlu0 %4539
        %4541 = vrot.lane.b32.xlu0 %v4518, 79
        %v4542 = vpop.permute.xlu0 %4541
        %4543 = vrot.lane.b32.xlu0 %v4519, 79
        %v4544 = vpop.permute.xlu0 %4543
        %4545 = vrot.lane.b32.xlu0 %v4520, 79
        %v4546 = vpop.permute.xlu0 %4545
        %4547 = vrot.lane.b32.xlu0 %v4521, 79
        %v4548 = vpop.permute.xlu0 %4547
        %4549 = vrot.lane.b32.xlu0 %v4522, 79
        %v4550 = vpop.permute.xlu0 %4549
        %4551 = vrot.lane.b32.xlu0 %v4523, 79
        %v4552 = vpop.permute.xlu0 %4551
        %4553 = vrot.lane.b32.xlu0 %v4524, 79
        %v4554 = vpop.permute.xlu0 %4553
        %vm4555 = vcmask 646144
        %v4556 = vsel %vm4555, %v4536, %v4538
        %v4557 = vsel %vm4555, %v4538, %v4540
        %v4558 = vsel %vm4555, %v4540, %v4542
        %v4559 = vsel %vm4555, %v4542, %v4544
        %v4560 = vsel %vm4555, %v4546, %v4548
        %v4561 = vsel %vm4555, %v4548, %v4550
        %v4562 = vsel %vm4555, %v4550, %v4552
        %v4563 = vsel %vm4555, %v4552, %v4554
        %v4574 = vadd.f32 %v4497, %v4556
        %v4575 = vadd.f32 %v4498, %v4557
        %v4576 = vadd.f32 %v4499, %v4558
        %v4577 = vadd.f32 %v4500, %v4559
        %v4578 = vadd.f32 %v4501, %v4544
        %v4579 = vadd.f32 %v4502, %v4560
        %v4580 = vadd.f32 %v4503, %v4561
        %v4581 = vadd.f32 %v4504, %v4562
        %v4582 = vadd.f32 %v4505, %v4563
        %v4583 = vadd.f32 %v4506, %v4554
        %4584 = vset.pattern.permute.xlu0 50
        %4585 = vperm.xlu0 %4584, %v789
        %v4586 = vpop.permute.xlu0 %4585
        %4588 = vset.pattern.permute.xlu0 50
        %4589 = vperm.xlu0 %4588, %v790
        %v4590 = vpop.permute.xlu0 %4589
        %v4592 = vmul.f32 %v4586, %v692
        %v4593 = vmul.f32 %v4586, %v715
        %v4594 = vmul.f32 %v4586, %v738
        %v4595 = vmul.f32 %v4586, %v761
        %v4596 = vmul.f32 %v4586, %v784
        %v4597 = vmul.f32 %v4590, %v695
        %v4598 = vmul.f32 %v4590, %v718
        %v4599 = vmul.f32 %v4590, %v741
        %v4600 = vmul.f32 %v4590, %v764
        %v4601 = vmul.f32 %v4590, %v787
        %4612 = vrot.lane.b32.xlu0 %v4592, 78
        %v4613 = vpop.permute.xlu0 %4612
        %4614 = vrot.lane.b32.xlu0 %v4593, 78
        %v4615 = vpop.permute.xlu0 %4614
        %4616 = vrot.lane.b32.xlu0 %v4594, 78
        %v4617 = vpop.permute.xlu0 %4616
        %4618 = vrot.lane.b32.xlu0 %v4595, 78
        %v4619 = vpop.permute.xlu0 %4618
        %4620 = vrot.lane.b32.xlu0 %v4596, 78
        %v4621 = vpop.permute.xlu0 %4620
        %4622 = vrot.lane.b32.xlu0 %v4597, 78
        %v4623 = vpop.permute.xlu0 %4622
        %4624 = vrot.lane.b32.xlu0 %v4598, 78
        %v4625 = vpop.permute.xlu0 %4624
        %4626 = vrot.lane.b32.xlu0 %v4599, 78
        %v4627 = vpop.permute.xlu0 %4626
        %4628 = vrot.lane.b32.xlu0 %v4600, 78
        %v4629 = vpop.permute.xlu0 %4628
        %4630 = vrot.lane.b32.xlu0 %v4601, 78
        %v4631 = vpop.permute.xlu0 %4630
        %vm4632 = vcmask 637952
        %v4633 = vsel %vm4632, %v4613, %v4615
        %v4634 = vsel %vm4632, %v4615, %v4617
        %v4635 = vsel %vm4632, %v4617, %v4619
        %v4636 = vsel %vm4632, %v4619, %v4621
        %v4637 = vsel %vm4632, %v4623, %v4625
        %v4638 = vsel %vm4632, %v4625, %v4627
        %v4639 = vsel %vm4632, %v4627, %v4629
        %v4640 = vsel %vm4632, %v4629, %v4631
        %v4651 = vadd.f32 %v4574, %v4633
        %v4652 = vadd.f32 %v4575, %v4634
        %v4653 = vadd.f32 %v4576, %v4635
        %v4654 = vadd.f32 %v4577, %v4636
        %v4655 = vadd.f32 %v4578, %v4621
        %v4656 = vadd.f32 %v4579, %v4637
        %v4657 = vadd.f32 %v4580, %v4638
        %v4658 = vadd.f32 %v4581, %v4639
        %v4659 = vadd.f32 %v4582, %v4640
        %v4660 = vadd.f32 %v4583, %v4631
        %4661 = vset.pattern.permute.xlu0 51
        %4662 = vperm.xlu0 %4661, %v789
        %v4663 = vpop.permute.xlu0 %4662
        %4665 = vset.pattern.permute.xlu0 51
        %4666 = vperm.xlu0 %4665, %v790
        %v4667 = vpop.permute.xlu0 %4666
        %v4669 = vmul.f32 %v4663, %v692
        %v4670 = vmul.f32 %v4663, %v715
        %v4671 = vmul.f32 %v4663, %v738
        %v4672 = vmul.f32 %v4663, %v761
        %v4673 = vmul.f32 %v4663, %v784
        %v4674 = vmul.f32 %v4667, %v695
        %v4675 = vmul.f32 %v4667, %v718
        %v4676 = vmul.f32 %v4667, %v741
        %v4677 = vmul.f32 %v4667, %v764
        %v4678 = vmul.f32 %v4667, %v787
        %4689 = vrot.lane.b32.xlu0 %v4669, 77
        %v4690 = vpop.permute.xlu0 %4689
        %4691 = vrot.lane.b32.xlu0 %v4670, 77
        %v4692 = vpop.permute.xlu0 %4691
        %4693 = vrot.lane.b32.xlu0 %v4671, 77
        %v4694 = vpop.permute.xlu0 %4693
        %4695 = vrot.lane.b32.xlu0 %v4672, 77
        %v4696 = vpop.permute.xlu0 %4695
        %4697 = vrot.lane.b32.xlu0 %v4673, 77
        %v4698 = vpop.permute.xlu0 %4697
        %4699 = vrot.lane.b32.xlu0 %v4674, 77
        %v4700 = vpop.permute.xlu0 %4699
        %4701 = vrot.lane.b32.xlu0 %v4675, 77
        %v4702 = vpop.permute.xlu0 %4701
        %4703 = vrot.lane.b32.xlu0 %v4676, 77
        %v4704 = vpop.permute.xlu0 %4703
        %4705 = vrot.lane.b32.xlu0 %v4677, 77
        %v4706 = vpop.permute.xlu0 %4705
        %4707 = vrot.lane.b32.xlu0 %v4678, 77
        %v4708 = vpop.permute.xlu0 %4707
        %vm4709 = vcmask 629760
        %v4710 = vsel %vm4709, %v4690, %v4692
        %v4711 = vsel %vm4709, %v4692, %v4694
        %v4712 = vsel %vm4709, %v4694, %v4696
        %v4713 = vsel %vm4709, %v4696, %v4698
        %v4714 = vsel %vm4709, %v4700, %v4702
        %v4715 = vsel %vm4709, %v4702, %v4704
        %v4716 = vsel %vm4709, %v4704, %v4706
        %v4717 = vsel %vm4709, %v4706, %v4708
        %v4728 = vadd.f32 %v4651, %v4710
        %v4729 = vadd.f32 %v4652, %v4711
        %v4730 = vadd.f32 %v4653, %v4712
        %v4731 = vadd.f32 %v4654, %v4713
        %v4732 = vadd.f32 %v4655, %v4698
        %v4733 = vadd.f32 %v4656, %v4714
        %v4734 = vadd.f32 %v4657, %v4715
        %v4735 = vadd.f32 %v4658, %v4716
        %v4736 = vadd.f32 %v4659, %v4717
        %v4737 = vadd.f32 %v4660, %v4708
        %4738 = vset.pattern.permute.xlu0 52
        %4739 = vperm.xlu0 %4738, %v789
        %v4740 = vpop.permute.xlu0 %4739
        %4742 = vset.pattern.permute.xlu0 52
        %4743 = vperm.xlu0 %4742, %v790
        %v4744 = vpop.permute.xlu0 %4743
        %v4746 = vmul.f32 %v4740, %v692
        %v4747 = vmul.f32 %v4740, %v715
        %v4748 = vmul.f32 %v4740, %v738
        %v4749 = vmul.f32 %v4740, %v761
        %v4750 = vmul.f32 %v4740, %v784
        %v4751 = vmul.f32 %v4744, %v695
        %v4752 = vmul.f32 %v4744, %v718
        %v4753 = vmul.f32 %v4744, %v741
        %v4754 = vmul.f32 %v4744, %v764
        %v4755 = vmul.f32 %v4744, %v787
        %4766 = vrot.lane.b32.xlu0 %v4746, 76
        %v4767 = vpop.permute.xlu0 %4766
        %4768 = vrot.lane.b32.xlu0 %v4747, 76
        %v4769 = vpop.permute.xlu0 %4768
        %4770 = vrot.lane.b32.xlu0 %v4748, 76
        %v4771 = vpop.permute.xlu0 %4770
        %4772 = vrot.lane.b32.xlu0 %v4749, 76
        %v4773 = vpop.permute.xlu0 %4772
        %4774 = vrot.lane.b32.xlu0 %v4750, 76
        %v4775 = vpop.permute.xlu0 %4774
        %4776 = vrot.lane.b32.xlu0 %v4751, 76
        %v4777 = vpop.permute.xlu0 %4776
        %4778 = vrot.lane.b32.xlu0 %v4752, 76
        %v4779 = vpop.permute.xlu0 %4778
        %4780 = vrot.lane.b32.xlu0 %v4753, 76
        %v4781 = vpop.permute.xlu0 %4780
        %4782 = vrot.lane.b32.xlu0 %v4754, 76
        %v4783 = vpop.permute.xlu0 %4782
        %4784 = vrot.lane.b32.xlu0 %v4755, 76
        %v4785 = vpop.permute.xlu0 %4784
        %vm4786 = vcmask 621568
        %v4787 = vsel %vm4786, %v4767, %v4769
        %v4788 = vsel %vm4786, %v4769, %v4771
        %v4789 = vsel %vm4786, %v4771, %v4773
        %v4790 = vsel %vm4786, %v4773, %v4775
        %v4791 = vsel %vm4786, %v4777, %v4779
        %v4792 = vsel %vm4786, %v4779, %v4781
        %v4793 = vsel %vm4786, %v4781, %v4783
        %v4794 = vsel %vm4786, %v4783, %v4785
        %v4805 = vadd.f32 %v4728, %v4787
        %v4806 = vadd.f32 %v4729, %v4788
        %v4807 = vadd.f32 %v4730, %v4789
        %v4808 = vadd.f32 %v4731, %v4790
        %v4809 = vadd.f32 %v4732, %v4775
        %v4810 = vadd.f32 %v4733, %v4791
        %v4811 = vadd.f32 %v4734, %v4792
        %v4812 = vadd.f32 %v4735, %v4793
        %v4813 = vadd.f32 %v4736, %v4794
        %v4814 = vadd.f32 %v4737, %v4785
        %4815 = vset.pattern.permute.xlu0 53
        %4816 = vperm.xlu0 %4815, %v789
        %v4817 = vpop.permute.xlu0 %4816
        %4819 = vset.pattern.permute.xlu0 53
        %4820 = vperm.xlu0 %4819, %v790
        %v4821 = vpop.permute.xlu0 %4820
        %v4823 = vmul.f32 %v4817, %v692
        %v4824 = vmul.f32 %v4817, %v715
        %v4825 = vmul.f32 %v4817, %v738
        %v4826 = vmul.f32 %v4817, %v761
        %v4827 = vmul.f32 %v4817, %v784
        %v4828 = vmul.f32 %v4821, %v695
        %v4829 = vmul.f32 %v4821, %v718
        %v4830 = vmul.f32 %v4821, %v741
        %v4831 = vmul.f32 %v4821, %v764
        %v4832 = vmul.f32 %v4821, %v787
        %4843 = vrot.lane.b32.xlu0 %v4823, 75
        %v4844 = vpop.permute.xlu0 %4843
        %4845 = vrot.lane.b32.xlu0 %v4824, 75
        %v4846 = vpop.permute.xlu0 %4845
        %4847 = vrot.lane.b32.xlu0 %v4825, 75
        %v4848 = vpop.permute.xlu0 %4847
        %4849 = vrot.lane.b32.xlu0 %v4826, 75
        %v4850 = vpop.permute.xlu0 %4849
        %4851 = vrot.lane.b32.xlu0 %v4827, 75
        %v4852 = vpop.permute.xlu0 %4851
        %4853 = vrot.lane.b32.xlu0 %v4828, 75
        %v4854 = vpop.permute.xlu0 %4853
        %4855 = vrot.lane.b32.xlu0 %v4829, 75
        %v4856 = vpop.permute.xlu0 %4855
        %4857 = vrot.lane.b32.xlu0 %v4830, 75
        %v4858 = vpop.permute.xlu0 %4857
        %4859 = vrot.lane.b32.xlu0 %v4831, 75
        %v4860 = vpop.permute.xlu0 %4859
        %4861 = vrot.lane.b32.xlu0 %v4832, 75
        %v4862 = vpop.permute.xlu0 %4861
        %vm4863 = vcmask 613376
        %v4864 = vsel %vm4863, %v4844, %v4846
        %v4865 = vsel %vm4863, %v4846, %v4848
        %v4866 = vsel %vm4863, %v4848, %v4850
        %v4867 = vsel %vm4863, %v4850, %v4852
        %v4868 = vsel %vm4863, %v4854, %v4856
        %v4869 = vsel %vm4863, %v4856, %v4858
        %v4870 = vsel %vm4863, %v4858, %v4860
        %v4871 = vsel %vm4863, %v4860, %v4862
        %v4882 = vadd.f32 %v4805, %v4864
        %v4883 = vadd.f32 %v4806, %v4865
        %v4884 = vadd.f32 %v4807, %v4866
        %v4885 = vadd.f32 %v4808, %v4867
        %v4886 = vadd.f32 %v4809, %v4852
        %v4887 = vadd.f32 %v4810, %v4868
        %v4888 = vadd.f32 %v4811, %v4869
        %v4889 = vadd.f32 %v4812, %v4870
        %v4890 = vadd.f32 %v4813, %v4871
        %v4891 = vadd.f32 %v4814, %v4862
        %4892 = vset.pattern.permute.xlu0 54
        %4893 = vperm.xlu0 %4892, %v789
        %v4894 = vpop.permute.xlu0 %4893
        %4896 = vset.pattern.permute.xlu0 54
        %4897 = vperm.xlu0 %4896, %v790
        %v4898 = vpop.permute.xlu0 %4897
        %v4900 = vmul.f32 %v4894, %v692
        %v4901 = vmul.f32 %v4894, %v715
        %v4902 = vmul.f32 %v4894, %v738
        %v4903 = vmul.f32 %v4894, %v761
        %v4904 = vmul.f32 %v4894, %v784
        %v4905 = vmul.f32 %v4898, %v695
        %v4906 = vmul.f32 %v4898, %v718
        %v4907 = vmul.f32 %v4898, %v741
        %v4908 = vmul.f32 %v4898, %v764
        %v4909 = vmul.f32 %v4898, %v787
        %4920 = vrot.lane.b32.xlu0 %v4900, 74
        %v4921 = vpop.permute.xlu0 %4920
        %4922 = vrot.lane.b32.xlu0 %v4901, 74
        %v4923 = vpop.permute.xlu0 %4922
        %4924 = vrot.lane.b32.xlu0 %v4902, 74
        %v4925 = vpop.permute.xlu0 %4924
        %4926 = vrot.lane.b32.xlu0 %v4903, 74
        %v4927 = vpop.permute.xlu0 %4926
        %4928 = vrot.lane.b32.xlu0 %v4904, 74
        %v4929 = vpop.permute.xlu0 %4928
        %4930 = vrot.lane.b32.xlu0 %v4905, 74
        %v4931 = vpop.permute.xlu0 %4930
        %4932 = vrot.lane.b32.xlu0 %v4906, 74
        %v4933 = vpop.permute.xlu0 %4932
        %4934 = vrot.lane.b32.xlu0 %v4907, 74
        %v4935 = vpop.permute.xlu0 %4934
        %4936 = vrot.lane.b32.xlu0 %v4908, 74
        %v4937 = vpop.permute.xlu0 %4936
        %4938 = vrot.lane.b32.xlu0 %v4909, 74
        %v4939 = vpop.permute.xlu0 %4938
        %vm4940 = vcmask 605184
        %v4941 = vsel %vm4940, %v4921, %v4923
        %v4942 = vsel %vm4940, %v4923, %v4925
        %v4943 = vsel %vm4940, %v4925, %v4927
        %v4944 = vsel %vm4940, %v4927, %v4929
        %v4945 = vsel %vm4940, %v4931, %v4933
        %v4946 = vsel %vm4940, %v4933, %v4935
        %v4947 = vsel %vm4940, %v4935, %v4937
        %v4948 = vsel %vm4940, %v4937, %v4939
        %v4959 = vadd.f32 %v4882, %v4941
        %v4960 = vadd.f32 %v4883, %v4942
        %v4961 = vadd.f32 %v4884, %v4943
        %v4962 = vadd.f32 %v4885, %v4944
        %v4963 = vadd.f32 %v4886, %v4929
        %v4964 = vadd.f32 %v4887, %v4945
        %v4965 = vadd.f32 %v4888, %v4946
        %v4966 = vadd.f32 %v4889, %v4947
        %v4967 = vadd.f32 %v4890, %v4948
        %v4968 = vadd.f32 %v4891, %v4939
        %4969 = vset.pattern.permute.xlu0 55
        %4970 = vperm.xlu0 %4969, %v789
        %v4971 = vpop.permute.xlu0 %4970
        %4973 = vset.pattern.permute.xlu0 55
        %4974 = vperm.xlu0 %4973, %v790
        %v4975 = vpop.permute.xlu0 %4974
        %v4977 = vmul.f32 %v4971, %v692
        %v4978 = vmul.f32 %v4971, %v715
        %v4979 = vmul.f32 %v4971, %v738
        %v4980 = vmul.f32 %v4971, %v761
        %v4981 = vmul.f32 %v4971, %v784
        %v4982 = vmul.f32 %v4975, %v695
        %v4983 = vmul.f32 %v4975, %v718
        %v4984 = vmul.f32 %v4975, %v741
        %v4985 = vmul.f32 %v4975, %v764
        %v4986 = vmul.f32 %v4975, %v787
        %4997 = vrot.lane.b32.xlu0 %v4977, 73
        %v4998 = vpop.permute.xlu0 %4997
        %4999 = vrot.lane.b32.xlu0 %v4978, 73
        %v5000 = vpop.permute.xlu0 %4999
        %5001 = vrot.lane.b32.xlu0 %v4979, 73
        %v5002 = vpop.permute.xlu0 %5001
        %5003 = vrot.lane.b32.xlu0 %v4980, 73
        %v5004 = vpop.permute.xlu0 %5003
        %5005 = vrot.lane.b32.xlu0 %v4981, 73
        %v5006 = vpop.permute.xlu0 %5005
        %5007 = vrot.lane.b32.xlu0 %v4982, 73
        %v5008 = vpop.permute.xlu0 %5007
        %5009 = vrot.lane.b32.xlu0 %v4983, 73
        %v5010 = vpop.permute.xlu0 %5009
        %5011 = vrot.lane.b32.xlu0 %v4984, 73
        %v5012 = vpop.permute.xlu0 %5011
        %5013 = vrot.lane.b32.xlu0 %v4985, 73
        %v5014 = vpop.permute.xlu0 %5013
        %5015 = vrot.lane.b32.xlu0 %v4986, 73
        %v5016 = vpop.permute.xlu0 %5015
        %vm5017 = vcmask 596992
        %v5018 = vsel %vm5017, %v4998, %v5000
        %v5019 = vsel %vm5017, %v5000, %v5002
        %v5020 = vsel %vm5017, %v5002, %v5004
        %v5021 = vsel %vm5017, %v5004, %v5006
        %v5022 = vsel %vm5017, %v5008, %v5010
        %v5023 = vsel %vm5017, %v5010, %v5012
        %v5024 = vsel %vm5017, %v5012, %v5014
        %v5025 = vsel %vm5017, %v5014, %v5016
        %v5036 = vadd.f32 %v4959, %v5018
        %v5037 = vadd.f32 %v4960, %v5019
        %v5038 = vadd.f32 %v4961, %v5020
        %v5039 = vadd.f32 %v4962, %v5021
        %v5040 = vadd.f32 %v4963, %v5006
        %v5041 = vadd.f32 %v4964, %v5022
        %v5042 = vadd.f32 %v4965, %v5023
        %v5043 = vadd.f32 %v4966, %v5024
        %v5044 = vadd.f32 %v4967, %v5025
        %v5045 = vadd.f32 %v4968, %v5016
        %5046 = vset.pattern.permute.xlu0 56
        %5047 = vperm.xlu0 %5046, %v789
        %v5048 = vpop.permute.xlu0 %5047
        %5050 = vset.pattern.permute.xlu0 56
        %5051 = vperm.xlu0 %5050, %v790
        %v5052 = vpop.permute.xlu0 %5051
        %v5054 = vmul.f32 %v5048, %v692
        %v5055 = vmul.f32 %v5048, %v715
        %v5056 = vmul.f32 %v5048, %v738
        %v5057 = vmul.f32 %v5048, %v761
        %v5058 = vmul.f32 %v5048, %v784
        %v5059 = vmul.f32 %v5052, %v695
        %v5060 = vmul.f32 %v5052, %v718
        %v5061 = vmul.f32 %v5052, %v741
        %v5062 = vmul.f32 %v5052, %v764
        %v5063 = vmul.f32 %v5052, %v787
        %5074 = vrot.lane.b32.xlu0 %v5054, 72
        %v5075 = vpop.permute.xlu0 %5074
        %5076 = vrot.lane.b32.xlu0 %v5055, 72
        %v5077 = vpop.permute.xlu0 %5076
        %5078 = vrot.lane.b32.xlu0 %v5056, 72
        %v5079 = vpop.permute.xlu0 %5078
        %5080 = vrot.lane.b32.xlu0 %v5057, 72
        %v5081 = vpop.permute.xlu0 %5080
        %5082 = vrot.lane.b32.xlu0 %v5058, 72
        %v5083 = vpop.permute.xlu0 %5082
        %5084 = vrot.lane.b32.xlu0 %v5059, 72
        %v5085 = vpop.permute.xlu0 %5084
        %5086 = vrot.lane.b32.xlu0 %v5060, 72
        %v5087 = vpop.permute.xlu0 %5086
        %5088 = vrot.lane.b32.xlu0 %v5061, 72
        %v5089 = vpop.permute.xlu0 %5088
        %5090 = vrot.lane.b32.xlu0 %v5062, 72
        %v5091 = vpop.permute.xlu0 %5090
        %5092 = vrot.lane.b32.xlu0 %v5063, 72
        %v5093 = vpop.permute.xlu0 %5092
        %vm5094 = vcmask 588800
        %v5095 = vsel %vm5094, %v5075, %v5077
        %v5096 = vsel %vm5094, %v5077, %v5079
        %v5097 = vsel %vm5094, %v5079, %v5081
        %v5098 = vsel %vm5094, %v5081, %v5083
        %v5099 = vsel %vm5094, %v5085, %v5087
        %v5100 = vsel %vm5094, %v5087, %v5089
        %v5101 = vsel %vm5094, %v5089, %v5091
        %v5102 = vsel %vm5094, %v5091, %v5093
        %v5113 = vadd.f32 %v5036, %v5095
        %v5114 = vadd.f32 %v5037, %v5096
        %v5115 = vadd.f32 %v5038, %v5097
        %v5116 = vadd.f32 %v5039, %v5098
        %v5117 = vadd.f32 %v5040, %v5083
        %v5118 = vadd.f32 %v5041, %v5099
        %v5119 = vadd.f32 %v5042, %v5100
        %v5120 = vadd.f32 %v5043, %v5101
        %v5121 = vadd.f32 %v5044, %v5102
        %v5122 = vadd.f32 %v5045, %v5093
        %5123 = vset.pattern.permute.xlu0 57
        %5124 = vperm.xlu0 %5123, %v789
        %v5125 = vpop.permute.xlu0 %5124
        %5127 = vset.pattern.permute.xlu0 57
        %5128 = vperm.xlu0 %5127, %v790
        %v5129 = vpop.permute.xlu0 %5128
        %v5131 = vmul.f32 %v5125, %v692
        %v5132 = vmul.f32 %v5125, %v715
        %v5133 = vmul.f32 %v5125, %v738
        %v5134 = vmul.f32 %v5125, %v761
        %v5135 = vmul.f32 %v5125, %v784
        %v5136 = vmul.f32 %v5129, %v695
        %v5137 = vmul.f32 %v5129, %v718
        %v5138 = vmul.f32 %v5129, %v741
        %v5139 = vmul.f32 %v5129, %v764
        %v5140 = vmul.f32 %v5129, %v787
        %5151 = vrot.lane.b32.xlu0 %v5131, 71
        %v5152 = vpop.permute.xlu0 %5151
        %5153 = vrot.lane.b32.xlu0 %v5132, 71
        %v5154 = vpop.permute.xlu0 %5153
        %5155 = vrot.lane.b32.xlu0 %v5133, 71
        %v5156 = vpop.permute.xlu0 %5155
        %5157 = vrot.lane.b32.xlu0 %v5134, 71
        %v5158 = vpop.permute.xlu0 %5157
        %5159 = vrot.lane.b32.xlu0 %v5135, 71
        %v5160 = vpop.permute.xlu0 %5159
        %5161 = vrot.lane.b32.xlu0 %v5136, 71
        %v5162 = vpop.permute.xlu0 %5161
        %5163 = vrot.lane.b32.xlu0 %v5137, 71
        %v5164 = vpop.permute.xlu0 %5163
        %5165 = vrot.lane.b32.xlu0 %v5138, 71
        %v5166 = vpop.permute.xlu0 %5165
        %5167 = vrot.lane.b32.xlu0 %v5139, 71
        %v5168 = vpop.permute.xlu0 %5167
        %5169 = vrot.lane.b32.xlu0 %v5140, 71
        %v5170 = vpop.permute.xlu0 %5169
        %vm5171 = vcmask 580608
        %v5172 = vsel %vm5171, %v5152, %v5154
        %v5173 = vsel %vm5171, %v5154, %v5156
        %v5174 = vsel %vm5171, %v5156, %v5158
        %v5175 = vsel %vm5171, %v5158, %v5160
        %v5176 = vsel %vm5171, %v5162, %v5164
        %v5177 = vsel %vm5171, %v5164, %v5166
        %v5178 = vsel %vm5171, %v5166, %v5168
        %v5179 = vsel %vm5171, %v5168, %v5170
        %v5190 = vadd.f32 %v5113, %v5172
        %v5191 = vadd.f32 %v5114, %v5173
        %v5192 = vadd.f32 %v5115, %v5174
        %v5193 = vadd.f32 %v5116, %v5175
        %v5194 = vadd.f32 %v5117, %v5160
        %v5195 = vadd.f32 %v5118, %v5176
        %v5196 = vadd.f32 %v5119, %v5177
        %v5197 = vadd.f32 %v5120, %v5178
        %v5198 = vadd.f32 %v5121, %v5179
        %v5199 = vadd.f32 %v5122, %v5170
        %5200 = vset.pattern.permute.xlu0 58
        %5201 = vperm.xlu0 %5200, %v789
        %v5202 = vpop.permute.xlu0 %5201
        %5204 = vset.pattern.permute.xlu0 58
        %5205 = vperm.xlu0 %5204, %v790
        %v5206 = vpop.permute.xlu0 %5205
        %v5208 = vmul.f32 %v5202, %v692
        %v5209 = vmul.f32 %v5202, %v715
        %v5210 = vmul.f32 %v5202, %v738
        %v5211 = vmul.f32 %v5202, %v761
        %v5212 = vmul.f32 %v5202, %v784
        %v5213 = vmul.f32 %v5206, %v695
        %v5214 = vmul.f32 %v5206, %v718
        %v5215 = vmul.f32 %v5206, %v741
        %v5216 = vmul.f32 %v5206, %v764
        %v5217 = vmul.f32 %v5206, %v787
        %5228 = vrot.lane.b32.xlu0 %v5208, 70
        %v5229 = vpop.permute.xlu0 %5228
        %5230 = vrot.lane.b32.xlu0 %v5209, 70
        %v5231 = vpop.permute.xlu0 %5230
        %5232 = vrot.lane.b32.xlu0 %v5210, 70
        %v5233 = vpop.permute.xlu0 %5232
        %5234 = vrot.lane.b32.xlu0 %v5211, 70
        %v5235 = vpop.permute.xlu0 %5234
        %5236 = vrot.lane.b32.xlu0 %v5212, 70
        %v5237 = vpop.permute.xlu0 %5236
        %5238 = vrot.lane.b32.xlu0 %v5213, 70
        %v5239 = vpop.permute.xlu0 %5238
        %5240 = vrot.lane.b32.xlu0 %v5214, 70
        %v5241 = vpop.permute.xlu0 %5240
        %5242 = vrot.lane.b32.xlu0 %v5215, 70
        %v5243 = vpop.permute.xlu0 %5242
        %5244 = vrot.lane.b32.xlu0 %v5216, 70
        %v5245 = vpop.permute.xlu0 %5244
        %5246 = vrot.lane.b32.xlu0 %v5217, 70
        %v5247 = vpop.permute.xlu0 %5246
        %vm5248 = vcmask 572416
        %v5249 = vsel %vm5248, %v5229, %v5231
        %v5250 = vsel %vm5248, %v5231, %v5233
        %v5251 = vsel %vm5248, %v5233, %v5235
        %v5252 = vsel %vm5248, %v5235, %v5237
        %v5253 = vsel %vm5248, %v5239, %v5241
        %v5254 = vsel %vm5248, %v5241, %v5243
        %v5255 = vsel %vm5248, %v5243, %v5245
        %v5256 = vsel %vm5248, %v5245, %v5247
        %v5267 = vadd.f32 %v5190, %v5249
        %v5268 = vadd.f32 %v5191, %v5250
        %v5269 = vadd.f32 %v5192, %v5251
        %v5270 = vadd.f32 %v5193, %v5252
        %v5271 = vadd.f32 %v5194, %v5237
        %v5272 = vadd.f32 %v5195, %v5253
        %v5273 = vadd.f32 %v5196, %v5254
        %v5274 = vadd.f32 %v5197, %v5255
        %v5275 = vadd.f32 %v5198, %v5256
        %v5276 = vadd.f32 %v5199, %v5247
        %5277 = vset.pattern.permute.xlu0 59
        %5278 = vperm.xlu0 %5277, %v789
        %v5279 = vpop.permute.xlu0 %5278
        %5281 = vset.pattern.permute.xlu0 59
        %5282 = vperm.xlu0 %5281, %v790
        %v5283 = vpop.permute.xlu0 %5282
        %v5285 = vmul.f32 %v5279, %v692
        %v5286 = vmul.f32 %v5279, %v715
        %v5287 = vmul.f32 %v5279, %v738
        %v5288 = vmul.f32 %v5279, %v761
        %v5289 = vmul.f32 %v5279, %v784
        %v5290 = vmul.f32 %v5283, %v695
        %v5291 = vmul.f32 %v5283, %v718
        %v5292 = vmul.f32 %v5283, %v741
        %v5293 = vmul.f32 %v5283, %v764
        %v5294 = vmul.f32 %v5283, %v787
        %5305 = vrot.lane.b32.xlu0 %v5285, 69
        %v5306 = vpop.permute.xlu0 %5305
        %5307 = vrot.lane.b32.xlu0 %v5286, 69
        %v5308 = vpop.permute.xlu0 %5307
        %5309 = vrot.lane.b32.xlu0 %v5287, 69
        %v5310 = vpop.permute.xlu0 %5309
        %5311 = vrot.lane.b32.xlu0 %v5288, 69
        %v5312 = vpop.permute.xlu0 %5311
        %5313 = vrot.lane.b32.xlu0 %v5289, 69
        %v5314 = vpop.permute.xlu0 %5313
        %5315 = vrot.lane.b32.xlu0 %v5290, 69
        %v5316 = vpop.permute.xlu0 %5315
        %5317 = vrot.lane.b32.xlu0 %v5291, 69
        %v5318 = vpop.permute.xlu0 %5317
        %5319 = vrot.lane.b32.xlu0 %v5292, 69
        %v5320 = vpop.permute.xlu0 %5319
        %5321 = vrot.lane.b32.xlu0 %v5293, 69
        %v5322 = vpop.permute.xlu0 %5321
        %5323 = vrot.lane.b32.xlu0 %v5294, 69
        %v5324 = vpop.permute.xlu0 %5323
        %vm5325 = vcmask 564224
        %v5326 = vsel %vm5325, %v5306, %v5308
        %v5327 = vsel %vm5325, %v5308, %v5310
        %v5328 = vsel %vm5325, %v5310, %v5312
        %v5329 = vsel %vm5325, %v5312, %v5314
        %v5330 = vsel %vm5325, %v5316, %v5318
        %v5331 = vsel %vm5325, %v5318, %v5320
        %v5332 = vsel %vm5325, %v5320, %v5322
        %v5333 = vsel %vm5325, %v5322, %v5324
        %v5344 = vadd.f32 %v5267, %v5326
        %v5345 = vadd.f32 %v5268, %v5327
        %v5346 = vadd.f32 %v5269, %v5328
        %v5347 = vadd.f32 %v5270, %v5329
        %v5348 = vadd.f32 %v5271, %v5314
        %v5349 = vadd.f32 %v5272, %v5330
        %v5350 = vadd.f32 %v5273, %v5331
        %v5351 = vadd.f32 %v5274, %v5332
        %v5352 = vadd.f32 %v5275, %v5333
        %v5353 = vadd.f32 %v5276, %v5324
        %5354 = vset.pattern.permute.xlu0 60
        %5355 = vperm.xlu0 %5354, %v789
        %v5356 = vpop.permute.xlu0 %5355
        %5358 = vset.pattern.permute.xlu0 60
        %5359 = vperm.xlu0 %5358, %v790
        %v5360 = vpop.permute.xlu0 %5359
        %v5362 = vmul.f32 %v5356, %v692
        %v5363 = vmul.f32 %v5356, %v715
        %v5364 = vmul.f32 %v5356, %v738
        %v5365 = vmul.f32 %v5356, %v761
        %v5366 = vmul.f32 %v5356, %v784
        %v5367 = vmul.f32 %v5360, %v695
        %v5368 = vmul.f32 %v5360, %v718
        %v5369 = vmul.f32 %v5360, %v741
        %v5370 = vmul.f32 %v5360, %v764
        %v5371 = vmul.f32 %v5360, %v787
        %5382 = vrot.lane.b32.xlu0 %v5362, 68
        %v5383 = vpop.permute.xlu0 %5382
        %5384 = vrot.lane.b32.xlu0 %v5363, 68
        %v5385 = vpop.permute.xlu0 %5384
        %5386 = vrot.lane.b32.xlu0 %v5364, 68
        %v5387 = vpop.permute.xlu0 %5386
        %5388 = vrot.lane.b32.xlu0 %v5365, 68
        %v5389 = vpop.permute.xlu0 %5388
        %5390 = vrot.lane.b32.xlu0 %v5366, 68
        %v5391 = vpop.permute.xlu0 %5390
        %5392 = vrot.lane.b32.xlu0 %v5367, 68
        %v5393 = vpop.permute.xlu0 %5392
        %5394 = vrot.lane.b32.xlu0 %v5368, 68
        %v5395 = vpop.permute.xlu0 %5394
        %5396 = vrot.lane.b32.xlu0 %v5369, 68
        %v5397 = vpop.permute.xlu0 %5396
        %5398 = vrot.lane.b32.xlu0 %v5370, 68
        %v5399 = vpop.permute.xlu0 %5398
        %5400 = vrot.lane.b32.xlu0 %v5371, 68
        %v5401 = vpop.permute.xlu0 %5400
        %vm5402 = vcmask 556032
        %v5403 = vsel %vm5402, %v5383, %v5385
        %v5404 = vsel %vm5402, %v5385, %v5387
        %v5405 = vsel %vm5402, %v5387, %v5389
        %v5406 = vsel %vm5402, %v5389, %v5391
        %v5407 = vsel %vm5402, %v5393, %v5395
        %v5408 = vsel %vm5402, %v5395, %v5397
        %v5409 = vsel %vm5402, %v5397, %v5399
        %v5410 = vsel %vm5402, %v5399, %v5401
        %v5421 = vadd.f32 %v5344, %v5403
        %v5422 = vadd.f32 %v5345, %v5404
        %v5423 = vadd.f32 %v5346, %v5405
        %v5424 = vadd.f32 %v5347, %v5406
        %v5425 = vadd.f32 %v5348, %v5391
        %v5426 = vadd.f32 %v5349, %v5407
        %v5427 = vadd.f32 %v5350, %v5408
        %v5428 = vadd.f32 %v5351, %v5409
        %v5429 = vadd.f32 %v5352, %v5410
        %v5430 = vadd.f32 %v5353, %v5401
        %5431 = vset.pattern.permute.xlu0 61
        %5432 = vperm.xlu0 %5431, %v789
        %v5433 = vpop.permute.xlu0 %5432
        %5435 = vset.pattern.permute.xlu0 61
        %5436 = vperm.xlu0 %5435, %v790
        %v5437 = vpop.permute.xlu0 %5436
        %v5439 = vmul.f32 %v5433, %v692
        %v5440 = vmul.f32 %v5433, %v715
        %v5441 = vmul.f32 %v5433, %v738
        %v5442 = vmul.f32 %v5433, %v761
        %v5443 = vmul.f32 %v5433, %v784
        %v5444 = vmul.f32 %v5437, %v695
        %v5445 = vmul.f32 %v5437, %v718
        %v5446 = vmul.f32 %v5437, %v741
        %v5447 = vmul.f32 %v5437, %v764
        %v5448 = vmul.f32 %v5437, %v787
        %5459 = vrot.lane.b32.xlu0 %v5439, 67
        %v5460 = vpop.permute.xlu0 %5459
        %5461 = vrot.lane.b32.xlu0 %v5440, 67
        %v5462 = vpop.permute.xlu0 %5461
        %5463 = vrot.lane.b32.xlu0 %v5441, 67
        %v5464 = vpop.permute.xlu0 %5463
        %5465 = vrot.lane.b32.xlu0 %v5442, 67
        %v5466 = vpop.permute.xlu0 %5465
        %5467 = vrot.lane.b32.xlu0 %v5443, 67
        %v5468 = vpop.permute.xlu0 %5467
        %5469 = vrot.lane.b32.xlu0 %v5444, 67
        %v5470 = vpop.permute.xlu0 %5469
        %5471 = vrot.lane.b32.xlu0 %v5445, 67
        %v5472 = vpop.permute.xlu0 %5471
        %5473 = vrot.lane.b32.xlu0 %v5446, 67
        %v5474 = vpop.permute.xlu0 %5473
        %5475 = vrot.lane.b32.xlu0 %v5447, 67
        %v5476 = vpop.permute.xlu0 %5475
        %5477 = vrot.lane.b32.xlu0 %v5448, 67
        %v5478 = vpop.permute.xlu0 %5477
        %vm5479 = vcmask 547840
        %v5480 = vsel %vm5479, %v5460, %v5462
        %v5481 = vsel %vm5479, %v5462, %v5464
        %v5482 = vsel %vm5479, %v5464, %v5466
        %v5483 = vsel %vm5479, %v5466, %v5468
        %v5484 = vsel %vm5479, %v5470, %v5472
        %v5485 = vsel %vm5479, %v5472, %v5474
        %v5486 = vsel %vm5479, %v5474, %v5476
        %v5487 = vsel %vm5479, %v5476, %v5478
        %v5498 = vadd.f32 %v5421, %v5480
        %v5499 = vadd.f32 %v5422, %v5481
        %v5500 = vadd.f32 %v5423, %v5482
        %v5501 = vadd.f32 %v5424, %v5483
        %v5502 = vadd.f32 %v5425, %v5468
        %v5503 = vadd.f32 %v5426, %v5484
        %v5504 = vadd.f32 %v5427, %v5485
        %v5505 = vadd.f32 %v5428, %v5486
        %v5506 = vadd.f32 %v5429, %v5487
        %v5507 = vadd.f32 %v5430, %v5478
        %5508 = vset.pattern.permute.xlu0 62
        %5509 = vperm.xlu0 %5508, %v789
        %v5510 = vpop.permute.xlu0 %5509
        %5512 = vset.pattern.permute.xlu0 62
        %5513 = vperm.xlu0 %5512, %v790
        %v5514 = vpop.permute.xlu0 %5513
        %v5516 = vmul.f32 %v5510, %v692
        %v5517 = vmul.f32 %v5510, %v715
        %v5518 = vmul.f32 %v5510, %v738
        %v5519 = vmul.f32 %v5510, %v761
        %v5520 = vmul.f32 %v5510, %v784
        %v5521 = vmul.f32 %v5514, %v695
        %v5522 = vmul.f32 %v5514, %v718
        %v5523 = vmul.f32 %v5514, %v741
        %v5524 = vmul.f32 %v5514, %v764
        %v5525 = vmul.f32 %v5514, %v787
        %5536 = vrot.lane.b32.xlu0 %v5516, 66
        %v5537 = vpop.permute.xlu0 %5536
        %5538 = vrot.lane.b32.xlu0 %v5517, 66
        %v5539 = vpop.permute.xlu0 %5538
        %5540 = vrot.lane.b32.xlu0 %v5518, 66
        %v5541 = vpop.permute.xlu0 %5540
        %5542 = vrot.lane.b32.xlu0 %v5519, 66
        %v5543 = vpop.permute.xlu0 %5542
        %5544 = vrot.lane.b32.xlu0 %v5520, 66
        %v5545 = vpop.permute.xlu0 %5544
        %5546 = vrot.lane.b32.xlu0 %v5521, 66
        %v5547 = vpop.permute.xlu0 %5546
        %5548 = vrot.lane.b32.xlu0 %v5522, 66
        %v5549 = vpop.permute.xlu0 %5548
        %5550 = vrot.lane.b32.xlu0 %v5523, 66
        %v5551 = vpop.permute.xlu0 %5550
        %5552 = vrot.lane.b32.xlu0 %v5524, 66
        %v5553 = vpop.permute.xlu0 %5552
        %5554 = vrot.lane.b32.xlu0 %v5525, 66
        %v5555 = vpop.permute.xlu0 %5554
        %vm5556 = vcmask 539648
        %v5557 = vsel %vm5556, %v5537, %v5539
        %v5558 = vsel %vm5556, %v5539, %v5541
        %v5559 = vsel %vm5556, %v5541, %v5543
        %v5560 = vsel %vm5556, %v5543, %v5545
        %v5561 = vsel %vm5556, %v5547, %v5549
        %v5562 = vsel %vm5556, %v5549, %v5551
        %v5563 = vsel %vm5556, %v5551, %v5553
        %v5564 = vsel %vm5556, %v5553, %v5555
        %v5575 = vadd.f32 %v5498, %v5557
        %v5576 = vadd.f32 %v5499, %v5558
        %v5577 = vadd.f32 %v5500, %v5559
        %v5578 = vadd.f32 %v5501, %v5560
        %v5579 = vadd.f32 %v5502, %v5545
        %v5580 = vadd.f32 %v5503, %v5561
        %v5581 = vadd.f32 %v5504, %v5562
        %v5582 = vadd.f32 %v5505, %v5563
        %v5583 = vadd.f32 %v5506, %v5564
        %v5584 = vadd.f32 %v5507, %v5555
        %5585 = vset.pattern.permute.xlu0 63
        %5586 = vperm.xlu0 %5585, %v789
        %v5587 = vpop.permute.xlu0 %5586
        %5589 = vset.pattern.permute.xlu0 63
        %5590 = vperm.xlu0 %5589, %v790
        %v5591 = vpop.permute.xlu0 %5590
        %v5593 = vmul.f32 %v5587, %v692
        %v5594 = vmul.f32 %v5587, %v715
        %v5595 = vmul.f32 %v5587, %v738
        %v5596 = vmul.f32 %v5587, %v761
        %v5597 = vmul.f32 %v5587, %v784
        %v5598 = vmul.f32 %v5591, %v695
        %v5599 = vmul.f32 %v5591, %v718
        %v5600 = vmul.f32 %v5591, %v741
        %v5601 = vmul.f32 %v5591, %v764
        %v5602 = vmul.f32 %v5591, %v787
        %5613 = vrot.lane.b32.xlu0 %v5593, 65
        %v5614 = vpop.permute.xlu0 %5613
        %5615 = vrot.lane.b32.xlu0 %v5594, 65
        %v5616 = vpop.permute.xlu0 %5615
        %5617 = vrot.lane.b32.xlu0 %v5595, 65
        %v5618 = vpop.permute.xlu0 %5617
        %5619 = vrot.lane.b32.xlu0 %v5596, 65
        %v5620 = vpop.permute.xlu0 %5619
        %5621 = vrot.lane.b32.xlu0 %v5597, 65
        %v5622 = vpop.permute.xlu0 %5621
        %5623 = vrot.lane.b32.xlu0 %v5598, 65
        %v5624 = vpop.permute.xlu0 %5623
        %5625 = vrot.lane.b32.xlu0 %v5599, 65
        %v5626 = vpop.permute.xlu0 %5625
        %5627 = vrot.lane.b32.xlu0 %v5600, 65
        %v5628 = vpop.permute.xlu0 %5627
        %5629 = vrot.lane.b32.xlu0 %v5601, 65
        %v5630 = vpop.permute.xlu0 %5629
        %5631 = vrot.lane.b32.xlu0 %v5602, 65
        %v5632 = vpop.permute.xlu0 %5631
        %vm5633 = vcmask 531456
        %v5634 = vsel %vm5633, %v5614, %v5616
        %v5635 = vsel %vm5633, %v5616, %v5618
        %v5636 = vsel %vm5633, %v5618, %v5620
        %v5637 = vsel %vm5633, %v5620, %v5622
        %v5638 = vsel %vm5633, %v5624, %v5626
        %v5639 = vsel %vm5633, %v5626, %v5628
        %v5640 = vsel %vm5633, %v5628, %v5630
        %v5641 = vsel %vm5633, %v5630, %v5632
        %v5652 = vadd.f32 %v5575, %v5634
        %v5653 = vadd.f32 %v5576, %v5635
        %v5654 = vadd.f32 %v5577, %v5636
        %v5655 = vadd.f32 %v5578, %v5637
        %v5656 = vadd.f32 %v5579, %v5622
        %v5657 = vadd.f32 %v5580, %v5638
        %v5658 = vadd.f32 %v5581, %v5639
        %v5659 = vadd.f32 %v5582, %v5640
        %v5660 = vadd.f32 %v5583, %v5641
        %v5661 = vadd.f32 %v5584, %v5632
        %5664 = vrot.lane.b32.xlu0 %v416, 6
        %v5665 = vpop.permute.xlu0 %5664
        %5666 = vrot.lane.b32.xlu0 %v417, 6
        %v5667 = vpop.permute.xlu0 %5666
        %v5670 = vmul.f32 %v649, %v5665
        %v5671 = vmul.f32 %v664, %v5667
        %5672 = vrot.lane.b32.xlu0 %v416, 5
        %v5673 = vpop.permute.xlu0 %5672
        %5674 = vrot.lane.b32.xlu0 %v417, 5
        %v5675 = vpop.permute.xlu0 %5674
        %v5678 = vmul.f32 %v649, %v5673
        %v5679 = vmul.f32 %v664, %v5675
        %5680 = vrot.lane.b32.xlu0 %v416, 4
        %v5681 = vpop.permute.xlu0 %5680
        %5682 = vrot.lane.b32.xlu0 %v417, 4
        %v5683 = vpop.permute.xlu0 %5682
        %v5686 = vadd.f32 %v5678, %v5681
        %v5687 = vadd.f32 %v5679, %v5683
        %5689 = vset.pattern.permute.xlu0 6
        %5690 = vperm.xlu0 %5689, %v5670
        %v5691 = vpop.permute.xlu0 %5690
        %5694 = vset.pattern.permute.xlu0 6
        %5695 = vperm.xlu0 %5694, %v5671
        %v5696 = vpop.permute.xlu0 %5695
        %v5698 = vmul.f32 %v5691, %v5652
        %v5699 = vmul.f32 %v5691, %v5653
        %v5700 = vmul.f32 %v5691, %v5654
        %v5701 = vmul.f32 %v5691, %v5655
        %v5702 = vmul.f32 %v5691, %v5656
        %v5703 = vmul.f32 %v5696, %v5657
        %v5704 = vmul.f32 %v5696, %v5658
        %v5705 = vmul.f32 %v5696, %v5659
        %v5706 = vmul.f32 %v5696, %v5660
        %v5707 = vmul.f32 %v5696, %v5661
        %5709 = vset.pattern.permute.xlu0 6
        %5710 = vperm.xlu0 %5709, %v5686
        %v5711 = vpop.permute.xlu0 %5710
        %5714 = vset.pattern.permute.xlu0 6
        %5715 = vperm.xlu0 %5714, %v5687
        %v5716 = vpop.permute.xlu0 %5715
        %v5718 = vadd.f32 %v5698, %v5711
        %v5719 = vadd.f32 %v5699, %v5711
        %v5720 = vadd.f32 %v5700, %v5711
        %v5721 = vadd.f32 %v5701, %v5711
        %v5722 = vadd.f32 %v5702, %v5711
        %v5723 = vadd.f32 %v5703, %v5716
        %v5724 = vadd.f32 %v5704, %v5716
        %v5725 = vadd.f32 %v5705, %v5716
        %v5726 = vadd.f32 %v5706, %v5716
        %v5727 = vadd.f32 %v5707, %v5716
        %vm5728 = vcmp.ge.f32.partialorder %v5718, 0.0
        %vm5729 = vcmp.ge.f32.partialorder %v5719, 0.0
        %vm5730 = vcmp.ge.f32.partialorder %v5720, 0.0
        %vm5731 = vcmp.ge.f32.partialorder %v5721, 0.0
        %vm5732 = vcmp.ge.f32.partialorder %v5722, 0.0
        %vm5733 = vcmp.ge.f32.partialorder %v5723, 0.0
        %vm5734 = vcmp.ge.f32.partialorder %v5724, 0.0
        %vm5735 = vcmp.ge.f32.partialorder %v5725, 0.0
        %vm5736 = vcmp.ge.f32.partialorder %v5726, 0.0
        %vm5737 = vcmp.ge.f32.partialorder %v5727, 0.0
        %v5738 = vsub.f32 0.0, %v5718
        %v5739 = vsub.f32 0.0, %v5719
        %v5740 = vsub.f32 0.0, %v5720
        %v5741 = vsub.f32 0.0, %v5721
        %v5742 = vsub.f32 0.0, %v5722
        %v5743 = vsub.f32 0.0, %v5723
        %v5744 = vsub.f32 0.0, %v5724
        %v5745 = vsub.f32 0.0, %v5725
        %v5746 = vsub.f32 0.0, %v5726
        %v5747 = vsub.f32 0.0, %v5727
        %v5748 = vmul.f32 %v5738, 1.442695
        %v5749 = vpow.pop %v5748
        %v5750 = vmul.f32 %v5739, 1.442695
        %v5751 = vpow.pop %v5750
        %v5752 = vmul.f32 %v5740, 1.442695
        %v5753 = vpow.pop %v5752
        %v5754 = vmul.f32 %v5741, 1.442695
        %v5755 = vpow.pop %v5754
        %v5756 = vmul.f32 %v5742, 1.442695
        %v5757 = vpow.pop %v5756
        %v5758 = vmul.f32 %v5743, 1.442695
        %v5759 = vpow.pop %v5758
        %v5760 = vmul.f32 %v5744, 1.442695
        %v5761 = vpow.pop %v5760
        %v5762 = vmul.f32 %v5745, 1.442695
        %v5763 = vpow.pop %v5762
        %v5764 = vmul.f32 %v5746, 1.442695
        %v5765 = vpow.pop %v5764
        %v5766 = vmul.f32 %v5747, 1.442695
        %v5767 = vpow.pop %v5766
        %v5768 = vsub.f32 1.0, %v5749
        %v5769 = vsub.f32 1.0, %v5751
        %v5770 = vsub.f32 1.0, %v5753
        %v5771 = vsub.f32 1.0, %v5755
        %v5772 = vsub.f32 1.0, %v5757
        %v5773 = vsub.f32 1.0, %v5759
        %v5774 = vsub.f32 1.0, %v5761
        %v5775 = vsub.f32 1.0, %v5763
        %v5776 = vsub.f32 1.0, %v5765
        %v5777 = vsub.f32 1.0, %v5767
        %v5778 = vmul.f32 %v5718, 1.442695
        %v5779 = vpow.pop %v5778
        %v5780 = vmul.f32 %v5719, 1.442695
        %v5781 = vpow.pop %v5780
        %v5782 = vmul.f32 %v5720, 1.442695
        %v5783 = vpow.pop %v5782
        %v5784 = vmul.f32 %v5721, 1.442695
        %v5785 = vpow.pop %v5784
        %v5786 = vmul.f32 %v5722, 1.442695
        %v5787 = vpow.pop %v5786
        %v5788 = vmul.f32 %v5723, 1.442695
        %v5789 = vpow.pop %v5788
        %v5790 = vmul.f32 %v5724, 1.442695
        %v5791 = vpow.pop %v5790
        %v5792 = vmul.f32 %v5725, 1.442695
        %v5793 = vpow.pop %v5792
        %v5794 = vmul.f32 %v5726, 1.442695
        %v5795 = vpow.pop %v5794
        %v5796 = vmul.f32 %v5727, 1.442695
        %v5797 = vpow.pop %v5796
        %v5798 = vsub.f32 %v5779, 1.0
        %v5799 = vsub.f32 %v5781, 1.0
        %v5800 = vsub.f32 %v5783, 1.0
        %v5801 = vsub.f32 %v5785, 1.0
        %v5802 = vsub.f32 %v5787, 1.0
        %v5803 = vsub.f32 %v5789, 1.0
        %v5804 = vsub.f32 %v5791, 1.0
        %v5805 = vsub.f32 %v5793, 1.0
        %v5806 = vsub.f32 %v5795, 1.0
        %v5807 = vsub.f32 %v5797, 1.0
        %v5808 = vsel %vm5728, %v5768, %v5798
        %v5809 = vsel %vm5729, %v5769, %v5799
        %v5810 = vsel %vm5730, %v5770, %v5800
        %v5811 = vsel %vm5731, %v5771, %v5801
        %v5812 = vsel %vm5732, %v5772, %v5802
        %v5813 = vsel %vm5733, %v5773, %v5803
        %v5814 = vsel %vm5734, %v5774, %v5804
        %v5815 = vsel %vm5735, %v5775, %v5805
        %v5816 = vsel %vm5736, %v5776, %v5806
        %v5817 = vsel %vm5737, %v5777, %v5807
        %v5818 = vld [vmem:[%s8] sm:$0xff]
        %v5819 = vld [vmem:[%s8 + $0x8] sm:$0xff]
        %v5820 = vld [vmem:[%s8 + $0x10] sm:$0xff]
        %v5821 = vld [vmem:[%s8 + $0x18] sm:$0xff]
        %v5822 = vld [vmem:[%s8 + $0x20] sm:$0xff]
        %v5823 = vld [vmem:[%s8 + $0x28] sm:$0xff]
        %v5824 = vld [vmem:[%s8 + $0x30] sm:$0xff]
        %v5825 = vld [vmem:[%s8 + $0x38] sm:$0xff]
        %v5826 = vld [vmem:[%s8 + $0x40] sm:$0xff]
        %v5827 = vld [vmem:[%s8 + $0x48] sm:$0xff]
        %v5828 = vld [vmem:[%s8 + $0x50] sm:$0xff]
        %v5829 = vld [vmem:[%s8 + $0x58] sm:$0xff]
        %v5830 = vld [vmem:[%s8 + $0x60] sm:$0xff]
        %v5831 = vld [vmem:[%s8 + $0x68] sm:$0xff]
        %v5832 = vld [vmem:[%s8 + $0x70] sm:$0xff]
        %v5833 = vld [vmem:[%s8 + $0x78] sm:$0xff]
        %v5834 = vld [vmem:[%s8 + $0x80] sm:$0xff]
        %v5835 = vld [vmem:[%s8 + $0x88] sm:$0xff]
        %v5836 = vld [vmem:[%s8 + $0x90] sm:$0xff]
        %v5837 = vld [vmem:[%s8 + $0x98] sm:$0xff]
        %v5838 = vld [vmem:[%s8 + $0xa0] sm:$0xff]
        %v5839 = vld [vmem:[%s8 + $0xa8] sm:$0xff]
        %v5840 = vld [vmem:[%s8 + $0xb0] sm:$0xff]
        %v5841 = vld [vmem:[%s8 + $0xb8] sm:$0xff]
        %v5842 = vld [vmem:[%s8 + $0xc0] sm:$0xff]
        %v5843 = vld [vmem:[%s8 + $0xc8] sm:$0xff]
        %v5844 = vld [vmem:[%s8 + $0xd0] sm:$0xff]
        %v5845 = vld [vmem:[%s8 + $0xd8] sm:$0xff]
        %v5846 = vld [vmem:[%s8 + $0xe0] sm:$0xff]
        %v5847 = vld [vmem:[%s8 + $0xe8] sm:$0xff]
        %v5848 = vld [vmem:[%s8 + $0xf0] sm:$0xff]
        %v5849 = vld [vmem:[%s8 + $0xf8] sm:$0xff]
        %v5850 = vld [vmem:[%s8 + $0x100] sm:$0xff]
        %v5851 = vld [vmem:[%s8 + $0x108] sm:$0xff]
        %v5852 = vld [vmem:[%s8 + $0x110] sm:$0xff]
        %v5853 = vld [vmem:[%s8 + $0x118] sm:$0xff]
        %v5854 = vld [vmem:[%s8 + $0x120] sm:$0xff]
        %v5855 = vld [vmem:[%s8 + $0x128] sm:$0xff]
        %v5856 = vld [vmem:[%s8 + $0x130] sm:$0xff]
        %v5857 = vld [vmem:[%s8 + $0x138] sm:$0xff]
        %v5858 = vld [vmem:[%s8 + $0x140] sm:$0xff]
        %v5859 = vld [vmem:[%s8 + $0x148] sm:$0xff]
        %v5860 = vld [vmem:[%s8 + $0x150] sm:$0xff]
        %v5861 = vld [vmem:[%s8 + $0x158] sm:$0xff]
        %v5862 = vld [vmem:[%s8 + $0x160] sm:$0xff]
        %v5863 = vld [vmem:[%s8 + $0x168] sm:$0xff]
        %v5864 = vld [vmem:[%s8 + $0x170] sm:$0xff]
        %v5865 = vld [vmem:[%s8 + $0x178] sm:$0xff]
        %v5866 = vld [vmem:[%s8 + $0x180] sm:$0xff]
        %v5867 = vld [vmem:[%s8 + $0x188] sm:$0xff]
        %v5868 = vld [vmem:[%s8 + $0x190] sm:$0xff]
        %v5869 = vld [vmem:[%s8 + $0x198] sm:$0xff]
        %v5870 = vld [vmem:[%s8 + $0x1a0] sm:$0xff]
        %v5871 = vld [vmem:[%s8 + $0x1a8] sm:$0xff]
        %v5872 = vld [vmem:[%s8 + $0x1b0] sm:$0xff]
        %v5873 = vld [vmem:[%s8 + $0x1b8] sm:$0xff]
        %v5874 = vld [vmem:[%s8 + $0x1c0] sm:$0xff]
        %v5875 = vld [vmem:[%s8 + $0x1c8] sm:$0xff]
        %v5876 = vld [vmem:[%s8 + $0x1d0] sm:$0xff]
        %v5877 = vld [vmem:[%s8 + $0x1d8] sm:$0xff]
        %v5878 = vld [vmem:[%s8 + $0x1e0] sm:$0xff]
        %v5879 = vld [vmem:[%s8 + $0x1e8] sm:$0xff]
        %v5880 = vld [vmem:[%s8 + $0x1f0] sm:$0xff]
        %v5881 = vld [vmem:[%s8 + $0x1f8] sm:$0xff]
        %v5882 = vld [vmem:[%s8 + $0x200] sm:$0xff]
        %v5883 = vld [vmem:[%s8 + $0x208] sm:$0xff]
        %v5884 = vld [vmem:[%s8 + $0x210] sm:$0xff]
        %v5885 = vld [vmem:[%s8 + $0x218] sm:$0xff]
        %v5886 = vld [vmem:[%s8 + $0x220] sm:$0xff]
        %v5887 = vld [vmem:[%s8 + $0x228] sm:$0xff]
        %v5888 = vld [vmem:[%s8 + $0x230] sm:$0xff]
        %v5889 = vld [vmem:[%s8 + $0x238] sm:$0xff]
        %v5890 = vld [vmem:[%s8 + $0x240] sm:$0xff]
        %v5891 = vld [vmem:[%s8 + $0x248] sm:$0xff]
        %v5892 = vld [vmem:[%s8 + $0x250] sm:$0xff]
        %v5893 = vld [vmem:[%s8 + $0x258] sm:$0xff]
        %v5894 = vld [vmem:[%s8 + $0x260] sm:$0xff]
        %v5895 = vld [vmem:[%s8 + $0x268] sm:$0xff]
        %v5896 = vld [vmem:[%s8 + $0x270] sm:$0xff]
        %v5897 = vld [vmem:[%s8 + $0x278] sm:$0xff]
        %v5898 = vld [vmem:[%s8 + $0x280] sm:$0xff]
        %v5899 = vld [vmem:[%s8 + $0x288] sm:$0xff]
        %v5900 = vld [vmem:[%s8 + $0x290] sm:$0xff]
        %v5901 = vld [vmem:[%s8 + $0x298] sm:$0xff]
        %v5902 = vld [vmem:[%s8 + $0x2a0] sm:$0xff]
        %v5903 = vld [vmem:[%s8 + $0x2a8] sm:$0xff]
        %v5904 = vld [vmem:[%s8 + $0x2b0] sm:$0xff]
        %v5905 = vld [vmem:[%s8 + $0x2b8] sm:$0xff]
        %v5906 = vld [vmem:[%s8 + $0x2c0] sm:$0xff]
        %v5907 = vld [vmem:[%s8 + $0x2c8] sm:$0xff]
        %v5908 = vld [vmem:[%s8 + $0x2d0] sm:$0xff]
        %v5909 = vld [vmem:[%s8 + $0x2d8] sm:$0xff]
        %v5910 = vld [vmem:[%s8 + $0x2e0] sm:$0xff]
        %v5911 = vld [vmem:[%s8 + $0x2e8] sm:$0xff]
        %v5912 = vld [vmem:[%s8 + $0x2f0] sm:$0xff]
        %v5913 = vld [vmem:[%s8 + $0x2f8] sm:$0xff]
        %v5914 = vld [vmem:[%s8 + $0x300] sm:$0xff]
        %v5915 = vld [vmem:[%s8 + $0x308] sm:$0xff]
        %v5916 = vld [vmem:[%s8 + $0x310] sm:$0xff]
        %v5917 = vld [vmem:[%s8 + $0x318] sm:$0xff]
        %v5918 = vld [vmem:[%s8 + $0x320] sm:$0xff]
        %v5919 = vld [vmem:[%s8 + $0x328] sm:$0xff]
        %v5920 = vld [vmem:[%s8 + $0x330] sm:$0xff]
        %v5921 = vld [vmem:[%s8 + $0x338] sm:$0xff]
        %v5922 = vld [vmem:[%s8 + $0x340] sm:$0xff]
        %v5923 = vld [vmem:[%s8 + $0x348] sm:$0xff]
        %v5924 = vld [vmem:[%s8 + $0x350] sm:$0xff]
        %v5925 = vld [vmem:[%s8 + $0x358] sm:$0xff]
        %v5926 = vld [vmem:[%s8 + $0x360] sm:$0xff]
        %v5927 = vld [vmem:[%s8 + $0x368] sm:$0xff]
        %v5928 = vld [vmem:[%s8 + $0x370] sm:$0xff]
        %v5929 = vld [vmem:[%s8 + $0x378] sm:$0xff]
        %v5930 = vld [vmem:[%s8 + $0x380] sm:$0xff]
        %v5931 = vld [vmem:[%s8 + $0x388] sm:$0xff]
        %v5932 = vld [vmem:[%s8 + $0x390] sm:$0xff]
        %v5933 = vld [vmem:[%s8 + $0x398] sm:$0xff]
        %v5934 = vld [vmem:[%s8 + $0x3a0] sm:$0xff]
        %v5935 = vld [vmem:[%s8 + $0x3a8] sm:$0xff]
        %v5936 = vld [vmem:[%s8 + $0x3b0] sm:$0xff]
        %v5937 = vld [vmem:[%s8 + $0x3b8] sm:$0xff]
        %v5938 = vld [vmem:[%s8 + $0x3c0] sm:$0xff]
        %v5939 = vld [vmem:[%s8 + $0x3c8] sm:$0xff]
        %v5940 = vld [vmem:[%s8 + $0x3d0] sm:$0xff]
        %v5941 = vld [vmem:[%s8 + $0x3d8] sm:$0xff]
        %v5942 = vld [vmem:[%s8 + $0x3e0] sm:$0xff]
        %v5943 = vld [vmem:[%s8 + $0x3e8] sm:$0xff]
        %v5944 = vld [vmem:[%s8 + $0x3f0] sm:$0xff]
        %v5945 = vld [vmem:[%s8 + $0x3f8] sm:$0xff]
        %v5946 = vld [vmem:[%s8 + $0x400] sm:$0xff]
        %v5947 = vld [vmem:[%s8 + $0x408] sm:$0xff]
        %v5948 = vld [vmem:[%s8 + $0x410] sm:$0xff]
        %v5949 = vld [vmem:[%s8 + $0x418] sm:$0xff]
        %v5950 = vld [vmem:[%s8 + $0x420] sm:$0xff]
        %v5951 = vld [vmem:[%s8 + $0x428] sm:$0xff]
        %v5952 = vld [vmem:[%s8 + $0x430] sm:$0xff]
        %v5953 = vld [vmem:[%s8 + $0x438] sm:$0xff]
        %v5954 = vld [vmem:[%s8 + $0x440] sm:$0xff]
        %v5955 = vld [vmem:[%s8 + $0x448] sm:$0xff]
        %v5956 = vld [vmem:[%s8 + $0x450] sm:$0xff]
        %v5957 = vld [vmem:[%s8 + $0x458] sm:$0xff]
        %v5958 = vld [vmem:[%s8 + $0x460] sm:$0xff]
        %v5959 = vld [vmem:[%s8 + $0x468] sm:$0xff]
        %v5960 = vld [vmem:[%s8 + $0x470] sm:$0xff]
        %v5961 = vld [vmem:[%s8 + $0x478] sm:$0xff]
        %v5962 = vld [vmem:[%s8 + $0x480] sm:$0xff]
        %v5963 = vld [vmem:[%s8 + $0x488] sm:$0xff]
        %v5964 = vld [vmem:[%s8 + $0x490] sm:$0xff]
        %v5965 = vld [vmem:[%s8 + $0x498] sm:$0xff]
        %v5966 = vld [vmem:[%s8 + $0x4a0] sm:$0xff]
        %v5967 = vld [vmem:[%s8 + $0x4a8] sm:$0xff]
        %v5968 = vld [vmem:[%s8 + $0x4b0] sm:$0xff]
        %v5969 = vld [vmem:[%s8 + $0x4b8] sm:$0xff]
        %v5970 = vld [vmem:[%s8 + $0x4c0] sm:$0xff]
        %v5971 = vld [vmem:[%s8 + $0x4c8] sm:$0xff]
        %v5972 = vld [vmem:[%s8 + $0x4d0] sm:$0xff]
        %v5973 = vld [vmem:[%s8 + $0x4d8] sm:$0xff]
        %v5974 = vld [vmem:[%s8 + $0x4e0] sm:$0xff]
        %v5975 = vld [vmem:[%s8 + $0x4e8] sm:$0xff]
        %v5976 = vld [vmem:[%s8 + $0x4f0] sm:$0xff]
        %v5977 = vld [vmem:[%s8 + $0x4f8] sm:$0xff]
        %v5978 = vld [vmem:[%s8 + $0x500] sm:$0xff]
        %v5979 = vld [vmem:[%s8 + $0x508] sm:$0xff]
        %v5980 = vld [vmem:[%s8 + $0x510] sm:$0xff]
        %v5981 = vld [vmem:[%s8 + $0x518] sm:$0xff]
        %v5982 = vld [vmem:[%s8 + $0x520] sm:$0xff]
        %v5983 = vld [vmem:[%s8 + $0x528] sm:$0xff]
        %v5984 = vld [vmem:[%s8 + $0x530] sm:$0xff]
        %v5985 = vld [vmem:[%s8 + $0x538] sm:$0xff]
        %v5986 = vld [vmem:[%s8 + $0x540] sm:$0xff]
        %v5987 = vld [vmem:[%s8 + $0x548] sm:$0xff]
        %v5988 = vld [vmem:[%s8 + $0x550] sm:$0xff]
        %v5989 = vld [vmem:[%s8 + $0x558] sm:$0xff]
        %v5990 = vld [vmem:[%s8 + $0x560] sm:$0xff]
        %v5991 = vld [vmem:[%s8 + $0x568] sm:$0xff]
        %v5992 = vld [vmem:[%s8 + $0x570] sm:$0xff]
        %v5993 = vld [vmem:[%s8 + $0x578] sm:$0xff]
        %v5994 = vld [vmem:[%s8 + $0x580] sm:$0xff]
        %v5995 = vld [vmem:[%s8 + $0x588] sm:$0xff]
        %v5996 = vld [vmem:[%s8 + $0x590] sm:$0xff]
        %v5997 = vld [vmem:[%s8 + $0x598] sm:$0xff]
        %v5998 = vld [vmem:[%s8 + $0x5a0] sm:$0xff]
        %v5999 = vld [vmem:[%s8 + $0x5a8] sm:$0xff]
        %v6000 = vld [vmem:[%s8 + $0x5b0] sm:$0xff]
        %v6001 = vld [vmem:[%s8 + $0x5b8] sm:$0xff]
        %v6002 = vld [vmem:[%s8 + $0x5c0] sm:$0xff]
        %v6003 = vld [vmem:[%s8 + $0x5c8] sm:$0xff]
        %v6004 = vld [vmem:[%s8 + $0x5d0] sm:$0xff]
        %v6005 = vld [vmem:[%s8 + $0x5d8] sm:$0xff]
        %v6006 = vld [vmem:[%s8 + $0x5e0] sm:$0xff]
        %v6007 = vld [vmem:[%s8 + $0x5e8] sm:$0xff]
        %v6008 = vld [vmem:[%s8 + $0x5f0] sm:$0xff]
        %v6009 = vld [vmem:[%s8 + $0x5f8] sm:$0xff]
        %v6010 = vld [vmem:[%s8 + $0x600] sm:$0xff]
        %v6011 = vld [vmem:[%s8 + $0x608] sm:$0xff]
        %v6012 = vld [vmem:[%s8 + $0x610] sm:$0xff]
        %v6013 = vld [vmem:[%s8 + $0x618] sm:$0xff]
        %v6014 = vld [vmem:[%s8 + $0x620] sm:$0xff]
        %v6015 = vld [vmem:[%s8 + $0x628] sm:$0xff]
        %v6016 = vld [vmem:[%s8 + $0x630] sm:$0xff]
        %v6017 = vld [vmem:[%s8 + $0x638] sm:$0xff]
        %v6018 = vld [vmem:[%s8 + $0x640] sm:$0xff]
        %v6019 = vld [vmem:[%s8 + $0x648] sm:$0xff]
        %v6020 = vld [vmem:[%s8 + $0x650] sm:$0xff]
        %v6021 = vld [vmem:[%s8 + $0x658] sm:$0xff]
        %v6022 = vld [vmem:[%s8 + $0x660] sm:$0xff]
        %v6023 = vld [vmem:[%s8 + $0x668] sm:$0xff]
        %v6024 = vld [vmem:[%s8 + $0x670] sm:$0xff]
        %v6025 = vld [vmem:[%s8 + $0x678] sm:$0xff]
        %v6026 = vld [vmem:[%s8 + $0x680] sm:$0xff]
        %v6027 = vld [vmem:[%s8 + $0x688] sm:$0xff]
        %v6028 = vld [vmem:[%s8 + $0x690] sm:$0xff]
        %v6029 = vld [vmem:[%s8 + $0x698] sm:$0xff]
        %v6030 = vld [vmem:[%s8 + $0x6a0] sm:$0xff]
        %v6031 = vld [vmem:[%s8 + $0x6a8] sm:$0xff]
        %v6032 = vld [vmem:[%s8 + $0x6b0] sm:$0xff]
        %v6033 = vld [vmem:[%s8 + $0x6b8] sm:$0xff]
        %v6034 = vld [vmem:[%s8 + $0x6c0] sm:$0x1]
        %v6035 = vld [vmem:[%s8 + $0x6c8] sm:$0x1]
        %v6036 = vld [vmem:[%s8 + $0x6d0] sm:$0x1]
        %v6038 = vsel %vm5633, %v5812, 0
        %v6041 = vsel %vm5633, %v5817, 0
        %vm6043 = vcmask 1040384
        %v6045 = vsel %vm6043, %v6034, 0
        %v6048 = vsel %vm6043, %v6035, 0
        %v6051 = vsel %vm6043, %v6036, 0
        %6053 = vmatpush.msra.mxu0 %v5863
        %6054 = vmatpush.msra.mxu0 %v5860
        %6055 = vmatpush.msra.mxu0 %v5857
        %6056 = vmatpush.msra.mxu0 %v5854
        %6057 = vmatpush.msra.mxu0 %v5851
        %6058 = vmatpush.msra.mxu0 %v5848
        %6059 = vmatpush.msra.mxu0 %v5845
        %6060 = vmatpush.msra.mxu0 %v5842
        %6061 = vmatpush.msra.mxu0 %v5839
        %6062 = vmatpush.msra.mxu0 %v5836
        %6063 = vmatpush.msra.mxu0 %v5833
        %6064 = vmatpush.msra.mxu0 %v5830
        %6065 = vmatpush.msra.mxu0 %v5827
        %6066 = vmatpush.msra.mxu0 %v5824
        %6067 = vmatpush.msra.mxu0 %v5821
        %6068 = vmatpush.msra.mxu0 %v5818
        %6069 = vmatmul.f32.gmra.mxu0 %v5808
        %v6070 = vpop.f32.mrf.mxu0
        %v6071 = vadd.f32 0.0, %v6070
        %6072 = vmatmul.f32.gmra.mxu0 %v5813
        %v6073 = vpop.f32.mrf.mxu0
        %v6074 = vadd.f32 0.0, %v6073
        %6075 = vdwg.mxu0
        %6076 = vmatpush.msra.mxu0 %v5911
        %6077 = vmatpush.msra.mxu0 %v5908
        %6078 = vmatpush.msra.mxu0 %v5905
        %6079 = vmatpush.msra.mxu0 %v5902
        %6080 = vmatpush.msra.mxu0 %v5899
        %6081 = vmatpush.msra.mxu0 %v5896
        %6082 = vmatpush.msra.mxu0 %v5893
        %6083 = vmatpush.msra.mxu0 %v5890
        %6084 = vmatpush.msra.mxu0 %v5887
        %6085 = vmatpush.msra.mxu0 %v5884
        %6086 = vmatpush.msra.mxu0 %v5881
        %6087 = vmatpush.msra.mxu0 %v5878
        %6088 = vmatpush.msra.mxu0 %v5875
        %6089 = vmatpush.msra.mxu0 %v5872
        %6090 = vmatpush.msra.mxu0 %v5869
        %6091 = vmatpush.msra.mxu0 %v5866
        %6092 = vmatmul.f32.gmra.mxu0 %v5809
        %v6093 = vpop.f32.mrf.mxu0
        %v6094 = vadd.f32 %v6071, %v6093
        %6095 = vmatmul.f32.gmra.mxu0 %v5814
        %v6096 = vpop.f32.mrf.mxu0
        %v6097 = vadd.f32 %v6074, %v6096
        %6098 = vdwg.mxu0
        %6099 = vmatpush.msra.mxu0 %v5959
        %6100 = vmatpush.msra.mxu0 %v5956
        %6101 = vmatpush.msra.mxu0 %v5953
        %6102 = vmatpush.msra.mxu0 %v5950
        %6103 = vmatpush.msra.mxu0 %v5947
        %6104 = vmatpush.msra.mxu0 %v5944
        %6105 = vmatpush.msra.mxu0 %v5941
        %6106 = vmatpush.msra.mxu0 %v5938
        %6107 = vmatpush.msra.mxu0 %v5935
        %6108 = vmatpush.msra.mxu0 %v5932
        %6109 = vmatpush.msra.mxu0 %v5929
        %6110 = vmatpush.msra.mxu0 %v5926
        %6111 = vmatpush.msra.mxu0 %v5923
        %6112 = vmatpush.msra.mxu0 %v5920
        %6113 = vmatpush.msra.mxu0 %v5917
        %6114 = vmatpush.msra.mxu0 %v5914
        %6115 = vmatmul.f32.gmra.mxu0 %v5810
        %v6116 = vpop.f32.mrf.mxu0
        %v6117 = vadd.f32 %v6094, %v6116
        %6118 = vmatmul.f32.gmra.mxu0 %v5815
        %v6119 = vpop.f32.mrf.mxu0
        %v6120 = vadd.f32 %v6097, %v6119
        %6121 = vdwg.mxu0
        %6122 = vmatpush.msra.mxu0 %v6007
        %6123 = vmatpush.msra.mxu0 %v6004
        %6124 = vmatpush.msra.mxu0 %v6001
        %6125 = vmatpush.msra.mxu0 %v5998
        %6126 = vmatpush.msra.mxu0 %v5995
        %6127 = vmatpush.msra.mxu0 %v5992
        %6128 = vmatpush.msra.mxu0 %v5989
        %6129 = vmatpush.msra.mxu0 %v5986
        %6130 = vmatpush.msra.mxu0 %v5983
        %6131 = vmatpush.msra.mxu0 %v5980
        %6132 = vmatpush.msra.mxu0 %v5977
        %6133 = vmatpush.msra.mxu0 %v5974
        %6134 = vmatpush.msra.mxu0 %v5971
        %6135 = vmatpush.msra.mxu0 %v5968
        %6136 = vmatpush.msra.mxu0 %v5965
        %6137 = vmatpush.msra.mxu0 %v5962
        %6138 = vmatmul.f32.gmra.mxu0 %v5811
        %v6139 = vpop.f32.mrf.mxu0
        %v6140 = vadd.f32 %v6117, %v6139
        %6141 = vmatmul.f32.gmra.mxu0 %v5816
        %v6142 = vpop.f32.mrf.mxu0
        %v6143 = vadd.f32 %v6120, %v6142
        %6144 = vdwg.mxu0
        %6145 = vmatpush.msra.mxu0 0.0
        %6146 = vmatpush.msra.mxu0 0.0
        %6147 = vmatpush.msra.mxu0 0.0
        %6148 = vmatpush.msra.mxu0 0.0
        %6149 = vmatpush.msra.mxu0 0.0
        %6150 = vmatpush.msra.mxu0 0.0
        %6151 = vmatpush.msra.mxu0 0.0
        %6152 = vmatpush.msra.mxu0 %v6045
        %6153 = vmatpush.msra.mxu0 %v6031
        %6154 = vmatpush.msra.mxu0 %v6028
        %6155 = vmatpush.msra.mxu0 %v6025
        %6156 = vmatpush.msra.mxu0 %v6022
        %6157 = vmatpush.msra.mxu0 %v6019
        %6158 = vmatpush.msra.mxu0 %v6016
        %6159 = vmatpush.msra.mxu0 %v6013
        %6160 = vmatpush.msra.mxu0 %v6010
        %6161 = vmatmul.f32.gmra.mxu0 %v6038
        %v6162 = vpop.f32.mrf.mxu0
        %v6163 = vadd.f32 %v6140, %v6162
        %6164 = vmatmul.f32.gmra.mxu0 %v6041
        %v6165 = vpop.f32.mrf.mxu0
        %v6166 = vadd.f32 %v6143, %v6165
        %6167 = vdwg.mxu0
        %6168 = vmatpush.msra.mxu0 %v5864
        %6169 = vmatpush.msra.mxu0 %v5861
        %6170 = vmatpush.msra.mxu0 %v5858
        %6171 = vmatpush.msra.mxu0 %v5855
        %6172 = vmatpush.msra.mxu0 %v5852
        %6173 = vmatpush.msra.mxu0 %v5849
        %6174 = vmatpush.msra.mxu0 %v5846
        %6175 = vmatpush.msra.mxu0 %v5843
        %6176 = vmatpush.msra.mxu0 %v5840
        %6177 = vmatpush.msra.mxu0 %v5837
        %6178 = vmatpush.msra.mxu0 %v5834
        %6179 = vmatpush.msra.mxu0 %v5831
        %6180 = vmatpush.msra.mxu0 %v5828
        %6181 = vmatpush.msra.mxu0 %v5825
        %6182 = vmatpush.msra.mxu0 %v5822
        %6183 = vmatpush.msra.mxu0 %v5819
        %6184 = vmatmul.f32.gmra.mxu0 %v5808
        %v6185 = vpop.f32.mrf.mxu0
        %v6186 = vadd.f32 0.0, %v6185
        %6187 = vmatmul.f32.gmra.mxu0 %v5813
        %v6188 = vpop.f32.mrf.mxu0
        %v6189 = vadd.f32 0.0, %v6188
        %6190 = vdwg.mxu0
        %6191 = vmatpush.msra.mxu0 %v5912
        %6192 = vmatpush.msra.mxu0 %v5909
        %6193 = vmatpush.msra.mxu0 %v5906
        %6194 = vmatpush.msra.mxu0 %v5903
        %6195 = vmatpush.msra.mxu0 %v5900
        %6196 = vmatpush.msra.mxu0 %v5897
        %6197 = vmatpush.msra.mxu0 %v5894
        %6198 = vmatpush.msra.mxu0 %v5891
        %6199 = vmatpush.msra.mxu0 %v5888
        %6200 = vmatpush.msra.mxu0 %v5885
        %6201 = vmatpush.msra.mxu0 %v5882
        %6202 = vmatpush.msra.mxu0 %v5879
        %6203 = vmatpush.msra.mxu0 %v5876
        %6204 = vmatpush.msra.mxu0 %v5873
        %6205 = vmatpush.msra.mxu0 %v5870
        %6206 = vmatpush.msra.mxu0 %v5867
        %6207 = vmatmul.f32.gmra.mxu0 %v5809
        %v6208 = vpop.f32.mrf.mxu0
        %v6209 = vadd.f32 %v6186, %v6208
        %6210 = vmatmul.f32.gmra.mxu0 %v5814
        %v6211 = vpop.f32.mrf.mxu0
        %v6212 = vadd.f32 %v6189, %v6211
        %6213 = vdwg.mxu0
        %6214 = vmatpush.msra.mxu0 %v5960
        %6215 = vmatpush.msra.mxu0 %v5957
        %6216 = vmatpush.msra.mxu0 %v5954
        %6217 = vmatpush.msra.mxu0 %v5951
        %6218 = vmatpush.msra.mxu0 %v5948
        %6219 = vmatpush.msra.mxu0 %v5945
        %6220 = vmatpush.msra.mxu0 %v5942
        %6221 = vmatpush.msra.mxu0 %v5939
        %6222 = vmatpush.msra.mxu0 %v5936
        %6223 = vmatpush.msra.mxu0 %v5933
        %6224 = vmatpush.msra.mxu0 %v5930
        %6225 = vmatpush.msra.mxu0 %v5927
        %6226 = vmatpush.msra.mxu0 %v5924
        %6227 = vmatpush.msra.mxu0 %v5921
        %6228 = vmatpush.msra.mxu0 %v5918
        %6229 = vmatpush.msra.mxu0 %v5915
        %6230 = vmatmul.f32.gmra.mxu0 %v5810
        %v6231 = vpop.f32.mrf.mxu0
        %v6232 = vadd.f32 %v6209, %v6231
        %6233 = vmatmul.f32.gmra.mxu0 %v5815
        %v6234 = vpop.f32.mrf.mxu0
        %v6235 = vadd.f32 %v6212, %v6234
        %6236 = vdwg.mxu0
        %6237 = vmatpush.msra.mxu0 %v6008
        %6238 = vmatpush.msra.mxu0 %v6005
        %6239 = vmatpush.msra.mxu0 %v6002
        %6240 = vmatpush.msra.mxu0 %v5999
        %6241 = vmatpush.msra.mxu0 %v5996
        %6242 = vmatpush.msra.mxu0 %v5993
        %6243 = vmatpush.msra.mxu0 %v5990
        %6244 = vmatpush.msra.mxu0 %v5987
        %6245 = vmatpush.msra.mxu0 %v5984
        %6246 = vmatpush.msra.mxu0 %v5981
        %6247 = vmatpush.msra.mxu0 %v5978
        %6248 = vmatpush.msra.mxu0 %v5975
        %6249 = vmatpush.msra.mxu0 %v5972
        %6250 = vmatpush.msra.mxu0 %v5969
        %6251 = vmatpush.msra.mxu0 %v5966
        %6252 = vmatpush.msra.mxu0 %v5963
        %6253 = vmatmul.f32.gmra.mxu0 %v5811
        %v6254 = vpop.f32.mrf.mxu0
        %v6255 = vadd.f32 %v6232, %v6254
        %6256 = vmatmul.f32.gmra.mxu0 %v5816
        %v6257 = vpop.f32.mrf.mxu0
        %v6258 = vadd.f32 %v6235, %v6257
        %6259 = vdwg.mxu0
        %6260 = vmatpush.msra.mxu0 0.0
        %6261 = vmatpush.msra.mxu0 0.0
        %6262 = vmatpush.msra.mxu0 0.0
        %6263 = vmatpush.msra.mxu0 0.0
        %6264 = vmatpush.msra.mxu0 0.0
        %6265 = vmatpush.msra.mxu0 0.0
        %6266 = vmatpush.msra.mxu0 0.0
        %6267 = vmatpush.msra.mxu0 %v6048
        %6268 = vmatpush.msra.mxu0 %v6032
        %6269 = vmatpush.msra.mxu0 %v6029
        %6270 = vmatpush.msra.mxu0 %v6026
        %6271 = vmatpush.msra.mxu0 %v6023
        %6272 = vmatpush.msra.mxu0 %v6020
        %6273 = vmatpush.msra.mxu0 %v6017
        %6274 = vmatpush.msra.mxu0 %v6014
        %6275 = vmatpush.msra.mxu0 %v6011
        %6276 = vmatmul.f32.gmra.mxu0 %v6038
        %v6277 = vpop.f32.mrf.mxu0
        %v6278 = vadd.f32 %v6255, %v6277
        %6279 = vmatmul.f32.gmra.mxu0 %v6041
        %v6280 = vpop.f32.mrf.mxu0
        %v6281 = vadd.f32 %v6258, %v6280
        %6282 = vdwg.mxu0
        %6283 = vmatpush.msra.mxu0 %v5865
        %6284 = vmatpush.msra.mxu0 %v5862
        %6285 = vmatpush.msra.mxu0 %v5859
        %6286 = vmatpush.msra.mxu0 %v5856
        %6287 = vmatpush.msra.mxu0 %v5853
        %6288 = vmatpush.msra.mxu0 %v5850
        %6289 = vmatpush.msra.mxu0 %v5847
        %6290 = vmatpush.msra.mxu0 %v5844
        %6291 = vmatpush.msra.mxu0 %v5841
        %6292 = vmatpush.msra.mxu0 %v5838
        %6293 = vmatpush.msra.mxu0 %v5835
        %6294 = vmatpush.msra.mxu0 %v5832
        %6295 = vmatpush.msra.mxu0 %v5829
        %6296 = vmatpush.msra.mxu0 %v5826
        %6297 = vmatpush.msra.mxu0 %v5823
        %6298 = vmatpush.msra.mxu0 %v5820
        %6299 = vmatmul.f32.gmra.mxu0 %v5808
        %v6300 = vpop.f32.mrf.mxu0
        %v6301 = vadd.f32 0.0, %v6300
        %6302 = vmatmul.f32.gmra.mxu0 %v5813
        %v6303 = vpop.f32.mrf.mxu0
        %v6304 = vadd.f32 0.0, %v6303
        %6305 = vdwg.mxu0
        %6306 = vmatpush.msra.mxu0 %v5913
        %6307 = vmatpush.msra.mxu0 %v5910
        %6308 = vmatpush.msra.mxu0 %v5907
        %6309 = vmatpush.msra.mxu0 %v5904
        %6310 = vmatpush.msra.mxu0 %v5901
        %6311 = vmatpush.msra.mxu0 %v5898
        %6312 = vmatpush.msra.mxu0 %v5895
        %6313 = vmatpush.msra.mxu0 %v5892
        %6314 = vmatpush.msra.mxu0 %v5889
        %6315 = vmatpush.msra.mxu0 %v5886
        %6316 = vmatpush.msra.mxu0 %v5883
        %6317 = vmatpush.msra.mxu0 %v5880
        %6318 = vmatpush.msra.mxu0 %v5877
        %6319 = vmatpush.msra.mxu0 %v5874
        %6320 = vmatpush.msra.mxu0 %v5871
        %6321 = vmatpush.msra.mxu0 %v5868
        %6322 = vmatmul.f32.gmra.mxu0 %v5809
        %v6323 = vpop.f32.mrf.mxu0
        %v6324 = vadd.f32 %v6301, %v6323
        %6325 = vmatmul.f32.gmra.mxu0 %v5814
        %v6326 = vpop.f32.mrf.mxu0
        %v6327 = vadd.f32 %v6304, %v6326
        %6328 = vdwg.mxu0
        %6329 = vmatpush.msra.mxu0 %v5961
        %6330 = vmatpush.msra.mxu0 %v5958
        %6331 = vmatpush.msra.mxu0 %v5955
        %6332 = vmatpush.msra.mxu0 %v5952
        %6333 = vmatpush.msra.mxu0 %v5949
        %6334 = vmatpush.msra.mxu0 %v5946
        %6335 = vmatpush.msra.mxu0 %v5943
        %6336 = vmatpush.msra.mxu0 %v5940
        %6337 = vmatpush.msra.mxu0 %v5937
        %6338 = vmatpush.msra.mxu0 %v5934
        %6339 = vmatpush.msra.mxu0 %v5931
        %6340 = vmatpush.msra.mxu0 %v5928
        %6341 = vmatpush.msra.mxu0 %v5925
        %6342 = vmatpush.msra.mxu0 %v5922
        %6343 = vmatpush.msra.mxu0 %v5919
        %6344 = vmatpush.msra.mxu0 %v5916
        %6345 = vmatmul.f32.gmra.mxu0 %v5810
        %v6346 = vpop.f32.mrf.mxu0
        %v6347 = vadd.f32 %v6324, %v6346
        %6348 = vmatmul.f32.gmra.mxu0 %v5815
        %v6349 = vpop.f32.mrf.mxu0
        %v6350 = vadd.f32 %v6327, %v6349
        %6351 = vdwg.mxu0
        %6352 = vmatpush.msra.mxu0 %v6009
        %6353 = vmatpush.msra.mxu0 %v6006
        %6354 = vmatpush.msra.mxu0 %v6003
        %6355 = vmatpush.msra.mxu0 %v6000
        %6356 = vmatpush.msra.mxu0 %v5997
        %6357 = vmatpush.msra.mxu0 %v5994
        %6358 = vmatpush.msra.mxu0 %v5991
        %6359 = vmatpush.msra.mxu0 %v5988
        %6360 = vmatpush.msra.mxu0 %v5985
        %6361 = vmatpush.msra.mxu0 %v5982
        %6362 = vmatpush.msra.mxu0 %v5979
        %6363 = vmatpush.msra.mxu0 %v5976
        %6364 = vmatpush.msra.mxu0 %v5973
        %6365 = vmatpush.msra.mxu0 %v5970
        %6366 = vmatpush.msra.mxu0 %v5967
        %6367 = vmatpush.msra.mxu0 %v5964
        %6368 = vmatmul.f32.gmra.mxu0 %v5811
        %v6369 = vpop.f32.mrf.mxu0
        %v6370 = vadd.f32 %v6347, %v6369
        %6371 = vmatmul.f32.gmra.mxu0 %v5816
        %v6372 = vpop.f32.mrf.mxu0
        %v6373 = vadd.f32 %v6350, %v6372
        %6374 = vdwg.mxu0
        %6375 = vmatpush.msra.mxu0 0.0
        %6376 = vmatpush.msra.mxu0 0.0
        %6377 = vmatpush.msra.mxu0 0.0
        %6378 = vmatpush.msra.mxu0 0.0
        %6379 = vmatpush.msra.mxu0 0.0
        %6380 = vmatpush.msra.mxu0 0.0
        %6381 = vmatpush.msra.mxu0 0.0
        %6382 = vmatpush.msra.mxu0 %v6051
        %6383 = vmatpush.msra.mxu0 %v6033
        %6384 = vmatpush.msra.mxu0 %v6030
        %6385 = vmatpush.msra.mxu0 %v6027
        %6386 = vmatpush.msra.mxu0 %v6024
        %6387 = vmatpush.msra.mxu0 %v6021
        %6388 = vmatpush.msra.mxu0 %v6018
        %6389 = vmatpush.msra.mxu0 %v6015
        %6390 = vmatpush.msra.mxu0 %v6012
        %6391 = vmatmul.f32.gmra.mxu0 %v6038
        %v6392 = vpop.f32.mrf.mxu0
        %v6393 = vadd.f32 %v6370, %v6392
        %6394 = vmatmul.f32.gmra.mxu0 %v6041
        %v6395 = vpop.f32.mrf.mxu0
        %v6396 = vadd.f32 %v6373, %v6395
        %6397 = vdwg.mxu0
        %v6398 = vld [vmem:[%s4] sm:$0xff]
        %v6399 = vld [vmem:[%s4 + $0x8] sm:$0xff]
        %6401 = vset.pattern.permute.xlu0 0
        %6402 = vperm.xlu0 %6401, %v6398
        %v6403 = vpop.permute.xlu0 %6402
        %6406 = vset.pattern.permute.xlu0 0
        %6407 = vperm.xlu0 %6406, %v6399
        %v6408 = vpop.permute.xlu0 %6407
        %v6410 = vmul.f32 %v6403, %v6163
        %v6411 = vmul.f32 %v6403, %v6278
        %v6412 = vmul.f32 %v6408, %v6166
        %v6413 = vmul.f32 %v6408, %v6281
        %6414 = vset.pattern.permute.xlu0 1
        %6415 = vperm.xlu0 %6414, %v6398
        %v6416 = vpop.permute.xlu0 %6415
        %6418 = vset.pattern.permute.xlu0 1
        %6419 = vperm.xlu0 %6418, %v6399
        %v6420 = vpop.permute.xlu0 %6419
        %v6422 = vmul.f32 %v6416, %v6163
        %v6423 = vmul.f32 %v6416, %v6278
        %v6424 = vmul.f32 %v6420, %v6166
        %v6425 = vmul.f32 %v6420, %v6281
        %6430 = vrot.lane.b32.xlu0 %v6422, 127
        %v6431 = vpop.permute.xlu0 %6430
        %6432 = vrot.lane.b32.xlu0 %v6423, 127
        %v6433 = vpop.permute.xlu0 %6432
        %6434 = vrot.lane.b32.xlu0 %v6424, 127
        %v6435 = vpop.permute.xlu0 %6434
        %6436 = vrot.lane.b32.xlu0 %v6425, 127
        %v6437 = vpop.permute.xlu0 %6436
        %v6438 = vsel %vm859, %v6431, %v6433
        %v6439 = vsel %vm859, %v6435, %v6437
        %v6444 = vadd.f32 %v6410, %v6438
        %v6445 = vadd.f32 %v6411, %v6433
        %v6446 = vadd.f32 %v6412, %v6439
        %v6447 = vadd.f32 %v6413, %v6437
        %6448 = vset.pattern.permute.xlu0 2
        %6449 = vperm.xlu0 %6448, %v6398
        %v6450 = vpop.permute.xlu0 %6449
        %6452 = vset.pattern.permute.xlu0 2
        %6453 = vperm.xlu0 %6452, %v6399
        %v6454 = vpop.permute.xlu0 %6453
        %v6456 = vmul.f32 %v6450, %v6163
        %v6457 = vmul.f32 %v6450, %v6278
        %v6458 = vmul.f32 %v6454, %v6166
        %v6459 = vmul.f32 %v6454, %v6281
        %6464 = vrot.lane.b32.xlu0 %v6456, 126
        %v6465 = vpop.permute.xlu0 %6464
        %6466 = vrot.lane.b32.xlu0 %v6457, 126
        %v6467 = vpop.permute.xlu0 %6466
        %6468 = vrot.lane.b32.xlu0 %v6458, 126
        %v6469 = vpop.permute.xlu0 %6468
        %6470 = vrot.lane.b32.xlu0 %v6459, 126
        %v6471 = vpop.permute.xlu0 %6470
        %v6472 = vsel %vm936, %v6465, %v6467
        %v6473 = vsel %vm936, %v6469, %v6471
        %v6478 = vadd.f32 %v6444, %v6472
        %v6479 = vadd.f32 %v6445, %v6467
        %v6480 = vadd.f32 %v6446, %v6473
        %v6481 = vadd.f32 %v6447, %v6471
        %6482 = vset.pattern.permute.xlu0 3
        %6483 = vperm.xlu0 %6482, %v6398
        %v6484 = vpop.permute.xlu0 %6483
        %6486 = vset.pattern.permute.xlu0 3
        %6487 = vperm.xlu0 %6486, %v6399
        %v6488 = vpop.permute.xlu0 %6487
        %v6490 = vmul.f32 %v6484, %v6163
        %v6491 = vmul.f32 %v6484, %v6278
        %v6492 = vmul.f32 %v6488, %v6166
        %v6493 = vmul.f32 %v6488, %v6281
        %6498 = vrot.lane.b32.xlu0 %v6490, 125
        %v6499 = vpop.permute.xlu0 %6498
        %6500 = vrot.lane.b32.xlu0 %v6491, 125
        %v6501 = vpop.permute.xlu0 %6500
        %6502 = vrot.lane.b32.xlu0 %v6492, 125
        %v6503 = vpop.permute.xlu0 %6502
        %6504 = vrot.lane.b32.xlu0 %v6493, 125
        %v6505 = vpop.permute.xlu0 %6504
        %v6506 = vsel %vm1013, %v6499, %v6501
        %v6507 = vsel %vm1013, %v6503, %v6505
        %v6512 = vadd.f32 %v6478, %v6506
        %v6513 = vadd.f32 %v6479, %v6501
        %v6514 = vadd.f32 %v6480, %v6507
        %v6515 = vadd.f32 %v6481, %v6505
        %6516 = vset.pattern.permute.xlu0 4
        %6517 = vperm.xlu0 %6516, %v6398
        %v6518 = vpop.permute.xlu0 %6517
        %6520 = vset.pattern.permute.xlu0 4
        %6521 = vperm.xlu0 %6520, %v6399
        %v6522 = vpop.permute.xlu0 %6521
        %v6524 = vmul.f32 %v6518, %v6163
        %v6525 = vmul.f32 %v6518, %v6278
        %v6526 = vmul.f32 %v6522, %v6166
        %v6527 = vmul.f32 %v6522, %v6281
        %6532 = vrot.lane.b32.xlu0 %v6524, 124
        %v6533 = vpop.permute.xlu0 %6532
        %6534 = vrot.lane.b32.xlu0 %v6525, 124
        %v6535 = vpop.permute.xlu0 %6534
        %6536 = vrot.lane.b32.xlu0 %v6526, 124
        %v6537 = vpop.permute.xlu0 %6536
        %6538 = vrot.lane.b32.xlu0 %v6527, 124
        %v6539 = vpop.permute.xlu0 %6538
        %v6540 = vsel %vm1090, %v6533, %v6535
        %v6541 = vsel %vm1090, %v6537, %v6539
        %v6546 = vadd.f32 %v6512, %v6540
        %v6547 = vadd.f32 %v6513, %v6535
        %v6548 = vadd.f32 %v6514, %v6541
        %v6549 = vadd.f32 %v6515, %v6539
        %6550 = vset.pattern.permute.xlu0 5
        %6551 = vperm.xlu0 %6550, %v6398
        %v6552 = vpop.permute.xlu0 %6551
        %6554 = vset.pattern.permute.xlu0 5
        %6555 = vperm.xlu0 %6554, %v6399
        %v6556 = vpop.permute.xlu0 %6555
        %v6558 = vmul.f32 %v6552, %v6163
        %v6559 = vmul.f32 %v6552, %v6278
        %v6560 = vmul.f32 %v6556, %v6166
        %v6561 = vmul.f32 %v6556, %v6281
        %6566 = vrot.lane.b32.xlu0 %v6558, 123
        %v6567 = vpop.permute.xlu0 %6566
        %6568 = vrot.lane.b32.xlu0 %v6559, 123
        %v6569 = vpop.permute.xlu0 %6568
        %6570 = vrot.lane.b32.xlu0 %v6560, 123
        %v6571 = vpop.permute.xlu0 %6570
        %6572 = vrot.lane.b32.xlu0 %v6561, 123
        %v6573 = vpop.permute.xlu0 %6572
        %v6574 = vsel %vm1167, %v6567, %v6569
        %v6575 = vsel %vm1167, %v6571, %v6573
        %v6580 = vadd.f32 %v6546, %v6574
        %v6581 = vadd.f32 %v6547, %v6569
        %v6582 = vadd.f32 %v6548, %v6575
        %v6583 = vadd.f32 %v6549, %v6573
        %6584 = vset.pattern.permute.xlu0 6
        %6585 = vperm.xlu0 %6584, %v6398
        %v6586 = vpop.permute.xlu0 %6585
        %6588 = vset.pattern.permute.xlu0 6
        %6589 = vperm.xlu0 %6588, %v6399
        %v6590 = vpop.permute.xlu0 %6589
        %v6592 = vmul.f32 %v6586, %v6163
        %v6593 = vmul.f32 %v6586, %v6278
        %v6594 = vmul.f32 %v6590, %v6166
        %v6595 = vmul.f32 %v6590, %v6281
        %6600 = vrot.lane.b32.xlu0 %v6592, 122
        %v6601 = vpop.permute.xlu0 %6600
        %6602 = vrot.lane.b32.xlu0 %v6593, 122
        %v6603 = vpop.permute.xlu0 %6602
        %6604 = vrot.lane.b32.xlu0 %v6594, 122
        %v6605 = vpop.permute.xlu0 %6604
        %6606 = vrot.lane.b32.xlu0 %v6595, 122
        %v6607 = vpop.permute.xlu0 %6606
        %v6608 = vsel %vm1244, %v6601, %v6603
        %v6609 = vsel %vm1244, %v6605, %v6607
        %v6614 = vadd.f32 %v6580, %v6608
        %v6615 = vadd.f32 %v6581, %v6603
        %v6616 = vadd.f32 %v6582, %v6609
        %v6617 = vadd.f32 %v6583, %v6607
        %6618 = vset.pattern.permute.xlu0 7
        %6619 = vperm.xlu0 %6618, %v6398
        %v6620 = vpop.permute.xlu0 %6619
        %6622 = vset.pattern.permute.xlu0 7
        %6623 = vperm.xlu0 %6622, %v6399
        %v6624 = vpop.permute.xlu0 %6623
        %v6626 = vmul.f32 %v6620, %v6163
        %v6627 = vmul.f32 %v6620, %v6278
        %v6628 = vmul.f32 %v6624, %v6166
        %v6629 = vmul.f32 %v6624, %v6281
        %6634 = vrot.lane.b32.xlu0 %v6626, 121
        %v6635 = vpop.permute.xlu0 %6634
        %6636 = vrot.lane.b32.xlu0 %v6627, 121
        %v6637 = vpop.permute.xlu0 %6636
        %6638 = vrot.lane.b32.xlu0 %v6628, 121
        %v6639 = vpop.permute.xlu0 %6638
        %6640 = vrot.lane.b32.xlu0 %v6629, 121
        %v6641 = vpop.permute.xlu0 %6640
        %v6642 = vsel %vm1321, %v6635, %v6637
        %v6643 = vsel %vm1321, %v6639, %v6641
        %v6648 = vadd.f32 %v6614, %v6642
        %v6649 = vadd.f32 %v6615, %v6637
        %v6650 = vadd.f32 %v6616, %v6643
        %v6651 = vadd.f32 %v6617, %v6641
        %6652 = vset.pattern.permute.xlu0 8
        %6653 = vperm.xlu0 %6652, %v6398
        %v6654 = vpop.permute.xlu0 %6653
        %6656 = vset.pattern.permute.xlu0 8
        %6657 = vperm.xlu0 %6656, %v6399
        %v6658 = vpop.permute.xlu0 %6657
        %v6660 = vmul.f32 %v6654, %v6163
        %v6661 = vmul.f32 %v6654, %v6278
        %v6662 = vmul.f32 %v6658, %v6166
        %v6663 = vmul.f32 %v6658, %v6281
        %6668 = vrot.lane.b32.xlu0 %v6660, 120
        %v6669 = vpop.permute.xlu0 %6668
        %6670 = vrot.lane.b32.xlu0 %v6661, 120
        %v6671 = vpop.permute.xlu0 %6670
        %6672 = vrot.lane.b32.xlu0 %v6662, 120
        %v6673 = vpop.permute.xlu0 %6672
        %6674 = vrot.lane.b32.xlu0 %v6663, 120
        %v6675 = vpop.permute.xlu0 %6674
        %v6676 = vsel %vm1398, %v6669, %v6671
        %v6677 = vsel %vm1398, %v6673, %v6675
        %v6682 = vadd.f32 %v6648, %v6676
        %v6683 = vadd.f32 %v6649, %v6671
        %v6684 = vadd.f32 %v6650, %v6677
        %v6685 = vadd.f32 %v6651, %v6675
        %6686 = vset.pattern.permute.xlu0 9
        %6687 = vperm.xlu0 %6686, %v6398
        %v6688 = vpop.permute.xlu0 %6687
        %6690 = vset.pattern.permute.xlu0 9
        %6691 = vperm.xlu0 %6690, %v6399
        %v6692 = vpop.permute.xlu0 %6691
        %v6694 = vmul.f32 %v6688, %v6163
        %v6695 = vmul.f32 %v6688, %v6278
        %v6696 = vmul.f32 %v6692, %v6166
        %v6697 = vmul.f32 %v6692, %v6281
        %6702 = vrot.lane.b32.xlu0 %v6694, 119
        %v6703 = vpop.permute.xlu0 %6702
        %6704 = vrot.lane.b32.xlu0 %v6695, 119
        %v6705 = vpop.permute.xlu0 %6704
        %6706 = vrot.lane.b32.xlu0 %v6696, 119
        %v6707 = vpop.permute.xlu0 %6706
        %6708 = vrot.lane.b32.xlu0 %v6697, 119
        %v6709 = vpop.permute.xlu0 %6708
        %v6710 = vsel %vm1475, %v6703, %v6705
        %v6711 = vsel %vm1475, %v6707, %v6709
        %v6716 = vadd.f32 %v6682, %v6710
        %v6717 = vadd.f32 %v6683, %v6705
        %v6718 = vadd.f32 %v6684, %v6711
        %v6719 = vadd.f32 %v6685, %v6709
        %6720 = vset.pattern.permute.xlu0 10
        %6721 = vperm.xlu0 %6720, %v6398
        %v6722 = vpop.permute.xlu0 %6721
        %6724 = vset.pattern.permute.xlu0 10
        %6725 = vperm.xlu0 %6724, %v6399
        %v6726 = vpop.permute.xlu0 %6725
        %v6728 = vmul.f32 %v6722, %v6163
        %v6729 = vmul.f32 %v6722, %v6278
        %v6730 = vmul.f32 %v6726, %v6166
        %v6731 = vmul.f32 %v6726, %v6281
        %6736 = vrot.lane.b32.xlu0 %v6728, 118
        %v6737 = vpop.permute.xlu0 %6736
        %6738 = vrot.lane.b32.xlu0 %v6729, 118
        %v6739 = vpop.permute.xlu0 %6738
        %6740 = vrot.lane.b32.xlu0 %v6730, 118
        %v6741 = vpop.permute.xlu0 %6740
        %6742 = vrot.lane.b32.xlu0 %v6731, 118
        %v6743 = vpop.permute.xlu0 %6742
        %v6744 = vsel %vm1552, %v6737, %v6739
        %v6745 = vsel %vm1552, %v6741, %v6743
        %v6750 = vadd.f32 %v6716, %v6744
        %v6751 = vadd.f32 %v6717, %v6739
        %v6752 = vadd.f32 %v6718, %v6745
        %v6753 = vadd.f32 %v6719, %v6743
        %6754 = vset.pattern.permute.xlu0 11
        %6755 = vperm.xlu0 %6754, %v6398
        %v6756 = vpop.permute.xlu0 %6755
        %6758 = vset.pattern.permute.xlu0 11
        %6759 = vperm.xlu0 %6758, %v6399
        %v6760 = vpop.permute.xlu0 %6759
        %v6762 = vmul.f32 %v6756, %v6163
        %v6763 = vmul.f32 %v6756, %v6278
        %v6764 = vmul.f32 %v6760, %v6166
        %v6765 = vmul.f32 %v6760, %v6281
        %6770 = vrot.lane.b32.xlu0 %v6762, 117
        %v6771 = vpop.permute.xlu0 %6770
        %6772 = vrot.lane.b32.xlu0 %v6763, 117
        %v6773 = vpop.permute.xlu0 %6772
        %6774 = vrot.lane.b32.xlu0 %v6764, 117
        %v6775 = vpop.permute.xlu0 %6774
        %6776 = vrot.lane.b32.xlu0 %v6765, 117
        %v6777 = vpop.permute.xlu0 %6776
        %v6778 = vsel %vm1629, %v6771, %v6773
        %v6779 = vsel %vm1629, %v6775, %v6777
        %v6784 = vadd.f32 %v6750, %v6778
        %v6785 = vadd.f32 %v6751, %v6773
        %v6786 = vadd.f32 %v6752, %v6779
        %v6787 = vadd.f32 %v6753, %v6777
        %6788 = vset.pattern.permute.xlu0 12
        %6789 = vperm.xlu0 %6788, %v6398
        %v6790 = vpop.permute.xlu0 %6789
        %6792 = vset.pattern.permute.xlu0 12
        %6793 = vperm.xlu0 %6792, %v6399
        %v6794 = vpop.permute.xlu0 %6793
        %v6796 = vmul.f32 %v6790, %v6163
        %v6797 = vmul.f32 %v6790, %v6278
        %v6798 = vmul.f32 %v6794, %v6166
        %v6799 = vmul.f32 %v6794, %v6281
        %6804 = vrot.lane.b32.xlu0 %v6796, 116
        %v6805 = vpop.permute.xlu0 %6804
        %6806 = vrot.lane.b32.xlu0 %v6797, 116
        %v6807 = vpop.permute.xlu0 %6806
        %6808 = vrot.lane.b32.xlu0 %v6798, 116
        %v6809 = vpop.permute.xlu0 %6808
        %6810 = vrot.lane.b32.xlu0 %v6799, 116
        %v6811 = vpop.permute.xlu0 %6810
        %v6812 = vsel %vm1706, %v6805, %v6807
        %v6813 = vsel %vm1706, %v6809, %v6811
        %v6818 = vadd.f32 %v6784, %v6812
        %v6819 = vadd.f32 %v6785, %v6807
        %v6820 = vadd.f32 %v6786, %v6813
        %v6821 = vadd.f32 %v6787, %v6811
        %6822 = vset.pattern.permute.xlu0 13
        %6823 = vperm.xlu0 %6822, %v6398
        %v6824 = vpop.permute.xlu0 %6823
        %6826 = vset.pattern.permute.xlu0 13
        %6827 = vperm.xlu0 %6826, %v6399
        %v6828 = vpop.permute.xlu0 %6827
        %v6830 = vmul.f32 %v6824, %v6163
        %v6831 = vmul.f32 %v6824, %v6278
        %v6832 = vmul.f32 %v6828, %v6166
        %v6833 = vmul.f32 %v6828, %v6281
        %6838 = vrot.lane.b32.xlu0 %v6830, 115
        %v6839 = vpop.permute.xlu0 %6838
        %6840 = vrot.lane.b32.xlu0 %v6831, 115
        %v6841 = vpop.permute.xlu0 %6840
        %6842 = vrot.lane.b32.xlu0 %v6832, 115
        %v6843 = vpop.permute.xlu0 %6842
        %6844 = vrot.lane.b32.xlu0 %v6833, 115
        %v6845 = vpop.permute.xlu0 %6844
        %v6846 = vsel %vm1783, %v6839, %v6841
        %v6847 = vsel %vm1783, %v6843, %v6845
        %v6852 = vadd.f32 %v6818, %v6846
        %v6853 = vadd.f32 %v6819, %v6841
        %v6854 = vadd.f32 %v6820, %v6847
        %v6855 = vadd.f32 %v6821, %v6845
        %6856 = vset.pattern.permute.xlu0 14
        %6857 = vperm.xlu0 %6856, %v6398
        %v6858 = vpop.permute.xlu0 %6857
        %6860 = vset.pattern.permute.xlu0 14
        %6861 = vperm.xlu0 %6860, %v6399
        %v6862 = vpop.permute.xlu0 %6861
        %v6864 = vmul.f32 %v6858, %v6163
        %v6865 = vmul.f32 %v6858, %v6278
        %v6866 = vmul.f32 %v6862, %v6166
        %v6867 = vmul.f32 %v6862, %v6281
        %6872 = vrot.lane.b32.xlu0 %v6864, 114
        %v6873 = vpop.permute.xlu0 %6872
        %6874 = vrot.lane.b32.xlu0 %v6865, 114
        %v6875 = vpop.permute.xlu0 %6874
        %6876 = vrot.lane.b32.xlu0 %v6866, 114
        %v6877 = vpop.permute.xlu0 %6876
        %6878 = vrot.lane.b32.xlu0 %v6867, 114
        %v6879 = vpop.permute.xlu0 %6878
        %v6880 = vsel %vm1860, %v6873, %v6875
        %v6881 = vsel %vm1860, %v6877, %v6879
        %v6886 = vadd.f32 %v6852, %v6880
        %v6887 = vadd.f32 %v6853, %v6875
        %v6888 = vadd.f32 %v6854, %v6881
        %v6889 = vadd.f32 %v6855, %v6879
        %6890 = vset.pattern.permute.xlu0 15
        %6891 = vperm.xlu0 %6890, %v6398
        %v6892 = vpop.permute.xlu0 %6891
        %6894 = vset.pattern.permute.xlu0 15
        %6895 = vperm.xlu0 %6894, %v6399
        %v6896 = vpop.permute.xlu0 %6895
        %v6898 = vmul.f32 %v6892, %v6163
        %v6899 = vmul.f32 %v6892, %v6278
        %v6900 = vmul.f32 %v6896, %v6166
        %v6901 = vmul.f32 %v6896, %v6281
        %6906 = vrot.lane.b32.xlu0 %v6898, 113
        %v6907 = vpop.permute.xlu0 %6906
        %6908 = vrot.lane.b32.xlu0 %v6899, 113
        %v6909 = vpop.permute.xlu0 %6908
        %6910 = vrot.lane.b32.xlu0 %v6900, 113
        %v6911 = vpop.permute.xlu0 %6910
        %6912 = vrot.lane.b32.xlu0 %v6901, 113
        %v6913 = vpop.permute.xlu0 %6912
        %v6914 = vsel %vm1937, %v6907, %v6909
        %v6915 = vsel %vm1937, %v6911, %v6913
        %v6920 = vadd.f32 %v6886, %v6914
        %v6921 = vadd.f32 %v6887, %v6909
        %v6922 = vadd.f32 %v6888, %v6915
        %v6923 = vadd.f32 %v6889, %v6913
        %6924 = vset.pattern.permute.xlu0 16
        %6925 = vperm.xlu0 %6924, %v6398
        %v6926 = vpop.permute.xlu0 %6925
        %6928 = vset.pattern.permute.xlu0 16
        %6929 = vperm.xlu0 %6928, %v6399
        %v6930 = vpop.permute.xlu0 %6929
        %v6932 = vmul.f32 %v6926, %v6163
        %v6933 = vmul.f32 %v6926, %v6278
        %v6934 = vmul.f32 %v6930, %v6166
        %v6935 = vmul.f32 %v6930, %v6281
        %6940 = vrot.lane.b32.xlu0 %v6932, 112
        %v6941 = vpop.permute.xlu0 %6940
        %6942 = vrot.lane.b32.xlu0 %v6933, 112
        %v6943 = vpop.permute.xlu0 %6942
        %6944 = vrot.lane.b32.xlu0 %v6934, 112
        %v6945 = vpop.permute.xlu0 %6944
        %6946 = vrot.lane.b32.xlu0 %v6935, 112
        %v6947 = vpop.permute.xlu0 %6946
        %v6948 = vsel %vm2014, %v6941, %v6943
        %v6949 = vsel %vm2014, %v6945, %v6947
        %v6954 = vadd.f32 %v6920, %v6948
        %v6955 = vadd.f32 %v6921, %v6943
        %v6956 = vadd.f32 %v6922, %v6949
        %v6957 = vadd.f32 %v6923, %v6947
        %6958 = vset.pattern.permute.xlu0 17
        %6959 = vperm.xlu0 %6958, %v6398
        %v6960 = vpop.permute.xlu0 %6959
        %6962 = vset.pattern.permute.xlu0 17
        %6963 = vperm.xlu0 %6962, %v6399
        %v6964 = vpop.permute.xlu0 %6963
        %v6966 = vmul.f32 %v6960, %v6163
        %v6967 = vmul.f32 %v6960, %v6278
        %v6968 = vmul.f32 %v6964, %v6166
        %v6969 = vmul.f32 %v6964, %v6281
        %6974 = vrot.lane.b32.xlu0 %v6966, 111
        %v6975 = vpop.permute.xlu0 %6974
        %6976 = vrot.lane.b32.xlu0 %v6967, 111
        %v6977 = vpop.permute.xlu0 %6976
        %6978 = vrot.lane.b32.xlu0 %v6968, 111
        %v6979 = vpop.permute.xlu0 %6978
        %6980 = vrot.lane.b32.xlu0 %v6969, 111
        %v6981 = vpop.permute.xlu0 %6980
        %v6982 = vsel %vm2091, %v6975, %v6977
        %v6983 = vsel %vm2091, %v6979, %v6981
        %v6988 = vadd.f32 %v6954, %v6982
        %v6989 = vadd.f32 %v6955, %v6977
        %v6990 = vadd.f32 %v6956, %v6983
        %v6991 = vadd.f32 %v6957, %v6981
        %6992 = vset.pattern.permute.xlu0 18
        %6993 = vperm.xlu0 %6992, %v6398
        %v6994 = vpop.permute.xlu0 %6993
        %6996 = vset.pattern.permute.xlu0 18
        %6997 = vperm.xlu0 %6996, %v6399
        %v6998 = vpop.permute.xlu0 %6997
        %v7000 = vmul.f32 %v6994, %v6163
        %v7001 = vmul.f32 %v6994, %v6278
        %v7002 = vmul.f32 %v6998, %v6166
        %v7003 = vmul.f32 %v6998, %v6281
        %7008 = vrot.lane.b32.xlu0 %v7000, 110
        %v7009 = vpop.permute.xlu0 %7008
        %7010 = vrot.lane.b32.xlu0 %v7001, 110
        %v7011 = vpop.permute.xlu0 %7010
        %7012 = vrot.lane.b32.xlu0 %v7002, 110
        %v7013 = vpop.permute.xlu0 %7012
        %7014 = vrot.lane.b32.xlu0 %v7003, 110
        %v7015 = vpop.permute.xlu0 %7014
        %v7016 = vsel %vm2168, %v7009, %v7011
        %v7017 = vsel %vm2168, %v7013, %v7015
        %v7022 = vadd.f32 %v6988, %v7016
        %v7023 = vadd.f32 %v6989, %v7011
        %v7024 = vadd.f32 %v6990, %v7017
        %v7025 = vadd.f32 %v6991, %v7015
        %7026 = vset.pattern.permute.xlu0 19
        %7027 = vperm.xlu0 %7026, %v6398
        %v7028 = vpop.permute.xlu0 %7027
        %7030 = vset.pattern.permute.xlu0 19
        %7031 = vperm.xlu0 %7030, %v6399
        %v7032 = vpop.permute.xlu0 %7031
        %v7034 = vmul.f32 %v7028, %v6163
        %v7035 = vmul.f32 %v7028, %v6278
        %v7036 = vmul.f32 %v7032, %v6166
        %v7037 = vmul.f32 %v7032, %v6281
        %7042 = vrot.lane.b32.xlu0 %v7034, 109
        %v7043 = vpop.permute.xlu0 %7042
        %7044 = vrot.lane.b32.xlu0 %v7035, 109
        %v7045 = vpop.permute.xlu0 %7044
        %7046 = vrot.lane.b32.xlu0 %v7036, 109
        %v7047 = vpop.permute.xlu0 %7046
        %7048 = vrot.lane.b32.xlu0 %v7037, 109
        %v7049 = vpop.permute.xlu0 %7048
        %v7050 = vsel %vm2245, %v7043, %v7045
        %v7051 = vsel %vm2245, %v7047, %v7049
        %v7056 = vadd.f32 %v7022, %v7050
        %v7057 = vadd.f32 %v7023, %v7045
        %v7058 = vadd.f32 %v7024, %v7051
        %v7059 = vadd.f32 %v7025, %v7049
        %7060 = vset.pattern.permute.xlu0 20
        %7061 = vperm.xlu0 %7060, %v6398
        %v7062 = vpop.permute.xlu0 %7061
        %7064 = vset.pattern.permute.xlu0 20
        %7065 = vperm.xlu0 %7064, %v6399
        %v7066 = vpop.permute.xlu0 %7065
        %v7068 = vmul.f32 %v7062, %v6163
        %v7069 = vmul.f32 %v7062, %v6278
        %v7070 = vmul.f32 %v7066, %v6166
        %v7071 = vmul.f32 %v7066, %v6281
        %7076 = vrot.lane.b32.xlu0 %v7068, 108
        %v7077 = vpop.permute.xlu0 %7076
        %7078 = vrot.lane.b32.xlu0 %v7069, 108
        %v7079 = vpop.permute.xlu0 %7078
        %7080 = vrot.lane.b32.xlu0 %v7070, 108
        %v7081 = vpop.permute.xlu0 %7080
        %7082 = vrot.lane.b32.xlu0 %v7071, 108
        %v7083 = vpop.permute.xlu0 %7082
        %v7084 = vsel %vm2322, %v7077, %v7079
        %v7085 = vsel %vm2322, %v7081, %v7083
        %v7090 = vadd.f32 %v7056, %v7084
        %v7091 = vadd.f32 %v7057, %v7079
        %v7092 = vadd.f32 %v7058, %v7085
        %v7093 = vadd.f32 %v7059, %v7083
        %7094 = vset.pattern.permute.xlu0 21
        %7095 = vperm.xlu0 %7094, %v6398
        %v7096 = vpop.permute.xlu0 %7095
        %7098 = vset.pattern.permute.xlu0 21
        %7099 = vperm.xlu0 %7098, %v6399
        %v7100 = vpop.permute.xlu0 %7099
        %v7102 = vmul.f32 %v7096, %v6163
        %v7103 = vmul.f32 %v7096, %v6278
        %v7104 = vmul.f32 %v7100, %v6166
        %v7105 = vmul.f32 %v7100, %v6281
        %7110 = vrot.lane.b32.xlu0 %v7102, 107
        %v7111 = vpop.permute.xlu0 %7110
        %7112 = vrot.lane.b32.xlu0 %v7103, 107
        %v7113 = vpop.permute.xlu0 %7112
        %7114 = vrot.lane.b32.xlu0 %v7104, 107
        %v7115 = vpop.permute.xlu0 %7114
        %7116 = vrot.lane.b32.xlu0 %v7105, 107
        %v7117 = vpop.permute.xlu0 %7116
        %v7118 = vsel %vm2399, %v7111, %v7113
        %v7119 = vsel %vm2399, %v7115, %v7117
        %v7124 = vadd.f32 %v7090, %v7118
        %v7125 = vadd.f32 %v7091, %v7113
        %v7126 = vadd.f32 %v7092, %v7119
        %v7127 = vadd.f32 %v7093, %v7117
        %7128 = vset.pattern.permute.xlu0 22
        %7129 = vperm.xlu0 %7128, %v6398
        %v7130 = vpop.permute.xlu0 %7129
        %7132 = vset.pattern.permute.xlu0 22
        %7133 = vperm.xlu0 %7132, %v6399
        %v7134 = vpop.permute.xlu0 %7133
        %v7136 = vmul.f32 %v7130, %v6163
        %v7137 = vmul.f32 %v7130, %v6278
        %v7138 = vmul.f32 %v7134, %v6166
        %v7139 = vmul.f32 %v7134, %v6281
        %7144 = vrot.lane.b32.xlu0 %v7136, 106
        %v7145 = vpop.permute.xlu0 %7144
        %7146 = vrot.lane.b32.xlu0 %v7137, 106
        %v7147 = vpop.permute.xlu0 %7146
        %7148 = vrot.lane.b32.xlu0 %v7138, 106
        %v7149 = vpop.permute.xlu0 %7148
        %7150 = vrot.lane.b32.xlu0 %v7139, 106
        %v7151 = vpop.permute.xlu0 %7150
        %v7152 = vsel %vm2476, %v7145, %v7147
        %v7153 = vsel %vm2476, %v7149, %v7151
        %v7158 = vadd.f32 %v7124, %v7152
        %v7159 = vadd.f32 %v7125, %v7147
        %v7160 = vadd.f32 %v7126, %v7153
        %v7161 = vadd.f32 %v7127, %v7151
        %7162 = vset.pattern.permute.xlu0 23
        %7163 = vperm.xlu0 %7162, %v6398
        %v7164 = vpop.permute.xlu0 %7163
        %7166 = vset.pattern.permute.xlu0 23
        %7167 = vperm.xlu0 %7166, %v6399
        %v7168 = vpop.permute.xlu0 %7167
        %v7170 = vmul.f32 %v7164, %v6163
        %v7171 = vmul.f32 %v7164, %v6278
        %v7172 = vmul.f32 %v7168, %v6166
        %v7173 = vmul.f32 %v7168, %v6281
        %7178 = vrot.lane.b32.xlu0 %v7170, 105
        %v7179 = vpop.permute.xlu0 %7178
        %7180 = vrot.lane.b32.xlu0 %v7171, 105
        %v7181 = vpop.permute.xlu0 %7180
        %7182 = vrot.lane.b32.xlu0 %v7172, 105
        %v7183 = vpop.permute.xlu0 %7182
        %7184 = vrot.lane.b32.xlu0 %v7173, 105
        %v7185 = vpop.permute.xlu0 %7184
        %v7186 = vsel %vm2553, %v7179, %v7181
        %v7187 = vsel %vm2553, %v7183, %v7185
        %v7192 = vadd.f32 %v7158, %v7186
        %v7193 = vadd.f32 %v7159, %v7181
        %v7194 = vadd.f32 %v7160, %v7187
        %v7195 = vadd.f32 %v7161, %v7185
        %7196 = vset.pattern.permute.xlu0 24
        %7197 = vperm.xlu0 %7196, %v6398
        %v7198 = vpop.permute.xlu0 %7197
        %7200 = vset.pattern.permute.xlu0 24
        %7201 = vperm.xlu0 %7200, %v6399
        %v7202 = vpop.permute.xlu0 %7201
        %v7204 = vmul.f32 %v7198, %v6163
        %v7205 = vmul.f32 %v7198, %v6278
        %v7206 = vmul.f32 %v7202, %v6166
        %v7207 = vmul.f32 %v7202, %v6281
        %7212 = vrot.lane.b32.xlu0 %v7204, 104
        %v7213 = vpop.permute.xlu0 %7212
        %7214 = vrot.lane.b32.xlu0 %v7205, 104
        %v7215 = vpop.permute.xlu0 %7214
        %7216 = vrot.lane.b32.xlu0 %v7206, 104
        %v7217 = vpop.permute.xlu0 %7216
        %7218 = vrot.lane.b32.xlu0 %v7207, 104
        %v7219 = vpop.permute.xlu0 %7218
        %v7220 = vsel %vm2630, %v7213, %v7215
        %v7221 = vsel %vm2630, %v7217, %v7219
        %v7226 = vadd.f32 %v7192, %v7220
        %v7227 = vadd.f32 %v7193, %v7215
        %v7228 = vadd.f32 %v7194, %v7221
        %v7229 = vadd.f32 %v7195, %v7219
        %7230 = vset.pattern.permute.xlu0 25
        %7231 = vperm.xlu0 %7230, %v6398
        %v7232 = vpop.permute.xlu0 %7231
        %7234 = vset.pattern.permute.xlu0 25
        %7235 = vperm.xlu0 %7234, %v6399
        %v7236 = vpop.permute.xlu0 %7235
        %v7238 = vmul.f32 %v7232, %v6163
        %v7239 = vmul.f32 %v7232, %v6278
        %v7240 = vmul.f32 %v7236, %v6166
        %v7241 = vmul.f32 %v7236, %v6281
        %7246 = vrot.lane.b32.xlu0 %v7238, 103
        %v7247 = vpop.permute.xlu0 %7246
        %7248 = vrot.lane.b32.xlu0 %v7239, 103
        %v7249 = vpop.permute.xlu0 %7248
        %7250 = vrot.lane.b32.xlu0 %v7240, 103
        %v7251 = vpop.permute.xlu0 %7250
        %7252 = vrot.lane.b32.xlu0 %v7241, 103
        %v7253 = vpop.permute.xlu0 %7252
        %v7254 = vsel %vm2707, %v7247, %v7249
        %v7255 = vsel %vm2707, %v7251, %v7253
        %v7260 = vadd.f32 %v7226, %v7254
        %v7261 = vadd.f32 %v7227, %v7249
        %v7262 = vadd.f32 %v7228, %v7255
        %v7263 = vadd.f32 %v7229, %v7253
        %7264 = vset.pattern.permute.xlu0 26
        %7265 = vperm.xlu0 %7264, %v6398
        %v7266 = vpop.permute.xlu0 %7265
        %7268 = vset.pattern.permute.xlu0 26
        %7269 = vperm.xlu0 %7268, %v6399
        %v7270 = vpop.permute.xlu0 %7269
        %v7272 = vmul.f32 %v7266, %v6163
        %v7273 = vmul.f32 %v7266, %v6278
        %v7274 = vmul.f32 %v7270, %v6166
        %v7275 = vmul.f32 %v7270, %v6281
        %7280 = vrot.lane.b32.xlu0 %v7272, 102
        %v7281 = vpop.permute.xlu0 %7280
        %7282 = vrot.lane.b32.xlu0 %v7273, 102
        %v7283 = vpop.permute.xlu0 %7282
        %7284 = vrot.lane.b32.xlu0 %v7274, 102
        %v7285 = vpop.permute.xlu0 %7284
        %7286 = vrot.lane.b32.xlu0 %v7275, 102
        %v7287 = vpop.permute.xlu0 %7286
        %v7288 = vsel %vm2784, %v7281, %v7283
        %v7289 = vsel %vm2784, %v7285, %v7287
        %v7294 = vadd.f32 %v7260, %v7288
        %v7295 = vadd.f32 %v7261, %v7283
        %v7296 = vadd.f32 %v7262, %v7289
        %v7297 = vadd.f32 %v7263, %v7287
        %7298 = vset.pattern.permute.xlu0 27
        %7299 = vperm.xlu0 %7298, %v6398
        %v7300 = vpop.permute.xlu0 %7299
        %7302 = vset.pattern.permute.xlu0 27
        %7303 = vperm.xlu0 %7302, %v6399
        %v7304 = vpop.permute.xlu0 %7303
        %v7306 = vmul.f32 %v7300, %v6163
        %v7307 = vmul.f32 %v7300, %v6278
        %v7308 = vmul.f32 %v7304, %v6166
        %v7309 = vmul.f32 %v7304, %v6281
        %7314 = vrot.lane.b32.xlu0 %v7306, 101
        %v7315 = vpop.permute.xlu0 %7314
        %7316 = vrot.lane.b32.xlu0 %v7307, 101
        %v7317 = vpop.permute.xlu0 %7316
        %7318 = vrot.lane.b32.xlu0 %v7308, 101
        %v7319 = vpop.permute.xlu0 %7318
        %7320 = vrot.lane.b32.xlu0 %v7309, 101
        %v7321 = vpop.permute.xlu0 %7320
        %v7322 = vsel %vm2861, %v7315, %v7317
        %v7323 = vsel %vm2861, %v7319, %v7321
        %v7328 = vadd.f32 %v7294, %v7322
        %v7329 = vadd.f32 %v7295, %v7317
        %v7330 = vadd.f32 %v7296, %v7323
        %v7331 = vadd.f32 %v7297, %v7321
        %7332 = vset.pattern.permute.xlu0 28
        %7333 = vperm.xlu0 %7332, %v6398
        %v7334 = vpop.permute.xlu0 %7333
        %7336 = vset.pattern.permute.xlu0 28
        %7337 = vperm.xlu0 %7336, %v6399
        %v7338 = vpop.permute.xlu0 %7337
        %v7340 = vmul.f32 %v7334, %v6163
        %v7341 = vmul.f32 %v7334, %v6278
        %v7342 = vmul.f32 %v7338, %v6166
        %v7343 = vmul.f32 %v7338, %v6281
        %7348 = vrot.lane.b32.xlu0 %v7340, 100
        %v7349 = vpop.permute.xlu0 %7348
        %7350 = vrot.lane.b32.xlu0 %v7341, 100
        %v7351 = vpop.permute.xlu0 %7350
        %7352 = vrot.lane.b32.xlu0 %v7342, 100
        %v7353 = vpop.permute.xlu0 %7352
        %7354 = vrot.lane.b32.xlu0 %v7343, 100
        %v7355 = vpop.permute.xlu0 %7354
        %v7356 = vsel %vm2938, %v7349, %v7351
        %v7357 = vsel %vm2938, %v7353, %v7355
        %v7362 = vadd.f32 %v7328, %v7356
        %v7363 = vadd.f32 %v7329, %v7351
        %v7364 = vadd.f32 %v7330, %v7357
        %v7365 = vadd.f32 %v7331, %v7355
        %7366 = vset.pattern.permute.xlu0 29
        %7367 = vperm.xlu0 %7366, %v6398
        %v7368 = vpop.permute.xlu0 %7367
        %7370 = vset.pattern.permute.xlu0 29
        %7371 = vperm.xlu0 %7370, %v6399
        %v7372 = vpop.permute.xlu0 %7371
        %v7374 = vmul.f32 %v7368, %v6163
        %v7375 = vmul.f32 %v7368, %v6278
        %v7376 = vmul.f32 %v7372, %v6166
        %v7377 = vmul.f32 %v7372, %v6281
        %7382 = vrot.lane.b32.xlu0 %v7374, 99
        %v7383 = vpop.permute.xlu0 %7382
        %7384 = vrot.lane.b32.xlu0 %v7375, 99
        %v7385 = vpop.permute.xlu0 %7384
        %7386 = vrot.lane.b32.xlu0 %v7376, 99
        %v7387 = vpop.permute.xlu0 %7386
        %7388 = vrot.lane.b32.xlu0 %v7377, 99
        %v7389 = vpop.permute.xlu0 %7388
        %v7390 = vsel %vm3015, %v7383, %v7385
        %v7391 = vsel %vm3015, %v7387, %v7389
        %v7396 = vadd.f32 %v7362, %v7390
        %v7397 = vadd.f32 %v7363, %v7385
        %v7398 = vadd.f32 %v7364, %v7391
        %v7399 = vadd.f32 %v7365, %v7389
        %7400 = vset.pattern.permute.xlu0 30
        %7401 = vperm.xlu0 %7400, %v6398
        %v7402 = vpop.permute.xlu0 %7401
        %7404 = vset.pattern.permute.xlu0 30
        %7405 = vperm.xlu0 %7404, %v6399
        %v7406 = vpop.permute.xlu0 %7405
        %v7408 = vmul.f32 %v7402, %v6163
        %v7409 = vmul.f32 %v7402, %v6278
        %v7410 = vmul.f32 %v7406, %v6166
        %v7411 = vmul.f32 %v7406, %v6281
        %7416 = vrot.lane.b32.xlu0 %v7408, 98
        %v7417 = vpop.permute.xlu0 %7416
        %7418 = vrot.lane.b32.xlu0 %v7409, 98
        %v7419 = vpop.permute.xlu0 %7418
        %7420 = vrot.lane.b32.xlu0 %v7410, 98
        %v7421 = vpop.permute.xlu0 %7420
        %7422 = vrot.lane.b32.xlu0 %v7411, 98
        %v7423 = vpop.permute.xlu0 %7422
        %v7424 = vsel %vm3092, %v7417, %v7419
        %v7425 = vsel %vm3092, %v7421, %v7423
        %v7430 = vadd.f32 %v7396, %v7424
        %v7431 = vadd.f32 %v7397, %v7419
        %v7432 = vadd.f32 %v7398, %v7425
        %v7433 = vadd.f32 %v7399, %v7423
        %7434 = vset.pattern.permute.xlu0 31
        %7435 = vperm.xlu0 %7434, %v6398
        %v7436 = vpop.permute.xlu0 %7435
        %7438 = vset.pattern.permute.xlu0 31
        %7439 = vperm.xlu0 %7438, %v6399
        %v7440 = vpop.permute.xlu0 %7439
        %v7442 = vmul.f32 %v7436, %v6163
        %v7443 = vmul.f32 %v7436, %v6278
        %v7444 = vmul.f32 %v7440, %v6166
        %v7445 = vmul.f32 %v7440, %v6281
        %7450 = vrot.lane.b32.xlu0 %v7442, 97
        %v7451 = vpop.permute.xlu0 %7450
        %7452 = vrot.lane.b32.xlu0 %v7443, 97
        %v7453 = vpop.permute.xlu0 %7452
        %7454 = vrot.lane.b32.xlu0 %v7444, 97
        %v7455 = vpop.permute.xlu0 %7454
        %7456 = vrot.lane.b32.xlu0 %v7445, 97
        %v7457 = vpop.permute.xlu0 %7456
        %v7458 = vsel %vm3169, %v7451, %v7453
        %v7459 = vsel %vm3169, %v7455, %v7457
        %v7464 = vadd.f32 %v7430, %v7458
        %v7465 = vadd.f32 %v7431, %v7453
        %v7466 = vadd.f32 %v7432, %v7459
        %v7467 = vadd.f32 %v7433, %v7457
        %7468 = vset.pattern.permute.xlu0 32
        %7469 = vperm.xlu0 %7468, %v6398
        %v7470 = vpop.permute.xlu0 %7469
        %7472 = vset.pattern.permute.xlu0 32
        %7473 = vperm.xlu0 %7472, %v6399
        %v7474 = vpop.permute.xlu0 %7473
        %v7476 = vmul.f32 %v7470, %v6163
        %v7477 = vmul.f32 %v7470, %v6278
        %v7478 = vmul.f32 %v7470, %v6393
        %v7479 = vmul.f32 %v7474, %v6166
        %v7480 = vmul.f32 %v7474, %v6281
        %v7481 = vmul.f32 %v7474, %v6396
        %7488 = vrot.lane.b32.xlu0 %v7476, 96
        %v7489 = vpop.permute.xlu0 %7488
        %7490 = vrot.lane.b32.xlu0 %v7477, 96
        %v7491 = vpop.permute.xlu0 %7490
        %7492 = vrot.lane.b32.xlu0 %v7478, 96
        %v7493 = vpop.permute.xlu0 %7492
        %7494 = vrot.lane.b32.xlu0 %v7479, 96
        %v7495 = vpop.permute.xlu0 %7494
        %7496 = vrot.lane.b32.xlu0 %v7480, 96
        %v7497 = vpop.permute.xlu0 %7496
        %7498 = vrot.lane.b32.xlu0 %v7481, 96
        %v7499 = vpop.permute.xlu0 %7498
        %v7500 = vsel %vm3246, %v7489, %v7491
        %v7501 = vsel %vm3246, %v7491, %v7493
        %v7502 = vsel %vm3246, %v7495, %v7497
        %v7503 = vsel %vm3246, %v7497, %v7499
        %v7508 = vadd.f32 %v7464, %v7500
        %v7509 = vadd.f32 %v7465, %v7501
        %v7510 = vadd.f32 %v7466, %v7502
        %v7511 = vadd.f32 %v7467, %v7503
        %7512 = vset.pattern.permute.xlu0 33
        %7513 = vperm.xlu0 %7512, %v6398
        %v7514 = vpop.permute.xlu0 %7513
        %7516 = vset.pattern.permute.xlu0 33
        %7517 = vperm.xlu0 %7516, %v6399
        %v7518 = vpop.permute.xlu0 %7517
        %v7520 = vmul.f32 %v7514, %v6163
        %v7521 = vmul.f32 %v7514, %v6278
        %v7522 = vmul.f32 %v7514, %v6393
        %v7523 = vmul.f32 %v7518, %v6166
        %v7524 = vmul.f32 %v7518, %v6281
        %v7525 = vmul.f32 %v7518, %v6396
        %7532 = vrot.lane.b32.xlu0 %v7520, 95
        %v7533 = vpop.permute.xlu0 %7532
        %7534 = vrot.lane.b32.xlu0 %v7521, 95
        %v7535 = vpop.permute.xlu0 %7534
        %7536 = vrot.lane.b32.xlu0 %v7522, 95
        %v7537 = vpop.permute.xlu0 %7536
        %7538 = vrot.lane.b32.xlu0 %v7523, 95
        %v7539 = vpop.permute.xlu0 %7538
        %7540 = vrot.lane.b32.xlu0 %v7524, 95
        %v7541 = vpop.permute.xlu0 %7540
        %7542 = vrot.lane.b32.xlu0 %v7525, 95
        %v7543 = vpop.permute.xlu0 %7542
        %v7544 = vsel %vm3323, %v7533, %v7535
        %v7545 = vsel %vm3323, %v7535, %v7537
        %v7546 = vsel %vm3323, %v7539, %v7541
        %v7547 = vsel %vm3323, %v7541, %v7543
        %v7552 = vadd.f32 %v7508, %v7544
        %v7553 = vadd.f32 %v7509, %v7545
        %v7554 = vadd.f32 %v7510, %v7546
        %v7555 = vadd.f32 %v7511, %v7547
        %7556 = vset.pattern.permute.xlu0 34
        %7557 = vperm.xlu0 %7556, %v6398
        %v7558 = vpop.permute.xlu0 %7557
        %7560 = vset.pattern.permute.xlu0 34
        %7561 = vperm.xlu0 %7560, %v6399
        %v7562 = vpop.permute.xlu0 %7561
        %v7564 = vmul.f32 %v7558, %v6163
        %v7565 = vmul.f32 %v7558, %v6278
        %v7566 = vmul.f32 %v7558, %v6393
        %v7567 = vmul.f32 %v7562, %v6166
        %v7568 = vmul.f32 %v7562, %v6281
        %v7569 = vmul.f32 %v7562, %v6396
        %7576 = vrot.lane.b32.xlu0 %v7564, 94
        %v7577 = vpop.permute.xlu0 %7576
        %7578 = vrot.lane.b32.xlu0 %v7565, 94
        %v7579 = vpop.permute.xlu0 %7578
        %7580 = vrot.lane.b32.xlu0 %v7566, 94
        %v7581 = vpop.permute.xlu0 %7580
        %7582 = vrot.lane.b32.xlu0 %v7567, 94
        %v7583 = vpop.permute.xlu0 %7582
        %7584 = vrot.lane.b32.xlu0 %v7568, 94
        %v7585 = vpop.permute.xlu0 %7584
        %7586 = vrot.lane.b32.xlu0 %v7569, 94
        %v7587 = vpop.permute.xlu0 %7586
        %v7588 = vsel %vm3400, %v7577, %v7579
        %v7589 = vsel %vm3400, %v7579, %v7581
        %v7590 = vsel %vm3400, %v7583, %v7585
        %v7591 = vsel %vm3400, %v7585, %v7587
        %v7596 = vadd.f32 %v7552, %v7588
        %v7597 = vadd.f32 %v7553, %v7589
        %v7598 = vadd.f32 %v7554, %v7590
        %v7599 = vadd.f32 %v7555, %v7591
        %7600 = vset.pattern.permute.xlu0 35
        %7601 = vperm.xlu0 %7600, %v6398
        %v7602 = vpop.permute.xlu0 %7601
        %7604 = vset.pattern.permute.xlu0 35
        %7605 = vperm.xlu0 %7604, %v6399
        %v7606 = vpop.permute.xlu0 %7605
        %v7608 = vmul.f32 %v7602, %v6163
        %v7609 = vmul.f32 %v7602, %v6278
        %v7610 = vmul.f32 %v7602, %v6393
        %v7611 = vmul.f32 %v7606, %v6166
        %v7612 = vmul.f32 %v7606, %v6281
        %v7613 = vmul.f32 %v7606, %v6396
        %7620 = vrot.lane.b32.xlu0 %v7608, 93
        %v7621 = vpop.permute.xlu0 %7620
        %7622 = vrot.lane.b32.xlu0 %v7609, 93
        %v7623 = vpop.permute.xlu0 %7622
        %7624 = vrot.lane.b32.xlu0 %v7610, 93
        %v7625 = vpop.permute.xlu0 %7624
        %7626 = vrot.lane.b32.xlu0 %v7611, 93
        %v7627 = vpop.permute.xlu0 %7626
        %7628 = vrot.lane.b32.xlu0 %v7612, 93
        %v7629 = vpop.permute.xlu0 %7628
        %7630 = vrot.lane.b32.xlu0 %v7613, 93
        %v7631 = vpop.permute.xlu0 %7630
        %v7632 = vsel %vm3477, %v7621, %v7623
        %v7633 = vsel %vm3477, %v7623, %v7625
        %v7634 = vsel %vm3477, %v7627, %v7629
        %v7635 = vsel %vm3477, %v7629, %v7631
        %v7640 = vadd.f32 %v7596, %v7632
        %v7641 = vadd.f32 %v7597, %v7633
        %v7642 = vadd.f32 %v7598, %v7634
        %v7643 = vadd.f32 %v7599, %v7635
        %7644 = vset.pattern.permute.xlu0 36
        %7645 = vperm.xlu0 %7644, %v6398
        %v7646 = vpop.permute.xlu0 %7645
        %7648 = vset.pattern.permute.xlu0 36
        %7649 = vperm.xlu0 %7648, %v6399
        %v7650 = vpop.permute.xlu0 %7649
        %v7652 = vmul.f32 %v7646, %v6163
        %v7653 = vmul.f32 %v7646, %v6278
        %v7654 = vmul.f32 %v7646, %v6393
        %v7655 = vmul.f32 %v7650, %v6166
        %v7656 = vmul.f32 %v7650, %v6281
        %v7657 = vmul.f32 %v7650, %v6396
        %7664 = vrot.lane.b32.xlu0 %v7652, 92
        %v7665 = vpop.permute.xlu0 %7664
        %7666 = vrot.lane.b32.xlu0 %v7653, 92
        %v7667 = vpop.permute.xlu0 %7666
        %7668 = vrot.lane.b32.xlu0 %v7654, 92
        %v7669 = vpop.permute.xlu0 %7668
        %7670 = vrot.lane.b32.xlu0 %v7655, 92
        %v7671 = vpop.permute.xlu0 %7670
        %7672 = vrot.lane.b32.xlu0 %v7656, 92
        %v7673 = vpop.permute.xlu0 %7672
        %7674 = vrot.lane.b32.xlu0 %v7657, 92
        %v7675 = vpop.permute.xlu0 %7674
        %v7676 = vsel %vm3554, %v7665, %v7667
        %v7677 = vsel %vm3554, %v7667, %v7669
        %v7678 = vsel %vm3554, %v7671, %v7673
        %v7679 = vsel %vm3554, %v7673, %v7675
        %v7684 = vadd.f32 %v7640, %v7676
        %v7685 = vadd.f32 %v7641, %v7677
        %v7686 = vadd.f32 %v7642, %v7678
        %v7687 = vadd.f32 %v7643, %v7679
        %7688 = vset.pattern.permute.xlu0 37
        %7689 = vperm.xlu0 %7688, %v6398
        %v7690 = vpop.permute.xlu0 %7689
        %7692 = vset.pattern.permute.xlu0 37
        %7693 = vperm.xlu0 %7692, %v6399
        %v7694 = vpop.permute.xlu0 %7693
        %v7696 = vmul.f32 %v7690, %v6163
        %v7697 = vmul.f32 %v7690, %v6278
        %v7698 = vmul.f32 %v7690, %v6393
        %v7699 = vmul.f32 %v7694, %v6166
        %v7700 = vmul.f32 %v7694, %v6281
        %v7701 = vmul.f32 %v7694, %v6396
        %7708 = vrot.lane.b32.xlu0 %v7696, 91
        %v7709 = vpop.permute.xlu0 %7708
        %7710 = vrot.lane.b32.xlu0 %v7697, 91
        %v7711 = vpop.permute.xlu0 %7710
        %7712 = vrot.lane.b32.xlu0 %v7698, 91
        %v7713 = vpop.permute.xlu0 %7712
        %7714 = vrot.lane.b32.xlu0 %v7699, 91
        %v7715 = vpop.permute.xlu0 %7714
        %7716 = vrot.lane.b32.xlu0 %v7700, 91
        %v7717 = vpop.permute.xlu0 %7716
        %7718 = vrot.lane.b32.xlu0 %v7701, 91
        %v7719 = vpop.permute.xlu0 %7718
        %v7720 = vsel %vm3631, %v7709, %v7711
        %v7721 = vsel %vm3631, %v7711, %v7713
        %v7722 = vsel %vm3631, %v7715, %v7717
        %v7723 = vsel %vm3631, %v7717, %v7719
        %v7728 = vadd.f32 %v7684, %v7720
        %v7729 = vadd.f32 %v7685, %v7721
        %v7730 = vadd.f32 %v7686, %v7722
        %v7731 = vadd.f32 %v7687, %v7723
        %7732 = vset.pattern.permute.xlu0 38
        %7733 = vperm.xlu0 %7732, %v6398
        %v7734 = vpop.permute.xlu0 %7733
        %7736 = vset.pattern.permute.xlu0 38
        %7737 = vperm.xlu0 %7736, %v6399
        %v7738 = vpop.permute.xlu0 %7737
        %v7740 = vmul.f32 %v7734, %v6163
        %v7741 = vmul.f32 %v7734, %v6278
        %v7742 = vmul.f32 %v7734, %v6393
        %v7743 = vmul.f32 %v7738, %v6166
        %v7744 = vmul.f32 %v7738, %v6281
        %v7745 = vmul.f32 %v7738, %v6396
        %7752 = vrot.lane.b32.xlu0 %v7740, 90
        %v7753 = vpop.permute.xlu0 %7752
        %7754 = vrot.lane.b32.xlu0 %v7741, 90
        %v7755 = vpop.permute.xlu0 %7754
        %7756 = vrot.lane.b32.xlu0 %v7742, 90
        %v7757 = vpop.permute.xlu0 %7756
        %7758 = vrot.lane.b32.xlu0 %v7743, 90
        %v7759 = vpop.permute.xlu0 %7758
        %7760 = vrot.lane.b32.xlu0 %v7744, 90
        %v7761 = vpop.permute.xlu0 %7760
        %7762 = vrot.lane.b32.xlu0 %v7745, 90
        %v7763 = vpop.permute.xlu0 %7762
        %v7764 = vsel %vm3708, %v7753, %v7755
        %v7765 = vsel %vm3708, %v7755, %v7757
        %v7766 = vsel %vm3708, %v7759, %v7761
        %v7767 = vsel %vm3708, %v7761, %v7763
        %v7772 = vadd.f32 %v7728, %v7764
        %v7773 = vadd.f32 %v7729, %v7765
        %v7774 = vadd.f32 %v7730, %v7766
        %v7775 = vadd.f32 %v7731, %v7767
        %7776 = vset.pattern.permute.xlu0 39
        %7777 = vperm.xlu0 %7776, %v6398
        %v7778 = vpop.permute.xlu0 %7777
        %7780 = vset.pattern.permute.xlu0 39
        %7781 = vperm.xlu0 %7780, %v6399
        %v7782 = vpop.permute.xlu0 %7781
        %v7784 = vmul.f32 %v7778, %v6163
        %v7785 = vmul.f32 %v7778, %v6278
        %v7786 = vmul.f32 %v7778, %v6393
        %v7787 = vmul.f32 %v7782, %v6166
        %v7788 = vmul.f32 %v7782, %v6281
        %v7789 = vmul.f32 %v7782, %v6396
        %7796 = vrot.lane.b32.xlu0 %v7784, 89
        %v7797 = vpop.permute.xlu0 %7796
        %7798 = vrot.lane.b32.xlu0 %v7785, 89
        %v7799 = vpop.permute.xlu0 %7798
        %7800 = vrot.lane.b32.xlu0 %v7786, 89
        %v7801 = vpop.permute.xlu0 %7800
        %7802 = vrot.lane.b32.xlu0 %v7787, 89
        %v7803 = vpop.permute.xlu0 %7802
        %7804 = vrot.lane.b32.xlu0 %v7788, 89
        %v7805 = vpop.permute.xlu0 %7804
        %7806 = vrot.lane.b32.xlu0 %v7789, 89
        %v7807 = vpop.permute.xlu0 %7806
        %v7808 = vsel %vm3785, %v7797, %v7799
        %v7809 = vsel %vm3785, %v7799, %v7801
        %v7810 = vsel %vm3785, %v7803, %v7805
        %v7811 = vsel %vm3785, %v7805, %v7807
        %v7816 = vadd.f32 %v7772, %v7808
        %v7817 = vadd.f32 %v7773, %v7809
        %v7818 = vadd.f32 %v7774, %v7810
        %v7819 = vadd.f32 %v7775, %v7811
        %7820 = vset.pattern.permute.xlu0 40
        %7821 = vperm.xlu0 %7820, %v6398
        %v7822 = vpop.permute.xlu0 %7821
        %7824 = vset.pattern.permute.xlu0 40
        %7825 = vperm.xlu0 %7824, %v6399
        %v7826 = vpop.permute.xlu0 %7825
        %v7828 = vmul.f32 %v7822, %v6163
        %v7829 = vmul.f32 %v7822, %v6278
        %v7830 = vmul.f32 %v7822, %v6393
        %v7831 = vmul.f32 %v7826, %v6166
        %v7832 = vmul.f32 %v7826, %v6281
        %v7833 = vmul.f32 %v7826, %v6396
        %7840 = vrot.lane.b32.xlu0 %v7828, 88
        %v7841 = vpop.permute.xlu0 %7840
        %7842 = vrot.lane.b32.xlu0 %v7829, 88
        %v7843 = vpop.permute.xlu0 %7842
        %7844 = vrot.lane.b32.xlu0 %v7830, 88
        %v7845 = vpop.permute.xlu0 %7844
        %7846 = vrot.lane.b32.xlu0 %v7831, 88
        %v7847 = vpop.permute.xlu0 %7846
        %7848 = vrot.lane.b32.xlu0 %v7832, 88
        %v7849 = vpop.permute.xlu0 %7848
        %7850 = vrot.lane.b32.xlu0 %v7833, 88
        %v7851 = vpop.permute.xlu0 %7850
        %v7852 = vsel %vm3862, %v7841, %v7843
        %v7853 = vsel %vm3862, %v7843, %v7845
        %v7854 = vsel %vm3862, %v7847, %v7849
        %v7855 = vsel %vm3862, %v7849, %v7851
        %v7860 = vadd.f32 %v7816, %v7852
        %v7861 = vadd.f32 %v7817, %v7853
        %v7862 = vadd.f32 %v7818, %v7854
        %v7863 = vadd.f32 %v7819, %v7855
        %7864 = vset.pattern.permute.xlu0 41
        %7865 = vperm.xlu0 %7864, %v6398
        %v7866 = vpop.permute.xlu0 %7865
        %7868 = vset.pattern.permute.xlu0 41
        %7869 = vperm.xlu0 %7868, %v6399
        %v7870 = vpop.permute.xlu0 %7869
        %v7872 = vmul.f32 %v7866, %v6163
        %v7873 = vmul.f32 %v7866, %v6278
        %v7874 = vmul.f32 %v7866, %v6393
        %v7875 = vmul.f32 %v7870, %v6166
        %v7876 = vmul.f32 %v7870, %v6281
        %v7877 = vmul.f32 %v7870, %v6396
        %7884 = vrot.lane.b32.xlu0 %v7872, 87
        %v7885 = vpop.permute.xlu0 %7884
        %7886 = vrot.lane.b32.xlu0 %v7873, 87
        %v7887 = vpop.permute.xlu0 %7886
        %7888 = vrot.lane.b32.xlu0 %v7874, 87
        %v7889 = vpop.permute.xlu0 %7888
        %7890 = vrot.lane.b32.xlu0 %v7875, 87
        %v7891 = vpop.permute.xlu0 %7890
        %7892 = vrot.lane.b32.xlu0 %v7876, 87
        %v7893 = vpop.permute.xlu0 %7892
        %7894 = vrot.lane.b32.xlu0 %v7877, 87
        %v7895 = vpop.permute.xlu0 %7894
        %v7896 = vsel %vm3939, %v7885, %v7887
        %v7897 = vsel %vm3939, %v7887, %v7889
        %v7898 = vsel %vm3939, %v7891, %v7893
        %v7899 = vsel %vm3939, %v7893, %v7895
        %v7904 = vadd.f32 %v7860, %v7896
        %v7905 = vadd.f32 %v7861, %v7897
        %v7906 = vadd.f32 %v7862, %v7898
        %v7907 = vadd.f32 %v7863, %v7899
        %7908 = vset.pattern.permute.xlu0 42
        %7909 = vperm.xlu0 %7908, %v6398
        %v7910 = vpop.permute.xlu0 %7909
        %7912 = vset.pattern.permute.xlu0 42
        %7913 = vperm.xlu0 %7912, %v6399
        %v7914 = vpop.permute.xlu0 %7913
        %v7916 = vmul.f32 %v7910, %v6163
        %v7917 = vmul.f32 %v7910, %v6278
        %v7918 = vmul.f32 %v7910, %v6393
        %v7919 = vmul.f32 %v7914, %v6166
        %v7920 = vmul.f32 %v7914, %v6281
        %v7921 = vmul.f32 %v7914, %v6396
        %7928 = vrot.lane.b32.xlu0 %v7916, 86
        %v7929 = vpop.permute.xlu0 %7928
        %7930 = vrot.lane.b32.xlu0 %v7917, 86
        %v7931 = vpop.permute.xlu0 %7930
        %7932 = vrot.lane.b32.xlu0 %v7918, 86
        %v7933 = vpop.permute.xlu0 %7932
        %7934 = vrot.lane.b32.xlu0 %v7919, 86
        %v7935 = vpop.permute.xlu0 %7934
        %7936 = vrot.lane.b32.xlu0 %v7920, 86
        %v7937 = vpop.permute.xlu0 %7936
        %7938 = vrot.lane.b32.xlu0 %v7921, 86
        %v7939 = vpop.permute.xlu0 %7938
        %v7940 = vsel %vm4016, %v7929, %v7931
        %v7941 = vsel %vm4016, %v7931, %v7933
        %v7942 = vsel %vm4016, %v7935, %v7937
        %v7943 = vsel %vm4016, %v7937, %v7939
        %v7948 = vadd.f32 %v7904, %v7940
        %v7949 = vadd.f32 %v7905, %v7941
        %v7950 = vadd.f32 %v7906, %v7942
        %v7951 = vadd.f32 %v7907, %v7943
        %7952 = vset.pattern.permute.xlu0 43
        %7953 = vperm.xlu0 %7952, %v6398
        %v7954 = vpop.permute.xlu0 %7953
        %7956 = vset.pattern.permute.xlu0 43
        %7957 = vperm.xlu0 %7956, %v6399
        %v7958 = vpop.permute.xlu0 %7957
        %v7960 = vmul.f32 %v7954, %v6163
        %v7961 = vmul.f32 %v7954, %v6278
        %v7962 = vmul.f32 %v7954, %v6393
        %v7963 = vmul.f32 %v7958, %v6166
        %v7964 = vmul.f32 %v7958, %v6281
        %v7965 = vmul.f32 %v7958, %v6396
        %7972 = vrot.lane.b32.xlu0 %v7960, 85
        %v7973 = vpop.permute.xlu0 %7972
        %7974 = vrot.lane.b32.xlu0 %v7961, 85
        %v7975 = vpop.permute.xlu0 %7974
        %7976 = vrot.lane.b32.xlu0 %v7962, 85
        %v7977 = vpop.permute.xlu0 %7976
        %7978 = vrot.lane.b32.xlu0 %v7963, 85
        %v7979 = vpop.permute.xlu0 %7978
        %7980 = vrot.lane.b32.xlu0 %v7964, 85
        %v7981 = vpop.permute.xlu0 %7980
        %7982 = vrot.lane.b32.xlu0 %v7965, 85
        %v7983 = vpop.permute.xlu0 %7982
        %v7984 = vsel %vm4093, %v7973, %v7975
        %v7985 = vsel %vm4093, %v7975, %v7977
        %v7986 = vsel %vm4093, %v7979, %v7981
        %v7987 = vsel %vm4093, %v7981, %v7983
        %v7992 = vadd.f32 %v7948, %v7984
        %v7993 = vadd.f32 %v7949, %v7985
        %v7994 = vadd.f32 %v7950, %v7986
        %v7995 = vadd.f32 %v7951, %v7987
        %7996 = vset.pattern.permute.xlu0 44
        %7997 = vperm.xlu0 %7996, %v6398
        %v7998 = vpop.permute.xlu0 %7997
        %8000 = vset.pattern.permute.xlu0 44
        %8001 = vperm.xlu0 %8000, %v6399
        %v8002 = vpop.permute.xlu0 %8001
        %v8004 = vmul.f32 %v7998, %v6163
        %v8005 = vmul.f32 %v7998, %v6278
        %v8006 = vmul.f32 %v7998, %v6393
        %v8007 = vmul.f32 %v8002, %v6166
        %v8008 = vmul.f32 %v8002, %v6281
        %v8009 = vmul.f32 %v8002, %v6396
        %8016 = vrot.lane.b32.xlu0 %v8004, 84
        %v8017 = vpop.permute.xlu0 %8016
        %8018 = vrot.lane.b32.xlu0 %v8005, 84
        %v8019 = vpop.permute.xlu0 %8018
        %8020 = vrot.lane.b32.xlu0 %v8006, 84
        %v8021 = vpop.permute.xlu0 %8020
        %8022 = vrot.lane.b32.xlu0 %v8007, 84
        %v8023 = vpop.permute.xlu0 %8022
        %8024 = vrot.lane.b32.xlu0 %v8008, 84
        %v8025 = vpop.permute.xlu0 %8024
        %8026 = vrot.lane.b32.xlu0 %v8009, 84
        %v8027 = vpop.permute.xlu0 %8026
        %v8028 = vsel %vm4170, %v8017, %v8019
        %v8029 = vsel %vm4170, %v8019, %v8021
        %v8030 = vsel %vm4170, %v8023, %v8025
        %v8031 = vsel %vm4170, %v8025, %v8027
        %v8036 = vadd.f32 %v7992, %v8028
        %v8037 = vadd.f32 %v7993, %v8029
        %v8038 = vadd.f32 %v7994, %v8030
        %v8039 = vadd.f32 %v7995, %v8031
        %8040 = vset.pattern.permute.xlu0 45
        %8041 = vperm.xlu0 %8040, %v6398
        %v8042 = vpop.permute.xlu0 %8041
        %8044 = vset.pattern.permute.xlu0 45
        %8045 = vperm.xlu0 %8044, %v6399
        %v8046 = vpop.permute.xlu0 %8045
        %v8048 = vmul.f32 %v8042, %v6163
        %v8049 = vmul.f32 %v8042, %v6278
        %v8050 = vmul.f32 %v8042, %v6393
        %v8051 = vmul.f32 %v8046, %v6166
        %v8052 = vmul.f32 %v8046, %v6281
        %v8053 = vmul.f32 %v8046, %v6396
        %8060 = vrot.lane.b32.xlu0 %v8048, 83
        %v8061 = vpop.permute.xlu0 %8060
        %8062 = vrot.lane.b32.xlu0 %v8049, 83
        %v8063 = vpop.permute.xlu0 %8062
        %8064 = vrot.lane.b32.xlu0 %v8050, 83
        %v8065 = vpop.permute.xlu0 %8064
        %8066 = vrot.lane.b32.xlu0 %v8051, 83
        %v8067 = vpop.permute.xlu0 %8066
        %8068 = vrot.lane.b32.xlu0 %v8052, 83
        %v8069 = vpop.permute.xlu0 %8068
        %8070 = vrot.lane.b32.xlu0 %v8053, 83
        %v8071 = vpop.permute.xlu0 %8070
        %v8072 = vsel %vm4247, %v8061, %v8063
        %v8073 = vsel %vm4247, %v8063, %v8065
        %v8074 = vsel %vm4247, %v8067, %v8069
        %v8075 = vsel %vm4247, %v8069, %v8071
        %v8080 = vadd.f32 %v8036, %v8072
        %v8081 = vadd.f32 %v8037, %v8073
        %v8082 = vadd.f32 %v8038, %v8074
        %v8083 = vadd.f32 %v8039, %v8075
        %8084 = vset.pattern.permute.xlu0 46
        %8085 = vperm.xlu0 %8084, %v6398
        %v8086 = vpop.permute.xlu0 %8085
        %8088 = vset.pattern.permute.xlu0 46
        %8089 = vperm.xlu0 %8088, %v6399
        %v8090 = vpop.permute.xlu0 %8089
        %v8092 = vmul.f32 %v8086, %v6163
        %v8093 = vmul.f32 %v8086, %v6278
        %v8094 = vmul.f32 %v8086, %v6393
        %v8095 = vmul.f32 %v8090, %v6166
        %v8096 = vmul.f32 %v8090, %v6281
        %v8097 = vmul.f32 %v8090, %v6396
        %8104 = vrot.lane.b32.xlu0 %v8092, 82
        %v8105 = vpop.permute.xlu0 %8104
        %8106 = vrot.lane.b32.xlu0 %v8093, 82
        %v8107 = vpop.permute.xlu0 %8106
        %8108 = vrot.lane.b32.xlu0 %v8094, 82
        %v8109 = vpop.permute.xlu0 %8108
        %8110 = vrot.lane.b32.xlu0 %v8095, 82
        %v8111 = vpop.permute.xlu0 %8110
        %8112 = vrot.lane.b32.xlu0 %v8096, 82
        %v8113 = vpop.permute.xlu0 %8112
        %8114 = vrot.lane.b32.xlu0 %v8097, 82
        %v8115 = vpop.permute.xlu0 %8114
        %v8116 = vsel %vm4324, %v8105, %v8107
        %v8117 = vsel %vm4324, %v8107, %v8109
        %v8118 = vsel %vm4324, %v8111, %v8113
        %v8119 = vsel %vm4324, %v8113, %v8115
        %v8124 = vadd.f32 %v8080, %v8116
        %v8125 = vadd.f32 %v8081, %v8117
        %v8126 = vadd.f32 %v8082, %v8118
        %v8127 = vadd.f32 %v8083, %v8119
        %8128 = vset.pattern.permute.xlu0 47
        %8129 = vperm.xlu0 %8128, %v6398
        %v8130 = vpop.permute.xlu0 %8129
        %8132 = vset.pattern.permute.xlu0 47
        %8133 = vperm.xlu0 %8132, %v6399
        %v8134 = vpop.permute.xlu0 %8133
        %v8136 = vmul.f32 %v8130, %v6163
        %v8137 = vmul.f32 %v8130, %v6278
        %v8138 = vmul.f32 %v8130, %v6393
        %v8139 = vmul.f32 %v8134, %v6166
        %v8140 = vmul.f32 %v8134, %v6281
        %v8141 = vmul.f32 %v8134, %v6396
        %8148 = vrot.lane.b32.xlu0 %v8136, 81
        %v8149 = vpop.permute.xlu0 %8148
        %8150 = vrot.lane.b32.xlu0 %v8137, 81
        %v8151 = vpop.permute.xlu0 %8150
        %8152 = vrot.lane.b32.xlu0 %v8138, 81
        %v8153 = vpop.permute.xlu0 %8152
        %8154 = vrot.lane.b32.xlu0 %v8139, 81
        %v8155 = vpop.permute.xlu0 %8154
        %8156 = vrot.lane.b32.xlu0 %v8140, 81
        %v8157 = vpop.permute.xlu0 %8156
        %8158 = vrot.lane.b32.xlu0 %v8141, 81
        %v8159 = vpop.permute.xlu0 %8158
        %v8160 = vsel %vm4401, %v8149, %v8151
        %v8161 = vsel %vm4401, %v8151, %v8153
        %v8162 = vsel %vm4401, %v8155, %v8157
        %v8163 = vsel %vm4401, %v8157, %v8159
        %v8168 = vadd.f32 %v8124, %v8160
        %v8169 = vadd.f32 %v8125, %v8161
        %v8170 = vadd.f32 %v8126, %v8162
        %v8171 = vadd.f32 %v8127, %v8163
        %8172 = vset.pattern.permute.xlu0 48
        %8173 = vperm.xlu0 %8172, %v6398
        %v8174 = vpop.permute.xlu0 %8173
        %8176 = vset.pattern.permute.xlu0 48
        %8177 = vperm.xlu0 %8176, %v6399
        %v8178 = vpop.permute.xlu0 %8177
        %v8180 = vmul.f32 %v8174, %v6163
        %v8181 = vmul.f32 %v8174, %v6278
        %v8182 = vmul.f32 %v8174, %v6393
        %v8183 = vmul.f32 %v8178, %v6166
        %v8184 = vmul.f32 %v8178, %v6281
        %v8185 = vmul.f32 %v8178, %v6396
        %8192 = vrot.lane.b32.xlu0 %v8180, 80
        %v8193 = vpop.permute.xlu0 %8192
        %8194 = vrot.lane.b32.xlu0 %v8181, 80
        %v8195 = vpop.permute.xlu0 %8194
        %8196 = vrot.lane.b32.xlu0 %v8182, 80
        %v8197 = vpop.permute.xlu0 %8196
        %8198 = vrot.lane.b32.xlu0 %v8183, 80
        %v8199 = vpop.permute.xlu0 %8198
        %8200 = vrot.lane.b32.xlu0 %v8184, 80
        %v8201 = vpop.permute.xlu0 %8200
        %8202 = vrot.lane.b32.xlu0 %v8185, 80
        %v8203 = vpop.permute.xlu0 %8202
        %v8204 = vsel %vm4478, %v8193, %v8195
        %v8205 = vsel %vm4478, %v8195, %v8197
        %v8206 = vsel %vm4478, %v8199, %v8201
        %v8207 = vsel %vm4478, %v8201, %v8203
        %v8212 = vadd.f32 %v8168, %v8204
        %v8213 = vadd.f32 %v8169, %v8205
        %v8214 = vadd.f32 %v8170, %v8206
        %v8215 = vadd.f32 %v8171, %v8207
        %8216 = vset.pattern.permute.xlu0 49
        %8217 = vperm.xlu0 %8216, %v6398
        %v8218 = vpop.permute.xlu0 %8217
        %8220 = vset.pattern.permute.xlu0 49
        %8221 = vperm.xlu0 %8220, %v6399
        %v8222 = vpop.permute.xlu0 %8221
        %v8224 = vmul.f32 %v8218, %v6163
        %v8225 = vmul.f32 %v8218, %v6278
        %v8226 = vmul.f32 %v8218, %v6393
        %v8227 = vmul.f32 %v8222, %v6166
        %v8228 = vmul.f32 %v8222, %v6281
        %v8229 = vmul.f32 %v8222, %v6396
        %8236 = vrot.lane.b32.xlu0 %v8224, 79
        %v8237 = vpop.permute.xlu0 %8236
        %8238 = vrot.lane.b32.xlu0 %v8225, 79
        %v8239 = vpop.permute.xlu0 %8238
        %8240 = vrot.lane.b32.xlu0 %v8226, 79
        %v8241 = vpop.permute.xlu0 %8240
        %8242 = vrot.lane.b32.xlu0 %v8227, 79
        %v8243 = vpop.permute.xlu0 %8242
        %8244 = vrot.lane.b32.xlu0 %v8228, 79
        %v8245 = vpop.permute.xlu0 %8244
        %8246 = vrot.lane.b32.xlu0 %v8229, 79
        %v8247 = vpop.permute.xlu0 %8246
        %v8248 = vsel %vm4555, %v8237, %v8239
        %v8249 = vsel %vm4555, %v8239, %v8241
        %v8250 = vsel %vm4555, %v8243, %v8245
        %v8251 = vsel %vm4555, %v8245, %v8247
        %v8256 = vadd.f32 %v8212, %v8248
        %v8257 = vadd.f32 %v8213, %v8249
        %v8258 = vadd.f32 %v8214, %v8250
        %v8259 = vadd.f32 %v8215, %v8251
        %8260 = vset.pattern.permute.xlu0 50
        %8261 = vperm.xlu0 %8260, %v6398
        %v8262 = vpop.permute.xlu0 %8261
        %8264 = vset.pattern.permute.xlu0 50
        %8265 = vperm.xlu0 %8264, %v6399
        %v8266 = vpop.permute.xlu0 %8265
        %v8268 = vmul.f32 %v8262, %v6163
        %v8269 = vmul.f32 %v8262, %v6278
        %v8270 = vmul.f32 %v8262, %v6393
        %v8271 = vmul.f32 %v8266, %v6166
        %v8272 = vmul.f32 %v8266, %v6281
        %v8273 = vmul.f32 %v8266, %v6396
        %8280 = vrot.lane.b32.xlu0 %v8268, 78
        %v8281 = vpop.permute.xlu0 %8280
        %8282 = vrot.lane.b32.xlu0 %v8269, 78
        %v8283 = vpop.permute.xlu0 %8282
        %8284 = vrot.lane.b32.xlu0 %v8270, 78
        %v8285 = vpop.permute.xlu0 %8284
        %8286 = vrot.lane.b32.xlu0 %v8271, 78
        %v8287 = vpop.permute.xlu0 %8286
        %8288 = vrot.lane.b32.xlu0 %v8272, 78
        %v8289 = vpop.permute.xlu0 %8288
        %8290 = vrot.lane.b32.xlu0 %v8273, 78
        %v8291 = vpop.permute.xlu0 %8290
        %v8292 = vsel %vm4632, %v8281, %v8283
        %v8293 = vsel %vm4632, %v8283, %v8285
        %v8294 = vsel %vm4632, %v8287, %v8289
        %v8295 = vsel %vm4632, %v8289, %v8291
        %v8300 = vadd.f32 %v8256, %v8292
        %v8301 = vadd.f32 %v8257, %v8293
        %v8302 = vadd.f32 %v8258, %v8294
        %v8303 = vadd.f32 %v8259, %v8295
        %8304 = vset.pattern.permute.xlu0 51
        %8305 = vperm.xlu0 %8304, %v6398
        %v8306 = vpop.permute.xlu0 %8305
        %8308 = vset.pattern.permute.xlu0 51
        %8309 = vperm.xlu0 %8308, %v6399
        %v8310 = vpop.permute.xlu0 %8309
        %v8312 = vmul.f32 %v8306, %v6163
        %v8313 = vmul.f32 %v8306, %v6278
        %v8314 = vmul.f32 %v8306, %v6393
        %v8315 = vmul.f32 %v8310, %v6166
        %v8316 = vmul.f32 %v8310, %v6281
        %v8317 = vmul.f32 %v8310, %v6396
        %8324 = vrot.lane.b32.xlu0 %v8312, 77
        %v8325 = vpop.permute.xlu0 %8324
        %8326 = vrot.lane.b32.xlu0 %v8313, 77
        %v8327 = vpop.permute.xlu0 %8326
        %8328 = vrot.lane.b32.xlu0 %v8314, 77
        %v8329 = vpop.permute.xlu0 %8328
        %8330 = vrot.lane.b32.xlu0 %v8315, 77
        %v8331 = vpop.permute.xlu0 %8330
        %8332 = vrot.lane.b32.xlu0 %v8316, 77
        %v8333 = vpop.permute.xlu0 %8332
        %8334 = vrot.lane.b32.xlu0 %v8317, 77
        %v8335 = vpop.permute.xlu0 %8334
        %v8336 = vsel %vm4709, %v8325, %v8327
        %v8337 = vsel %vm4709, %v8327, %v8329
        %v8338 = vsel %vm4709, %v8331, %v8333
        %v8339 = vsel %vm4709, %v8333, %v8335
        %v8344 = vadd.f32 %v8300, %v8336
        %v8345 = vadd.f32 %v8301, %v8337
        %v8346 = vadd.f32 %v8302, %v8338
        %v8347 = vadd.f32 %v8303, %v8339
        %8348 = vset.pattern.permute.xlu0 52
        %8349 = vperm.xlu0 %8348, %v6398
        %v8350 = vpop.permute.xlu0 %8349
        %8352 = vset.pattern.permute.xlu0 52
        %8353 = vperm.xlu0 %8352, %v6399
        %v8354 = vpop.permute.xlu0 %8353
        %v8356 = vmul.f32 %v8350, %v6163
        %v8357 = vmul.f32 %v8350, %v6278
        %v8358 = vmul.f32 %v8350, %v6393
        %v8359 = vmul.f32 %v8354, %v6166
        %v8360 = vmul.f32 %v8354, %v6281
        %v8361 = vmul.f32 %v8354, %v6396
        %8368 = vrot.lane.b32.xlu0 %v8356, 76
        %v8369 = vpop.permute.xlu0 %8368
        %8370 = vrot.lane.b32.xlu0 %v8357, 76
        %v8371 = vpop.permute.xlu0 %8370
        %8372 = vrot.lane.b32.xlu0 %v8358, 76
        %v8373 = vpop.permute.xlu0 %8372
        %8374 = vrot.lane.b32.xlu0 %v8359, 76
        %v8375 = vpop.permute.xlu0 %8374
        %8376 = vrot.lane.b32.xlu0 %v8360, 76
        %v8377 = vpop.permute.xlu0 %8376
        %8378 = vrot.lane.b32.xlu0 %v8361, 76
        %v8379 = vpop.permute.xlu0 %8378
        %v8380 = vsel %vm4786, %v8369, %v8371
        %v8381 = vsel %vm4786, %v8371, %v8373
        %v8382 = vsel %vm4786, %v8375, %v8377
        %v8383 = vsel %vm4786, %v8377, %v8379
        %v8388 = vadd.f32 %v8344, %v8380
        %v8389 = vadd.f32 %v8345, %v8381
        %v8390 = vadd.f32 %v8346, %v8382
        %v8391 = vadd.f32 %v8347, %v8383
        %8392 = vset.pattern.permute.xlu0 53
        %8393 = vperm.xlu0 %8392, %v6398
        %v8394 = vpop.permute.xlu0 %8393
        %8396 = vset.pattern.permute.xlu0 53
        %8397 = vperm.xlu0 %8396, %v6399
        %v8398 = vpop.permute.xlu0 %8397
        %v8400 = vmul.f32 %v8394, %v6163
        %v8401 = vmul.f32 %v8394, %v6278
        %v8402 = vmul.f32 %v8394, %v6393
        %v8403 = vmul.f32 %v8398, %v6166
        %v8404 = vmul.f32 %v8398, %v6281
        %v8405 = vmul.f32 %v8398, %v6396
        %8412 = vrot.lane.b32.xlu0 %v8400, 75
        %v8413 = vpop.permute.xlu0 %8412
        %8414 = vrot.lane.b32.xlu0 %v8401, 75
        %v8415 = vpop.permute.xlu0 %8414
        %8416 = vrot.lane.b32.xlu0 %v8402, 75
        %v8417 = vpop.permute.xlu0 %8416
        %8418 = vrot.lane.b32.xlu0 %v8403, 75
        %v8419 = vpop.permute.xlu0 %8418
        %8420 = vrot.lane.b32.xlu0 %v8404, 75
        %v8421 = vpop.permute.xlu0 %8420
        %8422 = vrot.lane.b32.xlu0 %v8405, 75
        %v8423 = vpop.permute.xlu0 %8422
        %v8424 = vsel %vm4863, %v8413, %v8415
        %v8425 = vsel %vm4863, %v8415, %v8417
        %v8426 = vsel %vm4863, %v8419, %v8421
        %v8427 = vsel %vm4863, %v8421, %v8423
        %v8432 = vadd.f32 %v8388, %v8424
        %v8433 = vadd.f32 %v8389, %v8425
        %v8434 = vadd.f32 %v8390, %v8426
        %v8435 = vadd.f32 %v8391, %v8427
        %8436 = vset.pattern.permute.xlu0 54
        %8437 = vperm.xlu0 %8436, %v6398
        %v8438 = vpop.permute.xlu0 %8437
        %8440 = vset.pattern.permute.xlu0 54
        %8441 = vperm.xlu0 %8440, %v6399
        %v8442 = vpop.permute.xlu0 %8441
        %v8444 = vmul.f32 %v8438, %v6163
        %v8445 = vmul.f32 %v8438, %v6278
        %v8446 = vmul.f32 %v8438, %v6393
        %v8447 = vmul.f32 %v8442, %v6166
        %v8448 = vmul.f32 %v8442, %v6281
        %v8449 = vmul.f32 %v8442, %v6396
        %8456 = vrot.lane.b32.xlu0 %v8444, 74
        %v8457 = vpop.permute.xlu0 %8456
        %8458 = vrot.lane.b32.xlu0 %v8445, 74
        %v8459 = vpop.permute.xlu0 %8458
        %8460 = vrot.lane.b32.xlu0 %v8446, 74
        %v8461 = vpop.permute.xlu0 %8460
        %8462 = vrot.lane.b32.xlu0 %v8447, 74
        %v8463 = vpop.permute.xlu0 %8462
        %8464 = vrot.lane.b32.xlu0 %v8448, 74
        %v8465 = vpop.permute.xlu0 %8464
        %8466 = vrot.lane.b32.xlu0 %v8449, 74
        %v8467 = vpop.permute.xlu0 %8466
        %v8468 = vsel %vm4940, %v8457, %v8459
        %v8469 = vsel %vm4940, %v8459, %v8461
        %v8470 = vsel %vm4940, %v8463, %v8465
        %v8471 = vsel %vm4940, %v8465, %v8467
        %v8476 = vadd.f32 %v8432, %v8468
        %v8477 = vadd.f32 %v8433, %v8469
        %v8478 = vadd.f32 %v8434, %v8470
        %v8479 = vadd.f32 %v8435, %v8471
        %8480 = vset.pattern.permute.xlu0 55
        %8481 = vperm.xlu0 %8480, %v6398
        %v8482 = vpop.permute.xlu0 %8481
        %8484 = vset.pattern.permute.xlu0 55
        %8485 = vperm.xlu0 %8484, %v6399
        %v8486 = vpop.permute.xlu0 %8485
        %v8488 = vmul.f32 %v8482, %v6163
        %v8489 = vmul.f32 %v8482, %v6278
        %v8490 = vmul.f32 %v8482, %v6393
        %v8491 = vmul.f32 %v8486, %v6166
        %v8492 = vmul.f32 %v8486, %v6281
        %v8493 = vmul.f32 %v8486, %v6396
        %8500 = vrot.lane.b32.xlu0 %v8488, 73
        %v8501 = vpop.permute.xlu0 %8500
        %8502 = vrot.lane.b32.xlu0 %v8489, 73
        %v8503 = vpop.permute.xlu0 %8502
        %8504 = vrot.lane.b32.xlu0 %v8490, 73
        %v8505 = vpop.permute.xlu0 %8504
        %8506 = vrot.lane.b32.xlu0 %v8491, 73
        %v8507 = vpop.permute.xlu0 %8506
        %8508 = vrot.lane.b32.xlu0 %v8492, 73
        %v8509 = vpop.permute.xlu0 %8508
        %8510 = vrot.lane.b32.xlu0 %v8493, 73
        %v8511 = vpop.permute.xlu0 %8510
        %v8512 = vsel %vm5017, %v8501, %v8503
        %v8513 = vsel %vm5017, %v8503, %v8505
        %v8514 = vsel %vm5017, %v8507, %v8509
        %v8515 = vsel %vm5017, %v8509, %v8511
        %v8520 = vadd.f32 %v8476, %v8512
        %v8521 = vadd.f32 %v8477, %v8513
        %v8522 = vadd.f32 %v8478, %v8514
        %v8523 = vadd.f32 %v8479, %v8515
        %8524 = vset.pattern.permute.xlu0 56
        %8525 = vperm.xlu0 %8524, %v6398
        %v8526 = vpop.permute.xlu0 %8525
        %8528 = vset.pattern.permute.xlu0 56
        %8529 = vperm.xlu0 %8528, %v6399
        %v8530 = vpop.permute.xlu0 %8529
        %v8532 = vmul.f32 %v8526, %v6163
        %v8533 = vmul.f32 %v8526, %v6278
        %v8534 = vmul.f32 %v8526, %v6393
        %v8535 = vmul.f32 %v8530, %v6166
        %v8536 = vmul.f32 %v8530, %v6281
        %v8537 = vmul.f32 %v8530, %v6396
        %8544 = vrot.lane.b32.xlu0 %v8532, 72
        %v8545 = vpop.permute.xlu0 %8544
        %8546 = vrot.lane.b32.xlu0 %v8533, 72
        %v8547 = vpop.permute.xlu0 %8546
        %8548 = vrot.lane.b32.xlu0 %v8534, 72
        %v8549 = vpop.permute.xlu0 %8548
        %8550 = vrot.lane.b32.xlu0 %v8535, 72
        %v8551 = vpop.permute.xlu0 %8550
        %8552 = vrot.lane.b32.xlu0 %v8536, 72
        %v8553 = vpop.permute.xlu0 %8552
        %8554 = vrot.lane.b32.xlu0 %v8537, 72
        %v8555 = vpop.permute.xlu0 %8554
        %v8556 = vsel %vm5094, %v8545, %v8547
        %v8557 = vsel %vm5094, %v8547, %v8549
        %v8558 = vsel %vm5094, %v8551, %v8553
        %v8559 = vsel %vm5094, %v8553, %v8555
        %v8564 = vadd.f32 %v8520, %v8556
        %v8565 = vadd.f32 %v8521, %v8557
        %v8566 = vadd.f32 %v8522, %v8558
        %v8567 = vadd.f32 %v8523, %v8559
        %8568 = vset.pattern.permute.xlu0 57
        %8569 = vperm.xlu0 %8568, %v6398
        %v8570 = vpop.permute.xlu0 %8569
        %8572 = vset.pattern.permute.xlu0 57
        %8573 = vperm.xlu0 %8572, %v6399
        %v8574 = vpop.permute.xlu0 %8573
        %v8576 = vmul.f32 %v8570, %v6163
        %v8577 = vmul.f32 %v8570, %v6278
        %v8578 = vmul.f32 %v8570, %v6393
        %v8579 = vmul.f32 %v8574, %v6166
        %v8580 = vmul.f32 %v8574, %v6281
        %v8581 = vmul.f32 %v8574, %v6396
        %8588 = vrot.lane.b32.xlu0 %v8576, 71
        %v8589 = vpop.permute.xlu0 %8588
        %8590 = vrot.lane.b32.xlu0 %v8577, 71
        %v8591 = vpop.permute.xlu0 %8590
        %8592 = vrot.lane.b32.xlu0 %v8578, 71
        %v8593 = vpop.permute.xlu0 %8592
        %8594 = vrot.lane.b32.xlu0 %v8579, 71
        %v8595 = vpop.permute.xlu0 %8594
        %8596 = vrot.lane.b32.xlu0 %v8580, 71
        %v8597 = vpop.permute.xlu0 %8596
        %8598 = vrot.lane.b32.xlu0 %v8581, 71
        %v8599 = vpop.permute.xlu0 %8598
        %v8600 = vsel %vm5171, %v8589, %v8591
        %v8601 = vsel %vm5171, %v8591, %v8593
        %v8602 = vsel %vm5171, %v8595, %v8597
        %v8603 = vsel %vm5171, %v8597, %v8599
        %v8608 = vadd.f32 %v8564, %v8600
        %v8609 = vadd.f32 %v8565, %v8601
        %v8610 = vadd.f32 %v8566, %v8602
        %v8611 = vadd.f32 %v8567, %v8603
        %8612 = vset.pattern.permute.xlu0 58
        %8613 = vperm.xlu0 %8612, %v6398
        %v8614 = vpop.permute.xlu0 %8613
        %8616 = vset.pattern.permute.xlu0 58
        %8617 = vperm.xlu0 %8616, %v6399
        %v8618 = vpop.permute.xlu0 %8617
        %v8620 = vmul.f32 %v8614, %v6163
        %v8621 = vmul.f32 %v8614, %v6278
        %v8622 = vmul.f32 %v8614, %v6393
        %v8623 = vmul.f32 %v8618, %v6166
        %v8624 = vmul.f32 %v8618, %v6281
        %v8625 = vmul.f32 %v8618, %v6396
        %8632 = vrot.lane.b32.xlu0 %v8620, 70
        %v8633 = vpop.permute.xlu0 %8632
        %8634 = vrot.lane.b32.xlu0 %v8621, 70
        %v8635 = vpop.permute.xlu0 %8634
        %8636 = vrot.lane.b32.xlu0 %v8622, 70
        %v8637 = vpop.permute.xlu0 %8636
        %8638 = vrot.lane.b32.xlu0 %v8623, 70
        %v8639 = vpop.permute.xlu0 %8638
        %8640 = vrot.lane.b32.xlu0 %v8624, 70
        %v8641 = vpop.permute.xlu0 %8640
        %8642 = vrot.lane.b32.xlu0 %v8625, 70
        %v8643 = vpop.permute.xlu0 %8642
        %v8644 = vsel %vm5248, %v8633, %v8635
        %v8645 = vsel %vm5248, %v8635, %v8637
        %v8646 = vsel %vm5248, %v8639, %v8641
        %v8647 = vsel %vm5248, %v8641, %v8643
        %v8652 = vadd.f32 %v8608, %v8644
        %v8653 = vadd.f32 %v8609, %v8645
        %v8654 = vadd.f32 %v8610, %v8646
        %v8655 = vadd.f32 %v8611, %v8647
        %8656 = vset.pattern.permute.xlu0 59
        %8657 = vperm.xlu0 %8656, %v6398
        %v8658 = vpop.permute.xlu0 %8657
        %8660 = vset.pattern.permute.xlu0 59
        %8661 = vperm.xlu0 %8660, %v6399
        %v8662 = vpop.permute.xlu0 %8661
        %v8664 = vmul.f32 %v8658, %v6163
        %v8665 = vmul.f32 %v8658, %v6278
        %v8666 = vmul.f32 %v8658, %v6393
        %v8667 = vmul.f32 %v8662, %v6166
        %v8668 = vmul.f32 %v8662, %v6281
        %v8669 = vmul.f32 %v8662, %v6396
        %8676 = vrot.lane.b32.xlu0 %v8664, 69
        %v8677 = vpop.permute.xlu0 %8676
        %8678 = vrot.lane.b32.xlu0 %v8665, 69
        %v8679 = vpop.permute.xlu0 %8678
        %8680 = vrot.lane.b32.xlu0 %v8666, 69
        %v8681 = vpop.permute.xlu0 %8680
        %8682 = vrot.lane.b32.xlu0 %v8667, 69
        %v8683 = vpop.permute.xlu0 %8682
        %8684 = vrot.lane.b32.xlu0 %v8668, 69
        %v8685 = vpop.permute.xlu0 %8684
        %8686 = vrot.lane.b32.xlu0 %v8669, 69
        %v8687 = vpop.permute.xlu0 %8686
        %v8688 = vsel %vm5325, %v8677, %v8679
        %v8689 = vsel %vm5325, %v8679, %v8681
        %v8690 = vsel %vm5325, %v8683, %v8685
        %v8691 = vsel %vm5325, %v8685, %v8687
        %v8696 = vadd.f32 %v8652, %v8688
        %v8697 = vadd.f32 %v8653, %v8689
        %v8698 = vadd.f32 %v8654, %v8690
        %v8699 = vadd.f32 %v8655, %v8691
        %8700 = vset.pattern.permute.xlu0 60
        %8701 = vperm.xlu0 %8700, %v6398
        %v8702 = vpop.permute.xlu0 %8701
        %8704 = vset.pattern.permute.xlu0 60
        %8705 = vperm.xlu0 %8704, %v6399
        %v8706 = vpop.permute.xlu0 %8705
        %v8708 = vmul.f32 %v8702, %v6163
        %v8709 = vmul.f32 %v8702, %v6278
        %v8710 = vmul.f32 %v8702, %v6393
        %v8711 = vmul.f32 %v8706, %v6166
        %v8712 = vmul.f32 %v8706, %v6281
        %v8713 = vmul.f32 %v8706, %v6396
        %8720 = vrot.lane.b32.xlu0 %v8708, 68
        %v8721 = vpop.permute.xlu0 %8720
        %8722 = vrot.lane.b32.xlu0 %v8709, 68
        %v8723 = vpop.permute.xlu0 %8722
        %8724 = vrot.lane.b32.xlu0 %v8710, 68
        %v8725 = vpop.permute.xlu0 %8724
        %8726 = vrot.lane.b32.xlu0 %v8711, 68
        %v8727 = vpop.permute.xlu0 %8726
        %8728 = vrot.lane.b32.xlu0 %v8712, 68
        %v8729 = vpop.permute.xlu0 %8728
        %8730 = vrot.lane.b32.xlu0 %v8713, 68
        %v8731 = vpop.permute.xlu0 %8730
        %v8732 = vsel %vm5402, %v8721, %v8723
        %v8733 = vsel %vm5402, %v8723, %v8725
        %v8734 = vsel %vm5402, %v8727, %v8729
        %v8735 = vsel %vm5402, %v8729, %v8731
        %v8740 = vadd.f32 %v8696, %v8732
        %v8741 = vadd.f32 %v8697, %v8733
        %v8742 = vadd.f32 %v8698, %v8734
        %v8743 = vadd.f32 %v8699, %v8735
        %8744 = vset.pattern.permute.xlu0 61
        %8745 = vperm.xlu0 %8744, %v6398
        %v8746 = vpop.permute.xlu0 %8745
        %8748 = vset.pattern.permute.xlu0 61
        %8749 = vperm.xlu0 %8748, %v6399
        %v8750 = vpop.permute.xlu0 %8749
        %v8752 = vmul.f32 %v8746, %v6163
        %v8753 = vmul.f32 %v8746, %v6278
        %v8754 = vmul.f32 %v8746, %v6393
        %v8755 = vmul.f32 %v8750, %v6166
        %v8756 = vmul.f32 %v8750, %v6281
        %v8757 = vmul.f32 %v8750, %v6396
        %8764 = vrot.lane.b32.xlu0 %v8752, 67
        %v8765 = vpop.permute.xlu0 %8764
        %8766 = vrot.lane.b32.xlu0 %v8753, 67
        %v8767 = vpop.permute.xlu0 %8766
        %8768 = vrot.lane.b32.xlu0 %v8754, 67
        %v8769 = vpop.permute.xlu0 %8768
        %8770 = vrot.lane.b32.xlu0 %v8755, 67
        %v8771 = vpop.permute.xlu0 %8770
        %8772 = vrot.lane.b32.xlu0 %v8756, 67
        %v8773 = vpop.permute.xlu0 %8772
        %8774 = vrot.lane.b32.xlu0 %v8757, 67
        %v8775 = vpop.permute.xlu0 %8774
        %v8776 = vsel %vm5479, %v8765, %v8767
        %v8777 = vsel %vm5479, %v8767, %v8769
        %v8778 = vsel %vm5479, %v8771, %v8773
        %v8779 = vsel %vm5479, %v8773, %v8775
        %v8784 = vadd.f32 %v8740, %v8776
        %v8785 = vadd.f32 %v8741, %v8777
        %v8786 = vadd.f32 %v8742, %v8778
        %v8787 = vadd.f32 %v8743, %v8779
        %8788 = vset.pattern.permute.xlu0 62
        %8789 = vperm.xlu0 %8788, %v6398
        %v8790 = vpop.permute.xlu0 %8789
        %8792 = vset.pattern.permute.xlu0 62
        %8793 = vperm.xlu0 %8792, %v6399
        %v8794 = vpop.permute.xlu0 %8793
        %v8796 = vmul.f32 %v8790, %v6163
        %v8797 = vmul.f32 %v8790, %v6278
        %v8798 = vmul.f32 %v8790, %v6393
        %v8799 = vmul.f32 %v8794, %v6166
        %v8800 = vmul.f32 %v8794, %v6281
        %v8801 = vmul.f32 %v8794, %v6396
        %8808 = vrot.lane.b32.xlu0 %v8796, 66
        %v8809 = vpop.permute.xlu0 %8808
        %8810 = vrot.lane.b32.xlu0 %v8797, 66
        %v8811 = vpop.permute.xlu0 %8810
        %8812 = vrot.lane.b32.xlu0 %v8798, 66
        %v8813 = vpop.permute.xlu0 %8812
        %8814 = vrot.lane.b32.xlu0 %v8799, 66
        %v8815 = vpop.permute.xlu0 %8814
        %8816 = vrot.lane.b32.xlu0 %v8800, 66
        %v8817 = vpop.permute.xlu0 %8816
        %8818 = vrot.lane.b32.xlu0 %v8801, 66
        %v8819 = vpop.permute.xlu0 %8818
        %v8820 = vsel %vm5556, %v8809, %v8811
        %v8821 = vsel %vm5556, %v8811, %v8813
        %v8822 = vsel %vm5556, %v8815, %v8817
        %v8823 = vsel %vm5556, %v8817, %v8819
        %v8828 = vadd.f32 %v8784, %v8820
        %v8829 = vadd.f32 %v8785, %v8821
        %v8830 = vadd.f32 %v8786, %v8822
        %v8831 = vadd.f32 %v8787, %v8823
        %8832 = vset.pattern.permute.xlu0 63
        %8833 = vperm.xlu0 %8832, %v6398
        %v8834 = vpop.permute.xlu0 %8833
        %8836 = vset.pattern.permute.xlu0 63
        %8837 = vperm.xlu0 %8836, %v6399
        %v8838 = vpop.permute.xlu0 %8837
        %v8840 = vmul.f32 %v8834, %v6163
        %v8841 = vmul.f32 %v8834, %v6278
        %v8842 = vmul.f32 %v8834, %v6393
        %v8843 = vmul.f32 %v8838, %v6166
        %v8844 = vmul.f32 %v8838, %v6281
        %v8845 = vmul.f32 %v8838, %v6396
        %8852 = vrot.lane.b32.xlu0 %v8840, 65
        %v8853 = vpop.permute.xlu0 %8852
        %8854 = vrot.lane.b32.xlu0 %v8841, 65
        %v8855 = vpop.permute.xlu0 %8854
        %8856 = vrot.lane.b32.xlu0 %v8842, 65
        %v8857 = vpop.permute.xlu0 %8856
        %8858 = vrot.lane.b32.xlu0 %v8843, 65
        %v8859 = vpop.permute.xlu0 %8858
        %8860 = vrot.lane.b32.xlu0 %v8844, 65
        %v8861 = vpop.permute.xlu0 %8860
        %8862 = vrot.lane.b32.xlu0 %v8845, 65
        %v8863 = vpop.permute.xlu0 %8862
        %v8864 = vsel %vm5633, %v8853, %v8855
        %v8865 = vsel %vm5633, %v8855, %v8857
        %v8866 = vsel %vm5633, %v8859, %v8861
        %v8867 = vsel %vm5633, %v8861, %v8863
        %v8872 = vadd.f32 %v8828, %v8864
        %v8873 = vadd.f32 %v8829, %v8865
        %v8874 = vadd.f32 %v8830, %v8866
        %v8875 = vadd.f32 %v8831, %v8867
        %v8876 = vld [vmem:[%s5] sm:$0xff]
        %v8877 = vld [vmem:[%s5 + $0x8] sm:$0xff]
        %8878 = vset.pattern.permute.xlu0 3
        %8879 = vperm.xlu0 %8878, %v416
        %v8880 = vpop.permute.xlu0 %8879
        %8882 = vset.pattern.permute.xlu0 3
        %8883 = vperm.xlu0 %8882, %v417
        %v8884 = vpop.permute.xlu0 %8883
        %v8887 = vsel %vm598, %v8876, 0
        %v8890 = vsel %vm598, %v8877, 0
        %8892 = vmatpush.msra.mxu0 0.0
        %8893 = vmatpush.msra.mxu0 0.0
        %8894 = vmatpush.msra.mxu0 0.0
        %8895 = vmatpush.msra.mxu0 0.0
        %8896 = vmatpush.msra.mxu0 0.0
        %8897 = vmatpush.msra.mxu0 0.0
        %8898 = vmatpush.msra.mxu0 0.0
        %8899 = vmatpush.msra.mxu0 0.0
        %8900 = vmatpush.msra.mxu0 0.0
        %8901 = vmatpush.msra.mxu0 0.0
        %8902 = vmatpush.msra.mxu0 0.0
        %8903 = vmatpush.msra.mxu0 0.0
        %8904 = vmatpush.msra.mxu0 0.0
        %8905 = vmatpush.msra.mxu0 0.0
        %8906 = vmatpush.msra.mxu0 %v8874
        %8907 = vmatpush.msra.mxu0 %v8872
        %8908 = vmatmul.f32.gmra.mxu0 %v8887
        %v8909 = vpop.f32.mrf.mxu0
        %v8910 = vadd.f32 %v8880, %v8909
        %8911 = vmatmul.f32.gmra.mxu0 %v8890
        %v8912 = vpop.f32.mrf.mxu0
        %v8913 = vadd.f32 %v8884, %v8912
        %8914 = vdwg.mxu0
        %8915 = vmatpush.msra.mxu0 0.0
        %8916 = vmatpush.msra.mxu0 0.0
        %8917 = vmatpush.msra.mxu0 0.0
        %8918 = vmatpush.msra.mxu0 0.0
        %8919 = vmatpush.msra.mxu0 0.0
        %8920 = vmatpush.msra.mxu0 0.0
        %8921 = vmatpush.msra.mxu0 0.0
        %8922 = vmatpush.msra.mxu0 0.0
        %8923 = vmatpush.msra.mxu0 0.0
        %8924 = vmatpush.msra.mxu0 0.0
        %8925 = vmatpush.msra.mxu0 0.0
        %8926 = vmatpush.msra.mxu0 0.0
        %8927 = vmatpush.msra.mxu0 0.0
        %8928 = vmatpush.msra.mxu0 0.0
        %8929 = vmatpush.msra.mxu0 %v8875
        %8930 = vmatpush.msra.mxu0 %v8873
        %8931 = vmatmul.f32.gmra.mxu0 %v8887
        %v8932 = vpop.f32.mrf.mxu0
        %v8933 = vadd.f32 %v8880, %v8932
        %8934 = vmatmul.f32.gmra.mxu0 %v8890
        %v8935 = vpop.f32.mrf.mxu0
        %v8936 = vadd.f32 %v8884, %v8935
        %8937 = vdwg.mxu0
        %8938 = vset.pattern.permute.xlu0 7
        %8939 = vperm.xlu0 %8938, %v416
        %v8940 = vpop.permute.xlu0 %8939
        %8942 = vset.pattern.permute.xlu0 7
        %8943 = vperm.xlu0 %8942, %v417
        %v8944 = vpop.permute.xlu0 %8943
        %vm8946 = vcmp.ge.f32.partialorder %v8910, %v8940
        %vm8947 = vcmp.ge.f32.partialorder %v8933, %v8940
        %vm8948 = vcmp.ge.f32.partialorder %v8913, %v8944
        %vm8949 = vcmp.ge.f32.partialorder %v8936, %v8944
        %v8950 = vsub.f32 %v8910, %v8940
        %v8951 = vsub.f32 %v8933, %v8940
        %v8952 = vsub.f32 %v8913, %v8944
        %v8953 = vsub.f32 %v8936, %v8944
        %8954 = vset.pattern.permute.xlu0 9
        %8955 = vperm.xlu0 %8954, %v416
        %v8956 = vpop.permute.xlu0 %8955
        %8958 = vset.pattern.permute.xlu0 9
        %8959 = vperm.xlu0 %8958, %v417
        %v8960 = vpop.permute.xlu0 %8959
        %v8962 = vmul.f32 %v8950, %v8956
        %v8963 = vmul.f32 %v8951, %v8956
        %v8964 = vmul.f32 %v8952, %v8960
        %v8965 = vmul.f32 %v8953, %v8960
        %v8966 = vadd.f32 %v8962, %v8940
        %v8967 = vadd.f32 %v8963, %v8940
        %v8968 = vadd.f32 %v8964, %v8944
        %v8969 = vadd.f32 %v8965, %v8944
        %8970 = vset.pattern.permute.xlu0 8
        %8971 = vperm.xlu0 %8970, %v416
        %v8972 = vpop.permute.xlu0 %8971
        %8974 = vset.pattern.permute.xlu0 8
        %8975 = vperm.xlu0 %8974, %v417
        %v8976 = vpop.permute.xlu0 %8975
        %v8978 = vsel %vm8946, %v8966, %v8972
        %v8979 = vsel %vm8947, %v8967, %v8972
        %v8980 = vsel %vm8948, %v8968, %v8976
        %v8981 = vsel %vm8949, %v8969, %v8976
        %v8982 = vld [vmem:[%s9] sm:$0xff]
        %v8983 = vld [vmem:[%s9 + $0x8] sm:$0xff]
        %v8984 = vld [vmem:[%s9 + $0x10] sm:$0xff]
        %v8985 = vld [vmem:[%s9 + $0x18] sm:$0xff]
        %v8986 = vld [vmem:[%s9 + $0x20] sm:$0xff]
        %v8987 = vld [vmem:[%s9 + $0x28] sm:$0xff]
        %v8988 = vld [vmem:[%s9 + $0x30] sm:$0xff]
        %v8989 = vld [vmem:[%s9 + $0x38] sm:$0xff]
        %v8990 = vld [vmem:[%s9 + $0x40] sm:$0xff]
        %v8991 = vld [vmem:[%s9 + $0x48] sm:$0xff]
        %v8992 = vld [vmem:[%s9 + $0x50] sm:$0xff]
        %v8993 = vld [vmem:[%s9 + $0x58] sm:$0xff]
        %v8994 = vld [vmem:[%s9 + $0x60] sm:$0xff]
        %v8995 = vld [vmem:[%s9 + $0x68] sm:$0xff]
        %v8996 = vld [vmem:[%s9 + $0x70] sm:$0xff]
        %v8997 = vld [vmem:[%s9 + $0x78] sm:$0xff]
        %v8998 = vld [vmem:[%s9 + $0x80] sm:$0xff]
        %v8999 = vld [vmem:[%s9 + $0x88] sm:$0xff]
        %v9000 = vld [vmem:[%s9 + $0x90] sm:$0xff]
        %v9001 = vld [vmem:[%s9 + $0x98] sm:$0xff]
        %v9002 = vld [vmem:[%s9 + $0xa0] sm:$0xff]
        %v9003 = vld [vmem:[%s9 + $0xa8] sm:$0xff]
        %v9004 = vld [vmem:[%s9 + $0xb0] sm:$0xff]
        %v9005 = vld [vmem:[%s9 + $0xb8] sm:$0xff]
        %v9006 = vld [vmem:[%s9 + $0xc0] sm:$0xff]
        %v9007 = vld [vmem:[%s9 + $0xc8] sm:$0xff]
        %v9008 = vld [vmem:[%s9 + $0xd0] sm:$0xff]
        %v9009 = vld [vmem:[%s9 + $0xd8] sm:$0xff]
        %v9010 = vld [vmem:[%s9 + $0xe0] sm:$0x1]
        %v9012 = vsel %vm3169, %v8979, 0
        %v9015 = vsel %vm3169, %v8981, 0
        %v9018 = vsel %vm6043, %v9010, 0
        %9020 = vmatpush.msra.mxu0 %v8997
        %9021 = vmatpush.msra.mxu0 %v8996
        %9022 = vmatpush.msra.mxu0 %v8995
        %9023 = vmatpush.msra.mxu0 %v8994
        %9024 = vmatpush.msra.mxu0 %v8993
        %9025 = vmatpush.msra.mxu0 %v8992
        %9026 = vmatpush.msra.mxu0 %v8991
        %9027 = vmatpush.msra.mxu0 %v8990
        %9028 = vmatpush.msra.mxu0 %v8989
        %9029 = vmatpush.msra.mxu0 %v8988
        %9030 = vmatpush.msra.mxu0 %v8987
        %9031 = vmatpush.msra.mxu0 %v8986
        %9032 = vmatpush.msra.mxu0 %v8985
        %9033 = vmatpush.msra.mxu0 %v8984
        %9034 = vmatpush.msra.mxu0 %v8983
        %9035 = vmatpush.msra.mxu0 %v8982
        %9036 = vmatmul.f32.gmra.mxu0 %v8978
        %v9037 = vpop.f32.mrf.mxu0
        %v9038 = vadd.f32 0.0, %v9037
        %9039 = vmatmul.f32.gmra.mxu0 %v8980
        %v9040 = vpop.f32.mrf.mxu0
        %v9041 = vadd.f32 0.0, %v9040
        %9042 = vdwg.mxu0
        %9043 = vmatpush.msra.mxu0 0.0
        %9044 = vmatpush.msra.mxu0 0.0
        %9045 = vmatpush.msra.mxu0 0.0
        %9046 = vmatpush.msra.mxu0 %v9018
        %9047 = vmatpush.msra.mxu0 %v9009
        %9048 = vmatpush.msra.mxu0 %v9008
        %9049 = vmatpush.msra.mxu0 %v9007
        %9050 = vmatpush.msra.mxu0 %v9006
        %9051 = vmatpush.msra.mxu0 %v9005
        %9052 = vmatpush.msra.mxu0 %v9004
        %9053 = vmatpush.msra.mxu0 %v9003
        %9054 = vmatpush.msra.mxu0 %v9002
        %9055 = vmatpush.msra.mxu0 %v9001
        %9056 = vmatpush.msra.mxu0 %v9000
        %9057 = vmatpush.msra.mxu0 %v8999
        %9058 = vmatpush.msra.mxu0 %v8998
        %9059 = vmatmul.f32.gmra.mxu0 %v9012
        %v9060 = vpop.f32.mrf.mxu0
        %v9061 = vadd.f32 %v9038, %v9060
        %9062 = vmatmul.f32.gmra.mxu0 %v9015
        %v9063 = vpop.f32.mrf.mxu0
        %v9064 = vadd.f32 %v9041, %v9063
        %9065 = vdwg.mxu0
        %v9066 = vld [vmem:[%s6] sm:$0xff]
        %v9067 = vld [vmem:[%s6 + $0x8] sm:$0xff]
        %v9068 = vld [vmem:[%s6 + $0x10] sm:$0xff]
        %v9069 = vld [vmem:[%s6 + $0x18] sm:$0xff]
        %v9070 = vld [vmem:[%s6 + $0x20] sm:$0xff]
        %v9071 = vld [vmem:[%s6 + $0x28] sm:$0xff]
        %v9072 = vld [vmem:[%s6 + $0x30] sm:$0xff]
        %v9073 = vld [vmem:[%s6 + $0x38] sm:$0xff]
        %v9074 = vld [vmem:[%s6 + $0x40] sm:$0xff]
        %v9075 = vld [vmem:[%s6 + $0x48] sm:$0xff]
        %v9076 = vld [vmem:[%s6 + $0x50] sm:$0xff]
        %v9077 = vld [vmem:[%s6 + $0x58] sm:$0xff]
        %v9078 = vld [vmem:[%s6 + $0x60] sm:$0xff]
        %v9079 = vld [vmem:[%s6 + $0x68] sm:$0xff]
        %v9080 = vld [vmem:[%s6 + $0x70] sm:$0xff]
        %v9081 = vld [vmem:[%s6 + $0x78] sm:$0xff]
        %v9082 = vld [vmem:[%s6 + $0x80] sm:$0xff]
        %v9083 = vld [vmem:[%s6 + $0x88] sm:$0xff]
        %v9084 = vld [vmem:[%s6 + $0x90] sm:$0xff]
        %v9085 = vld [vmem:[%s6 + $0x98] sm:$0xff]
        %v9086 = vld [vmem:[%s6 + $0xa0] sm:$0xff]
        %v9087 = vld [vmem:[%s6 + $0xa8] sm:$0xff]
        %v9088 = vld [vmem:[%s6 + $0xb0] sm:$0xff]
        %v9089 = vld [vmem:[%s6 + $0xb8] sm:$0xff]
        %v9090 = vld [vmem:[%s6 + $0xc0] sm:$0xff]
        %v9091 = vld [vmem:[%s6 + $0xc8] sm:$0xff]
        %v9092 = vld [vmem:[%s6 + $0xd0] sm:$0xff]
        %v9093 = vld [vmem:[%s6 + $0xd8] sm:$0xff]
        %v9094 = vld [vmem:[%s6 + $0xe0] sm:$0xff]
        %v9095 = vld [vmem:[%s6 + $0xe8] sm:$0xff]
        %v9096 = vld [vmem:[%s6 + $0xf0] sm:$0xff]
        %v9097 = vld [vmem:[%s6 + $0xf8] sm:$0xff]
        %v9098 = vld [vmem:[%s6 + $0x100] sm:$0xff]
        %v9099 = vld [vmem:[%s6 + $0x108] sm:$0xff]
        %v9100 = vld [vmem:[%s6 + $0x110] sm:$0xff]
        %v9101 = vld [vmem:[%s6 + $0x118] sm:$0xff]
        %v9102 = vld [vmem:[%s6 + $0x120] sm:$0xff]
        %v9103 = vld [vmem:[%s6 + $0x128] sm:$0xff]
        %v9104 = vld [vmem:[%s6 + $0x130] sm:$0xff]
        %v9105 = vld [vmem:[%s6 + $0x138] sm:$0xff]
        %v9106 = vld [vmem:[%s6 + $0x140] sm:$0xff]
        %v9107 = vld [vmem:[%s6 + $0x148] sm:$0xff]
        %v9108 = vld [vmem:[%s6 + $0x150] sm:$0xff]
        %v9109 = vld [vmem:[%s6 + $0x158] sm:$0xff]
        %v9110 = vld [vmem:[%s6 + $0x160] sm:$0xff]
        %v9111 = vld [vmem:[%s6 + $0x168] sm:$0xff]
        %v9112 = vld [vmem:[%s6 + $0x170] sm:$0xff]
        %v9113 = vld [vmem:[%s6 + $0x178] sm:$0xff]
        %v9114 = vld [vmem:[%s6 + $0x180] sm:$0xff]
        %v9115 = vld [vmem:[%s6 + $0x188] sm:$0xff]
        %v9116 = vld [vmem:[%s6 + $0x190] sm:$0xff]
        %v9117 = vld [vmem:[%s6 + $0x198] sm:$0xff]
        %v9118 = vld [vmem:[%s6 + $0x1a0] sm:$0xff]
        %v9119 = vld [vmem:[%s6 + $0x1a8] sm:$0xff]
        %v9120 = vld [vmem:[%s6 + $0x1b0] sm:$0xff]
        %v9121 = vld [vmem:[%s6 + $0x1b8] sm:$0xff]
        %v9122 = vld [vmem:[%s6 + $0x1c0] sm:$0xff]
        %v9123 = vld [vmem:[%s6 + $0x1c8] sm:$0xff]
        %v9124 = vld [vmem:[%s6 + $0x1d0] sm:$0xff]
        %v9125 = vld [vmem:[%s6 + $0x1d8] sm:$0xff]
        %v9126 = vld [vmem:[%s6 + $0x1e0] sm:$0xff]
        %v9127 = vld [vmem:[%s6 + $0x1e8] sm:$0xff]
        %v9128 = vld [vmem:[%s6 + $0x1f0] sm:$0xff]
        %v9129 = vld [vmem:[%s6 + $0x1f8] sm:$0xff]
        %v9131 = vsel %vm598, %v9066, 0
        %v9134 = vsel %vm598, %v9067, 0
        %v9137 = vsel %vm598, %v9068, 0
        %v9140 = vsel %vm598, %v9069, 0
        %v9143 = vsel %vm598, %v9070, 0
        %v9146 = vsel %vm598, %v9071, 0
        %v9149 = vsel %vm598, %v9072, 0
        %v9152 = vsel %vm598, %v9073, 0
        %v9155 = vsel %vm598, %v9074, 0
        %v9158 = vsel %vm598, %v9075, 0
        %v9161 = vsel %vm598, %v9076, 0
        %v9164 = vsel %vm598, %v9077, 0
        %v9167 = vsel %vm598, %v9078, 0
        %v9170 = vsel %vm598, %v9079, 0
        %v9173 = vsel %vm598, %v9080, 0
        %v9176 = vsel %vm598, %v9081, 0
        %v9179 = vsel %vm598, %v9082, 0
        %v9182 = vsel %vm598, %v9083, 0
        %v9185 = vsel %vm598, %v9084, 0
        %v9188 = vsel %vm598, %v9085, 0
        %v9191 = vsel %vm598, %v9086, 0
        %v9194 = vsel %vm598, %v9087, 0
        %v9197 = vsel %vm598, %v9088, 0
        %v9200 = vsel %vm598, %v9089, 0
        %v9203 = vsel %vm598, %v9090, 0
        %v9206 = vsel %vm598, %v9091, 0
        %v9209 = vsel %vm598, %v9092, 0
        %v9212 = vsel %vm598, %v9093, 0
        %v9215 = vsel %vm598, %v9094, 0
        %v9218 = vsel %vm598, %v9095, 0
        %v9221 = vsel %vm598, %v9096, 0
        %v9224 = vsel %vm598, %v9097, 0
        %v9227 = vsel %vm598, %v9098, 0
        %v9230 = vsel %vm598, %v9099, 0
        %v9233 = vsel %vm598, %v9100, 0
        %v9236 = vsel %vm598, %v9101, 0
        %v9239 = vsel %vm598, %v9102, 0
        %v9242 = vsel %vm598, %v9103, 0
        %v9245 = vsel %vm598, %v9104, 0
        %v9248 = vsel %vm598, %v9105, 0
        %v9251 = vsel %vm598, %v9106, 0
        %v9254 = vsel %vm598, %v9107, 0
        %v9257 = vsel %vm598, %v9108, 0
        %v9260 = vsel %vm598, %v9109, 0
        %v9263 = vsel %vm598, %v9110, 0
        %v9266 = vsel %vm598, %v9111, 0
        %v9269 = vsel %vm598, %v9112, 0
        %v9272 = vsel %vm598, %v9113, 0
        %v9275 = vsel %vm598, %v9114, 0
        %v9278 = vsel %vm598, %v9115, 0
        %v9281 = vsel %vm598, %v9116, 0
        %v9284 = vsel %vm598, %v9117, 0
        %v9287 = vsel %vm598, %v9118, 0
        %v9290 = vsel %vm598, %v9119, 0
        %v9293 = vsel %vm598, %v9120, 0
        %v9296 = vsel %vm598, %v9121, 0
        %v9299 = vsel %vm598, %v9122, 0
        %v9302 = vsel %vm598, %v9123, 0
        %v9305 = vsel %vm598, %v9124, 0
        %v9308 = vsel %vm598, %v9125, 0
        %v9311 = vsel %vm598, %v9126, 0
        %v9314 = vsel %vm598, %v9127, 0
        %v9317 = vsel %vm598, %v9128, 0
        %v9320 = vsel %vm598, %v9129, 0
        %9322 = vmatpush.msra.mxu0 0.0
        %9323 = vmatpush.msra.mxu0 0.0
        %9324 = vmatpush.msra.mxu0 0.0
        %9325 = vmatpush.msra.mxu0 0.0
        %9326 = vmatpush.msra.mxu0 0.0
        %9327 = vmatpush.msra.mxu0 0.0
        %9328 = vmatpush.msra.mxu0 0.0
        %9329 = vmatpush.msra.mxu0 0.0
        %9330 = vmatpush.msra.mxu0 0.0
        %9331 = vmatpush.msra.mxu0 0.0
        %9332 = vmatpush.msra.mxu0 0.0
        %9333 = vmatpush.msra.mxu0 0.0
        %9334 = vmatpush.msra.mxu0 0.0
        %9335 = vmatpush.msra.mxu0 0.0
        %9336 = vmatpush.msra.mxu0 %v9064
        %9337 = vmatpush.msra.mxu0 %v9061
        %9338 = vmatmul.f32.gmra.mxu0 %v9131
        %v9339 = vpop.f32.mrf.mxu0
        %v9340 = vadd.f32 0.0, %v9339
        %9341 = vmatmul.f32.gmra.mxu0 %v9134
        %v9342 = vpop.f32.mrf.mxu0
        %v9343 = vadd.f32 0.0, %v9342
        %9344 = vmatmul.f32.gmra.mxu0 %v9137
        %v9345 = vpop.f32.mrf.mxu0
        %v9346 = vadd.f32 0.0, %v9345
        %9347 = vmatmul.f32.gmra.mxu0 %v9140
        %v9348 = vpop.f32.mrf.mxu0
        %v9349 = vadd.f32 0.0, %v9348
        %9350 = vmatmul.f32.gmra.mxu0 %v9143
        %v9351 = vpop.f32.mrf.mxu0
        %v9352 = vadd.f32 0.0, %v9351
        %9353 = vmatmul.f32.gmra.mxu0 %v9146
        %v9354 = vpop.f32.mrf.mxu0
        %v9355 = vadd.f32 0.0, %v9354
        %9356 = vmatmul.f32.gmra.mxu0 %v9149
        %v9357 = vpop.f32.mrf.mxu0
        %v9358 = vadd.f32 0.0, %v9357
        %9359 = vmatmul.f32.gmra.mxu0 %v9152
        %v9360 = vpop.f32.mrf.mxu0
        %v9361 = vadd.f32 0.0, %v9360
        %9362 = vmatmul.f32.gmra.mxu0 %v9155
        %v9363 = vpop.f32.mrf.mxu0
        %v9364 = vadd.f32 0.0, %v9363
        %9365 = vmatmul.f32.gmra.mxu0 %v9158
        %v9366 = vpop.f32.mrf.mxu0
        %v9367 = vadd.f32 0.0, %v9366
        %9368 = vmatmul.f32.gmra.mxu0 %v9161
        %v9369 = vpop.f32.mrf.mxu0
        %v9370 = vadd.f32 0.0, %v9369
        %9371 = vmatmul.f32.gmra.mxu0 %v9164
        %v9372 = vpop.f32.mrf.mxu0
        %v9373 = vadd.f32 0.0, %v9372
        %9374 = vmatmul.f32.gmra.mxu0 %v9167
        %v9375 = vpop.f32.mrf.mxu0
        %v9376 = vadd.f32 0.0, %v9375
        %9377 = vmatmul.f32.gmra.mxu0 %v9170
        %v9378 = vpop.f32.mrf.mxu0
        %v9379 = vadd.f32 0.0, %v9378
        %9380 = vmatmul.f32.gmra.mxu0 %v9173
        %v9381 = vpop.f32.mrf.mxu0
        %v9382 = vadd.f32 0.0, %v9381
        %9383 = vmatmul.f32.gmra.mxu0 %v9176
        %v9384 = vpop.f32.mrf.mxu0
        %v9385 = vadd.f32 0.0, %v9384
        %9386 = vmatmul.f32.gmra.mxu0 %v9179
        %v9387 = vpop.f32.mrf.mxu0
        %v9388 = vadd.f32 0.0, %v9387
        %9389 = vmatmul.f32.gmra.mxu0 %v9182
        %v9390 = vpop.f32.mrf.mxu0
        %v9391 = vadd.f32 0.0, %v9390
        %9392 = vmatmul.f32.gmra.mxu0 %v9185
        %v9393 = vpop.f32.mrf.mxu0
        %v9394 = vadd.f32 0.0, %v9393
        %9395 = vmatmul.f32.gmra.mxu0 %v9188
        %v9396 = vpop.f32.mrf.mxu0
        %v9397 = vadd.f32 0.0, %v9396
        %9398 = vmatmul.f32.gmra.mxu0 %v9191
        %v9399 = vpop.f32.mrf.mxu0
        %v9400 = vadd.f32 0.0, %v9399
        %9401 = vmatmul.f32.gmra.mxu0 %v9194
        %v9402 = vpop.f32.mrf.mxu0
        %v9403 = vadd.f32 0.0, %v9402
        %9404 = vmatmul.f32.gmra.mxu0 %v9197
        %v9405 = vpop.f32.mrf.mxu0
        %v9406 = vadd.f32 0.0, %v9405
        %9407 = vmatmul.f32.gmra.mxu0 %v9200
        %v9408 = vpop.f32.mrf.mxu0
        %v9409 = vadd.f32 0.0, %v9408
        %9410 = vmatmul.f32.gmra.mxu0 %v9203
        %v9411 = vpop.f32.mrf.mxu0
        %v9412 = vadd.f32 0.0, %v9411
        %9413 = vmatmul.f32.gmra.mxu0 %v9206
        %v9414 = vpop.f32.mrf.mxu0
        %v9415 = vadd.f32 0.0, %v9414
        %9416 = vmatmul.f32.gmra.mxu0 %v9209
        %v9417 = vpop.f32.mrf.mxu0
        %v9418 = vadd.f32 0.0, %v9417
        %9419 = vmatmul.f32.gmra.mxu0 %v9212
        %v9420 = vpop.f32.mrf.mxu0
        %v9421 = vadd.f32 0.0, %v9420
        %9422 = vmatmul.f32.gmra.mxu0 %v9215
        %v9423 = vpop.f32.mrf.mxu0
        %v9424 = vadd.f32 0.0, %v9423
        %9425 = vmatmul.f32.gmra.mxu0 %v9218
        %v9426 = vpop.f32.mrf.mxu0
        %v9427 = vadd.f32 0.0, %v9426
        %9428 = vmatmul.f32.gmra.mxu0 %v9221
        %v9429 = vpop.f32.mrf.mxu0
        %v9430 = vadd.f32 0.0, %v9429
        %9431 = vmatmul.f32.gmra.mxu0 %v9224
        %v9432 = vpop.f32.mrf.mxu0
        %v9433 = vadd.f32 0.0, %v9432
        %9434 = vmatmul.f32.gmra.mxu0 %v9227
        %v9435 = vpop.f32.mrf.mxu0
        %v9436 = vadd.f32 0.0, %v9435
        %9437 = vmatmul.f32.gmra.mxu0 %v9230
        %v9438 = vpop.f32.mrf.mxu0
        %v9439 = vadd.f32 0.0, %v9438
        %9440 = vmatmul.f32.gmra.mxu0 %v9233
        %v9441 = vpop.f32.mrf.mxu0
        %v9442 = vadd.f32 0.0, %v9441
        %9443 = vmatmul.f32.gmra.mxu0 %v9236
        %v9444 = vpop.f32.mrf.mxu0
        %v9445 = vadd.f32 0.0, %v9444
        %9446 = vmatmul.f32.gmra.mxu0 %v9239
        %v9447 = vpop.f32.mrf.mxu0
        %v9448 = vadd.f32 0.0, %v9447
        %9449 = vmatmul.f32.gmra.mxu0 %v9242
        %v9450 = vpop.f32.mrf.mxu0
        %v9451 = vadd.f32 0.0, %v9450
        %9452 = vmatmul.f32.gmra.mxu0 %v9245
        %v9453 = vpop.f32.mrf.mxu0
        %v9454 = vadd.f32 0.0, %v9453
        %9455 = vmatmul.f32.gmra.mxu0 %v9248
        %v9456 = vpop.f32.mrf.mxu0
        %v9457 = vadd.f32 0.0, %v9456
        %9458 = vmatmul.f32.gmra.mxu0 %v9251
        %v9459 = vpop.f32.mrf.mxu0
        %v9460 = vadd.f32 0.0, %v9459
        %9461 = vmatmul.f32.gmra.mxu0 %v9254
        %v9462 = vpop.f32.mrf.mxu0
        %v9463 = vadd.f32 0.0, %v9462
        %9464 = vmatmul.f32.gmra.mxu0 %v9257
        %v9465 = vpop.f32.mrf.mxu0
        %v9466 = vadd.f32 0.0, %v9465
        %9467 = vmatmul.f32.gmra.mxu0 %v9260
        %v9468 = vpop.f32.mrf.mxu0
        %v9469 = vadd.f32 0.0, %v9468
        %9470 = vmatmul.f32.gmra.mxu0 %v9263
        %v9471 = vpop.f32.mrf.mxu0
        %v9472 = vadd.f32 0.0, %v9471
        %9473 = vmatmul.f32.gmra.mxu0 %v9266
        %v9474 = vpop.f32.mrf.mxu0
        %v9475 = vadd.f32 0.0, %v9474
        %9476 = vmatmul.f32.gmra.mxu0 %v9269
        %v9477 = vpop.f32.mrf.mxu0
        %v9478 = vadd.f32 0.0, %v9477
        %9479 = vmatmul.f32.gmra.mxu0 %v9272
        %v9480 = vpop.f32.mrf.mxu0
        %v9481 = vadd.f32 0.0, %v9480
        %9482 = vmatmul.f32.gmra.mxu0 %v9275
        %v9483 = vpop.f32.mrf.mxu0
        %v9484 = vadd.f32 0.0, %v9483
        %9485 = vmatmul.f32.gmra.mxu0 %v9278
        %v9486 = vpop.f32.mrf.mxu0
        %v9487 = vadd.f32 0.0, %v9486
        %9488 = vmatmul.f32.gmra.mxu0 %v9281
        %v9489 = vpop.f32.mrf.mxu0
        %v9490 = vadd.f32 0.0, %v9489
        %9491 = vmatmul.f32.gmra.mxu0 %v9284
        %v9492 = vpop.f32.mrf.mxu0
        %v9493 = vadd.f32 0.0, %v9492
        %9494 = vmatmul.f32.gmra.mxu0 %v9287
        %v9495 = vpop.f32.mrf.mxu0
        %v9496 = vadd.f32 0.0, %v9495
        %9497 = vmatmul.f32.gmra.mxu0 %v9290
        %v9498 = vpop.f32.mrf.mxu0
        %v9499 = vadd.f32 0.0, %v9498
        %9500 = vmatmul.f32.gmra.mxu0 %v9293
        %v9501 = vpop.f32.mrf.mxu0
        %v9502 = vadd.f32 0.0, %v9501
        %9503 = vmatmul.f32.gmra.mxu0 %v9296
        %v9504 = vpop.f32.mrf.mxu0
        %v9505 = vadd.f32 0.0, %v9504
        %9506 = vmatmul.f32.gmra.mxu0 %v9299
        %v9507 = vpop.f32.mrf.mxu0
        %v9508 = vadd.f32 0.0, %v9507
        %9509 = vmatmul.f32.gmra.mxu0 %v9302
        %v9510 = vpop.f32.mrf.mxu0
        %v9511 = vadd.f32 0.0, %v9510
        %9512 = vmatmul.f32.gmra.mxu0 %v9305
        %v9513 = vpop.f32.mrf.mxu0
        %v9514 = vadd.f32 0.0, %v9513
        %9515 = vmatmul.f32.gmra.mxu0 %v9308
        %v9516 = vpop.f32.mrf.mxu0
        %v9517 = vadd.f32 0.0, %v9516
        %9518 = vmatmul.f32.gmra.mxu0 %v9311
        %v9519 = vpop.f32.mrf.mxu0
        %v9520 = vadd.f32 0.0, %v9519
        %9521 = vmatmul.f32.gmra.mxu0 %v9314
        %v9522 = vpop.f32.mrf.mxu0
        %v9523 = vadd.f32 0.0, %v9522
        %9524 = vmatmul.f32.gmra.mxu0 %v9317
        %v9525 = vpop.f32.mrf.mxu0
        %v9526 = vadd.f32 0.0, %v9525
        %9527 = vmatmul.f32.gmra.mxu0 %v9320
        %v9528 = vpop.f32.mrf.mxu0
        %v9529 = vadd.f32 0.0, %v9528
        %9530 = vdwg.mxu0
        %9533 = vrot.lane.b32.xlu0 %v9346, 127
        %v9534 = vpop.permute.xlu0 %9533
        %9535 = vrot.lane.b32.xlu0 %v9349, 127
        %v9536 = vpop.permute.xlu0 %9535
        %v9539 = vadd.f32 %v9340, %v9534
        %v9540 = vadd.f32 %v9343, %v9536
        %9543 = vrot.lane.b32.xlu0 %v9352, 126
        %v9544 = vpop.permute.xlu0 %9543
        %9545 = vrot.lane.b32.xlu0 %v9355, 126
        %v9546 = vpop.permute.xlu0 %9545
        %v9549 = vadd.f32 %v9539, %v9544
        %v9550 = vadd.f32 %v9540, %v9546
        %9553 = vrot.lane.b32.xlu0 %v9358, 125
        %v9554 = vpop.permute.xlu0 %9553
        %9555 = vrot.lane.b32.xlu0 %v9361, 125
        %v9556 = vpop.permute.xlu0 %9555
        %v9559 = vadd.f32 %v9549, %v9554
        %v9560 = vadd.f32 %v9550, %v9556
        %9563 = vrot.lane.b32.xlu0 %v9364, 124
        %v9564 = vpop.permute.xlu0 %9563
        %9565 = vrot.lane.b32.xlu0 %v9367, 124
        %v9566 = vpop.permute.xlu0 %9565
        %v9569 = vadd.f32 %v9559, %v9564
        %v9570 = vadd.f32 %v9560, %v9566
        %9573 = vrot.lane.b32.xlu0 %v9370, 123
        %v9574 = vpop.permute.xlu0 %9573
        %9575 = vrot.lane.b32.xlu0 %v9373, 123
        %v9576 = vpop.permute.xlu0 %9575
        %v9579 = vadd.f32 %v9569, %v9574
        %v9580 = vadd.f32 %v9570, %v9576
        %9583 = vrot.lane.b32.xlu0 %v9376, 122
        %v9584 = vpop.permute.xlu0 %9583
        %9585 = vrot.lane.b32.xlu0 %v9379, 122
        %v9586 = vpop.permute.xlu0 %9585
        %v9589 = vadd.f32 %v9579, %v9584
        %v9590 = vadd.f32 %v9580, %v9586
        %9593 = vrot.lane.b32.xlu0 %v9382, 121
        %v9594 = vpop.permute.xlu0 %9593
        %9595 = vrot.lane.b32.xlu0 %v9385, 121
        %v9596 = vpop.permute.xlu0 %9595
        %v9599 = vadd.f32 %v9589, %v9594
        %v9600 = vadd.f32 %v9590, %v9596
        %9603 = vrot.lane.b32.xlu0 %v9388, 120
        %v9604 = vpop.permute.xlu0 %9603
        %9605 = vrot.lane.b32.xlu0 %v9391, 120
        %v9606 = vpop.permute.xlu0 %9605
        %v9609 = vadd.f32 %v9599, %v9604
        %v9610 = vadd.f32 %v9600, %v9606
        %9613 = vrot.lane.b32.xlu0 %v9394, 119
        %v9614 = vpop.permute.xlu0 %9613
        %9615 = vrot.lane.b32.xlu0 %v9397, 119
        %v9616 = vpop.permute.xlu0 %9615
        %v9619 = vadd.f32 %v9609, %v9614
        %v9620 = vadd.f32 %v9610, %v9616
        %9623 = vrot.lane.b32.xlu0 %v9400, 118
        %v9624 = vpop.permute.xlu0 %9623
        %9625 = vrot.lane.b32.xlu0 %v9403, 118
        %v9626 = vpop.permute.xlu0 %9625
        %v9629 = vadd.f32 %v9619, %v9624
        %v9630 = vadd.f32 %v9620, %v9626
        %9633 = vrot.lane.b32.xlu0 %v9406, 117
        %v9634 = vpop.permute.xlu0 %9633
        %9635 = vrot.lane.b32.xlu0 %v9409, 117
        %v9636 = vpop.permute.xlu0 %9635
        %v9639 = vadd.f32 %v9629, %v9634
        %v9640 = vadd.f32 %v9630, %v9636
        %9643 = vrot.lane.b32.xlu0 %v9412, 116
        %v9644 = vpop.permute.xlu0 %9643
        %9645 = vrot.lane.b32.xlu0 %v9415, 116
        %v9646 = vpop.permute.xlu0 %9645
        %v9649 = vadd.f32 %v9639, %v9644
        %v9650 = vadd.f32 %v9640, %v9646
        %9653 = vrot.lane.b32.xlu0 %v9418, 115
        %v9654 = vpop.permute.xlu0 %9653
        %9655 = vrot.lane.b32.xlu0 %v9421, 115
        %v9656 = vpop.permute.xlu0 %9655
        %v9659 = vadd.f32 %v9649, %v9654
        %v9660 = vadd.f32 %v9650, %v9656
        %9663 = vrot.lane.b32.xlu0 %v9424, 114
        %v9664 = vpop.permute.xlu0 %9663
        %9665 = vrot.lane.b32.xlu0 %v9427, 114
        %v9666 = vpop.permute.xlu0 %9665
        %v9669 = vadd.f32 %v9659, %v9664
        %v9670 = vadd.f32 %v9660, %v9666
        %9673 = vrot.lane.b32.xlu0 %v9430, 113
        %v9674 = vpop.permute.xlu0 %9673
        %9675 = vrot.lane.b32.xlu0 %v9433, 113
        %v9676 = vpop.permute.xlu0 %9675
        %v9679 = vadd.f32 %v9669, %v9674
        %v9680 = vadd.f32 %v9670, %v9676
        %9683 = vrot.lane.b32.xlu0 %v9436, 112
        %v9684 = vpop.permute.xlu0 %9683
        %9685 = vrot.lane.b32.xlu0 %v9439, 112
        %v9686 = vpop.permute.xlu0 %9685
        %v9689 = vadd.f32 %v9679, %v9684
        %v9690 = vadd.f32 %v9680, %v9686
        %9693 = vrot.lane.b32.xlu0 %v9442, 111
        %v9694 = vpop.permute.xlu0 %9693
        %9695 = vrot.lane.b32.xlu0 %v9445, 111
        %v9696 = vpop.permute.xlu0 %9695
        %v9699 = vadd.f32 %v9689, %v9694
        %v9700 = vadd.f32 %v9690, %v9696
        %9703 = vrot.lane.b32.xlu0 %v9448, 110
        %v9704 = vpop.permute.xlu0 %9703
        %9705 = vrot.lane.b32.xlu0 %v9451, 110
        %v9706 = vpop.permute.xlu0 %9705
        %v9709 = vadd.f32 %v9699, %v9704
        %v9710 = vadd.f32 %v9700, %v9706
        %9713 = vrot.lane.b32.xlu0 %v9454, 109
        %v9714 = vpop.permute.xlu0 %9713
        %9715 = vrot.lane.b32.xlu0 %v9457, 109
        %v9716 = vpop.permute.xlu0 %9715
        %v9719 = vadd.f32 %v9709, %v9714
        %v9720 = vadd.f32 %v9710, %v9716
        %9723 = vrot.lane.b32.xlu0 %v9460, 108
        %v9724 = vpop.permute.xlu0 %9723
        %9725 = vrot.lane.b32.xlu0 %v9463, 108
        %v9726 = vpop.permute.xlu0 %9725
        %v9729 = vadd.f32 %v9719, %v9724
        %v9730 = vadd.f32 %v9720, %v9726
        %9733 = vrot.lane.b32.xlu0 %v9466, 107
        %v9734 = vpop.permute.xlu0 %9733
        %9735 = vrot.lane.b32.xlu0 %v9469, 107
        %v9736 = vpop.permute.xlu0 %9735
        %v9739 = vadd.f32 %v9729, %v9734
        %v9740 = vadd.f32 %v9730, %v9736
        %9743 = vrot.lane.b32.xlu0 %v9472, 106
        %v9744 = vpop.permute.xlu0 %9743
        %9745 = vrot.lane.b32.xlu0 %v9475, 106
        %v9746 = vpop.permute.xlu0 %9745
        %v9749 = vadd.f32 %v9739, %v9744
        %v9750 = vadd.f32 %v9740, %v9746
        %9753 = vrot.lane.b32.xlu0 %v9478, 105
        %v9754 = vpop.permute.xlu0 %9753
        %9755 = vrot.lane.b32.xlu0 %v9481, 105
        %v9756 = vpop.permute.xlu0 %9755
        %v9759 = vadd.f32 %v9749, %v9754
        %v9760 = vadd.f32 %v9750, %v9756
        %9763 = vrot.lane.b32.xlu0 %v9484, 104
        %v9764 = vpop.permute.xlu0 %9763
        %9765 = vrot.lane.b32.xlu0 %v9487, 104
        %v9766 = vpop.permute.xlu0 %9765
        %v9769 = vadd.f32 %v9759, %v9764
        %v9770 = vadd.f32 %v9760, %v9766
        %9773 = vrot.lane.b32.xlu0 %v9490, 103
        %v9774 = vpop.permute.xlu0 %9773
        %9775 = vrot.lane.b32.xlu0 %v9493, 103
        %v9776 = vpop.permute.xlu0 %9775
        %v9779 = vadd.f32 %v9769, %v9774
        %v9780 = vadd.f32 %v9770, %v9776
        %9783 = vrot.lane.b32.xlu0 %v9496, 102
        %v9784 = vpop.permute.xlu0 %9783
        %9785 = vrot.lane.b32.xlu0 %v9499, 102
        %v9786 = vpop.permute.xlu0 %9785
        %v9789 = vadd.f32 %v9779, %v9784
        %v9790 = vadd.f32 %v9780, %v9786
        %9793 = vrot.lane.b32.xlu0 %v9502, 101
        %v9794 = vpop.permute.xlu0 %9793
        %9795 = vrot.lane.b32.xlu0 %v9505, 101
        %v9796 = vpop.permute.xlu0 %9795
        %v9799 = vadd.f32 %v9789, %v9794
        %v9800 = vadd.f32 %v9790, %v9796
        %9803 = vrot.lane.b32.xlu0 %v9508, 100
        %v9804 = vpop.permute.xlu0 %9803
        %9805 = vrot.lane.b32.xlu0 %v9511, 100
        %v9806 = vpop.permute.xlu0 %9805
        %v9809 = vadd.f32 %v9799, %v9804
        %v9810 = vadd.f32 %v9800, %v9806
        %9813 = vrot.lane.b32.xlu0 %v9514, 99
        %v9814 = vpop.permute.xlu0 %9813
        %9815 = vrot.lane.b32.xlu0 %v9517, 99
        %v9816 = vpop.permute.xlu0 %9815
        %v9819 = vadd.f32 %v9809, %v9814
        %v9820 = vadd.f32 %v9810, %v9816
        %9823 = vrot.lane.b32.xlu0 %v9520, 98
        %v9824 = vpop.permute.xlu0 %9823
        %9825 = vrot.lane.b32.xlu0 %v9523, 98
        %v9826 = vpop.permute.xlu0 %9825
        %v9829 = vadd.f32 %v9819, %v9824
        %v9830 = vadd.f32 %v9820, %v9826
        %9833 = vrot.lane.b32.xlu0 %v9526, 97
        %v9834 = vpop.permute.xlu0 %9833
        %9835 = vrot.lane.b32.xlu0 %v9529, 97
        %v9836 = vpop.permute.xlu0 %9835
        %v9839 = vadd.f32 %v9829, %v9834
        %v9840 = vadd.f32 %v9830, %v9836
        %9841 = vset.pattern.permute.xlu0 4
        %9842 = vperm.xlu0 %9841, %v416
        %v9843 = vpop.permute.xlu0 %9842
        %9845 = vset.pattern.permute.xlu0 4
        %9846 = vperm.xlu0 %9845, %v417
        %v9847 = vpop.permute.xlu0 %9846
        %v9849 = vmul.f32 %v9839, %v9843
        %v9850 = vmul.f32 %v9840, %v9847
        %9851 = vset.pattern.permute.xlu0 5
        %9852 = vperm.xlu0 %9851, %v416
        %v9853 = vpop.permute.xlu0 %9852
        %9855 = vset.pattern.permute.xlu0 5
        %9856 = vperm.xlu0 %9855, %v417
        %v9857 = vpop.permute.xlu0 %9856
        %v9859 = vadd.f32 %v9849, %v9853
        %v9860 = vadd.f32 %v9850, %v9857
        %9861 = vset.pattern.permute.xlu0 10
        %9862 = vperm.xlu0 %9861, %v416
        %v9863 = vpop.permute.xlu0 %9862
        %9865 = vset.pattern.permute.xlu0 10
        %9866 = vperm.xlu0 %9865, %v417
        %v9867 = vpop.permute.xlu0 %9866
        %vm9869 = vcmp.ge.f32.partialorder %v9859, %v9863
        %vm9870 = vcmp.ge.f32.partialorder %v9860, %v9867
        %v9871 = vsub.f32 %v9859, %v9863
        %v9872 = vsub.f32 %v9860, %v9867
        %9873 = vset.pattern.permute.xlu0 12
        %9874 = vperm.xlu0 %9873, %v416
        %v9875 = vpop.permute.xlu0 %9874
        %9877 = vset.pattern.permute.xlu0 12
        %9878 = vperm.xlu0 %9877, %v417
        %v9879 = vpop.permute.xlu0 %9878
        %v9881 = vmul.f32 %v9871, %v9875
        %v9882 = vmul.f32 %v9872, %v9879
        %v9883 = vadd.f32 %v9881, %v9863
        %v9884 = vadd.f32 %v9882, %v9867
        %9885 = vset.pattern.permute.xlu0 11
        %9886 = vperm.xlu0 %9885, %v416
        %v9887 = vpop.permute.xlu0 %9886
        %9889 = vset.pattern.permute.xlu0 11
        %9890 = vperm.xlu0 %9889, %v417
        %v9891 = vpop.permute.xlu0 %9890
        %v9893 = vsel %vm9869, %v9883, %v9887
        %v9894 = vsel %vm9870, %v9884, %v9891
        %v9895 = vld [vmem:[%s10] sm:$0xff]
        %v9896 = vld [vmem:[%s10 + $0x8] sm:$0xff]
        %v9897 = vld [vmem:[%s10 + $0x10] sm:$0xff]
        %v9898 = vld [vmem:[%s10 + $0x18] sm:$0x1]
        %vm9899 = vcmask 203776
        %v9901 = vsel %vm9899, %v9893, 0
        %v9904 = vsel %vm9899, %v9894, 0
        %v9907 = vsel %vm6043, %v9898, 0
        %9909 = vmatpush.msra.mxu0 0.0
        %9910 = vmatpush.msra.mxu0 0.0
        %9911 = vmatpush.msra.mxu0 0.0
        %9912 = vmatpush.msra.mxu0 0.0
        %9913 = vmatpush.msra.mxu0 0.0
        %9914 = vmatpush.msra.mxu0 0.0
        %9915 = vmatpush.msra.mxu0 0.0
        %9916 = vmatpush.msra.mxu0 0.0
        %9917 = vmatpush.msra.mxu0 0.0
        %9918 = vmatpush.msra.mxu0 0.0
        %9919 = vmatpush.msra.mxu0 0.0
        %9920 = vmatpush.msra.mxu0 0.0
        %9921 = vmatpush.msra.mxu0 %v9907
        %9922 = vmatpush.msra.mxu0 %v9897
        %9923 = vmatpush.msra.mxu0 %v9896
        %9924 = vmatpush.msra.mxu0 %v9895
        %9925 = vmatmul.f32.gmra.mxu0 %v9901
        %v9926 = vpop.f32.mrf.mxu0
        %v9927 = vadd.f32 0.0, %v9926
        %9928 = vmatmul.f32.gmra.mxu0 %v9904
        %v9929 = vpop.f32.mrf.mxu0
        %v9930 = vadd.f32 0.0, %v9929
        %9931 = vdwg.mxu0
        %v9932 = vld [vmem:[%s7] sm:$0xff]
        %v9933 = vld [vmem:[%s7 + $0x8] sm:$0xff]
        %v9934 = vld [vmem:[%s7 + $0x10] sm:$0xff]
        %v9936 = vsel %vm598, %v9932, 0
        %v9939 = vsel %vm598, %v9933, 0
        %v9942 = vsel %vm598, %v9934, 0
        %9944 = vmatpush.msra.mxu0 0.0
        %9945 = vmatpush.msra.mxu0 0.0
        %9946 = vmatpush.msra.mxu0 0.0
        %9947 = vmatpush.msra.mxu0 0.0
        %9948 = vmatpush.msra.mxu0 0.0
        %9949 = vmatpush.msra.mxu0 0.0
        %9950 = vmatpush.msra.mxu0 0.0
        %9951 = vmatpush.msra.mxu0 0.0
        %9952 = vmatpush.msra.mxu0 0.0
        %9953 = vmatpush.msra.mxu0 0.0
        %9954 = vmatpush.msra.mxu0 0.0
        %9955 = vmatpush.msra.mxu0 0.0
        %9956 = vmatpush.msra.mxu0 0.0
        %9957 = vmatpush.msra.mxu0 0.0
        %9958 = vmatpush.msra.mxu0 %v9930
        %9959 = vmatpush.msra.mxu0 %v9927
        %9960 = vmatmul.f32.gmra.mxu0 %v9936
        %v9961 = vpop.f32.mrf.mxu0
        %v9962 = vadd.f32 0.0, %v9961
        %9963 = vmatmul.f32.gmra.mxu0 %v9939
        %v9964 = vpop.f32.mrf.mxu0
        %v9965 = vadd.f32 0.0, %v9964
        %9966 = vmatmul.f32.gmra.mxu0 %v9942
        %v9967 = vpop.f32.mrf.mxu0
        %v9968 = vadd.f32 0.0, %v9967
        %9969 = vdwg.mxu0
        %9971 = vrot.lane.b32.xlu0 %v9962, 13
        %v9972 = vpop.permute.xlu0 %9971
        %v9974 = vadd.f32 %v416, %v9972
        %9976 = vrot.lane.b32.xlu0 %v9965, 12
        %v9977 = vpop.permute.xlu0 %9976
        %v9979 = vadd.f32 %v9974, %v9977
        %9981 = vrot.lane.b32.xlu0 %v9968, 11
        %v9982 = vpop.permute.xlu0 %9981
        %v9984 = vadd.f32 %v9979, %v9982
        %9986 = vset.pattern.permute.xlu0 13
        %9987 = vperm.xlu0 %9986, %v9984
        %v9988 = vpop.permute.xlu0 %9987
        %v9990 = vmul.f32 %v615, %v9988
        %vm9991 = vcmask 27648
        %v9992 = vsel %vm9991, %v9990, 0.0
        %v9993 = vrot.slane %v9992, 4
        %v9994 = vadd.f32 %v9992, %v9993
        %v9995 = vrot.slane %v9994, 2
        %v9996 = vadd.f32 %v9994, %v9995
        %v9997 = vrot.slane %v9996, 1
        %v9998 = vadd.f32 %v9996, %v9997
        %vm9999 = vcmask 31744
        %v10000 = vsel %vm9999, %v9998, -inf
        %10001 = vmax.xlane.f32.xlu0 %v10000
        %v10002 = vpop.xlane.xlu0 %10001
        %v10003 = vsub.f32 %v9998, %v10002
        %v10004 = vmul.f32 %v10003, 1.442695
        %v10005 = vpow.pop %v10004
        %v10006 = vsel %vm9999, %v10005, 0.0
        %10007 = vadd.xlane.f32.xlu0 %v10006
        %v10008 = vpop.xlane.xlu0 %10007
        %v10009 = vrcp.pop %v10008
        %v10010 = vmul.f32 %v10008, %v10009
        %v10011 = vsub.f32 1.0, %v10010
        %v10012 = vmul.f32 %v10009, %v10011
        %v10013 = vadd.f32 %v10009, %v10012
        %vm10014 = vweird.f32 %v10008
        %vm10015 = vweird.f32 %v10009
        %vm10016 = vmor %vm10014, %vm10015
        %v10017 = vsel %vm10016, %v10009, %v10013
        %v10018 = vand.u32 2147483647, %v10008
        %vm10019 = vcmp.eq.f32.partialorder %v10018, 8.507059e+37
        %v10020 = vand.u32 %v10008, 2147483648
        %v10021 = vor.u32 1.1754944e-38, %v10020
        %v10022 = vsel %vm10019, %v10021, %v10017
        %v10023 = vmul.f32 %v10005, %v10022
        %vm10024 = vcmask 24576
        %10025 = vst.msk [vmem:[%s405] sm:$0x1] %vm10024, %v10023
        %s10026 = sand.u32 %s291, 1
        %s10027 = scalar_lea.sflag [#allocation3], %s10026
        %s10028 = sand.u32 %s291, 1
        %s10029 = scalar_lea.vmem [#allocation2], %s10028
        // Predicated region
        $region69: #{tpu_custom_call.1} parent=67 // pred_check
          %p10030 = pneg %p301
        $region70: #{tpu_custom_call.1} parent=67 // pred_check_branch
          %10032 = sbr.rel (%p10030) target = $region72
        $region71: #{tpu_custom_call.1} parent=67 // pred_region
          %10034 = vsyncadd %s10027, 0
          %s10035 = scalar_lea.hbm %s12, %s26
          %s10037 = sshll.u32 %s10029, 4
          %s10038 = int_to_ptr.vmem [resolvable:$true] %s10037
          %s10039 = sshll.u32 %s10035, 4
          %s10040 = int_to_ptr.hbm [resolvable:$true] %s10039
          %10042 = dma.vmem_to_hbm [thread:$0]  %s10038, 16, %s10040, %s10027
        $region72: #{tpu_custom_call.1} parent=67 // pred_fallthru
          _
      $region68: #{tpu_custom_call.1} parent=5 // pred_fallthru
        _
      %p10043 = scmp.le.s32.totalorder 2, %s21
      // Predicated region
      $region73: #{tpu_custom_call.1} parent=5 // pred_check
        %p10044 = pneg %p10043
      $region74: #{tpu_custom_call.1} parent=5 // pred_check_branch
        %10046 = sbr.rel (%p10044) target = $region76
      $region75: #{tpu_custom_call.1} parent=5 // pred_region
        %s10047 = ssub.s32 %s21, 2
        // Predicated region
        $region77: #{tpu_custom_call.1} parent=75 // pred_check
          %p10048 = pneg %p307
        $region78: #{tpu_custom_call.1} parent=75 // pred_check_branch
          %10050 = sbr.rel (%p10048) target = $region80
        $region79: #{tpu_custom_call.1} parent=75 // pred_region
          %s10051 = sand.u32 %s292, 1
          %s10052 = scalar_lea.sflag [#allocation3], %s10051
          %s10053 = sand.u32 %s292, 1
          %s10054 = scalar_lea.vmem [#allocation2], %s10053
          %10056 = dma.done %s10052, 16
        $region80: #{tpu_custom_call.1} parent=75 // pred_fallthru
          _
      $region76: #{tpu_custom_call.1} parent=5 // pred_fallthru
        _
    $region6: #{tpu_custom_call.1} parent=1 // loop_footer
      %s25 = sadd.s32 1, %s21
    $region7: #{tpu_custom_call.1} parent=1 // loop_footer_branch
      %20 = sbr.rel target = $region3
    $region8: #{tpu_custom_call.1} parent=1 // loop_exit
      _
    %10057 = vsyncpa [#allocation3], 1
    %s10058 = scalar_lea.sflag [#allocation3], 1
    %10059 = vsyncpa %s10058, 1

</llo_original>
